<compile_context>
chip_gen: v6e
topology: v6e:2x2x1
jax: 0.10.0
libtpu: 0.0.40
codegen_flags: <defaults>
</compile_context>

<pallas_src>
import jax
import jax.numpy as jnp
from jax import lax
from jax.experimental import pallas as pl
from jax.experimental.pallas import tpu as pltpu

# ---------------- synthetic small shapes consistent with SLOT_MO -----------
B = 2            # batch
T = 4            # frames after backbone (resolution3d[0])
H, W = 8, 8      # spatial resolution after backbone (self.resolution)
C_IN = 64        # backbone output channels (self.in_c)
D = 64           # args.channel == hidden_dim2 == slot_dim
S = 21           # num_slots (args.bg_slot == False)
NUM_ACTOR = 20   # num_actor_class (allocated_slot == True)
HW = H * W
OUT_LANES = D + HW            # 128-lane output slab: [slots | attn_ori]
SCALE = D ** -0.5
EPS_LN = 1e-5
EPS_BN = 1e-5
EPS_SLOT = 1e-8

assert C_IN == D, "weight stacking assumes in_c == slot_dim for this config"
assert OUT_LANES == 128, "lane-dense output slab assumes D + HW == 128"

# indices into the stacked (NW, D, D) weight array
W_CONV, W_FC1, W_FC2, W_Q, W_SFC1, W_SFC2, W_GRU_HN = range(7)
NW = 7
# indices into the stacked (NV, D) vector array (biases / LN gammas & betas)
(V_CONV_B, V_LN_G, V_LN_B, V_FC1_B, V_FC2_B,
 V_NIN_G, V_NIN_B, V_NSL_G, V_NSL_B, V_BQ,
 V_NPF_G, V_NPF_B, V_SFC1_B, V_SFC2_B, V_GRU_BHN) = range(15)
NV = 15


# ------------------------- helper (pure JAX glue) ---------------------------
def build_grid(resolution):
    rs = [jnp.linspace(0.0, 1.0, r) for r in resolution]
    g = jnp.meshgrid(*rs, indexing="ij")
    g = jnp.stack(g, axis=-1).reshape(resolution[0], resolution[1], -1)
    g = g[None]
    return jnp.concatenate([g, 1.0 - g], axis=-1)          # (1, H, W, 4)


# --------------------- fused token-pipeline + SlotAttention kernel ----------
# grid = (B,).  The whole frame sequence for one batch element is processed in
# an unrolled in-kernel loop; the slot state is carried as a plain value.
def slot_mo_kernel(x_ref, init_ref, wstk_ref, wkv_ref, gruw_ref, pe_ref,
                   vecs_ref, bkv_ref, grub_ref, out_ref):
    n_frames = x_ref.shape[1]                               # static

    def vec(i):                                             # (1, D) row of the stack
        return vecs_ref[i:i + 1, :]

    def layer_norm(v, g, b):
        # mean and mean-of-squares are independent reductions (shorter chain)
        mu = jnp.mean(v, axis=-1, keepdims=True)
        ms = jnp.mean(v * v, axis=-1, keepdims=True)
        var = ms - mu * mu
        return (v - mu) * lax.rsqrt(var + EPS_LN) * g + b

    # ---- hoist all parameters once (used every frame / slot update) --------
    w_conv = wstk_ref[W_CONV]
    w_fc1 = wstk_ref[W_FC1]
    w_fc2 = wstk_ref[W_FC2]
    w_q = wstk_ref[W_Q]
    w_sfc1 = wstk_ref[W_SFC1]
    w_sfc2 = wstk_ref[W_SFC2]
    w_gru_hn = wstk_ref[W_GRU_HN]
    w_kv = wkv_ref[...]
    w_gru = gruw_ref[...]
    pe = pe_ref[...]
    b_kv = bkv_ref[...]
    b_gru = grub_ref[...]

    b_conv = vec(V_CONV_B)
    ln_g, ln_b = vec(V_LN_G), vec(V_LN_B)
    b_fc1, b_fc2 = vec(V_FC1_B), vec(V_FC2_B)
    nin_g, nin_b = vec(V_NIN_G), vec(V_NIN_B)
    nsl_g, nsl_b = vec(V_NSL_G), vec(V_NSL_B)
    npf_g, npf_b = vec(V_NPF_G), vec(V_NPF_B)
    b_q = vec(V_BQ)
    b_sfc1, b_sfc2 = vec(V_SFC1_B), vec(V_SFC2_B)
    b_gru_hn = vec(V_GRU_BHN)

    # ---- one SlotAttention iteration (== get_attention) --------------------
    def slot_update(slots_prev, k, v):
        sn = layer_norm(slots_prev, nsl_g, nsl_b)           # norm_slots
        q = jnp.dot(sn, w_q, preferred_element_type=jnp.float32) + b_q
        # q @ k^T via dot_general (contract last dims) -- no explicit transpose.
        dots = lax.dot_general(q, k, (((1,), (1,)), ((), ())),
                               preferred_element_type=jnp.float32) * SCALE  # (S, HW)
        # softmax over the slot axis (torch dim=1), + eps  (exact: exported)
        m = jnp.max(dots, axis=0, keepdims=True)
        e = jnp.exp(dots - m)
        attn_ori = e / jnp.sum(e, axis=0, keepdims=True) + EPS_SLOT
        # renormalize per slot over positions (internal only -> approx recip)
        attn = attn_ori * pl.reciprocal(
            jnp.sum(attn_ori, axis=-1, keepdims=True), approx=True)
        updates = jnp.dot(attn, v, preferred_element_type=jnp.float32)      # (S, D)

        # GRUCell(updates, slots_prev), PyTorch gate order (r, z, n).
        # One fused K=2D matmul gives gi+gh; recover gh_n with one small matmul.
        gcat = jnp.concatenate([updates, slots_prev], axis=-1)              # (S, 2D)
        gsum = jnp.dot(gcat, w_gru, preferred_element_type=jnp.float32) + b_gru
        gh_n = (jnp.dot(slots_prev, w_gru_hn, preferred_element_type=jnp.float32)
                + b_gru_hn)
        r = jax.nn.sigmoid(gsum[:, :D])
        z = jax.nn.sigmoid(gsum[:, D:2 * D])
        n = jnp.tanh(gsum[:, 2 * D:] + (r - 1.0) * gh_n)    # = gi_n + r*gh_n
        slots = (1.0 - z) * n + z * slots_prev

        # residual MLP: slots + fc2(relu(fc1(norm_pre_ff(slots))))
        pf = layer_norm(slots, npf_g, npf_b)
        hh = jnp.maximum(
            jnp.dot(pf, w_sfc1, preferred_element_type=jnp.float32) + b_sfc1, 0.0)
        slots = slots + (jnp.dot(hh, w_sfc2, preferred_element_type=jnp.float32)
                         + b_sfc2)
        return slots, attn_ori

    slots = init_ref[...]                                   # (S, D)

    for f in range(n_frames):                               # static unroll
        # ---- token pipeline: ReLU -> [BN folded into conv] -> conv -> ReLU
        #      -> SoftPositionEmbed -> LN -> FC1 -> ReLU -> FC2
        x = x_ref[0, f]                                     # (HW, C_IN)
        h = jnp.maximum(x, 0.0)
        h = jnp.dot(h, w_conv, preferred_element_type=jnp.float32) + b_conv
        h = jnp.maximum(h, 0.0)
        h = h + pe                                          # SoftPositionEmbed
        h = layer_norm(h, ln_g, ln_b)
        h = jnp.maximum(
            jnp.dot(h, w_fc1, preferred_element_type=jnp.float32) + b_fc1, 0.0)
        tokens = jnp.dot(h, w_fc2, preferred_element_type=jnp.float32) + b_fc2

        # ---- shared k/v projection for this frame
        xn = layer_norm(tokens, nin_g, nin_b)               # norm_input
        kv = jnp.dot(xn, w_kv, preferred_element_type=jnp.float32) + b_kv
        k = kv[:, :D]                                       # (HW, D)
        v = kv[:, D:]                                       # (HW, D)

        if f == 0:
            # warm-up get_attention() before the frame loop (updates slots,
            # outputs discarded) -- reuses frame-0 tokens/k/v, matches PyTorch.
            slots, _ = slot_update(slots, k, v)
        slots, attn_ori = slot_update(slots, k, v)

        # lane-dense 128-wide slab: [slots | attn_ori]
        out_ref[0, f] = jnp.concatenate([slots, attn_ori], axis=-1)


def slot_mo_call(x_seq, p):
    Bb, Tt = x_seq.shape[0], x_seq.shape[1]

    def full(shape):
        return pl.BlockSpec(shape, lambda b, _s=shape: (0,) * len(_s))

    in_specs = [
        pl.BlockSpec((1, Tt, HW, C_IN), lambda b: (b, 0, 0, 0)),  # all frames, one batch
        full((S, D)),                                # slots_init
        full((NW, D, D)),                            # stacked (D,D) weights
        full((D, 2 * D)),                            # fused to_k|to_v
        full((2 * D, 3 * D)),                        # fused GRU [W_ih; W_hh]
        full((HW, D)),                               # precomputed pos-embed
        full((NV, D)),                               # stacked biases / LN params
        full((1, 2 * D)),                            # fused k|v bias
        full((1, 3 * D)),                            # fused GRU bias (b_ih + b_hh)
    ]
    out_specs = pl.BlockSpec((1, Tt, S, OUT_LANES), lambda b: (b, 0, 0, 0))

    return pl.pallas_call(
        slot_mo_kernel,
        out_shape=jax.ShapeDtypeStruct((Bb, Tt, S, OUT_LANES), jnp.float32),
        grid_spec=pltpu.PrefetchScalarGridSpec(
            num_scalar_prefetch=0,
            grid=(Bb,),
            in_specs=in_specs,
            out_specs=out_specs),
        compiler_params=pltpu.CompilerParams(
            dimension_semantics=("parallel",)),
    )(x_seq, p["slots_init"], p["wstk"], p["wkv"], p["gru_w"],
      p["pe_emb"], p["vecs"], p["bkv"], p["gru_b"])


# --------------------------- parameter init ---------------------------------
def init_params(key):
    ks = jax.random.split(key, 16)

    def lin(k, fan_in, fan_out):
        kw, kb = jax.random.split(k)
        lim = 1.0 / jnp.sqrt(fan_in)
        w = jax.random.uniform(kw, (fan_in, fan_out), minval=-lim, maxval=lim)
        b = jax.random.uniform(kb, (fan_out,), minval=-lim, maxval=lim)
        return w.astype(jnp.float32), b.astype(jnp.float32)

    # conv3d: ReLU -> BatchNorm3d(in_c) [eval stats] -> 1x1x1 conv -> ReLU.
    # Fold the BN affine exactly into the conv.
    bn_gamma = jnp.ones((C_IN,), jnp.float32)
    bn_beta = jnp.zeros((C_IN,), jnp.float32)
    bn_mean = jnp.zeros((C_IN,), jnp.float32)
    bn_var = jnp.ones((C_IN,), jnp.float32)
    bn_s = bn_gamma / jnp.sqrt(bn_var + EPS_BN)
    bn_off = bn_beta - bn_mean * bn_s
    conv_w, conv_b = lin(ks[0], C_IN, D)
    conv_w_f = (bn_s[:, None] * conv_w).astype(jnp.float32)
    conv_b_f = (bn_off @ conv_w + conv_b).astype(jnp.float32)

    # SoftPositionEmbed: Linear(4 -> D) on the fixed grid (constant -> precompute)
    pe_w, pe_b = lin(ks[1], 4, D)
    grid = build_grid([H, W]).reshape(HW, 4).astype(jnp.float32)
    pe_emb = (grid @ pe_w + pe_b).astype(jnp.float32)

    # outer LN / FC1 / FC2
    ln_g = jnp.ones((D,), jnp.float32); ln_b = jnp.zeros((D,), jnp.float32)
    fc1_w, fc1_b = lin(ks[2], D, D)
    fc2_w, fc2_b = lin(ks[3], D, D)

    # SlotAttention
    nin_g = jnp.ones((D,), jnp.float32); nin_b = jnp.zeros((D,), jnp.float32)
    nsl_g = jnp.ones((D,), jnp.float32); nsl_b = jnp.zeros((D,), jnp.float32)
    npf_g = jnp.ones((D,), jnp.float32); npf_b = jnp.zeros((D,), jnp.float32)
    wq, bq = lin(ks[4], D, D)
    wk, bk = lin(ks[5], D, D)
    wv, bv = lin(ks[6], D, D)
    sfc1_w, sfc1_b = lin(ks[7], D, D)
    sfc2_w, sfc2_b = lin(ks[8], D, D)

    # GRUCell weights, PyTorch gate order (r, z, n), pre-transposed:
    # W_ih^T, W_hh^T : (D, 3D);  b_ih, b_hh : (3D,)
    lim = 1.0 / jnp.sqrt(D)
    w_ih_t = jax.random.uniform(ks[9], (D, 3 * D), minval=-lim, maxval=lim).astype(jnp.float32)
    w_hh_t = jax.random.uniform(ks[10], (D, 3 * D), minval=-lim, maxval=lim).astype(jnp.float32)
    b_ih = jax.random.uniform(ks[14], (3 * D,), minval=-lim, maxval=lim).astype(jnp.float32)
    b_hh = jax.random.uniform(ks[15], (3 * D,), minval=-lim, maxval=lim).astype(jnp.float32)
    gru_wcat = jnp.concatenate([w_ih_t, w_hh_t], axis=0)          # (2D, 3D)
    gru_bcat = (b_ih + b_hh)[None, :]                             # (1, 3D)
    gru_w_hn = w_hh_t[:, 2 * D:]                                  # (D, D)  n-gate of W_hh
    gru_b_hn = b_hh[2 * D:]                                       # (D,)

    # slots buffer: torch.normal(mu.expand(1,S,D), |sigma|.expand(1,S,D))
    mu = jax.random.normal(ks[11], (1, 1, D))
    sigma = jnp.abs(jax.random.normal(ks[12], (1, 1, D)))
    slots_init = (mu + sigma * jax.random.normal(ks[13], (1, S, D)))[0].astype(jnp.float32)

    return {
        "slots_init": slots_init,
        "wstk": jnp.stack([conv_w_f, fc1_w, fc2_w, wq, sfc1_w, sfc2_w,
                           gru_w_hn]).astype(jnp.float32),
        "wkv": jnp.concatenate([wk, wv], axis=1).astype(jnp.float32),
        "gru_w": gru_wcat,
        "pe_emb": pe_emb,
        "vecs": jnp.stack([conv_b_f, ln_g, ln_b, fc1_b, fc2_b,
                           nin_g, nin_b, nsl_g, nsl_b, bq,
                           npf_g, npf_b, sfc1_b, sfc2_b, gru_b_hn]).astype(jnp.float32),
        "bkv": jnp.concatenate([bk, bv])[None, :].astype(jnp.float32),
        "gru_b": gru_bcat,
    }


# ------------------------------- forward ------------------------------------
@jax.jit
def slot_mo_forward(x_feat, p):
    # x_feat: post-backbone features, NCTHW = (B, C_IN, T, H, W)
    Bb, C, Tt, Hh, Ww = x_feat.shape
    x_seq = jnp.transpose(x_feat, (0, 2, 3, 4, 1)).reshape(Bb, Tt, Hh * Ww, C)
    out = slot_mo_call(x_seq, p)                             # (B, T, S, D+HW)
    slots_all = out[..., :D]                                 # (B, T, S, D)
    attn_all = out[..., D:]                                  # (B, T, S, HW)
    # nn.Dropout(p=0.5) is identity at inference.
    slots_out = slots_all[:, -1, :NUM_ACTOR, :]              # allocated_slot == True
    attn_masks = attn_all.reshape(Bb, Tt, S, Hh, Ww)
    # TODO(synk): Allocated_Head / Head and the conv3d_ego ego branch are not
    # defined in the reference source; return pre-head slots and attention maps.
    return slots_out, attn_masks


if __name__ == "__main__":
    key = jax.random.PRNGKey(0)
    kx, kp = jax.random.split(key)
    params = init_params(kp)
    # TODO(synk): pretrained i3d_r50 / x3d / inception backbone (torch.hub) has no
    # in-script equivalent; the kernel consumes synthetic post-backbone features.
    x_feat = jax.random.normal(kx, (B, C_IN, T, H, W), dtype=jnp.float32)
    slots_out, attn_masks = slot_mo_forward(x_feat, params)
    jax.block_until_ready((slots_out, attn_masks))
    assert slots_out.shape == (B, NUM_ACTOR, D)
    assert attn_masks.shape == (B, T, S, H, W)
    print("KERNEL_OK")
</pallas_src>

<mosaic_0001>
module attributes {stable_mosaic.version = 11 : i64} {
  func.func @slot_mo_kernel(%arg0: i32, %arg1: memref<1x4x64x64xf32, #tpu.memory_space<vmem>>, %arg2: memref<21x64xf32, #tpu.memory_space<vmem>>, %arg3: memref<7x64x64xf32, #tpu.memory_space<vmem>>, %arg4: memref<64x128xf32, #tpu.memory_space<vmem>>, %arg5: memref<128x192xf32, #tpu.memory_space<vmem>>, %arg6: memref<64x64xf32, #tpu.memory_space<vmem>>, %arg7: memref<15x64xf32, #tpu.memory_space<vmem>>, %arg8: memref<1x128xf32, #tpu.memory_space<vmem>>, %arg9: memref<1x192xf32, #tpu.memory_space<vmem>>, %arg10: memref<1x4x21x128xf32, #tpu.memory_space<vmem>>) attributes {dimension_semantics = [#tpu.dimension_semantics<parallel>], iteration_bounds = array<i64: 2>, scalar_prefetch = 0 : i64, scratch_operands = 0 : i64, tpu.core_type = #tpu.core_type<tc>, window_params = [{transform_indices = @transform_0, window_bounds = array<i64: 1, 4, 64, 64>}, {pipeline_mode = #tpu.pipeline_mode<synchronous>, transform_indices = @transform_1, window_bounds = array<i64: 21, 64>}, {pipeline_mode = #tpu.pipeline_mode<synchronous>, transform_indices = @transform_2, window_bounds = array<i64: 7, 64, 64>}, {pipeline_mode = #tpu.pipeline_mode<synchronous>, transform_indices = @transform_3, window_bounds = array<i64: 64, 128>}, {pipeline_mode = #tpu.pipeline_mode<synchronous>, transform_indices = @transform_4, window_bounds = array<i64: 128, 192>}, {pipeline_mode = #tpu.pipeline_mode<synchronous>, transform_indices = @transform_5, window_bounds = array<i64: 64, 64>}, {pipeline_mode = #tpu.pipeline_mode<synchronous>, transform_indices = @transform_6, window_bounds = array<i64: 15, 64>}, {pipeline_mode = #tpu.pipeline_mode<synchronous>, transform_indices = @transform_7, window_bounds = array<i64: 1, 128>}, {pipeline_mode = #tpu.pipeline_mode<synchronous>, transform_indices = @transform_8, window_bounds = array<i64: 1, 192>}, {transform_indices = @transform_9, window_bounds = array<i64: 1, 4, 21, 128>}]} {
    %c0 = arith.constant 0 : index
    %c0_0 = arith.constant 0 : index
    %c0_1 = arith.constant 0 : index
    %0 = vector.load %arg3[%c0, %c0_0, %c0_1] : memref<7x64x64xf32, #tpu.memory_space<vmem>>, vector<1x64x64xf32>
    %1 = vector.shape_cast %0 : vector<1x64x64xf32> to vector<64x64xf32>
    %c1 = arith.constant 1 : index
    %c0_2 = arith.constant 0 : index
    %c0_3 = arith.constant 0 : index
    %2 = vector.load %arg3[%c1, %c0_2, %c0_3] : memref<7x64x64xf32, #tpu.memory_space<vmem>>, vector<1x64x64xf32>
    %3 = vector.shape_cast %2 : vector<1x64x64xf32> to vector<64x64xf32>
    %c2 = arith.constant 2 : index
    %c0_4 = arith.constant 0 : index
    %c0_5 = arith.constant 0 : index
    %4 = vector.load %arg3[%c2, %c0_4, %c0_5] : memref<7x64x64xf32, #tpu.memory_space<vmem>>, vector<1x64x64xf32>
    %5 = vector.shape_cast %4 : vector<1x64x64xf32> to vector<64x64xf32>
    %c3 = arith.constant 3 : index
    %c0_6 = arith.constant 0 : index
    %c0_7 = arith.constant 0 : index
    %6 = vector.load %arg3[%c3, %c0_6, %c0_7] : memref<7x64x64xf32, #tpu.memory_space<vmem>>, vector<1x64x64xf32>
    %7 = vector.shape_cast %6 : vector<1x64x64xf32> to vector<64x64xf32>
    %c4 = arith.constant 4 : index
    %c0_8 = arith.constant 0 : index
    %c0_9 = arith.constant 0 : index
    %8 = vector.load %arg3[%c4, %c0_8, %c0_9] : memref<7x64x64xf32, #tpu.memory_space<vmem>>, vector<1x64x64xf32>
    %9 = vector.shape_cast %8 : vector<1x64x64xf32> to vector<64x64xf32>
    %c5 = arith.constant 5 : index
    %c0_10 = arith.constant 0 : index
    %c0_11 = arith.constant 0 : index
    %10 = vector.load %arg3[%c5, %c0_10, %c0_11] : memref<7x64x64xf32, #tpu.memory_space<vmem>>, vector<1x64x64xf32>
    %11 = vector.shape_cast %10 : vector<1x64x64xf32> to vector<64x64xf32>
    %c6 = arith.constant 6 : index
    %c0_12 = arith.constant 0 : index
    %c0_13 = arith.constant 0 : index
    %12 = vector.load %arg3[%c6, %c0_12, %c0_13] : memref<7x64x64xf32, #tpu.memory_space<vmem>>, vector<1x64x64xf32>
    %13 = vector.shape_cast %12 : vector<1x64x64xf32> to vector<64x64xf32>
    %c0_14 = arith.constant 0 : index
    %c0_15 = arith.constant 0 : index
    %14 = vector.load %arg4[%c0_14, %c0_15] : memref<64x128xf32, #tpu.memory_space<vmem>>, vector<64x128xf32>
    %c0_16 = arith.constant 0 : index
    %c0_17 = arith.constant 0 : index
    %15 = vector.load %arg5[%c0_16, %c0_17] : memref<128x192xf32, #tpu.memory_space<vmem>>, vector<128x192xf32>
    %c0_18 = arith.constant 0 : index
    %c0_19 = arith.constant 0 : index
    %16 = vector.load %arg6[%c0_18, %c0_19] : memref<64x64xf32, #tpu.memory_space<vmem>>, vector<64x64xf32>
    %c0_20 = arith.constant 0 : index
    %c0_21 = arith.constant 0 : index
    %17 = vector.load %arg8[%c0_20, %c0_21] : memref<1x128xf32, #tpu.memory_space<vmem>>, vector<1x128xf32>
    %c0_22 = arith.constant 0 : index
    %c0_23 = arith.constant 0 : index
    %18 = vector.load %arg9[%c0_22, %c0_23] : memref<1x192xf32, #tpu.memory_space<vmem>>, vector<1x192xf32>
    %c0_24 = arith.constant 0 : index
    %c0_25 = arith.constant 0 : index
    %19 = vector.load %arg7[%c0_24, %c0_25] : memref<15x64xf32, #tpu.memory_space<vmem>>, vector<1x64xf32>
    %c1_26 = arith.constant 1 : index
    %c0_27 = arith.constant 0 : index
    %20 = vector.load %arg7[%c1_26, %c0_27] : memref<15x64xf32, #tpu.memory_space<vmem>>, vector<1x64xf32>
    %c2_28 = arith.constant 2 : index
    %c0_29 = arith.constant 0 : index
    %21 = vector.load %arg7[%c2_28, %c0_29] : memref<15x64xf32, #tpu.memory_space<vmem>>, vector<1x64xf32>
    %c3_30 = arith.constant 3 : index
    %c0_31 = arith.constant 0 : index
    %22 = vector.load %arg7[%c3_30, %c0_31] : memref<15x64xf32, #tpu.memory_space<vmem>>, vector<1x64xf32>
    %c4_32 = arith.constant 4 : index
    %c0_33 = arith.constant 0 : index
    %23 = vector.load %arg7[%c4_32, %c0_33] : memref<15x64xf32, #tpu.memory_space<vmem>>, vector<1x64xf32>
    %c5_34 = arith.constant 5 : index
    %c0_35 = arith.constant 0 : index
    %24 = vector.load %arg7[%c5_34, %c0_35] : memref<15x64xf32, #tpu.memory_space<vmem>>, vector<1x64xf32>
    %c6_36 = arith.constant 6 : index
    %c0_37 = arith.constant 0 : index
    %25 = vector.load %arg7[%c6_36, %c0_37] : memref<15x64xf32, #tpu.memory_space<vmem>>, vector<1x64xf32>
    %c7 = arith.constant 7 : index
    %c0_38 = arith.constant 0 : index
    %26 = vector.load %arg7[%c7, %c0_38] : memref<15x64xf32, #tpu.memory_space<vmem>>, vector<1x64xf32>
    %c8 = arith.constant 8 : index
    %c0_39 = arith.constant 0 : index
    %27 = vector.load %arg7[%c8, %c0_39] : memref<15x64xf32, #tpu.memory_space<vmem>>, vector<1x64xf32>
    %c10 = arith.constant 10 : index
    %c0_40 = arith.constant 0 : index
    %28 = vector.load %arg7[%c10, %c0_40] : memref<15x64xf32, #tpu.memory_space<vmem>>, vector<1x64xf32>
    %c11 = arith.constant 11 : index
    %c0_41 = arith.constant 0 : index
    %29 = vector.load %arg7[%c11, %c0_41] : memref<15x64xf32, #tpu.memory_space<vmem>>, vector<1x64xf32>
    %c9 = arith.constant 9 : index
    %c0_42 = arith.constant 0 : index
    %30 = vector.load %arg7[%c9, %c0_42] : memref<15x64xf32, #tpu.memory_space<vmem>>, vector<1x64xf32>
    %c12 = arith.constant 12 : index
    %c0_43 = arith.constant 0 : index
    %31 = vector.load %arg7[%c12, %c0_43] : memref<15x64xf32, #tpu.memory_space<vmem>>, vector<1x64xf32>
    %c13 = arith.constant 13 : index
    %c0_44 = arith.constant 0 : index
    %32 = vector.load %arg7[%c13, %c0_44] : memref<15x64xf32, #tpu.memory_space<vmem>>, vector<1x64xf32>
    %c14 = arith.constant 14 : index
    %c0_45 = arith.constant 0 : index
    %33 = vector.load %arg7[%c14, %c0_45] : memref<15x64xf32, #tpu.memory_space<vmem>>, vector<1x64xf32>
    %c0_46 = arith.constant 0 : index
    %c0_47 = arith.constant 0 : index
    %34 = vector.load %arg2[%c0_46, %c0_47] : memref<21x64xf32, #tpu.memory_space<vmem>>, vector<21x64xf32>
    %c0_48 = arith.constant 0 : index
    %c0_49 = arith.constant 0 : index
    %c0_50 = arith.constant 0 : index
    %c0_51 = arith.constant 0 : index
    %35 = vector.load %arg1[%c0_48, %c0_49, %c0_50, %c0_51] : memref<1x4x64x64xf32, #tpu.memory_space<vmem>>, vector<1x1x64x64xf32>
    %36 = vector.shape_cast %35 : vector<1x1x64x64xf32> to vector<64x64xf32>
    %cst = arith.constant 0.000000e+00 : f32
    %37 = vector.broadcast %cst : f32 to vector<64x64xf32>
    %38 = arith.maximumf %36, %37 : vector<64x64xf32>
    %cst_52 = arith.constant dense<0.000000e+00> : vector<64x64xf32>
    %39 = tpu.matmul %38, %1, %cst_52 {dimension_numbers = #tpu.dot_dimension_numbers<[1], [0], [0], [1], [0, 0, 1, 1], [], []>} : vector<64x64xf32>, vector<64x64xf32>, vector<64x64xf32> -> vector<64x64xf32>
    %40 = vector.broadcast %19 : vector<1x64xf32> to vector<64x64xf32>
    %41 = arith.addf %39, %40 : vector<64x64xf32>
    %cst_53 = arith.constant 0.000000e+00 : f32
    %42 = vector.broadcast %cst_53 : f32 to vector<64x64xf32>
    %43 = arith.maximumf %41, %42 : vector<64x64xf32>
    %44 = arith.addf %43, %16 : vector<64x64xf32>
    %cst_54 = arith.constant dense<0.000000e+00> : vector<64xf32>
    %45 = vector.multi_reduction <add>, %44, %cst_54 [1] : vector<64x64xf32> to vector<64xf32>
    %46 = vector.shape_cast %45 : vector<64xf32> to vector<64x1xf32>
    %cst_55 = arith.constant 6.400000e+01 : f32
    %47 = vector.broadcast %cst_55 : f32 to vector<64x1xf32>
    %48 = arith.divf %46, %47 : vector<64x1xf32>
    %49 = arith.mulf %44, %44 : vector<64x64xf32>
    %cst_56 = arith.constant dense<0.000000e+00> : vector<64xf32>
    %50 = vector.multi_reduction <add>, %49, %cst_56 [1] : vector<64x64xf32> to vector<64xf32>
    %51 = vector.shape_cast %50 : vector<64xf32> to vector<64x1xf32>
    %cst_57 = arith.constant 6.400000e+01 : f32
    %52 = vector.broadcast %cst_57 : f32 to vector<64x1xf32>
    %53 = arith.divf %51, %52 : vector<64x1xf32>
    %54 = arith.mulf %48, %48 : vector<64x1xf32>
    %55 = arith.subf %53, %54 : vector<64x1xf32>
    %56 = vector.broadcast %48 : vector<64x1xf32> to vector<64x64xf32>
    %57 = arith.subf %44, %56 : vector<64x64xf32>
    %cst_58 = arith.constant 9.99999974E-6 : f32
    %58 = vector.broadcast %cst_58 : f32 to vector<64x1xf32>
    %59 = arith.addf %55, %58 : vector<64x1xf32>
    %60 = math.rsqrt %59 : vector<64x1xf32>
    %61 = vector.broadcast %60 : vector<64x1xf32> to vector<64x64xf32>
    %62 = arith.mulf %57, %61 : vector<64x64xf32>
    %63 = vector.broadcast %20 : vector<1x64xf32> to vector<64x64xf32>
    %64 = arith.mulf %62, %63 : vector<64x64xf32>
    %65 = vector.broadcast %21 : vector<1x64xf32> to vector<64x64xf32>
    %66 = arith.addf %64, %65 : vector<64x64xf32>
    %cst_59 = arith.constant dense<0.000000e+00> : vector<64x64xf32>
    %67 = tpu.matmul %66, %3, %cst_59 {dimension_numbers = #tpu.dot_dimension_numbers<[1], [0], [0], [1], [0, 0, 1, 1], [], []>} : vector<64x64xf32>, vector<64x64xf32>, vector<64x64xf32> -> vector<64x64xf32>
    %68 = vector.broadcast %22 : vector<1x64xf32> to vector<64x64xf32>
    %69 = arith.addf %67, %68 : vector<64x64xf32>
    %cst_60 = arith.constant 0.000000e+00 : f32
    %70 = vector.broadcast %cst_60 : f32 to vector<64x64xf32>
    %71 = arith.maximumf %69, %70 : vector<64x64xf32>
    %cst_61 = arith.constant dense<0.000000e+00> : vector<64x64xf32>
    %72 = tpu.matmul %71, %5, %cst_61 {dimension_numbers = #tpu.dot_dimension_numbers<[1], [0], [0], [1], [0, 0, 1, 1], [], []>} : vector<64x64xf32>, vector<64x64xf32>, vector<64x64xf32> -> vector<64x64xf32>
    %73 = vector.broadcast %23 : vector<1x64xf32> to vector<64x64xf32>
    %74 = arith.addf %72, %73 : vector<64x64xf32>
    %cst_62 = arith.constant dense<0.000000e+00> : vector<64xf32>
    %75 = vector.multi_reduction <add>, %74, %cst_62 [1] : vector<64x64xf32> to vector<64xf32>
    %76 = vector.shape_cast %75 : vector<64xf32> to vector<64x1xf32>
    %cst_63 = arith.constant 6.400000e+01 : f32
    %77 = vector.broadcast %cst_63 : f32 to vector<64x1xf32>
    %78 = arith.divf %76, %77 : vector<64x1xf32>
    %79 = arith.mulf %74, %74 : vector<64x64xf32>
    %cst_64 = arith.constant dense<0.000000e+00> : vector<64xf32>
    %80 = vector.multi_reduction <add>, %79, %cst_64 [1] : vector<64x64xf32> to vector<64xf32>
    %81 = vector.shape_cast %80 : vector<64xf32> to vector<64x1xf32>
    %cst_65 = arith.constant 6.400000e+01 : f32
    %82 = vector.broadcast %cst_65 : f32 to vector<64x1xf32>
    %83 = arith.divf %81, %82 : vector<64x1xf32>
    %84 = arith.mulf %78, %78 : vector<64x1xf32>
    %85 = arith.subf %83, %84 : vector<64x1xf32>
    %86 = vector.broadcast %78 : vector<64x1xf32> to vector<64x64xf32>
    %87 = arith.subf %74, %86 : vector<64x64xf32>
    %cst_66 = arith.constant 9.99999974E-6 : f32
    %88 = vector.broadcast %cst_66 : f32 to vector<64x1xf32>
    %89 = arith.addf %85, %88 : vector<64x1xf32>
    %90 = math.rsqrt %89 : vector<64x1xf32>
    %91 = vector.broadcast %90 : vector<64x1xf32> to vector<64x64xf32>
    %92 = arith.mulf %87, %91 : vector<64x64xf32>
    %93 = vector.broadcast %24 : vector<1x64xf32> to vector<64x64xf32>
    %94 = arith.mulf %92, %93 : vector<64x64xf32>
    %95 = vector.broadcast %25 : vector<1x64xf32> to vector<64x64xf32>
    %96 = arith.addf %94, %95 : vector<64x64xf32>
    %cst_67 = arith.constant dense<0.000000e+00> : vector<64x128xf32>
    %97 = tpu.matmul %96, %14, %cst_67 {dimension_numbers = #tpu.dot_dimension_numbers<[1], [0], [0], [1], [0, 0, 1, 1], [], []>} : vector<64x64xf32>, vector<64x128xf32>, vector<64x128xf32> -> vector<64x128xf32>
    %98 = vector.broadcast %17 : vector<1x128xf32> to vector<64x128xf32>
    %99 = arith.addf %97, %98 : vector<64x128xf32>
    %100 = vector.extract_strided_slice %99 {offsets = [0, 0], sizes = [64, 64], strides = [1, 1]} : vector<64x128xf32> to vector<64x64xf32>
    %101 = vector.extract_strided_slice %99 {offsets = [0, 64], sizes = [64, 64], strides = [1, 1]} : vector<64x128xf32> to vector<64x64xf32>
    %cst_68 = arith.constant dense<0.000000e+00> : vector<21xf32>
    %102 = vector.multi_reduction <add>, %34, %cst_68 [1] : vector<21x64xf32> to vector<21xf32>
    %103 = vector.shape_cast %102 : vector<21xf32> to vector<21x1xf32>
    %cst_69 = arith.constant 6.400000e+01 : f32
    %104 = vector.broadcast %cst_69 : f32 to vector<21x1xf32>
    %105 = arith.divf %103, %104 : vector<21x1xf32>
    %106 = arith.mulf %34, %34 : vector<21x64xf32>
    %cst_70 = arith.constant dense<0.000000e+00> : vector<21xf32>
    %107 = vector.multi_reduction <add>, %106, %cst_70 [1] : vector<21x64xf32> to vector<21xf32>
    %108 = vector.shape_cast %107 : vector<21xf32> to vector<21x1xf32>
    %cst_71 = arith.constant 6.400000e+01 : f32
    %109 = vector.broadcast %cst_71 : f32 to vector<21x1xf32>
    %110 = arith.divf %108, %109 : vector<21x1xf32>
    %111 = arith.mulf %105, %105 : vector<21x1xf32>
    %112 = arith.subf %110, %111 : vector<21x1xf32>
    %113 = vector.broadcast %105 : vector<21x1xf32> to vector<21x64xf32>
    %114 = arith.subf %34, %113 : vector<21x64xf32>
    %cst_72 = arith.constant 9.99999974E-6 : f32
    %115 = vector.broadcast %cst_72 : f32 to vector<21x1xf32>
    %116 = arith.addf %112, %115 : vector<21x1xf32>
    %117 = math.rsqrt %116 : vector<21x1xf32>
    %118 = vector.broadcast %117 : vector<21x1xf32> to vector<21x64xf32>
    %119 = arith.mulf %114, %118 : vector<21x64xf32>
    %120 = vector.broadcast %26 : vector<1x64xf32> to vector<21x64xf32>
    %121 = arith.mulf %119, %120 : vector<21x64xf32>
    %122 = vector.broadcast %27 : vector<1x64xf32> to vector<21x64xf32>
    %123 = arith.addf %121, %122 : vector<21x64xf32>
    %cst_73 = arith.constant dense<0.000000e+00> : vector<21x64xf32>
    %124 = tpu.matmul %123, %7, %cst_73 {dimension_numbers = #tpu.dot_dimension_numbers<[1], [0], [0], [1], [0, 0, 1, 1], [], []>} : vector<21x64xf32>, vector<64x64xf32>, vector<21x64xf32> -> vector<21x64xf32>
    %125 = vector.broadcast %30 : vector<1x64xf32> to vector<21x64xf32>
    %126 = arith.addf %124, %125 : vector<21x64xf32>
    %cst_74 = arith.constant dense<0.000000e+00> : vector<21x64xf32>
    %127 = tpu.matmul %126, %100, %cst_74 {dimension_numbers = #tpu.dot_dimension_numbers<[1], [1], [0], [0], [0, 0, 1, 0], [], []>} : vector<21x64xf32>, vector<64x64xf32>, vector<21x64xf32> -> vector<21x64xf32>
    %cst_75 = arith.constant 1.250000e-01 : f32
    %128 = vector.broadcast %cst_75 : f32 to vector<21x64xf32>
    %129 = arith.mulf %127, %128 : vector<21x64xf32>
    %cst_76 = arith.constant dense<0xFF800000> : vector<64xf32>
    %130 = vector.multi_reduction <maximumf>, %129, %cst_76 [0] : vector<21x64xf32> to vector<64xf32>
    %131 = vector.shape_cast %130 : vector<64xf32> to vector<1x64xf32>
    %132 = vector.broadcast %131 : vector<1x64xf32> to vector<21x64xf32>
    %133 = arith.subf %129, %132 : vector<21x64xf32>
    %134 = math.exp %133 : vector<21x64xf32>
    %cst_77 = arith.constant dense<0.000000e+00> : vector<64xf32>
    %135 = vector.multi_reduction <add>, %134, %cst_77 [0] : vector<21x64xf32> to vector<64xf32>
    %136 = vector.shape_cast %135 : vector<64xf32> to vector<1x64xf32>
    %137 = vector.broadcast %136 : vector<1x64xf32> to vector<21x64xf32>
    %138 = arith.divf %134, %137 : vector<21x64xf32>
    %cst_78 = arith.constant 9.99999993E-9 : f32
    %139 = vector.broadcast %cst_78 : f32 to vector<21x64xf32>
    %140 = arith.addf %138, %139 : vector<21x64xf32>
    %cst_79 = arith.constant dense<0.000000e+00> : vector<21xf32>
    %141 = vector.multi_reduction <add>, %140, %cst_79 [1] : vector<21x64xf32> to vector<21xf32>
    %142 = vector.shape_cast %141 : vector<21xf32> to vector<21x1xf32>
    %143 = tpu.reciprocal %142 {approx = true} : vector<21x1xf32> -> vector<21x1xf32>
    %144 = vector.broadcast %143 : vector<21x1xf32> to vector<21x64xf32>
    %145 = arith.mulf %140, %144 : vector<21x64xf32>
    %cst_80 = arith.constant dense<0.000000e+00> : vector<21x64xf32>
    %146 = tpu.matmul %145, %101, %cst_80 {dimension_numbers = #tpu.dot_dimension_numbers<[1], [0], [0], [1], [0, 0, 1, 1], [], []>} : vector<21x64xf32>, vector<64x64xf32>, vector<21x64xf32> -> vector<21x64xf32>
    %147 = tpu.concatenate %146, %34 in 1 : vector<21x64xf32>, vector<21x64xf32> -> vector<21x128xf32>
    %cst_81 = arith.constant dense<0.000000e+00> : vector<21x192xf32>
    %148 = tpu.matmul %147, %15, %cst_81 {dimension_numbers = #tpu.dot_dimension_numbers<[1], [0], [0], [1], [0, 0, 1, 1], [], []>} : vector<21x128xf32>, vector<128x192xf32>, vector<21x192xf32> -> vector<21x192xf32>
    %149 = vector.broadcast %18 : vector<1x192xf32> to vector<21x192xf32>
    %150 = arith.addf %148, %149 : vector<21x192xf32>
    %cst_82 = arith.constant dense<0.000000e+00> : vector<21x64xf32>
    %151 = tpu.matmul %34, %13, %cst_82 {dimension_numbers = #tpu.dot_dimension_numbers<[1], [0], [0], [1], [0, 0, 1, 1], [], []>} : vector<21x64xf32>, vector<64x64xf32>, vector<21x64xf32> -> vector<21x64xf32>
    %152 = vector.broadcast %33 : vector<1x64xf32> to vector<21x64xf32>
    %153 = arith.addf %151, %152 : vector<21x64xf32>
    %154 = vector.extract_strided_slice %150 {offsets = [0, 0], sizes = [21, 64], strides = [1, 1]} : vector<21x192xf32> to vector<21x64xf32>
    %155 = arith.negf %154 : vector<21x64xf32>
    %156 = math.exp %155 : vector<21x64xf32>
    %cst_83 = arith.constant 1.000000e+00 : f32
    %157 = vector.broadcast %cst_83 : f32 to vector<21x64xf32>
    %158 = arith.addf %157, %156 : vector<21x64xf32>
    %159 = arith.divf %157, %158 : vector<21x64xf32>
    %160 = vector.extract_strided_slice %150 {offsets = [0, 64], sizes = [21, 64], strides = [1, 1]} : vector<21x192xf32> to vector<21x64xf32>
    %161 = arith.negf %160 : vector<21x64xf32>
    %162 = math.exp %161 : vector<21x64xf32>
    %cst_84 = arith.constant 1.000000e+00 : f32
    %163 = vector.broadcast %cst_84 : f32 to vector<21x64xf32>
    %164 = arith.addf %163, %162 : vector<21x64xf32>
    %165 = arith.divf %163, %164 : vector<21x64xf32>
    %166 = vector.extract_strided_slice %150 {offsets = [0, 128], sizes = [21, 64], strides = [1, 1]} : vector<21x192xf32> to vector<21x64xf32>
    %cst_85 = arith.constant 1.000000e+00 : f32
    %167 = vector.broadcast %cst_85 : f32 to vector<21x64xf32>
    %168 = arith.subf %159, %167 : vector<21x64xf32>
    %169 = arith.mulf %168, %153 : vector<21x64xf32>
    %170 = arith.addf %166, %169 : vector<21x64xf32>
    %171 = math.tanh %170 : vector<21x64xf32>
    %cst_86 = arith.constant 1.000000e+00 : f32
    %172 = vector.broadcast %cst_86 : f32 to vector<21x64xf32>
    %173 = arith.subf %172, %165 : vector<21x64xf32>
    %174 = arith.mulf %173, %171 : vector<21x64xf32>
    %175 = arith.mulf %165, %34 : vector<21x64xf32>
    %176 = arith.addf %174, %175 : vector<21x64xf32>
    %cst_87 = arith.constant dense<0.000000e+00> : vector<21xf32>
    %177 = vector.multi_reduction <add>, %176, %cst_87 [1] : vector<21x64xf32> to vector<21xf32>
    %178 = vector.shape_cast %177 : vector<21xf32> to vector<21x1xf32>
    %cst_88 = arith.constant 6.400000e+01 : f32
    %179 = vector.broadcast %cst_88 : f32 to vector<21x1xf32>
    %180 = arith.divf %178, %179 : vector<21x1xf32>
    %181 = arith.mulf %176, %176 : vector<21x64xf32>
    %cst_89 = arith.constant dense<0.000000e+00> : vector<21xf32>
    %182 = vector.multi_reduction <add>, %181, %cst_89 [1] : vector<21x64xf32> to vector<21xf32>
    %183 = vector.shape_cast %182 : vector<21xf32> to vector<21x1xf32>
    %cst_90 = arith.constant 6.400000e+01 : f32
    %184 = vector.broadcast %cst_90 : f32 to vector<21x1xf32>
    %185 = arith.divf %183, %184 : vector<21x1xf32>
    %186 = arith.mulf %180, %180 : vector<21x1xf32>
    %187 = arith.subf %185, %186 : vector<21x1xf32>
    %188 = vector.broadcast %180 : vector<21x1xf32> to vector<21x64xf32>
    %189 = arith.subf %176, %188 : vector<21x64xf32>
    %cst_91 = arith.constant 9.99999974E-6 : f32
    %190 = vector.broadcast %cst_91 : f32 to vector<21x1xf32>
    %191 = arith.addf %187, %190 : vector<21x1xf32>
    %192 = math.rsqrt %191 : vector<21x1xf32>
    %193 = vector.broadcast %192 : vector<21x1xf32> to vector<21x64xf32>
    %194 = arith.mulf %189, %193 : vector<21x64xf32>
    %195 = vector.broadcast %28 : vector<1x64xf32> to vector<21x64xf32>
    %196 = arith.mulf %194, %195 : vector<21x64xf32>
    %197 = vector.broadcast %29 : vector<1x64xf32> to vector<21x64xf32>
    %198 = arith.addf %196, %197 : vector<21x64xf32>
    %cst_92 = arith.constant dense<0.000000e+00> : vector<21x64xf32>
    %199 = tpu.matmul %198, %9, %cst_92 {dimension_numbers = #tpu.dot_dimension_numbers<[1], [0], [0], [1], [0, 0, 1, 1], [], []>} : vector<21x64xf32>, vector<64x64xf32>, vector<21x64xf32> -> vector<21x64xf32>
    %200 = vector.broadcast %31 : vector<1x64xf32> to vector<21x64xf32>
    %201 = arith.addf %199, %200 : vector<21x64xf32>
    %cst_93 = arith.constant 0.000000e+00 : f32
    %202 = vector.broadcast %cst_93 : f32 to vector<21x64xf32>
    %203 = arith.maximumf %201, %202 : vector<21x64xf32>
    %cst_94 = arith.constant dense<0.000000e+00> : vector<21x64xf32>
    %204 = tpu.matmul %203, %11, %cst_94 {dimension_numbers = #tpu.dot_dimension_numbers<[1], [0], [0], [1], [0, 0, 1, 1], [], []>} : vector<21x64xf32>, vector<64x64xf32>, vector<21x64xf32> -> vector<21x64xf32>
    %205 = vector.broadcast %32 : vector<1x64xf32> to vector<21x64xf32>
    %206 = arith.addf %204, %205 : vector<21x64xf32>
    %207 = arith.addf %176, %206 : vector<21x64xf32>
    %cst_95 = arith.constant dense<0.000000e+00> : vector<21xf32>
    %208 = vector.multi_reduction <add>, %207, %cst_95 [1] : vector<21x64xf32> to vector<21xf32>
    %209 = vector.shape_cast %208 : vector<21xf32> to vector<21x1xf32>
    %cst_96 = arith.constant 6.400000e+01 : f32
    %210 = vector.broadcast %cst_96 : f32 to vector<21x1xf32>
    %211 = arith.divf %209, %210 : vector<21x1xf32>
    %212 = arith.mulf %207, %207 : vector<21x64xf32>
    %cst_97 = arith.constant dense<0.000000e+00> : vector<21xf32>
    %213 = vector.multi_reduction <add>, %212, %cst_97 [1] : vector<21x64xf32> to vector<21xf32>
    %214 = vector.shape_cast %213 : vector<21xf32> to vector<21x1xf32>
    %cst_98 = arith.constant 6.400000e+01 : f32
    %215 = vector.broadcast %cst_98 : f32 to vector<21x1xf32>
    %216 = arith.divf %214, %215 : vector<21x1xf32>
    %217 = arith.mulf %211, %211 : vector<21x1xf32>
    %218 = arith.subf %216, %217 : vector<21x1xf32>
    %219 = vector.broadcast %211 : vector<21x1xf32> to vector<21x64xf32>
    %220 = arith.subf %207, %219 : vector<21x64xf32>
    %cst_99 = arith.constant 9.99999974E-6 : f32
    %221 = vector.broadcast %cst_99 : f32 to vector<21x1xf32>
    %222 = arith.addf %218, %221 : vector<21x1xf32>
    %223 = math.rsqrt %222 : vector<21x1xf32>
    %224 = vector.broadcast %223 : vector<21x1xf32> to vector<21x64xf32>
    %225 = arith.mulf %220, %224 : vector<21x64xf32>
    %226 = vector.broadcast %26 : vector<1x64xf32> to vector<21x64xf32>
    %227 = arith.mulf %225, %226 : vector<21x64xf32>
    %228 = vector.broadcast %27 : vector<1x64xf32> to vector<21x64xf32>
    %229 = arith.addf %227, %228 : vector<21x64xf32>
    %cst_100 = arith.constant dense<0.000000e+00> : vector<21x64xf32>
    %230 = tpu.matmul %229, %7, %cst_100 {dimension_numbers = #tpu.dot_dimension_numbers<[1], [0], [0], [1], [0, 0, 1, 1], [], []>} : vector<21x64xf32>, vector<64x64xf32>, vector<21x64xf32> -> vector<21x64xf32>
    %231 = vector.broadcast %30 : vector<1x64xf32> to vector<21x64xf32>
    %232 = arith.addf %230, %231 : vector<21x64xf32>
    %cst_101 = arith.constant dense<0.000000e+00> : vector<21x64xf32>
    %233 = tpu.matmul %232, %100, %cst_101 {dimension_numbers = #tpu.dot_dimension_numbers<[1], [1], [0], [0], [0, 0, 1, 0], [], []>} : vector<21x64xf32>, vector<64x64xf32>, vector<21x64xf32> -> vector<21x64xf32>
    %cst_102 = arith.constant 1.250000e-01 : f32
    %234 = vector.broadcast %cst_102 : f32 to vector<21x64xf32>
    %235 = arith.mulf %233, %234 : vector<21x64xf32>
    %cst_103 = arith.constant dense<0xFF800000> : vector<64xf32>
    %236 = vector.multi_reduction <maximumf>, %235, %cst_103 [0] : vector<21x64xf32> to vector<64xf32>
    %237 = vector.shape_cast %236 : vector<64xf32> to vector<1x64xf32>
    %238 = vector.broadcast %237 : vector<1x64xf32> to vector<21x64xf32>
    %239 = arith.subf %235, %238 : vector<21x64xf32>
    %240 = math.exp %239 : vector<21x64xf32>
    %cst_104 = arith.constant dense<0.000000e+00> : vector<64xf32>
    %241 = vector.multi_reduction <add>, %240, %cst_104 [0] : vector<21x64xf32> to vector<64xf32>
    %242 = vector.shape_cast %241 : vector<64xf32> to vector<1x64xf32>
    %243 = vector.broadcast %242 : vector<1x64xf32> to vector<21x64xf32>
    %244 = arith.divf %240, %243 : vector<21x64xf32>
    %cst_105 = arith.constant 9.99999993E-9 : f32
    %245 = vector.broadcast %cst_105 : f32 to vector<21x64xf32>
    %246 = arith.addf %244, %245 : vector<21x64xf32>
    %cst_106 = arith.constant dense<0.000000e+00> : vector<21xf32>
    %247 = vector.multi_reduction <add>, %246, %cst_106 [1] : vector<21x64xf32> to vector<21xf32>
    %248 = vector.shape_cast %247 : vector<21xf32> to vector<21x1xf32>
    %249 = tpu.reciprocal %248 {approx = true} : vector<21x1xf32> -> vector<21x1xf32>
    %250 = vector.broadcast %249 : vector<21x1xf32> to vector<21x64xf32>
    %251 = arith.mulf %246, %250 : vector<21x64xf32>
    %cst_107 = arith.constant dense<0.000000e+00> : vector<21x64xf32>
    %252 = tpu.matmul %251, %101, %cst_107 {dimension_numbers = #tpu.dot_dimension_numbers<[1], [0], [0], [1], [0, 0, 1, 1], [], []>} : vector<21x64xf32>, vector<64x64xf32>, vector<21x64xf32> -> vector<21x64xf32>
    %253 = tpu.concatenate %252, %207 in 1 : vector<21x64xf32>, vector<21x64xf32> -> vector<21x128xf32>
    %cst_108 = arith.constant dense<0.000000e+00> : vector<21x192xf32>
    %254 = tpu.matmul %253, %15, %cst_108 {dimension_numbers = #tpu.dot_dimension_numbers<[1], [0], [0], [1], [0, 0, 1, 1], [], []>} : vector<21x128xf32>, vector<128x192xf32>, vector<21x192xf32> -> vector<21x192xf32>
    %255 = vector.broadcast %18 : vector<1x192xf32> to vector<21x192xf32>
    %256 = arith.addf %254, %255 : vector<21x192xf32>
    %cst_109 = arith.constant dense<0.000000e+00> : vector<21x64xf32>
    %257 = tpu.matmul %207, %13, %cst_109 {dimension_numbers = #tpu.dot_dimension_numbers<[1], [0], [0], [1], [0, 0, 1, 1], [], []>} : vector<21x64xf32>, vector<64x64xf32>, vector<21x64xf32> -> vector<21x64xf32>
    %258 = vector.broadcast %33 : vector<1x64xf32> to vector<21x64xf32>
    %259 = arith.addf %257, %258 : vector<21x64xf32>
    %260 = vector.extract_strided_slice %256 {offsets = [0, 0], sizes = [21, 64], strides = [1, 1]} : vector<21x192xf32> to vector<21x64xf32>
    %261 = arith.negf %260 : vector<21x64xf32>
    %262 = math.exp %261 : vector<21x64xf32>
    %cst_110 = arith.constant 1.000000e+00 : f32
    %263 = vector.broadcast %cst_110 : f32 to vector<21x64xf32>
    %264 = arith.addf %263, %262 : vector<21x64xf32>
    %265 = arith.divf %263, %264 : vector<21x64xf32>
    %266 = vector.extract_strided_slice %256 {offsets = [0, 64], sizes = [21, 64], strides = [1, 1]} : vector<21x192xf32> to vector<21x64xf32>
    %267 = arith.negf %266 : vector<21x64xf32>
    %268 = math.exp %267 : vector<21x64xf32>
    %cst_111 = arith.constant 1.000000e+00 : f32
    %269 = vector.broadcast %cst_111 : f32 to vector<21x64xf32>
    %270 = arith.addf %269, %268 : vector<21x64xf32>
    %271 = arith.divf %269, %270 : vector<21x64xf32>
    %272 = vector.extract_strided_slice %256 {offsets = [0, 128], sizes = [21, 64], strides = [1, 1]} : vector<21x192xf32> to vector<21x64xf32>
    %cst_112 = arith.constant 1.000000e+00 : f32
    %273 = vector.broadcast %cst_112 : f32 to vector<21x64xf32>
    %274 = arith.subf %265, %273 : vector<21x64xf32>
    %275 = arith.mulf %274, %259 : vector<21x64xf32>
    %276 = arith.addf %272, %275 : vector<21x64xf32>
    %277 = math.tanh %276 : vector<21x64xf32>
    %cst_113 = arith.constant 1.000000e+00 : f32
    %278 = vector.broadcast %cst_113 : f32 to vector<21x64xf32>
    %279 = arith.subf %278, %271 : vector<21x64xf32>
    %280 = arith.mulf %279, %277 : vector<21x64xf32>
    %281 = arith.mulf %271, %207 : vector<21x64xf32>
    %282 = arith.addf %280, %281 : vector<21x64xf32>
    %cst_114 = arith.constant dense<0.000000e+00> : vector<21xf32>
    %283 = vector.multi_reduction <add>, %282, %cst_114 [1] : vector<21x64xf32> to vector<21xf32>
    %284 = vector.shape_cast %283 : vector<21xf32> to vector<21x1xf32>
    %cst_115 = arith.constant 6.400000e+01 : f32
    %285 = vector.broadcast %cst_115 : f32 to vector<21x1xf32>
    %286 = arith.divf %284, %285 : vector<21x1xf32>
    %287 = arith.mulf %282, %282 : vector<21x64xf32>
    %cst_116 = arith.constant dense<0.000000e+00> : vector<21xf32>
    %288 = vector.multi_reduction <add>, %287, %cst_116 [1] : vector<21x64xf32> to vector<21xf32>
    %289 = vector.shape_cast %288 : vector<21xf32> to vector<21x1xf32>
    %cst_117 = arith.constant 6.400000e+01 : f32
    %290 = vector.broadcast %cst_117 : f32 to vector<21x1xf32>
    %291 = arith.divf %289, %290 : vector<21x1xf32>
    %292 = arith.mulf %286, %286 : vector<21x1xf32>
    %293 = arith.subf %291, %292 : vector<21x1xf32>
    %294 = vector.broadcast %286 : vector<21x1xf32> to vector<21x64xf32>
    %295 = arith.subf %282, %294 : vector<21x64xf32>
    %cst_118 = arith.constant 9.99999974E-6 : f32
    %296 = vector.broadcast %cst_118 : f32 to vector<21x1xf32>
    %297 = arith.addf %293, %296 : vector<21x1xf32>
    %298 = math.rsqrt %297 : vector<21x1xf32>
    %299 = vector.broadcast %298 : vector<21x1xf32> to vector<21x64xf32>
    %300 = arith.mulf %295, %299 : vector<21x64xf32>
    %301 = vector.broadcast %28 : vector<1x64xf32> to vector<21x64xf32>
    %302 = arith.mulf %300, %301 : vector<21x64xf32>
    %303 = vector.broadcast %29 : vector<1x64xf32> to vector<21x64xf32>
    %304 = arith.addf %302, %303 : vector<21x64xf32>
    %cst_119 = arith.constant dense<0.000000e+00> : vector<21x64xf32>
    %305 = tpu.matmul %304, %9, %cst_119 {dimension_numbers = #tpu.dot_dimension_numbers<[1], [0], [0], [1], [0, 0, 1, 1], [], []>} : vector<21x64xf32>, vector<64x64xf32>, vector<21x64xf32> -> vector<21x64xf32>
    %306 = vector.broadcast %31 : vector<1x64xf32> to vector<21x64xf32>
    %307 = arith.addf %305, %306 : vector<21x64xf32>
    %cst_120 = arith.constant 0.000000e+00 : f32
    %308 = vector.broadcast %cst_120 : f32 to vector<21x64xf32>
    %309 = arith.maximumf %307, %308 : vector<21x64xf32>
    %cst_121 = arith.constant dense<0.000000e+00> : vector<21x64xf32>
    %310 = tpu.matmul %309, %11, %cst_121 {dimension_numbers = #tpu.dot_dimension_numbers<[1], [0], [0], [1], [0, 0, 1, 1], [], []>} : vector<21x64xf32>, vector<64x64xf32>, vector<21x64xf32> -> vector<21x64xf32>
    %311 = vector.broadcast %32 : vector<1x64xf32> to vector<21x64xf32>
    %312 = arith.addf %310, %311 : vector<21x64xf32>
    %313 = arith.addf %282, %312 : vector<21x64xf32>
    %314 = tpu.concatenate %313, %246 in 1 : vector<21x64xf32>, vector<21x64xf32> -> vector<21x128xf32>
    %c0_122 = arith.constant 0 : index
    %c0_123 = arith.constant 0 : index
    %c0_124 = arith.constant 0 : index
    %c0_125 = arith.constant 0 : index
    %315 = vector.load %arg10[%c0_122, %c0_123, %c0_124, %c0_125] : memref<1x4x21x128xf32, #tpu.memory_space<vmem>>, vector<1x1x21x128xf32>
    %316 = vector.shape_cast %315 : vector<1x1x21x128xf32> to vector<21x128xf32>
    %317 = vector.shape_cast %314 : vector<21x128xf32> to vector<1x1x21x128xf32>
    tpu.vector_store %arg10[%c0_122, %c0_123, %c0_124, %c0_125], %317 {strides = array<i32>} : memref<1x4x21x128xf32, #tpu.memory_space<vmem>>, vector<1x1x21x128xf32>,
    %c0_126 = arith.constant 0 : index
    %c1_127 = arith.constant 1 : index
    %c0_128 = arith.constant 0 : index
    %c0_129 = arith.constant 0 : index
    %318 = vector.load %arg1[%c0_126, %c1_127, %c0_128, %c0_129] : memref<1x4x64x64xf32, #tpu.memory_space<vmem>>, vector<1x1x64x64xf32>
    %319 = vector.shape_cast %318 : vector<1x1x64x64xf32> to vector<64x64xf32>
    %cst_130 = arith.constant 0.000000e+00 : f32
    %320 = vector.broadcast %cst_130 : f32 to vector<64x64xf32>
    %321 = arith.maximumf %319, %320 : vector<64x64xf32>
    %cst_131 = arith.constant dense<0.000000e+00> : vector<64x64xf32>
    %322 = tpu.matmul %321, %1, %cst_131 {dimension_numbers = #tpu.dot_dimension_numbers<[1], [0], [0], [1], [0, 0, 1, 1], [], []>} : vector<64x64xf32>, vector<64x64xf32>, vector<64x64xf32> -> vector<64x64xf32>
    %323 = vector.broadcast %19 : vector<1x64xf32> to vector<64x64xf32>
    %324 = arith.addf %322, %323 : vector<64x64xf32>
    %cst_132 = arith.constant 0.000000e+00 : f32
    %325 = vector.broadcast %cst_132 : f32 to vector<64x64xf32>
    %326 = arith.maximumf %324, %325 : vector<64x64xf32>
    %327 = arith.addf %326, %16 : vector<64x64xf32>
    %cst_133 = arith.constant dense<0.000000e+00> : vector<64xf32>
    %328 = vector.multi_reduction <add>, %327, %cst_133 [1] : vector<64x64xf32> to vector<64xf32>
    %329 = vector.shape_cast %328 : vector<64xf32> to vector<64x1xf32>
    %cst_134 = arith.constant 6.400000e+01 : f32
    %330 = vector.broadcast %cst_134 : f32 to vector<64x1xf32>
    %331 = arith.divf %329, %330 : vector<64x1xf32>
    %332 = arith.mulf %327, %327 : vector<64x64xf32>
    %cst_135 = arith.constant dense<0.000000e+00> : vector<64xf32>
    %333 = vector.multi_reduction <add>, %332, %cst_135 [1] : vector<64x64xf32> to vector<64xf32>
    %334 = vector.shape_cast %333 : vector<64xf32> to vector<64x1xf32>
    %cst_136 = arith.constant 6.400000e+01 : f32
    %335 = vector.broadcast %cst_136 : f32 to vector<64x1xf32>
    %336 = arith.divf %334, %335 : vector<64x1xf32>
    %337 = arith.mulf %331, %331 : vector<64x1xf32>
    %338 = arith.subf %336, %337 : vector<64x1xf32>
    %339 = vector.broadcast %331 : vector<64x1xf32> to vector<64x64xf32>
    %340 = arith.subf %327, %339 : vector<64x64xf32>
    %cst_137 = arith.constant 9.99999974E-6 : f32
    %341 = vector.broadcast %cst_137 : f32 to vector<64x1xf32>
    %342 = arith.addf %338, %341 : vector<64x1xf32>
    %343 = math.rsqrt %342 : vector<64x1xf32>
    %344 = vector.broadcast %343 : vector<64x1xf32> to vector<64x64xf32>
    %345 = arith.mulf %340, %344 : vector<64x64xf32>
    %346 = vector.broadcast %20 : vector<1x64xf32> to vector<64x64xf32>
    %347 = arith.mulf %345, %346 : vector<64x64xf32>
    %348 = vector.broadcast %21 : vector<1x64xf32> to vector<64x64xf32>
    %349 = arith.addf %347, %348 : vector<64x64xf32>
    %cst_138 = arith.constant dense<0.000000e+00> : vector<64x64xf32>
    %350 = tpu.matmul %349, %3, %cst_138 {dimension_numbers = #tpu.dot_dimension_numbers<[1], [0], [0], [1], [0, 0, 1, 1], [], []>} : vector<64x64xf32>, vector<64x64xf32>, vector<64x64xf32> -> vector<64x64xf32>
    %351 = vector.broadcast %22 : vector<1x64xf32> to vector<64x64xf32>
    %352 = arith.addf %350, %351 : vector<64x64xf32>
    %cst_139 = arith.constant 0.000000e+00 : f32
    %353 = vector.broadcast %cst_139 : f32 to vector<64x64xf32>
    %354 = arith.maximumf %352, %353 : vector<64x64xf32>
    %cst_140 = arith.constant dense<0.000000e+00> : vector<64x64xf32>
    %355 = tpu.matmul %354, %5, %cst_140 {dimension_numbers = #tpu.dot_dimension_numbers<[1], [0], [0], [1], [0, 0, 1, 1], [], []>} : vector<64x64xf32>, vector<64x64xf32>, vector<64x64xf32> -> vector<64x64xf32>
    %356 = vector.broadcast %23 : vector<1x64xf32> to vector<64x64xf32>
    %357 = arith.addf %355, %356 : vector<64x64xf32>
    %cst_141 = arith.constant dense<0.000000e+00> : vector<64xf32>
    %358 = vector.multi_reduction <add>, %357, %cst_141 [1] : vector<64x64xf32> to vector<64xf32>
    %359 = vector.shape_cast %358 : vector<64xf32> to vector<64x1xf32>
    %cst_142 = arith.constant 6.400000e+01 : f32
    %360 = vector.broadcast %cst_142 : f32 to vector<64x1xf32>
    %361 = arith.divf %359, %360 : vector<64x1xf32>
    %362 = arith.mulf %357, %357 : vector<64x64xf32>
    %cst_143 = arith.constant dense<0.000000e+00> : vector<64xf32>
    %363 = vector.multi_reduction <add>, %362, %cst_143 [1] : vector<64x64xf32> to vector<64xf32>
    %364 = vector.shape_cast %363 : vector<64xf32> to vector<64x1xf32>
    %cst_144 = arith.constant 6.400000e+01 : f32
    %365 = vector.broadcast %cst_144 : f32 to vector<64x1xf32>
    %366 = arith.divf %364, %365 : vector<64x1xf32>
    %367 = arith.mulf %361, %361 : vector<64x1xf32>
    %368 = arith.subf %366, %367 : vector<64x1xf32>
    %369 = vector.broadcast %361 : vector<64x1xf32> to vector<64x64xf32>
    %370 = arith.subf %357, %369 : vector<64x64xf32>
    %cst_145 = arith.constant 9.99999974E-6 : f32
    %371 = vector.broadcast %cst_145 : f32 to vector<64x1xf32>
    %372 = arith.addf %368, %371 : vector<64x1xf32>
    %373 = math.rsqrt %372 : vector<64x1xf32>
    %374 = vector.broadcast %373 : vector<64x1xf32> to vector<64x64xf32>
    %375 = arith.mulf %370, %374 : vector<64x64xf32>
    %376 = vector.broadcast %24 : vector<1x64xf32> to vector<64x64xf32>
    %377 = arith.mulf %375, %376 : vector<64x64xf32>
    %378 = vector.broadcast %25 : vector<1x64xf32> to vector<64x64xf32>
    %379 = arith.addf %377, %378 : vector<64x64xf32>
    %cst_146 = arith.constant dense<0.000000e+00> : vector<64x128xf32>
    %380 = tpu.matmul %379, %14, %cst_146 {dimension_numbers = #tpu.dot_dimension_numbers<[1], [0], [0], [1], [0, 0, 1, 1], [], []>} : vector<64x64xf32>, vector<64x128xf32>, vector<64x128xf32> -> vector<64x128xf32>
    %381 = vector.broadcast %17 : vector<1x128xf32> to vector<64x128xf32>
    %382 = arith.addf %380, %381 : vector<64x128xf32>
    %383 = vector.extract_strided_slice %382 {offsets = [0, 0], sizes = [64, 64], strides = [1, 1]} : vector<64x128xf32> to vector<64x64xf32>
    %384 = vector.extract_strided_slice %382 {offsets = [0, 64], sizes = [64, 64], strides = [1, 1]} : vector<64x128xf32> to vector<64x64xf32>
    %cst_147 = arith.constant dense<0.000000e+00> : vector<21xf32>
    %385 = vector.multi_reduction <add>, %313, %cst_147 [1] : vector<21x64xf32> to vector<21xf32>
    %386 = vector.shape_cast %385 : vector<21xf32> to vector<21x1xf32>
    %cst_148 = arith.constant 6.400000e+01 : f32
    %387 = vector.broadcast %cst_148 : f32 to vector<21x1xf32>
    %388 = arith.divf %386, %387 : vector<21x1xf32>
    %389 = arith.mulf %313, %313 : vector<21x64xf32>
    %cst_149 = arith.constant dense<0.000000e+00> : vector<21xf32>
    %390 = vector.multi_reduction <add>, %389, %cst_149 [1] : vector<21x64xf32> to vector<21xf32>
    %391 = vector.shape_cast %390 : vector<21xf32> to vector<21x1xf32>
    %cst_150 = arith.constant 6.400000e+01 : f32
    %392 = vector.broadcast %cst_150 : f32 to vector<21x1xf32>
    %393 = arith.divf %391, %392 : vector<21x1xf32>
    %394 = arith.mulf %388, %388 : vector<21x1xf32>
    %395 = arith.subf %393, %394 : vector<21x1xf32>
    %396 = vector.broadcast %388 : vector<21x1xf32> to vector<21x64xf32>
    %397 = arith.subf %313, %396 : vector<21x64xf32>
    %cst_151 = arith.constant 9.99999974E-6 : f32
    %398 = vector.broadcast %cst_151 : f32 to vector<21x1xf32>
    %399 = arith.addf %395, %398 : vector<21x1xf32>
    %400 = math.rsqrt %399 : vector<21x1xf32>
    %401 = vector.broadcast %400 : vector<21x1xf32> to vector<21x64xf32>
    %402 = arith.mulf %397, %401 : vector<21x64xf32>
    %403 = vector.broadcast %26 : vector<1x64xf32> to vector<21x64xf32>
    %404 = arith.mulf %402, %403 : vector<21x64xf32>
    %405 = vector.broadcast %27 : vector<1x64xf32> to vector<21x64xf32>
    %406 = arith.addf %404, %405 : vector<21x64xf32>
    %cst_152 = arith.constant dense<0.000000e+00> : vector<21x64xf32>
    %407 = tpu.matmul %406, %7, %cst_152 {dimension_numbers = #tpu.dot_dimension_numbers<[1], [0], [0], [1], [0, 0, 1, 1], [], []>} : vector<21x64xf32>, vector<64x64xf32>, vector<21x64xf32> -> vector<21x64xf32>
    %408 = vector.broadcast %30 : vector<1x64xf32> to vector<21x64xf32>
    %409 = arith.addf %407, %408 : vector<21x64xf32>
    %cst_153 = arith.constant dense<0.000000e+00> : vector<21x64xf32>
    %410 = tpu.matmul %409, %383, %cst_153 {dimension_numbers = #tpu.dot_dimension_numbers<[1], [1], [0], [0], [0, 0, 1, 0], [], []>} : vector<21x64xf32>, vector<64x64xf32>, vector<21x64xf32> -> vector<21x64xf32>
    %cst_154 = arith.constant 1.250000e-01 : f32
    %411 = vector.broadcast %cst_154 : f32 to vector<21x64xf32>
    %412 = arith.mulf %410, %411 : vector<21x64xf32>
    %cst_155 = arith.constant dense<0xFF800000> : vector<64xf32>
    %413 = vector.multi_reduction <maximumf>, %412, %cst_155 [0] : vector<21x64xf32> to vector<64xf32>
    %414 = vector.shape_cast %413 : vector<64xf32> to vector<1x64xf32>
    %415 = vector.broadcast %414 : vector<1x64xf32> to vector<21x64xf32>
    %416 = arith.subf %412, %415 : vector<21x64xf32>
    %417 = math.exp %416 : vector<21x64xf32>
    %cst_156 = arith.constant dense<0.000000e+00> : vector<64xf32>
    %418 = vector.multi_reduction <add>, %417, %cst_156 [0] : vector<21x64xf32> to vector<64xf32>
    %419 = vector.shape_cast %418 : vector<64xf32> to vector<1x64xf32>
    %420 = vector.broadcast %419 : vector<1x64xf32> to vector<21x64xf32>
    %421 = arith.divf %417, %420 : vector<21x64xf32>
    %cst_157 = arith.constant 9.99999993E-9 : f32
    %422 = vector.broadcast %cst_157 : f32 to vector<21x64xf32>
    %423 = arith.addf %421, %422 : vector<21x64xf32>
    %cst_158 = arith.constant dense<0.000000e+00> : vector<21xf32>
    %424 = vector.multi_reduction <add>, %423, %cst_158 [1] : vector<21x64xf32> to vector<21xf32>
    %425 = vector.shape_cast %424 : vector<21xf32> to vector<21x1xf32>
    %426 = tpu.reciprocal %425 {approx = true} : vector<21x1xf32> -> vector<21x1xf32>
    %427 = vector.broadcast %426 : vector<21x1xf32> to vector<21x64xf32>
    %428 = arith.mulf %423, %427 : vector<21x64xf32>
    %cst_159 = arith.constant dense<0.000000e+00> : vector<21x64xf32>
    %429 = tpu.matmul %428, %384, %cst_159 {dimension_numbers = #tpu.dot_dimension_numbers<[1], [0], [0], [1], [0, 0, 1, 1], [], []>} : vector<21x64xf32>, vector<64x64xf32>, vector<21x64xf32> -> vector<21x64xf32>
    %430 = tpu.concatenate %429, %313 in 1 : vector<21x64xf32>, vector<21x64xf32> -> vector<21x128xf32>
    %cst_160 = arith.constant dense<0.000000e+00> : vector<21x192xf32>
    %431 = tpu.matmul %430, %15, %cst_160 {dimension_numbers = #tpu.dot_dimension_numbers<[1], [0], [0], [1], [0, 0, 1, 1], [], []>} : vector<21x128xf32>, vector<128x192xf32>, vector<21x192xf32> -> vector<21x192xf32>
    %432 = vector.broadcast %18 : vector<1x192xf32> to vector<21x192xf32>
    %433 = arith.addf %431, %432 : vector<21x192xf32>
    %cst_161 = arith.constant dense<0.000000e+00> : vector<21x64xf32>
    %434 = tpu.matmul %313, %13, %cst_161 {dimension_numbers = #tpu.dot_dimension_numbers<[1], [0], [0], [1], [0, 0, 1, 1], [], []>} : vector<21x64xf32>, vector<64x64xf32>, vector<21x64xf32> -> vector<21x64xf32>
    %435 = vector.broadcast %33 : vector<1x64xf32> to vector<21x64xf32>
    %436 = arith.addf %434, %435 : vector<21x64xf32>
    %437 = vector.extract_strided_slice %433 {offsets = [0, 0], sizes = [21, 64], strides = [1, 1]} : vector<21x192xf32> to vector<21x64xf32>
    %438 = arith.negf %437 : vector<21x64xf32>
    %439 = math.exp %438 : vector<21x64xf32>
    %cst_162 = arith.constant 1.000000e+00 : f32
    %440 = vector.broadcast %cst_162 : f32 to vector<21x64xf32>
    %441 = arith.addf %440, %439 : vector<21x64xf32>
    %442 = arith.divf %440, %441 : vector<21x64xf32>
    %443 = vector.extract_strided_slice %433 {offsets = [0, 64], sizes = [21, 64], strides = [1, 1]} : vector<21x192xf32> to vector<21x64xf32>
    %444 = arith.negf %443 : vector<21x64xf32>
    %445 = math.exp %444 : vector<21x64xf32>
    %cst_163 = arith.constant 1.000000e+00 : f32
    %446 = vector.broadcast %cst_163 : f32 to vector<21x64xf32>
    %447 = arith.addf %446, %445 : vector<21x64xf32>
    %448 = arith.divf %446, %447 : vector<21x64xf32>
    %449 = vector.extract_strided_slice %433 {offsets = [0, 128], sizes = [21, 64], strides = [1, 1]} : vector<21x192xf32> to vector<21x64xf32>
    %cst_164 = arith.constant 1.000000e+00 : f32
    %450 = vector.broadcast %cst_164 : f32 to vector<21x64xf32>
    %451 = arith.subf %442, %450 : vector<21x64xf32>
    %452 = arith.mulf %451, %436 : vector<21x64xf32>
    %453 = arith.addf %449, %452 : vector<21x64xf32>
    %454 = math.tanh %453 : vector<21x64xf32>
    %cst_165 = arith.constant 1.000000e+00 : f32
    %455 = vector.broadcast %cst_165 : f32 to vector<21x64xf32>
    %456 = arith.subf %455, %448 : vector<21x64xf32>
    %457 = arith.mulf %456, %454 : vector<21x64xf32>
    %458 = arith.mulf %448, %313 : vector<21x64xf32>
    %459 = arith.addf %457, %458 : vector<21x64xf32>
    %cst_166 = arith.constant dense<0.000000e+00> : vector<21xf32>
    %460 = vector.multi_reduction <add>, %459, %cst_166 [1] : vector<21x64xf32> to vector<21xf32>
    %461 = vector.shape_cast %460 : vector<21xf32> to vector<21x1xf32>
    %cst_167 = arith.constant 6.400000e+01 : f32
    %462 = vector.broadcast %cst_167 : f32 to vector<21x1xf32>
    %463 = arith.divf %461, %462 : vector<21x1xf32>
    %464 = arith.mulf %459, %459 : vector<21x64xf32>
    %cst_168 = arith.constant dense<0.000000e+00> : vector<21xf32>
    %465 = vector.multi_reduction <add>, %464, %cst_168 [1] : vector<21x64xf32> to vector<21xf32>
    %466 = vector.shape_cast %465 : vector<21xf32> to vector<21x1xf32>
    %cst_169 = arith.constant 6.400000e+01 : f32
    %467 = vector.broadcast %cst_169 : f32 to vector<21x1xf32>
    %468 = arith.divf %466, %467 : vector<21x1xf32>
    %469 = arith.mulf %463, %463 : vector<21x1xf32>
    %470 = arith.subf %468, %469 : vector<21x1xf32>
    %471 = vector.broadcast %463 : vector<21x1xf32> to vector<21x64xf32>
    %472 = arith.subf %459, %471 : vector<21x64xf32>
    %cst_170 = arith.constant 9.99999974E-6 : f32
    %473 = vector.broadcast %cst_170 : f32 to vector<21x1xf32>
    %474 = arith.addf %470, %473 : vector<21x1xf32>
    %475 = math.rsqrt %474 : vector<21x1xf32>
    %476 = vector.broadcast %475 : vector<21x1xf32> to vector<21x64xf32>
    %477 = arith.mulf %472, %476 : vector<21x64xf32>
    %478 = vector.broadcast %28 : vector<1x64xf32> to vector<21x64xf32>
    %479 = arith.mulf %477, %478 : vector<21x64xf32>
    %480 = vector.broadcast %29 : vector<1x64xf32> to vector<21x64xf32>
    %481 = arith.addf %479, %480 : vector<21x64xf32>
    %cst_171 = arith.constant dense<0.000000e+00> : vector<21x64xf32>
    %482 = tpu.matmul %481, %9, %cst_171 {dimension_numbers = #tpu.dot_dimension_numbers<[1], [0], [0], [1], [0, 0, 1, 1], [], []>} : vector<21x64xf32>, vector<64x64xf32>, vector<21x64xf32> -> vector<21x64xf32>
    %483 = vector.broadcast %31 : vector<1x64xf32> to vector<21x64xf32>
    %484 = arith.addf %482, %483 : vector<21x64xf32>
    %cst_172 = arith.constant 0.000000e+00 : f32
    %485 = vector.broadcast %cst_172 : f32 to vector<21x64xf32>
    %486 = arith.maximumf %484, %485 : vector<21x64xf32>
    %cst_173 = arith.constant dense<0.000000e+00> : vector<21x64xf32>
    %487 = tpu.matmul %486, %11, %cst_173 {dimension_numbers = #tpu.dot_dimension_numbers<[1], [0], [0], [1], [0, 0, 1, 1], [], []>} : vector<21x64xf32>, vector<64x64xf32>, vector<21x64xf32> -> vector<21x64xf32>
    %488 = vector.broadcast %32 : vector<1x64xf32> to vector<21x64xf32>
    %489 = arith.addf %487, %488 : vector<21x64xf32>
    %490 = arith.addf %459, %489 : vector<21x64xf32>
    %491 = tpu.concatenate %490, %423 in 1 : vector<21x64xf32>, vector<21x64xf32> -> vector<21x128xf32>
    %c0_174 = arith.constant 0 : index
    %c1_175 = arith.constant 1 : index
    %c0_176 = arith.constant 0 : index
    %c0_177 = arith.constant 0 : index
    %492 = vector.load %arg10[%c0_174, %c1_175, %c0_176, %c0_177] : memref<1x4x21x128xf32, #tpu.memory_space<vmem>>, vector<1x1x21x128xf32>
    %493 = vector.shape_cast %492 : vector<1x1x21x128xf32> to vector<21x128xf32>
    %494 = vector.shape_cast %491 : vector<21x128xf32> to vector<1x1x21x128xf32>
    tpu.vector_store %arg10[%c0_174, %c1_175, %c0_176, %c0_177], %494 {strides = array<i32>} : memref<1x4x21x128xf32, #tpu.memory_space<vmem>>, vector<1x1x21x128xf32>,
    %c0_178 = arith.constant 0 : index
    %c2_179 = arith.constant 2 : index
    %c0_180 = arith.constant 0 : index
    %c0_181 = arith.constant 0 : index
    %495 = vector.load %arg1[%c0_178, %c2_179, %c0_180, %c0_181] : memref<1x4x64x64xf32, #tpu.memory_space<vmem>>, vector<1x1x64x64xf32>
    %496 = vector.shape_cast %495 : vector<1x1x64x64xf32> to vector<64x64xf32>
    %cst_182 = arith.constant 0.000000e+00 : f32
    %497 = vector.broadcast %cst_182 : f32 to vector<64x64xf32>
    %498 = arith.maximumf %496, %497 : vector<64x64xf32>
    %cst_183 = arith.constant dense<0.000000e+00> : vector<64x64xf32>
    %499 = tpu.matmul %498, %1, %cst_183 {dimension_numbers = #tpu.dot_dimension_numbers<[1], [0], [0], [1], [0, 0, 1, 1], [], []>} : vector<64x64xf32>, vector<64x64xf32>, vector<64x64xf32> -> vector<64x64xf32>
    %500 = vector.broadcast %19 : vector<1x64xf32> to vector<64x64xf32>
    %501 = arith.addf %499, %500 : vector<64x64xf32>
    %cst_184 = arith.constant 0.000000e+00 : f32
    %502 = vector.broadcast %cst_184 : f32 to vector<64x64xf32>
    %503 = arith.maximumf %501, %502 : vector<64x64xf32>
    %504 = arith.addf %503, %16 : vector<64x64xf32>
    %cst_185 = arith.constant dense<0.000000e+00> : vector<64xf32>
    %505 = vector.multi_reduction <add>, %504, %cst_185 [1] : vector<64x64xf32> to vector<64xf32>
    %506 = vector.shape_cast %505 : vector<64xf32> to vector<64x1xf32>
    %cst_186 = arith.constant 6.400000e+01 : f32
    %507 = vector.broadcast %cst_186 : f32 to vector<64x1xf32>
    %508 = arith.divf %506, %507 : vector<64x1xf32>
    %509 = arith.mulf %504, %504 : vector<64x64xf32>
    %cst_187 = arith.constant dense<0.000000e+00> : vector<64xf32>
    %510 = vector.multi_reduction <add>, %509, %cst_187 [1] : vector<64x64xf32> to vector<64xf32>
    %511 = vector.shape_cast %510 : vector<64xf32> to vector<64x1xf32>
    %cst_188 = arith.constant 6.400000e+01 : f32
    %512 = vector.broadcast %cst_188 : f32 to vector<64x1xf32>
    %513 = arith.divf %511, %512 : vector<64x1xf32>
    %514 = arith.mulf %508, %508 : vector<64x1xf32>
    %515 = arith.subf %513, %514 : vector<64x1xf32>
    %516 = vector.broadcast %508 : vector<64x1xf32> to vector<64x64xf32>
    %517 = arith.subf %504, %516 : vector<64x64xf32>
    %cst_189 = arith.constant 9.99999974E-6 : f32
    %518 = vector.broadcast %cst_189 : f32 to vector<64x1xf32>
    %519 = arith.addf %515, %518 : vector<64x1xf32>
    %520 = math.rsqrt %519 : vector<64x1xf32>
    %521 = vector.broadcast %520 : vector<64x1xf32> to vector<64x64xf32>
    %522 = arith.mulf %517, %521 : vector<64x64xf32>
    %523 = vector.broadcast %20 : vector<1x64xf32> to vector<64x64xf32>
    %524 = arith.mulf %522, %523 : vector<64x64xf32>
    %525 = vector.broadcast %21 : vector<1x64xf32> to vector<64x64xf32>
    %526 = arith.addf %524, %525 : vector<64x64xf32>
    %cst_190 = arith.constant dense<0.000000e+00> : vector<64x64xf32>
    %527 = tpu.matmul %526, %3, %cst_190 {dimension_numbers = #tpu.dot_dimension_numbers<[1], [0], [0], [1], [0, 0, 1, 1], [], []>} : vector<64x64xf32>, vector<64x64xf32>, vector<64x64xf32> -> vector<64x64xf32>
    %528 = vector.broadcast %22 : vector<1x64xf32> to vector<64x64xf32>
    %529 = arith.addf %527, %528 : vector<64x64xf32>
    %cst_191 = arith.constant 0.000000e+00 : f32
    %530 = vector.broadcast %cst_191 : f32 to vector<64x64xf32>
    %531 = arith.maximumf %529, %530 : vector<64x64xf32>
    %cst_192 = arith.constant dense<0.000000e+00> : vector<64x64xf32>
    %532 = tpu.matmul %531, %5, %cst_192 {dimension_numbers = #tpu.dot_dimension_numbers<[1], [0], [0], [1], [0, 0, 1, 1], [], []>} : vector<64x64xf32>, vector<64x64xf32>, vector<64x64xf32> -> vector<64x64xf32>
    %533 = vector.broadcast %23 : vector<1x64xf32> to vector<64x64xf32>
    %534 = arith.addf %532, %533 : vector<64x64xf32>
    %cst_193 = arith.constant dense<0.000000e+00> : vector<64xf32>
    %535 = vector.multi_reduction <add>, %534, %cst_193 [1] : vector<64x64xf32> to vector<64xf32>
    %536 = vector.shape_cast %535 : vector<64xf32> to vector<64x1xf32>
    %cst_194 = arith.constant 6.400000e+01 : f32
    %537 = vector.broadcast %cst_194 : f32 to vector<64x1xf32>
    %538 = arith.divf %536, %537 : vector<64x1xf32>
    %539 = arith.mulf %534, %534 : vector<64x64xf32>
    %cst_195 = arith.constant dense<0.000000e+00> : vector<64xf32>
    %540 = vector.multi_reduction <add>, %539, %cst_195 [1] : vector<64x64xf32> to vector<64xf32>
    %541 = vector.shape_cast %540 : vector<64xf32> to vector<64x1xf32>
    %cst_196 = arith.constant 6.400000e+01 : f32
    %542 = vector.broadcast %cst_196 : f32 to vector<64x1xf32>
    %543 = arith.divf %541, %542 : vector<64x1xf32>
    %544 = arith.mulf %538, %538 : vector<64x1xf32>
    %545 = arith.subf %543, %544 : vector<64x1xf32>
    %546 = vector.broadcast %538 : vector<64x1xf32> to vector<64x64xf32>
    %547 = arith.subf %534, %546 : vector<64x64xf32>
    %cst_197 = arith.constant 9.99999974E-6 : f32
    %548 = vector.broadcast %cst_197 : f32 to vector<64x1xf32>
    %549 = arith.addf %545, %548 : vector<64x1xf32>
    %550 = math.rsqrt %549 : vector<64x1xf32>
    %551 = vector.broadcast %550 : vector<64x1xf32> to vector<64x64xf32>
    %552 = arith.mulf %547, %551 : vector<64x64xf32>
    %553 = vector.broadcast %24 : vector<1x64xf32> to vector<64x64xf32>
    %554 = arith.mulf %552, %553 : vector<64x64xf32>
    %555 = vector.broadcast %25 : vector<1x64xf32> to vector<64x64xf32>
    %556 = arith.addf %554, %555 : vector<64x64xf32>
    %cst_198 = arith.constant dense<0.000000e+00> : vector<64x128xf32>
    %557 = tpu.matmul %556, %14, %cst_198 {dimension_numbers = #tpu.dot_dimension_numbers<[1], [0], [0], [1], [0, 0, 1, 1], [], []>} : vector<64x64xf32>, vector<64x128xf32>, vector<64x128xf32> -> vector<64x128xf32>
    %558 = vector.broadcast %17 : vector<1x128xf32> to vector<64x128xf32>
    %559 = arith.addf %557, %558 : vector<64x128xf32>
    %560 = vector.extract_strided_slice %559 {offsets = [0, 0], sizes = [64, 64], strides = [1, 1]} : vector<64x128xf32> to vector<64x64xf32>
    %561 = vector.extract_strided_slice %559 {offsets = [0, 64], sizes = [64, 64], strides = [1, 1]} : vector<64x128xf32> to vector<64x64xf32>
    %cst_199 = arith.constant dense<0.000000e+00> : vector<21xf32>
    %562 = vector.multi_reduction <add>, %490, %cst_199 [1] : vector<21x64xf32> to vector<21xf32>
    %563 = vector.shape_cast %562 : vector<21xf32> to vector<21x1xf32>
    %cst_200 = arith.constant 6.400000e+01 : f32
    %564 = vector.broadcast %cst_200 : f32 to vector<21x1xf32>
    %565 = arith.divf %563, %564 : vector<21x1xf32>
    %566 = arith.mulf %490, %490 : vector<21x64xf32>
    %cst_201 = arith.constant dense<0.000000e+00> : vector<21xf32>
    %567 = vector.multi_reduction <add>, %566, %cst_201 [1] : vector<21x64xf32> to vector<21xf32>
    %568 = vector.shape_cast %567 : vector<21xf32> to vector<21x1xf32>
    %cst_202 = arith.constant 6.400000e+01 : f32
    %569 = vector.broadcast %cst_202 : f32 to vector<21x1xf32>
    %570 = arith.divf %568, %569 : vector<21x1xf32>
    %571 = arith.mulf %565, %565 : vector<21x1xf32>
    %572 = arith.subf %570, %571 : vector<21x1xf32>
    %573 = vector.broadcast %565 : vector<21x1xf32> to vector<21x64xf32>
    %574 = arith.subf %490, %573 : vector<21x64xf32>
    %cst_203 = arith.constant 9.99999974E-6 : f32
    %575 = vector.broadcast %cst_203 : f32 to vector<21x1xf32>
    %576 = arith.addf %572, %575 : vector<21x1xf32>
    %577 = math.rsqrt %576 : vector<21x1xf32>
    %578 = vector.broadcast %577 : vector<21x1xf32> to vector<21x64xf32>
    %579 = arith.mulf %574, %578 : vector<21x64xf32>
    %580 = vector.broadcast %26 : vector<1x64xf32> to vector<21x64xf32>
    %581 = arith.mulf %579, %580 : vector<21x64xf32>
    %582 = vector.broadcast %27 : vector<1x64xf32> to vector<21x64xf32>
    %583 = arith.addf %581, %582 : vector<21x64xf32>
    %cst_204 = arith.constant dense<0.000000e+00> : vector<21x64xf32>
    %584 = tpu.matmul %583, %7, %cst_204 {dimension_numbers = #tpu.dot_dimension_numbers<[1], [0], [0], [1], [0, 0, 1, 1], [], []>} : vector<21x64xf32>, vector<64x64xf32>, vector<21x64xf32> -> vector<21x64xf32>
    %585 = vector.broadcast %30 : vector<1x64xf32> to vector<21x64xf32>
    %586 = arith.addf %584, %585 : vector<21x64xf32>
    %cst_205 = arith.constant dense<0.000000e+00> : vector<21x64xf32>
    %587 = tpu.matmul %586, %560, %cst_205 {dimension_numbers = #tpu.dot_dimension_numbers<[1], [1], [0], [0], [0, 0, 1, 0], [], []>} : vector<21x64xf32>, vector<64x64xf32>, vector<21x64xf32> -> vector<21x64xf32>
    %cst_206 = arith.constant 1.250000e-01 : f32
    %588 = vector.broadcast %cst_206 : f32 to vector<21x64xf32>
    %589 = arith.mulf %587, %588 : vector<21x64xf32>
    %cst_207 = arith.constant dense<0xFF800000> : vector<64xf32>
    %590 = vector.multi_reduction <maximumf>, %589, %cst_207 [0] : vector<21x64xf32> to vector<64xf32>
    %591 = vector.shape_cast %590 : vector<64xf32> to vector<1x64xf32>
    %592 = vector.broadcast %591 : vector<1x64xf32> to vector<21x64xf32>
    %593 = arith.subf %589, %592 : vector<21x64xf32>
    %594 = math.exp %593 : vector<21x64xf32>
    %cst_208 = arith.constant dense<0.000000e+00> : vector<64xf32>
    %595 = vector.multi_reduction <add>, %594, %cst_208 [0] : vector<21x64xf32> to vector<64xf32>
    %596 = vector.shape_cast %595 : vector<64xf32> to vector<1x64xf32>
    %597 = vector.broadcast %596 : vector<1x64xf32> to vector<21x64xf32>
    %598 = arith.divf %594, %597 : vector<21x64xf32>
    %cst_209 = arith.constant 9.99999993E-9 : f32
    %599 = vector.broadcast %cst_209 : f32 to vector<21x64xf32>
    %600 = arith.addf %598, %599 : vector<21x64xf32>
    %cst_210 = arith.constant dense<0.000000e+00> : vector<21xf32>
    %601 = vector.multi_reduction <add>, %600, %cst_210 [1] : vector<21x64xf32> to vector<21xf32>
    %602 = vector.shape_cast %601 : vector<21xf32> to vector<21x1xf32>
    %603 = tpu.reciprocal %602 {approx = true} : vector<21x1xf32> -> vector<21x1xf32>
    %604 = vector.broadcast %603 : vector<21x1xf32> to vector<21x64xf32>
    %605 = arith.mulf %600, %604 : vector<21x64xf32>
    %cst_211 = arith.constant dense<0.000000e+00> : vector<21x64xf32>
    %606 = tpu.matmul %605, %561, %cst_211 {dimension_numbers = #tpu.dot_dimension_numbers<[1], [0], [0], [1], [0, 0, 1, 1], [], []>} : vector<21x64xf32>, vector<64x64xf32>, vector<21x64xf32> -> vector<21x64xf32>
    %607 = tpu.concatenate %606, %490 in 1 : vector<21x64xf32>, vector<21x64xf32> -> vector<21x128xf32>
    %cst_212 = arith.constant dense<0.000000e+00> : vector<21x192xf32>
    %608 = tpu.matmul %607, %15, %cst_212 {dimension_numbers = #tpu.dot_dimension_numbers<[1], [0], [0], [1], [0, 0, 1, 1], [], []>} : vector<21x128xf32>, vector<128x192xf32>, vector<21x192xf32> -> vector<21x192xf32>
    %609 = vector.broadcast %18 : vector<1x192xf32> to vector<21x192xf32>
    %610 = arith.addf %608, %609 : vector<21x192xf32>
    %cst_213 = arith.constant dense<0.000000e+00> : vector<21x64xf32>
    %611 = tpu.matmul %490, %13, %cst_213 {dimension_numbers = #tpu.dot_dimension_numbers<[1], [0], [0], [1], [0, 0, 1, 1], [], []>} : vector<21x64xf32>, vector<64x64xf32>, vector<21x64xf32> -> vector<21x64xf32>
    %612 = vector.broadcast %33 : vector<1x64xf32> to vector<21x64xf32>
    %613 = arith.addf %611, %612 : vector<21x64xf32>
    %614 = vector.extract_strided_slice %610 {offsets = [0, 0], sizes = [21, 64], strides = [1, 1]} : vector<21x192xf32> to vector<21x64xf32>
    %615 = arith.negf %614 : vector<21x64xf32>
    %616 = math.exp %615 : vector<21x64xf32>
    %cst_214 = arith.constant 1.000000e+00 : f32
    %617 = vector.broadcast %cst_214 : f32 to vector<21x64xf32>
    %618 = arith.addf %617, %616 : vector<21x64xf32>
    %619 = arith.divf %617, %618 : vector<21x64xf32>
    %620 = vector.extract_strided_slice %610 {offsets = [0, 64], sizes = [21, 64], strides = [1, 1]} : vector<21x192xf32> to vector<21x64xf32>
    %621 = arith.negf %620 : vector<21x64xf32>
    %622 = math.exp %621 : vector<21x64xf32>
    %cst_215 = arith.constant 1.000000e+00 : f32
    %623 = vector.broadcast %cst_215 : f32 to vector<21x64xf32>
    %624 = arith.addf %623, %622 : vector<21x64xf32>
    %625 = arith.divf %623, %624 : vector<21x64xf32>
    %626 = vector.extract_strided_slice %610 {offsets = [0, 128], sizes = [21, 64], strides = [1, 1]} : vector<21x192xf32> to vector<21x64xf32>
    %cst_216 = arith.constant 1.000000e+00 : f32
    %627 = vector.broadcast %cst_216 : f32 to vector<21x64xf32>
    %628 = arith.subf %619, %627 : vector<21x64xf32>
    %629 = arith.mulf %628, %613 : vector<21x64xf32>
    %630 = arith.addf %626, %629 : vector<21x64xf32>
    %631 = math.tanh %630 : vector<21x64xf32>
    %cst_217 = arith.constant 1.000000e+00 : f32
    %632 = vector.broadcast %cst_217 : f32 to vector<21x64xf32>
    %633 = arith.subf %632, %625 : vector<21x64xf32>
    %634 = arith.mulf %633, %631 : vector<21x64xf32>
    %635 = arith.mulf %625, %490 : vector<21x64xf32>
    %636 = arith.addf %634, %635 : vector<21x64xf32>
    %cst_218 = arith.constant dense<0.000000e+00> : vector<21xf32>
    %637 = vector.multi_reduction <add>, %636, %cst_218 [1] : vector<21x64xf32> to vector<21xf32>
    %638 = vector.shape_cast %637 : vector<21xf32> to vector<21x1xf32>
    %cst_219 = arith.constant 6.400000e+01 : f32
    %639 = vector.broadcast %cst_219 : f32 to vector<21x1xf32>
    %640 = arith.divf %638, %639 : vector<21x1xf32>
    %641 = arith.mulf %636, %636 : vector<21x64xf32>
    %cst_220 = arith.constant dense<0.000000e+00> : vector<21xf32>
    %642 = vector.multi_reduction <add>, %641, %cst_220 [1] : vector<21x64xf32> to vector<21xf32>
    %643 = vector.shape_cast %642 : vector<21xf32> to vector<21x1xf32>
    %cst_221 = arith.constant 6.400000e+01 : f32
    %644 = vector.broadcast %cst_221 : f32 to vector<21x1xf32>
    %645 = arith.divf %643, %644 : vector<21x1xf32>
    %646 = arith.mulf %640, %640 : vector<21x1xf32>
    %647 = arith.subf %645, %646 : vector<21x1xf32>
    %648 = vector.broadcast %640 : vector<21x1xf32> to vector<21x64xf32>
    %649 = arith.subf %636, %648 : vector<21x64xf32>
    %cst_222 = arith.constant 9.99999974E-6 : f32
    %650 = vector.broadcast %cst_222 : f32 to vector<21x1xf32>
    %651 = arith.addf %647, %650 : vector<21x1xf32>
    %652 = math.rsqrt %651 : vector<21x1xf32>
    %653 = vector.broadcast %652 : vector<21x1xf32> to vector<21x64xf32>
    %654 = arith.mulf %649, %653 : vector<21x64xf32>
    %655 = vector.broadcast %28 : vector<1x64xf32> to vector<21x64xf32>
    %656 = arith.mulf %654, %655 : vector<21x64xf32>
    %657 = vector.broadcast %29 : vector<1x64xf32> to vector<21x64xf32>
    %658 = arith.addf %656, %657 : vector<21x64xf32>
    %cst_223 = arith.constant dense<0.000000e+00> : vector<21x64xf32>
    %659 = tpu.matmul %658, %9, %cst_223 {dimension_numbers = #tpu.dot_dimension_numbers<[1], [0], [0], [1], [0, 0, 1, 1], [], []>} : vector<21x64xf32>, vector<64x64xf32>, vector<21x64xf32> -> vector<21x64xf32>
    %660 = vector.broadcast %31 : vector<1x64xf32> to vector<21x64xf32>
    %661 = arith.addf %659, %660 : vector<21x64xf32>
    %cst_224 = arith.constant 0.000000e+00 : f32
    %662 = vector.broadcast %cst_224 : f32 to vector<21x64xf32>
    %663 = arith.maximumf %661, %662 : vector<21x64xf32>
    %cst_225 = arith.constant dense<0.000000e+00> : vector<21x64xf32>
    %664 = tpu.matmul %663, %11, %cst_225 {dimension_numbers = #tpu.dot_dimension_numbers<[1], [0], [0], [1], [0, 0, 1, 1], [], []>} : vector<21x64xf32>, vector<64x64xf32>, vector<21x64xf32> -> vector<21x64xf32>
    %665 = vector.broadcast %32 : vector<1x64xf32> to vector<21x64xf32>
    %666 = arith.addf %664, %665 : vector<21x64xf32>
    %667 = arith.addf %636, %666 : vector<21x64xf32>
    %668 = tpu.concatenate %667, %600 in 1 : vector<21x64xf32>, vector<21x64xf32> -> vector<21x128xf32>
    %c0_226 = arith.constant 0 : index
    %c2_227 = arith.constant 2 : index
    %c0_228 = arith.constant 0 : index
    %c0_229 = arith.constant 0 : index
    %669 = vector.load %arg10[%c0_226, %c2_227, %c0_228, %c0_229] : memref<1x4x21x128xf32, #tpu.memory_space<vmem>>, vector<1x1x21x128xf32>
    %670 = vector.shape_cast %669 : vector<1x1x21x128xf32> to vector<21x128xf32>
    %671 = vector.shape_cast %668 : vector<21x128xf32> to vector<1x1x21x128xf32>
    tpu.vector_store %arg10[%c0_226, %c2_227, %c0_228, %c0_229], %671 {strides = array<i32>} : memref<1x4x21x128xf32, #tpu.memory_space<vmem>>, vector<1x1x21x128xf32>,
    %c0_230 = arith.constant 0 : index
    %c3_231 = arith.constant 3 : index
    %c0_232 = arith.constant 0 : index
    %c0_233 = arith.constant 0 : index
    %672 = vector.load %arg1[%c0_230, %c3_231, %c0_232, %c0_233] : memref<1x4x64x64xf32, #tpu.memory_space<vmem>>, vector<1x1x64x64xf32>
    %673 = vector.shape_cast %672 : vector<1x1x64x64xf32> to vector<64x64xf32>
    %cst_234 = arith.constant 0.000000e+00 : f32
    %674 = vector.broadcast %cst_234 : f32 to vector<64x64xf32>
    %675 = arith.maximumf %673, %674 : vector<64x64xf32>
    %cst_235 = arith.constant dense<0.000000e+00> : vector<64x64xf32>
    %676 = tpu.matmul %675, %1, %cst_235 {dimension_numbers = #tpu.dot_dimension_numbers<[1], [0], [0], [1], [0, 0, 1, 1], [], []>} : vector<64x64xf32>, vector<64x64xf32>, vector<64x64xf32> -> vector<64x64xf32>
    %677 = vector.broadcast %19 : vector<1x64xf32> to vector<64x64xf32>
    %678 = arith.addf %676, %677 : vector<64x64xf32>
    %cst_236 = arith.constant 0.000000e+00 : f32
    %679 = vector.broadcast %cst_236 : f32 to vector<64x64xf32>
    %680 = arith.maximumf %678, %679 : vector<64x64xf32>
    %681 = arith.addf %680, %16 : vector<64x64xf32>
    %cst_237 = arith.constant dense<0.000000e+00> : vector<64xf32>
    %682 = vector.multi_reduction <add>, %681, %cst_237 [1] : vector<64x64xf32> to vector<64xf32>
    %683 = vector.shape_cast %682 : vector<64xf32> to vector<64x1xf32>
    %cst_238 = arith.constant 6.400000e+01 : f32
    %684 = vector.broadcast %cst_238 : f32 to vector<64x1xf32>
    %685 = arith.divf %683, %684 : vector<64x1xf32>
    %686 = arith.mulf %681, %681 : vector<64x64xf32>
    %cst_239 = arith.constant dense<0.000000e+00> : vector<64xf32>
    %687 = vector.multi_reduction <add>, %686, %cst_239 [1] : vector<64x64xf32> to vector<64xf32>
    %688 = vector.shape_cast %687 : vector<64xf32> to vector<64x1xf32>
    %cst_240 = arith.constant 6.400000e+01 : f32
    %689 = vector.broadcast %cst_240 : f32 to vector<64x1xf32>
    %690 = arith.divf %688, %689 : vector<64x1xf32>
    %691 = arith.mulf %685, %685 : vector<64x1xf32>
    %692 = arith.subf %690, %691 : vector<64x1xf32>
    %693 = vector.broadcast %685 : vector<64x1xf32> to vector<64x64xf32>
    %694 = arith.subf %681, %693 : vector<64x64xf32>
    %cst_241 = arith.constant 9.99999974E-6 : f32
    %695 = vector.broadcast %cst_241 : f32 to vector<64x1xf32>
    %696 = arith.addf %692, %695 : vector<64x1xf32>
    %697 = math.rsqrt %696 : vector<64x1xf32>
    %698 = vector.broadcast %697 : vector<64x1xf32> to vector<64x64xf32>
    %699 = arith.mulf %694, %698 : vector<64x64xf32>
    %700 = vector.broadcast %20 : vector<1x64xf32> to vector<64x64xf32>
    %701 = arith.mulf %699, %700 : vector<64x64xf32>
    %702 = vector.broadcast %21 : vector<1x64xf32> to vector<64x64xf32>
    %703 = arith.addf %701, %702 : vector<64x64xf32>
    %cst_242 = arith.constant dense<0.000000e+00> : vector<64x64xf32>
    %704 = tpu.matmul %703, %3, %cst_242 {dimension_numbers = #tpu.dot_dimension_numbers<[1], [0], [0], [1], [0, 0, 1, 1], [], []>} : vector<64x64xf32>, vector<64x64xf32>, vector<64x64xf32> -> vector<64x64xf32>
    %705 = vector.broadcast %22 : vector<1x64xf32> to vector<64x64xf32>
    %706 = arith.addf %704, %705 : vector<64x64xf32>
    %cst_243 = arith.constant 0.000000e+00 : f32
    %707 = vector.broadcast %cst_243 : f32 to vector<64x64xf32>
    %708 = arith.maximumf %706, %707 : vector<64x64xf32>
    %cst_244 = arith.constant dense<0.000000e+00> : vector<64x64xf32>
    %709 = tpu.matmul %708, %5, %cst_244 {dimension_numbers = #tpu.dot_dimension_numbers<[1], [0], [0], [1], [0, 0, 1, 1], [], []>} : vector<64x64xf32>, vector<64x64xf32>, vector<64x64xf32> -> vector<64x64xf32>
    %710 = vector.broadcast %23 : vector<1x64xf32> to vector<64x64xf32>
    %711 = arith.addf %709, %710 : vector<64x64xf32>
    %cst_245 = arith.constant dense<0.000000e+00> : vector<64xf32>
    %712 = vector.multi_reduction <add>, %711, %cst_245 [1] : vector<64x64xf32> to vector<64xf32>
    %713 = vector.shape_cast %712 : vector<64xf32> to vector<64x1xf32>
    %cst_246 = arith.constant 6.400000e+01 : f32
    %714 = vector.broadcast %cst_246 : f32 to vector<64x1xf32>
    %715 = arith.divf %713, %714 : vector<64x1xf32>
    %716 = arith.mulf %711, %711 : vector<64x64xf32>
    %cst_247 = arith.constant dense<0.000000e+00> : vector<64xf32>
    %717 = vector.multi_reduction <add>, %716, %cst_247 [1] : vector<64x64xf32> to vector<64xf32>
    %718 = vector.shape_cast %717 : vector<64xf32> to vector<64x1xf32>
    %cst_248 = arith.constant 6.400000e+01 : f32
    %719 = vector.broadcast %cst_248 : f32 to vector<64x1xf32>
    %720 = arith.divf %718, %719 : vector<64x1xf32>
    %721 = arith.mulf %715, %715 : vector<64x1xf32>
    %722 = arith.subf %720, %721 : vector<64x1xf32>
    %723 = vector.broadcast %715 : vector<64x1xf32> to vector<64x64xf32>
    %724 = arith.subf %711, %723 : vector<64x64xf32>
    %cst_249 = arith.constant 9.99999974E-6 : f32
    %725 = vector.broadcast %cst_249 : f32 to vector<64x1xf32>
    %726 = arith.addf %722, %725 : vector<64x1xf32>
    %727 = math.rsqrt %726 : vector<64x1xf32>
    %728 = vector.broadcast %727 : vector<64x1xf32> to vector<64x64xf32>
    %729 = arith.mulf %724, %728 : vector<64x64xf32>
    %730 = vector.broadcast %24 : vector<1x64xf32> to vector<64x64xf32>
    %731 = arith.mulf %729, %730 : vector<64x64xf32>
    %732 = vector.broadcast %25 : vector<1x64xf32> to vector<64x64xf32>
    %733 = arith.addf %731, %732 : vector<64x64xf32>
    %cst_250 = arith.constant dense<0.000000e+00> : vector<64x128xf32>
    %734 = tpu.matmul %733, %14, %cst_250 {dimension_numbers = #tpu.dot_dimension_numbers<[1], [0], [0], [1], [0, 0, 1, 1], [], []>} : vector<64x64xf32>, vector<64x128xf32>, vector<64x128xf32> -> vector<64x128xf32>
    %735 = vector.broadcast %17 : vector<1x128xf32> to vector<64x128xf32>
    %736 = arith.addf %734, %735 : vector<64x128xf32>
    %737 = vector.extract_strided_slice %736 {offsets = [0, 0], sizes = [64, 64], strides = [1, 1]} : vector<64x128xf32> to vector<64x64xf32>
    %738 = vector.extract_strided_slice %736 {offsets = [0, 64], sizes = [64, 64], strides = [1, 1]} : vector<64x128xf32> to vector<64x64xf32>
    %cst_251 = arith.constant dense<0.000000e+00> : vector<21xf32>
    %739 = vector.multi_reduction <add>, %667, %cst_251 [1] : vector<21x64xf32> to vector<21xf32>
    %740 = vector.shape_cast %739 : vector<21xf32> to vector<21x1xf32>
    %cst_252 = arith.constant 6.400000e+01 : f32
    %741 = vector.broadcast %cst_252 : f32 to vector<21x1xf32>
    %742 = arith.divf %740, %741 : vector<21x1xf32>
    %743 = arith.mulf %667, %667 : vector<21x64xf32>
    %cst_253 = arith.constant dense<0.000000e+00> : vector<21xf32>
    %744 = vector.multi_reduction <add>, %743, %cst_253 [1] : vector<21x64xf32> to vector<21xf32>
    %745 = vector.shape_cast %744 : vector<21xf32> to vector<21x1xf32>
    %cst_254 = arith.constant 6.400000e+01 : f32
    %746 = vector.broadcast %cst_254 : f32 to vector<21x1xf32>
    %747 = arith.divf %745, %746 : vector<21x1xf32>
    %748 = arith.mulf %742, %742 : vector<21x1xf32>
    %749 = arith.subf %747, %748 : vector<21x1xf32>
    %750 = vector.broadcast %742 : vector<21x1xf32> to vector<21x64xf32>
    %751 = arith.subf %667, %750 : vector<21x64xf32>
    %cst_255 = arith.constant 9.99999974E-6 : f32
    %752 = vector.broadcast %cst_255 : f32 to vector<21x1xf32>
    %753 = arith.addf %749, %752 : vector<21x1xf32>
    %754 = math.rsqrt %753 : vector<21x1xf32>
    %755 = vector.broadcast %754 : vector<21x1xf32> to vector<21x64xf32>
    %756 = arith.mulf %751, %755 : vector<21x64xf32>
    %757 = vector.broadcast %26 : vector<1x64xf32> to vector<21x64xf32>
    %758 = arith.mulf %756, %757 : vector<21x64xf32>
    %759 = vector.broadcast %27 : vector<1x64xf32> to vector<21x64xf32>
    %760 = arith.addf %758, %759 : vector<21x64xf32>
    %cst_256 = arith.constant dense<0.000000e+00> : vector<21x64xf32>
    %761 = tpu.matmul %760, %7, %cst_256 {dimension_numbers = #tpu.dot_dimension_numbers<[1], [0], [0], [1], [0, 0, 1, 1], [], []>} : vector<21x64xf32>, vector<64x64xf32>, vector<21x64xf32> -> vector<21x64xf32>
    %762 = vector.broadcast %30 : vector<1x64xf32> to vector<21x64xf32>
    %763 = arith.addf %761, %762 : vector<21x64xf32>
    %cst_257 = arith.constant dense<0.000000e+00> : vector<21x64xf32>
    %764 = tpu.matmul %763, %737, %cst_257 {dimension_numbers = #tpu.dot_dimension_numbers<[1], [1], [0], [0], [0, 0, 1, 0], [], []>} : vector<21x64xf32>, vector<64x64xf32>, vector<21x64xf32> -> vector<21x64xf32>
    %cst_258 = arith.constant 1.250000e-01 : f32
    %765 = vector.broadcast %cst_258 : f32 to vector<21x64xf32>
    %766 = arith.mulf %764, %765 : vector<21x64xf32>
    %cst_259 = arith.constant dense<0xFF800000> : vector<64xf32>
    %767 = vector.multi_reduction <maximumf>, %766, %cst_259 [0] : vector<21x64xf32> to vector<64xf32>
    %768 = vector.shape_cast %767 : vector<64xf32> to vector<1x64xf32>
    %769 = vector.broadcast %768 : vector<1x64xf32> to vector<21x64xf32>
    %770 = arith.subf %766, %769 : vector<21x64xf32>
    %771 = math.exp %770 : vector<21x64xf32>
    %cst_260 = arith.constant dense<0.000000e+00> : vector<64xf32>
    %772 = vector.multi_reduction <add>, %771, %cst_260 [0] : vector<21x64xf32> to vector<64xf32>
    %773 = vector.shape_cast %772 : vector<64xf32> to vector<1x64xf32>
    %774 = vector.broadcast %773 : vector<1x64xf32> to vector<21x64xf32>
    %775 = arith.divf %771, %774 : vector<21x64xf32>
    %cst_261 = arith.constant 9.99999993E-9 : f32
    %776 = vector.broadcast %cst_261 : f32 to vector<21x64xf32>
    %777 = arith.addf %775, %776 : vector<21x64xf32>
    %cst_262 = arith.constant dense<0.000000e+00> : vector<21xf32>
    %778 = vector.multi_reduction <add>, %777, %cst_262 [1] : vector<21x64xf32> to vector<21xf32>
    %779 = vector.shape_cast %778 : vector<21xf32> to vector<21x1xf32>
    %780 = tpu.reciprocal %779 {approx = true} : vector<21x1xf32> -> vector<21x1xf32>
    %781 = vector.broadcast %780 : vector<21x1xf32> to vector<21x64xf32>
    %782 = arith.mulf %777, %781 : vector<21x64xf32>
    %cst_263 = arith.constant dense<0.000000e+00> : vector<21x64xf32>
    %783 = tpu.matmul %782, %738, %cst_263 {dimension_numbers = #tpu.dot_dimension_numbers<[1], [0], [0], [1], [0, 0, 1, 1], [], []>} : vector<21x64xf32>, vector<64x64xf32>, vector<21x64xf32> -> vector<21x64xf32>
    %784 = tpu.concatenate %783, %667 in 1 : vector<21x64xf32>, vector<21x64xf32> -> vector<21x128xf32>
    %cst_264 = arith.constant dense<0.000000e+00> : vector<21x192xf32>
    %785 = tpu.matmul %784, %15, %cst_264 {dimension_numbers = #tpu.dot_dimension_numbers<[1], [0], [0], [1], [0, 0, 1, 1], [], []>} : vector<21x128xf32>, vector<128x192xf32>, vector<21x192xf32> -> vector<21x192xf32>
    %786 = vector.broadcast %18 : vector<1x192xf32> to vector<21x192xf32>
    %787 = arith.addf %785, %786 : vector<21x192xf32>
    %cst_265 = arith.constant dense<0.000000e+00> : vector<21x64xf32>
    %788 = tpu.matmul %667, %13, %cst_265 {dimension_numbers = #tpu.dot_dimension_numbers<[1], [0], [0], [1], [0, 0, 1, 1], [], []>} : vector<21x64xf32>, vector<64x64xf32>, vector<21x64xf32> -> vector<21x64xf32>
    %789 = vector.broadcast %33 : vector<1x64xf32> to vector<21x64xf32>
    %790 = arith.addf %788, %789 : vector<21x64xf32>
    %791 = vector.extract_strided_slice %787 {offsets = [0, 0], sizes = [21, 64], strides = [1, 1]} : vector<21x192xf32> to vector<21x64xf32>
    %792 = arith.negf %791 : vector<21x64xf32>
    %793 = math.exp %792 : vector<21x64xf32>
    %cst_266 = arith.constant 1.000000e+00 : f32
    %794 = vector.broadcast %cst_266 : f32 to vector<21x64xf32>
    %795 = arith.addf %794, %793 : vector<21x64xf32>
    %796 = arith.divf %794, %795 : vector<21x64xf32>
    %797 = vector.extract_strided_slice %787 {offsets = [0, 64], sizes = [21, 64], strides = [1, 1]} : vector<21x192xf32> to vector<21x64xf32>
    %798 = arith.negf %797 : vector<21x64xf32>
    %799 = math.exp %798 : vector<21x64xf32>
    %cst_267 = arith.constant 1.000000e+00 : f32
    %800 = vector.broadcast %cst_267 : f32 to vector<21x64xf32>
    %801 = arith.addf %800, %799 : vector<21x64xf32>
    %802 = arith.divf %800, %801 : vector<21x64xf32>
    %803 = vector.extract_strided_slice %787 {offsets = [0, 128], sizes = [21, 64], strides = [1, 1]} : vector<21x192xf32> to vector<21x64xf32>
    %cst_268 = arith.constant 1.000000e+00 : f32
    %804 = vector.broadcast %cst_268 : f32 to vector<21x64xf32>
    %805 = arith.subf %796, %804 : vector<21x64xf32>
    %806 = arith.mulf %805, %790 : vector<21x64xf32>
    %807 = arith.addf %803, %806 : vector<21x64xf32>
    %808 = math.tanh %807 : vector<21x64xf32>
    %cst_269 = arith.constant 1.000000e+00 : f32
    %809 = vector.broadcast %cst_269 : f32 to vector<21x64xf32>
    %810 = arith.subf %809, %802 : vector<21x64xf32>
    %811 = arith.mulf %810, %808 : vector<21x64xf32>
    %812 = arith.mulf %802, %667 : vector<21x64xf32>
    %813 = arith.addf %811, %812 : vector<21x64xf32>
    %cst_270 = arith.constant dense<0.000000e+00> : vector<21xf32>
    %814 = vector.multi_reduction <add>, %813, %cst_270 [1] : vector<21x64xf32> to vector<21xf32>
    %815 = vector.shape_cast %814 : vector<21xf32> to vector<21x1xf32>
    %cst_271 = arith.constant 6.400000e+01 : f32
    %816 = vector.broadcast %cst_271 : f32 to vector<21x1xf32>
    %817 = arith.divf %815, %816 : vector<21x1xf32>
    %818 = arith.mulf %813, %813 : vector<21x64xf32>
    %cst_272 = arith.constant dense<0.000000e+00> : vector<21xf32>
    %819 = vector.multi_reduction <add>, %818, %cst_272 [1] : vector<21x64xf32> to vector<21xf32>
    %820 = vector.shape_cast %819 : vector<21xf32> to vector<21x1xf32>
    %cst_273 = arith.constant 6.400000e+01 : f32
    %821 = vector.broadcast %cst_273 : f32 to vector<21x1xf32>
    %822 = arith.divf %820, %821 : vector<21x1xf32>
    %823 = arith.mulf %817, %817 : vector<21x1xf32>
    %824 = arith.subf %822, %823 : vector<21x1xf32>
    %825 = vector.broadcast %817 : vector<21x1xf32> to vector<21x64xf32>
    %826 = arith.subf %813, %825 : vector<21x64xf32>
    %cst_274 = arith.constant 9.99999974E-6 : f32
    %827 = vector.broadcast %cst_274 : f32 to vector<21x1xf32>
    %828 = arith.addf %824, %827 : vector<21x1xf32>
    %829 = math.rsqrt %828 : vector<21x1xf32>
    %830 = vector.broadcast %829 : vector<21x1xf32> to vector<21x64xf32>
    %831 = arith.mulf %826, %830 : vector<21x64xf32>
    %832 = vector.broadcast %28 : vector<1x64xf32> to vector<21x64xf32>
    %833 = arith.mulf %831, %832 : vector<21x64xf32>
    %834 = vector.broadcast %29 : vector<1x64xf32> to vector<21x64xf32>
    %835 = arith.addf %833, %834 : vector<21x64xf32>
    %cst_275 = arith.constant dense<0.000000e+00> : vector<21x64xf32>
    %836 = tpu.matmul %835, %9, %cst_275 {dimension_numbers = #tpu.dot_dimension_numbers<[1], [0], [0], [1], [0, 0, 1, 1], [], []>} : vector<21x64xf32>, vector<64x64xf32>, vector<21x64xf32> -> vector<21x64xf32>
    %837 = vector.broadcast %31 : vector<1x64xf32> to vector<21x64xf32>
    %838 = arith.addf %836, %837 : vector<21x64xf32>
    %cst_276 = arith.constant 0.000000e+00 : f32
    %839 = vector.broadcast %cst_276 : f32 to vector<21x64xf32>
    %840 = arith.maximumf %838, %839 : vector<21x64xf32>
    %cst_277 = arith.constant dense<0.000000e+00> : vector<21x64xf32>
    %841 = tpu.matmul %840, %11, %cst_277 {dimension_numbers = #tpu.dot_dimension_numbers<[1], [0], [0], [1], [0, 0, 1, 1], [], []>} : vector<21x64xf32>, vector<64x64xf32>, vector<21x64xf32> -> vector<21x64xf32>
    %842 = vector.broadcast %32 : vector<1x64xf32> to vector<21x64xf32>
    %843 = arith.addf %841, %842 : vector<21x64xf32>
    %844 = arith.addf %813, %843 : vector<21x64xf32>
    %845 = tpu.concatenate %844, %777 in 1 : vector<21x64xf32>, vector<21x64xf32> -> vector<21x128xf32>
    %c0_278 = arith.constant 0 : index
    %c3_279 = arith.constant 3 : index
    %c0_280 = arith.constant 0 : index
    %c0_281 = arith.constant 0 : index
    %846 = vector.load %arg10[%c0_278, %c3_279, %c0_280, %c0_281] : memref<1x4x21x128xf32, #tpu.memory_space<vmem>>, vector<1x1x21x128xf32>
    %847 = vector.shape_cast %846 : vector<1x1x21x128xf32> to vector<21x128xf32>
    %848 = vector.shape_cast %845 : vector<21x128xf32> to vector<1x1x21x128xf32>
    tpu.vector_store %arg10[%c0_278, %c3_279, %c0_280, %c0_281], %848 {strides = array<i32>} : memref<1x4x21x128xf32, #tpu.memory_space<vmem>>, vector<1x1x21x128xf32>,
    return
  }
  func.func @transform_0(%arg0: i32) -> (i32, i32, i32, i32) {
    %c0_i32 = arith.constant 0 : i32
    %c0_i32_0 = arith.constant 0 : i32
    %c0_i32_1 = arith.constant 0 : i32
    %c0_i32_2 = arith.constant 0 : i32
    return %arg0, %c0_i32, %c0_i32_0, %c0_i32_1 : i32, i32, i32, i32
  }
  func.func @transform_1(%arg0: i32) -> (i32, i32) {
    %c0_i32 = arith.constant 0 : i32
    %c0_i32_0 = arith.constant 0 : i32
    %c0_i32_1 = arith.constant 0 : i32
    return %c0_i32, %c0_i32_0 : i32, i32
  }
  func.func @transform_2(%arg0: i32) -> (i32, i32, i32) {
    %c0_i32 = arith.constant 0 : i32
    %c0_i32_0 = arith.constant 0 : i32
    %c0_i32_1 = arith.constant 0 : i32
    %c0_i32_2 = arith.constant 0 : i32
    return %c0_i32, %c0_i32_0, %c0_i32_1 : i32, i32, i32
  }
  func.func @transform_3(%arg0: i32) -> (i32, i32) {
    %c0_i32 = arith.constant 0 : i32
    %c0_i32_0 = arith.constant 0 : i32
    %c0_i32_1 = arith.constant 0 : i32
    return %c0_i32, %c0_i32_0 : i32, i32
  }
  func.func @transform_4(%arg0: i32) -> (i32, i32) {
    %c0_i32 = arith.constant 0 : i32
    %c0_i32_0 = arith.constant 0 : i32
    %c0_i32_1 = arith.constant 0 : i32
    return %c0_i32, %c0_i32_0 : i32, i32
  }
  func.func @transform_5(%arg0: i32) -> (i32, i32) {
    %c0_i32 = arith.constant 0 : i32
    %c0_i32_0 = arith.constant 0 : i32
    %c0_i32_1 = arith.constant 0 : i32
    return %c0_i32, %c0_i32_0 : i32, i32
  }
  func.func @transform_6(%arg0: i32) -> (i32, i32) {
    %c0_i32 = arith.constant 0 : i32
    %c0_i32_0 = arith.constant 0 : i32
    %c0_i32_1 = arith.constant 0 : i32
    return %c0_i32, %c0_i32_0 : i32, i32
  }
  func.func @transform_7(%arg0: i32) -> (i32, i32) {
    %c0_i32 = arith.constant 0 : i32
    %c0_i32_0 = arith.constant 0 : i32
    %c0_i32_1 = arith.constant 0 : i32
    return %c0_i32, %c0_i32_0 : i32, i32
  }
  func.func @transform_8(%arg0: i32) -> (i32, i32) {
    %c0_i32 = arith.constant 0 : i32
    %c0_i32_0 = arith.constant 0 : i32
    %c0_i32_1 = arith.constant 0 : i32
    return %c0_i32, %c0_i32_0 : i32, i32
  }
  func.func @transform_9(%arg0: i32) -> (i32, i32, i32, i32) {
    %c0_i32 = arith.constant 0 : i32
    %c0_i32_0 = arith.constant 0 : i32
    %c0_i32_1 = arith.constant 0 : i32
    %c0_i32_2 = arith.constant 0 : i32
    return %arg0, %c0_i32, %c0_i32_0, %c0_i32_1 : i32, i32, i32, i32
  }
}

</mosaic_0001>

<llo_original>
// kernel: slot_mo_forward.1
$region0: #{slot_mo_forward.1}
  #allocation0 [shape = 'u32[]', space=smem, size = 0x4, offset = 0x4, fixed_abs, tag = 'smem constant byte address 0x4 - core index']
  #allocation1 [shape = 'u32[144,128]{1,0:T(1,128)}', space=vmem, size = 0x12000, scoped, tag = 'internal scratch']
  %s0 = inlined_call_operand.hbm [shape: f32[2,4,64,64], index: 0, kind: input, shape index: {}]
  %s1 = inlined_call_operand.hbm [shape: f32[21,64], index: 1, kind: input, shape index: {}]
  %s2 = inlined_call_operand.vmem [shape: f32[7,64,64], index: 2, kind: input, shape index: {}]
  %s3 = inlined_call_operand.hbm [shape: f32[64,128], index: 3, kind: input, shape index: {}]
  %s4 = inlined_call_operand.vmem [shape: f32[128,192], index: 4, kind: input, shape index: {}]
  %s5 = inlined_call_operand.hbm [shape: f32[64,64], index: 5, kind: input, shape index: {}]
  %s6 = inlined_call_operand.vmem [shape: f32[15,64], index: 6, kind: input, shape index: {}]
  %s7 = inlined_call_operand.hbm [shape: f32[1,128], index: 7, kind: input, shape index: {}]
  %s8 = inlined_call_operand.hbm [shape: f32[1,192], index: 8, kind: input, shape index: {}]
  %s9 = inlined_call_operand.vmem [shape: f32[2,4,21,128], index: 9, kind: output, shape index: {}]
  %s10 = sld [smem:[#allocation0]]
  $region93: #{slot_mo_forward.1} parent=0
    _
  %s12 = ssub.s32 1, %s10
  %s13 = scalar_select 0, %s12, %s10
  $region1: #{slot_mo_forward.1} parent=0
    #allocation2 [shape = 'u8[262144]{0}', space=vmem, size = 0x40000, scoped, tag = 'input window, operand 0']
    #allocation3 [shape = 's32[2]{0}', space=sflag, size = 0x8, scoped, tag = 'scoped memory for slot_mo_forward.1']
    #allocation4 [shape = 'u8[12288]{0}', space=vmem, size = 0x3000, scoped, tag = 'input window, operand 1, single buffered']
    #allocation5 [shape = 's32[1]{0}', space=sflag, size = 0x4, scoped, tag = 'scoped memory for slot_mo_forward.1']
    #allocation6 [shape = 'u8[32768]{0}', space=vmem, size = 0x8000, scoped, tag = 'input window, operand 3, single buffered']
    #allocation7 [shape = 'u8[32768]{0}', space=vmem, size = 0x8000, scoped, tag = 'input window, operand 5, single buffered']
    #allocation8 [shape = 's32[1]{0}', space=sflag, size = 0x4, scoped, tag = 'scoped memory for slot_mo_forward.1']
    #allocation9 [shape = 'u8[512]{0}', space=vmem, size = 0x400, scoped, tag = 'input window, operand 7, single buffered']
    #allocation10 [shape = 'u8[1024]{0}', space=vmem, size = 0x400, scoped, tag = 'input window, operand 8, single buffered']
    #allocation11 [shape = 's32[1]{0}', space=sflag, size = 0x4, scoped, tag = 'scoped memory for slot_mo_forward.1']
    %14 = vsyncpa [#allocation3], 0
    %s15 = scalar_lea.sflag [#allocation3], 1
    %16 = vsyncpa %s15, 0
    %17 = vsyncpa [#allocation5], 0
    %18 = vsyncpa [#allocation8], 0
    %19 = vsyncpa [#allocation11], 0
    loop: start=0, step=1, limit=4
    $region2: #{slot_mo_forward.1} parent=1 // loop_pre_header
      _
    $region3: #{slot_mo_forward.1} parent=1 // loop_header
      %s21 = sphi 0, %s25
      %p22 = scmp.ge.s32.totalorder %s21, 4
      %s31 = sphi 0, %s33
      %s34 = sphi 0, %s31
      %s35 = sphi 0, %s34
      %s51 = sphi 0, %s35
      %s55 = sphi 0, %s55
      %s57 = sphi 0, %s55
      %s58 = sphi 0, %s57
      %s72 = sphi 0, %s58
      %s76 = sphi 0, %s76
      %s78 = sphi 0, %s76
      %s79 = sphi 0, %s78
      %s93 = sphi 0, %s79
      %s97 = sphi 0, %s97
      %s99 = sphi 0, %s97
      %s100 = sphi 0, %s99
      %s114 = sphi 0, %s100
      %s118 = sphi 0, %s118
      %s120 = sphi 0, %s118
      %s121 = sphi 0, %s120
      %s135 = sphi 0, %s121
      %s139 = sphi 0, %s139
      %s141 = sphi 0, %s139
      %s142 = sphi 0, %s141
      %s156 = sphi 0, %s142
      %s160 = sphi 0, %s160
      %s162 = sphi 0, %s160
      %s163 = sphi 0, %s162
      %s177 = sphi 0, %s163
      %s181 = sphi 0, %s181
      %s183 = sphi 0, %s181
      %s184 = sphi 0, %s183
      %s198 = sphi 0, %s184
      %s202 = sphi 0, %s202
      %s204 = sphi 0, %s202
      %s205 = sphi 0, %s204
      %s219 = sphi 0, %s205
      %s225 = sphi 0, %s227
      %s228 = sphi 0, %s225
      %s229 = sphi 0, %s228
      %s245 = sphi 0, %s229
    $region4: #{slot_mo_forward.1} parent=1 // loop_header_branch
      %24 = sbr.rel (%p22) target = $region8
    $region5: #{slot_mo_forward.1} parent=1 // loop_body
      %s26 = ssub.s32 %s21, 1
      %s27 = ssub.s32 %s21, 2
      %s28 = sadd.s32 %s21, 1
      %s29 = ssub.s32 %s21, %s28
      %p30 = scmp.eq.s32.totalorder %s29, 0
      %s32 = sadd.s32 %s31, 1
      %s33 = scalar_select %p30, %s31, %s32
      %p36 = pneg %p30
      %p37 = scmp.eq.s32.totalorder %s21, 1
      %p38 = por %p36, %p37
      %p39 = scmp.ne.s32.totalorder %s31, %s34
      %p40 = scmp.eq.s32.totalorder %s21, 0
      %p41 = por %p39, %p40
      %p42 = scmp.ne.s32.totalorder %s31, %s34
      %p43 = scmp.eq.s32.totalorder %s26, 1
      %p44 = por %p42, %p43
      %p45 = scmp.ne.s32.totalorder %s34, %s35
      %p46 = scmp.eq.s32.totalorder %s26, 0
      %p47 = por %p45, %p46
      %p48 = scmp.ne.s32.totalorder %s34, %s35
      %p49 = scmp.eq.s32.totalorder %s27, 1
      %p50 = por %p48, %p49
      %p52 = scmp.ne.s32.totalorder %s35, %s51
      %p53 = scmp.eq.s32.totalorder %s27, 0
      %p54 = por %p52, %p53
      %s56 = sadd.s32 %s55, 1
      %p59 = scmp.eq.s32.totalorder %s21, 1
      %p60 = scmp.ne.s32.totalorder %s55, %s57
      %p61 = scmp.eq.s32.totalorder %s21, 0
      %p62 = por %p60, %p61
      %p63 = scmp.ne.s32.totalorder %s55, %s57
      %p64 = scmp.eq.s32.totalorder %s26, 1
      %p65 = por %p63, %p64
      %p66 = scmp.ne.s32.totalorder %s57, %s58
      %p67 = scmp.eq.s32.totalorder %s26, 0
      %p68 = por %p66, %p67
      %p69 = scmp.ne.s32.totalorder %s57, %s58
      %p70 = scmp.eq.s32.totalorder %s27, 1
      %p71 = por %p69, %p70
      %p73 = scmp.ne.s32.totalorder %s58, %s72
      %p74 = scmp.eq.s32.totalorder %s27, 0
      %p75 = por %p73, %p74
      %s77 = sadd.s32 %s76, 1
      %p80 = scmp.eq.s32.totalorder %s21, 1
      %p81 = scmp.ne.s32.totalorder %s76, %s78
      %p82 = scmp.eq.s32.totalorder %s21, 0
      %p83 = por %p81, %p82
      %p84 = scmp.ne.s32.totalorder %s76, %s78
      %p85 = scmp.eq.s32.totalorder %s26, 1
      %p86 = por %p84, %p85
      %p87 = scmp.ne.s32.totalorder %s78, %s79
      %p88 = scmp.eq.s32.totalorder %s26, 0
      %p89 = por %p87, %p88
      %p90 = scmp.ne.s32.totalorder %s78, %s79
      %p91 = scmp.eq.s32.totalorder %s27, 1
      %p92 = por %p90, %p91
      %p94 = scmp.ne.s32.totalorder %s79, %s93
      %p95 = scmp.eq.s32.totalorder %s27, 0
      %p96 = por %p94, %p95
      %s98 = sadd.s32 %s97, 1
      %p101 = scmp.eq.s32.totalorder %s21, 1
      %p102 = scmp.ne.s32.totalorder %s97, %s99
      %p103 = scmp.eq.s32.totalorder %s21, 0
      %p104 = por %p102, %p103
      %p105 = scmp.ne.s32.totalorder %s97, %s99
      %p106 = scmp.eq.s32.totalorder %s26, 1
      %p107 = por %p105, %p106
      %p108 = scmp.ne.s32.totalorder %s99, %s100
      %p109 = scmp.eq.s32.totalorder %s26, 0
      %p110 = por %p108, %p109
      %p111 = scmp.ne.s32.totalorder %s99, %s100
      %p112 = scmp.eq.s32.totalorder %s27, 1
      %p113 = por %p111, %p112
      %p115 = scmp.ne.s32.totalorder %s100, %s114
      %p116 = scmp.eq.s32.totalorder %s27, 0
      %p117 = por %p115, %p116
      %s119 = sadd.s32 %s118, 1
      %p122 = scmp.eq.s32.totalorder %s21, 1
      %p123 = scmp.ne.s32.totalorder %s118, %s120
      %p124 = scmp.eq.s32.totalorder %s21, 0
      %p125 = por %p123, %p124
      %p126 = scmp.ne.s32.totalorder %s118, %s120
      %p127 = scmp.eq.s32.totalorder %s26, 1
      %p128 = por %p126, %p127
      %p129 = scmp.ne.s32.totalorder %s120, %s121
      %p130 = scmp.eq.s32.totalorder %s26, 0
      %p131 = por %p129, %p130
      %p132 = scmp.ne.s32.totalorder %s120, %s121
      %p133 = scmp.eq.s32.totalorder %s27, 1
      %p134 = por %p132, %p133
      %p136 = scmp.ne.s32.totalorder %s121, %s135
      %p137 = scmp.eq.s32.totalorder %s27, 0
      %p138 = por %p136, %p137
      %s140 = sadd.s32 %s139, 1
      %p143 = scmp.eq.s32.totalorder %s21, 1
      %p144 = scmp.ne.s32.totalorder %s139, %s141
      %p145 = scmp.eq.s32.totalorder %s21, 0
      %p146 = por %p144, %p145
      %p147 = scmp.ne.s32.totalorder %s139, %s141
      %p148 = scmp.eq.s32.totalorder %s26, 1
      %p149 = por %p147, %p148
      %p150 = scmp.ne.s32.totalorder %s141, %s142
      %p151 = scmp.eq.s32.totalorder %s26, 0
      %p152 = por %p150, %p151
      %p153 = scmp.ne.s32.totalorder %s141, %s142
      %p154 = scmp.eq.s32.totalorder %s27, 1
      %p155 = por %p153, %p154
      %p157 = scmp.ne.s32.totalorder %s142, %s156
      %p158 = scmp.eq.s32.totalorder %s27, 0
      %p159 = por %p157, %p158
      %s161 = sadd.s32 %s160, 1
      %p164 = scmp.eq.s32.totalorder %s21, 1
      %p165 = scmp.ne.s32.totalorder %s160, %s162
      %p166 = scmp.eq.s32.totalorder %s21, 0
      %p167 = por %p165, %p166
      %p168 = scmp.ne.s32.totalorder %s160, %s162
      %p169 = scmp.eq.s32.totalorder %s26, 1
      %p170 = por %p168, %p169
      %p171 = scmp.ne.s32.totalorder %s162, %s163
      %p172 = scmp.eq.s32.totalorder %s26, 0
      %p173 = por %p171, %p172
      %p174 = scmp.ne.s32.totalorder %s162, %s163
      %p175 = scmp.eq.s32.totalorder %s27, 1
      %p176 = por %p174, %p175
      %p178 = scmp.ne.s32.totalorder %s163, %s177
      %p179 = scmp.eq.s32.totalorder %s27, 0
      %p180 = por %p178, %p179
      %s182 = sadd.s32 %s181, 1
      %p185 = scmp.eq.s32.totalorder %s21, 1
      %p186 = scmp.ne.s32.totalorder %s181, %s183
      %p187 = scmp.eq.s32.totalorder %s21, 0
      %p188 = por %p186, %p187
      %p189 = scmp.ne.s32.totalorder %s181, %s183
      %p190 = scmp.eq.s32.totalorder %s26, 1
      %p191 = por %p189, %p190
      %p192 = scmp.ne.s32.totalorder %s183, %s184
      %p193 = scmp.eq.s32.totalorder %s26, 0
      %p194 = por %p192, %p193
      %p195 = scmp.ne.s32.totalorder %s183, %s184
      %p196 = scmp.eq.s32.totalorder %s27, 1
      %p197 = por %p195, %p196
      %p199 = scmp.ne.s32.totalorder %s184, %s198
      %p200 = scmp.eq.s32.totalorder %s27, 0
      %p201 = por %p199, %p200
      %s203 = sadd.s32 %s202, 1
      %p206 = scmp.eq.s32.totalorder %s21, 1
      %p207 = scmp.ne.s32.totalorder %s202, %s204
      %p208 = scmp.eq.s32.totalorder %s21, 0
      %p209 = por %p207, %p208
      %p210 = scmp.ne.s32.totalorder %s202, %s204
      %p211 = scmp.eq.s32.totalorder %s26, 1
      %p212 = por %p210, %p211
      %p213 = scmp.ne.s32.totalorder %s204, %s205
      %p214 = scmp.eq.s32.totalorder %s26, 0
      %p215 = por %p213, %p214
      %p216 = scmp.ne.s32.totalorder %s204, %s205
      %p217 = scmp.eq.s32.totalorder %s27, 1
      %p218 = por %p216, %p217
      %p220 = scmp.ne.s32.totalorder %s205, %s219
      %p221 = scmp.eq.s32.totalorder %s27, 0
      %p222 = por %p220, %p221
      %s223 = ssub.s32 %s21, %s28
      %p224 = scmp.eq.s32.totalorder %s223, 0
      %s226 = sadd.s32 %s225, 1
      %s227 = scalar_select %p224, %s225, %s226
      %p230 = pneg %p224
      %p231 = scmp.eq.s32.totalorder %s21, 1
      %p232 = por %p230, %p231
      %p233 = scmp.ne.s32.totalorder %s225, %s228
      %p234 = scmp.eq.s32.totalorder %s21, 0
      %p235 = por %p233, %p234
      %p236 = scmp.ne.s32.totalorder %s225, %s228
      %p237 = scmp.eq.s32.totalorder %s26, 1
      %p238 = por %p236, %p237
      %p239 = scmp.ne.s32.totalorder %s228, %s229
      %p240 = scmp.eq.s32.totalorder %s26, 0
      %p241 = por %p239, %p240
      %p242 = scmp.ne.s32.totalorder %s228, %s229
      %p243 = scmp.eq.s32.totalorder %s27, 1
      %p244 = por %p242, %p243
      %p246 = scmp.ne.s32.totalorder %s229, %s245
      %p247 = scmp.eq.s32.totalorder %s27, 0
      %p248 = por %p246, %p247
      %p249 = scmp.le.s32.totalorder 1, %s21
      %p250 = scmp.lt.s32.totalorder %s21, 3
      %p251 = pnand %p249, %p250
      %p252 = pneg %p251
      // Predicated region
      $region9: #{slot_mo_forward.1} parent=5 // pred_check
        _
      $region10: #{slot_mo_forward.1} parent=5 // pred_check_branch
        %254 = sbr.rel (%p251) target = $region12
      $region11: #{slot_mo_forward.1} parent=5 // pred_region
        %s255 = ssub.s32 %s21, 1
        // Predicated region
        $region13: #{slot_mo_forward.1} parent=11 // pred_check
          %p256 = pneg %p68
        $region14: #{slot_mo_forward.1} parent=11 // pred_check_branch
          %258 = sbr.rel (%p256) target = $region16
        $region15: #{slot_mo_forward.1} parent=11 // pred_region
          %s260 = ssub.s32 384, 384
          %261 = vsyncadd [#allocation5], %s260
          %s262 = sshll.u32 [#allocation4], 4
          %s263 = int_to_ptr.vmem [resolvable:$true] %s262
          %268 = dma.hbm_to_vmem [thread:$0]  %s1, 384, %s263, [#allocation5], 128, 128, 8
        $region16: #{slot_mo_forward.1} parent=11 // pred_fallthru
          _
        // Predicated region
        $region17: #{slot_mo_forward.1} parent=11 // pred_check
          %p269 = pneg %p89
        $region18: #{slot_mo_forward.1} parent=11 // pred_check_branch
          %271 = sbr.rel (%p269) target = $region20
        $region19: #{slot_mo_forward.1} parent=11 // pred_region
          _
        $region20: #{slot_mo_forward.1} parent=11 // pred_fallthru
          _
        // Predicated region
        $region21: #{slot_mo_forward.1} parent=11 // pred_check
          %p272 = pneg %p110
        $region22: #{slot_mo_forward.1} parent=11 // pred_check_branch
          %274 = sbr.rel (%p272) target = $region24
        $region23: #{slot_mo_forward.1} parent=11 // pred_region
          %s276 = ssub.s32 1024, 1024
          %277 = vsyncadd [#allocation5], %s276
          %s278 = sshll.u32 [#allocation6], 4
          %s279 = int_to_ptr.vmem [resolvable:$true] %s278
          %284 = dma.hbm_to_vmem [thread:$0]  %s3, 1024, %s279, [#allocation5], 128, 128, 8
        $region24: #{slot_mo_forward.1} parent=11 // pred_fallthru
          _
        // Predicated region
        $region25: #{slot_mo_forward.1} parent=11 // pred_check
          %p285 = pneg %p131
        $region26: #{slot_mo_forward.1} parent=11 // pred_check_branch
          %287 = sbr.rel (%p285) target = $region28
        $region27: #{slot_mo_forward.1} parent=11 // pred_region
          _
        $region28: #{slot_mo_forward.1} parent=11 // pred_fallthru
          _
        // Predicated region
        $region29: #{slot_mo_forward.1} parent=11 // pred_check
          %p288 = pneg %p152
        $region30: #{slot_mo_forward.1} parent=11 // pred_check_branch
          %290 = sbr.rel (%p288) target = $region32
        $region31: #{slot_mo_forward.1} parent=11 // pred_region
          %s292 = ssub.s32 1024, 1024
          %293 = vsyncadd [#allocation8], %s292
          %s294 = sshll.u32 [#allocation7], 4
          %s295 = int_to_ptr.vmem [resolvable:$true] %s294
          %300 = dma.hbm_to_vmem [thread:$0]  %s5, 1024, %s295, [#allocation8], 128, 128, 8
        $region32: #{slot_mo_forward.1} parent=11 // pred_fallthru
          _
        // Predicated region
        $region33: #{slot_mo_forward.1} parent=11 // pred_check
          %p301 = pneg %p173
        $region34: #{slot_mo_forward.1} parent=11 // pred_check_branch
          %303 = sbr.rel (%p301) target = $region36
        $region35: #{slot_mo_forward.1} parent=11 // pred_region
          _
        $region36: #{slot_mo_forward.1} parent=11 // pred_fallthru
          _
        // Predicated region
        $region37: #{slot_mo_forward.1} parent=11 // pred_check
          %p304 = pneg %p194
        $region38: #{slot_mo_forward.1} parent=11 // pred_check_branch
          %306 = sbr.rel (%p304) target = $region40
        $region39: #{slot_mo_forward.1} parent=11 // pred_region
          %s308 = ssub.s32 16, 16
          %309 = vsyncadd [#allocation8], %s308
          %s311 = sshll.u32 [#allocation9], 4
          %s312 = int_to_ptr.vmem [resolvable:$true] %s311
          %314 = dma.hbm_to_vmem [thread:$0]  %s7, 16, %s312, [#allocation8]
        $region40: #{slot_mo_forward.1} parent=11 // pred_fallthru
          _
        // Predicated region
        $region41: #{slot_mo_forward.1} parent=11 // pred_check
          %p315 = pneg %p215
        $region42: #{slot_mo_forward.1} parent=11 // pred_check_branch
          %317 = sbr.rel (%p315) target = $region44
        $region43: #{slot_mo_forward.1} parent=11 // pred_region
          %s319 = ssub.s32 32, 32
          %320 = vsyncadd [#allocation11], %s319
          %s322 = sshll.u32 [#allocation10], 4
          %s323 = int_to_ptr.vmem [resolvable:$true] %s322
          %325 = dma.hbm_to_vmem [thread:$0]  %s8, 32, %s323, [#allocation11]
        $region44: #{slot_mo_forward.1} parent=11 // pred_fallthru
          _
      $region12: #{slot_mo_forward.1} parent=5 // pred_fallthru
        _
      %p326 = scmp.lt.s32.totalorder %s21, 2
      // Predicated region
      $region45: #{slot_mo_forward.1} parent=5 // pred_check
        %p327 = pneg %p326
      $region46: #{slot_mo_forward.1} parent=5 // pred_check_branch
        %329 = sbr.rel (%p327) target = $region48
      $region47: #{slot_mo_forward.1} parent=5 // pred_region
        // Predicated region
        $region49: #{slot_mo_forward.1} parent=47 // pred_check
          %p330 = pneg %p41
        $region50: #{slot_mo_forward.1} parent=47 // pred_check_branch
          %332 = sbr.rel (%p330) target = $region52
        $region51: #{slot_mo_forward.1} parent=47 // pred_region
          %s333 = sand.u32 %s31, 1
          %s334 = scalar_lea.sflag [#allocation3], %s333
          %s335 = sand.u32 %s31, 1
          %s336 = smul.addr %s335, 256
          %s337 = scalar_lea.vmem [#allocation2], %s336
          %s339 = ssub.s32 4096, 4096
          %340 = vsyncadd %s334, %s339
          %s341 = smul.addr %s21, 32
          %s342 = smul.addr %s341, 128
          %s343 = scalar_lea.hbm %s0, %s342
          %s344 = sshll.u32 %s337, 4
          %s345 = int_to_ptr.vmem [resolvable:$true] %s344
          %350 = dma.hbm_to_vmem [thread:$0]  %s343, 4096, %s345, %s334, 128, 128, 8
        $region52: #{slot_mo_forward.1} parent=47 // pred_fallthru
          _
      $region48: #{slot_mo_forward.1} parent=5 // pred_fallthru
        _
      %p351 = scmp.le.s32.totalorder 1, %s21
      %p352 = scmp.lt.s32.totalorder %s21, 3
      %p353 = pnand %p351, %p352
      %p354 = pneg %p353
      // Predicated region
      $region53: #{slot_mo_forward.1} parent=5 // pred_check
        _
      $region54: #{slot_mo_forward.1} parent=5 // pred_check_branch
        %356 = sbr.rel (%p353) target = $region56
      $region55: #{slot_mo_forward.1} parent=5 // pred_region
        %s357 = ssub.s32 %s21, 1
        %s358 = sand.u32 %s34, 1
        %s359 = scalar_lea.sflag [#allocation3], %s358
        %s360 = sand.u32 %s34, 1
        %s361 = smul.addr %s360, 256
        %s362 = scalar_lea.vmem [#allocation2], %s361
        // Predicated region
        $region57: #{slot_mo_forward.1} parent=55 // pred_check
          %p363 = pneg %p47
        $region58: #{slot_mo_forward.1} parent=55 // pred_check_branch
          %365 = sbr.rel (%p363) target = $region60
        $region59: #{slot_mo_forward.1} parent=55 // pred_region
          %366 = dma.done %s359, 4096
        $region60: #{slot_mo_forward.1} parent=55 // pred_fallthru
          _
        // Predicated region
        $region61: #{slot_mo_forward.1} parent=55 // pred_check
          %p367 = pneg %p68
        $region62: #{slot_mo_forward.1} parent=55 // pred_check_branch
          %369 = sbr.rel (%p367) target = $region64
        $region63: #{slot_mo_forward.1} parent=55 // pred_region
          %370 = dma.done [#allocation5], 384
        $region64: #{slot_mo_forward.1} parent=55 // pred_fallthru
          _
        // Predicated region
        $region65: #{slot_mo_forward.1} parent=55 // pred_check
          %p371 = pneg %p110
        $region66: #{slot_mo_forward.1} parent=55 // pred_check_branch
          %373 = sbr.rel (%p371) target = $region68
        $region67: #{slot_mo_forward.1} parent=55 // pred_region
          %374 = dma.done [#allocation5], 1024
        $region68: #{slot_mo_forward.1} parent=55 // pred_fallthru
          _
        // Predicated region
        $region69: #{slot_mo_forward.1} parent=55 // pred_check
          %p375 = pneg %p152
        $region70: #{slot_mo_forward.1} parent=55 // pred_check_branch
          %377 = sbr.rel (%p375) target = $region72
        $region71: #{slot_mo_forward.1} parent=55 // pred_region
          %378 = dma.done [#allocation8], 1024
        $region72: #{slot_mo_forward.1} parent=55 // pred_fallthru
          _
        // Predicated region
        $region73: #{slot_mo_forward.1} parent=55 // pred_check
          %p379 = pneg %p194
        $region74: #{slot_mo_forward.1} parent=55 // pred_check_branch
          %381 = sbr.rel (%p379) target = $region76
        $region75: #{slot_mo_forward.1} parent=55 // pred_region
          %382 = dma.done [#allocation8], 16
        $region76: #{slot_mo_forward.1} parent=55 // pred_fallthru
          _
        // Predicated region
        $region77: #{slot_mo_forward.1} parent=55 // pred_check
          %p383 = pneg %p215
        $region78: #{slot_mo_forward.1} parent=55 // pred_check_branch
          %385 = sbr.rel (%p383) target = $region80
        $region79: #{slot_mo_forward.1} parent=55 // pred_region
          %386 = dma.done [#allocation11], 32
        $region80: #{slot_mo_forward.1} parent=55 // pred_fallthru
          _
        %s387 = sand.u32 %s34, 1
        %s388 = scalar_lea.sflag [#allocation3], %s387
        %s389 = sand.u32 %s34, 1
        %s390 = smul.addr %s389, 256
        %s391 = scalar_lea.vmem [#allocation2], %s390
        %p392 = pneg %p47
        %p393 = pneg %p44
        %p394 = pneg %p68
        %p395 = pneg %p65
        %p396 = pneg %p89
        %p397 = pneg %p86
        %p398 = pneg %p110
        %p399 = pneg %p107
        %p400 = pneg %p131
        %p401 = pneg %p128
        %p402 = pneg %p152
        %p403 = pneg %p149
        %p404 = pneg %p173
        %p405 = pneg %p170
        %p406 = pneg %p194
        %p407 = pneg %p191
        %p408 = pneg %p215
        %p409 = pneg %p212
        %p410 = pneg %p241
        %p411 = pneg %p238
        %p412 = scmp.lt.s32.totalorder %s26, 1
        %s413 = scalar_select %p412, %s26, 1
        %s414 = smul.addr %s413, 12
        %s415 = smul.addr %s414, 8
        %s416 = scalar_lea.vmem %s9, %s415
        %p417 = scmp.lt.s32.totalorder %s26, 1
        %s418 = scalar_select %p417, %s26, 1
        %s419 = smul.addr %s418, 12
        %s420 = smul.addr %s419, 8
        %s421 = scalar_lea.vmem %s9, %s420
        %v422 = vld [vmem:[%s2] sm:$0xff]
        %v423 = vld [vmem:[%s2 + $0x8] sm:$0xff]
        %v424 = vld [vmem:[%s2 + $0x10] sm:$0xff]
        %v425 = vld [vmem:[%s2 + $0x18] sm:$0xff]
        %v426 = vld [vmem:[%s2 + $0x20] sm:$0xff]
        %v427 = vld [vmem:[%s2 + $0x28] sm:$0xff]
        %v428 = vld [vmem:[%s2 + $0x30] sm:$0xff]
        %v429 = vld [vmem:[%s2 + $0x38] sm:$0xff]
        %s430 = scalar_lea.vmem %s2, 64
        %v431 = vld [vmem:[%s430] sm:$0xff]
        %v432 = vld [vmem:[%s430 + $0x8] sm:$0xff]
        %v433 = vld [vmem:[%s430 + $0x10] sm:$0xff]
        %v434 = vld [vmem:[%s430 + $0x18] sm:$0xff]
        %v435 = vld [vmem:[%s430 + $0x20] sm:$0xff]
        %v436 = vld [vmem:[%s430 + $0x28] sm:$0xff]
        %v437 = vld [vmem:[%s430 + $0x30] sm:$0xff]
        %v438 = vld [vmem:[%s430 + $0x38] sm:$0xff]
        %s439 = scalar_lea.vmem %s2, 128
        %v440 = vld [vmem:[%s439] sm:$0xff]
        %v441 = vld [vmem:[%s439 + $0x8] sm:$0xff]
        %v442 = vld [vmem:[%s439 + $0x10] sm:$0xff]
        %v443 = vld [vmem:[%s439 + $0x18] sm:$0xff]
        %v444 = vld [vmem:[%s439 + $0x20] sm:$0xff]
        %v445 = vld [vmem:[%s439 + $0x28] sm:$0xff]
        %v446 = vld [vmem:[%s439 + $0x30] sm:$0xff]
        %v447 = vld [vmem:[%s439 + $0x38] sm:$0xff]
        %s448 = scalar_lea.vmem %s2, 192
        %v449 = vld [vmem:[%s448] sm:$0xff]
        %v450 = vld [vmem:[%s448 + $0x8] sm:$0xff]
        %v451 = vld [vmem:[%s448 + $0x10] sm:$0xff]
        %v452 = vld [vmem:[%s448 + $0x18] sm:$0xff]
        %v453 = vld [vmem:[%s448 + $0x20] sm:$0xff]
        %v454 = vld [vmem:[%s448 + $0x28] sm:$0xff]
        %v455 = vld [vmem:[%s448 + $0x30] sm:$0xff]
        %v456 = vld [vmem:[%s448 + $0x38] sm:$0xff]
        %s457 = scalar_lea.vmem %s2, 256
        %v458 = vld [vmem:[%s457] sm:$0xff]
        %v459 = vld [vmem:[%s457 + $0x8] sm:$0xff]
        %v460 = vld [vmem:[%s457 + $0x10] sm:$0xff]
        %v461 = vld [vmem:[%s457 + $0x18] sm:$0xff]
        %v462 = vld [vmem:[%s457 + $0x20] sm:$0xff]
        %v463 = vld [vmem:[%s457 + $0x28] sm:$0xff]
        %v464 = vld [vmem:[%s457 + $0x30] sm:$0xff]
        %v465 = vld [vmem:[%s457 + $0x38] sm:$0xff]
        %s466 = scalar_lea.vmem %s2, 320
        %v467 = vld [vmem:[%s466] sm:$0xff]
        %v468 = vld [vmem:[%s466 + $0x8] sm:$0xff]
        %v469 = vld [vmem:[%s466 + $0x10] sm:$0xff]
        %v470 = vld [vmem:[%s466 + $0x18] sm:$0xff]
        %v471 = vld [vmem:[%s466 + $0x20] sm:$0xff]
        %v472 = vld [vmem:[%s466 + $0x28] sm:$0xff]
        %v473 = vld [vmem:[%s466 + $0x30] sm:$0xff]
        %v474 = vld [vmem:[%s466 + $0x38] sm:$0xff]
        %s475 = scalar_lea.vmem %s2, 384
        %v476 = vld [vmem:[%s475] sm:$0xff]
        %v477 = vld [vmem:[%s475 + $0x8] sm:$0xff]
        %v478 = vld [vmem:[%s475 + $0x10] sm:$0xff]
        %v479 = vld [vmem:[%s475 + $0x18] sm:$0xff]
        %v480 = vld [vmem:[%s475 + $0x20] sm:$0xff]
        %v481 = vld [vmem:[%s475 + $0x28] sm:$0xff]
        %v482 = vld [vmem:[%s475 + $0x30] sm:$0xff]
        %v483 = vld [vmem:[%s475 + $0x38] sm:$0xff]
        %v484 = vld [vmem:[#allocation6] sm:$0xff]
        %v485 = vld [vmem:[#allocation6 + $0x8] sm:$0xff]
        %v486 = vld [vmem:[#allocation6 + $0x10] sm:$0xff]
        %v487 = vld [vmem:[#allocation6 + $0x18] sm:$0xff]
        %v488 = vld [vmem:[#allocation6 + $0x20] sm:$0xff]
        %v489 = vld [vmem:[#allocation6 + $0x28] sm:$0xff]
        %v490 = vld [vmem:[#allocation6 + $0x30] sm:$0xff]
        %v491 = vld [vmem:[#allocation6 + $0x38] sm:$0xff]
        %v492 = vld [vmem:[%s4] sm:$0xff]
        %v493 = vld [vmem:[%s4 + $0x8] sm:$0xff]
        %v494 = vld [vmem:[%s4 + $0x10] sm:$0xff]
        %v495 = vld [vmem:[%s4 + $0x18] sm:$0xff]
        %v496 = vld [vmem:[%s4 + $0x20] sm:$0xff]
        %v497 = vld [vmem:[%s4 + $0x28] sm:$0xff]
        %v498 = vld [vmem:[%s4 + $0x30] sm:$0xff]
        %v499 = vld [vmem:[%s4 + $0x38] sm:$0xff]
        %v500 = vld [vmem:[%s4 + $0x40] sm:$0xff]
        %v501 = vld [vmem:[%s4 + $0x48] sm:$0xff]
        %v502 = vld [vmem:[%s4 + $0x50] sm:$0xff]
        %v503 = vld [vmem:[%s4 + $0x58] sm:$0xff]
        %v504 = vld [vmem:[%s4 + $0x60] sm:$0xff]
        %v505 = vld [vmem:[%s4 + $0x68] sm:$0xff]
        %v506 = vld [vmem:[%s4 + $0x70] sm:$0xff]
        %v507 = vld [vmem:[%s4 + $0x78] sm:$0xff]
        %v508 = vld [vmem:[%s4 + $0x80] sm:$0xff]
        %v509 = vld [vmem:[%s4 + $0x88] sm:$0xff]
        %v510 = vld [vmem:[%s4 + $0x90] sm:$0xff]
        %v511 = vld [vmem:[%s4 + $0x98] sm:$0xff]
        %v512 = vld [vmem:[%s4 + $0xa0] sm:$0xff]
        %v513 = vld [vmem:[%s4 + $0xa8] sm:$0xff]
        %v514 = vld [vmem:[%s4 + $0xb0] sm:$0xff]
        %v515 = vld [vmem:[%s4 + $0xb8] sm:$0xff]
        %v516 = vld [vmem:[%s4 + $0xc0] sm:$0xff]
        %v517 = vld [vmem:[%s4 + $0xc8] sm:$0xff]
        %v518 = vld [vmem:[%s4 + $0xd0] sm:$0xff]
        %v519 = vld [vmem:[%s4 + $0xd8] sm:$0xff]
        %v520 = vld [vmem:[%s4 + $0xe0] sm:$0xff]
        %v521 = vld [vmem:[%s4 + $0xe8] sm:$0xff]
        %v522 = vld [vmem:[%s4 + $0xf0] sm:$0xff]
        %v523 = vld [vmem:[%s4 + $0xf8] sm:$0xff]
        %v524 = vld [vmem:[#allocation7] sm:$0xff]
        %v525 = vld [vmem:[#allocation7 + $0x8] sm:$0xff]
        %v526 = vld [vmem:[#allocation7 + $0x10] sm:$0xff]
        %v527 = vld [vmem:[#allocation7 + $0x18] sm:$0xff]
        %v528 = vld [vmem:[#allocation7 + $0x20] sm:$0xff]
        %v529 = vld [vmem:[#allocation7 + $0x28] sm:$0xff]
        %v530 = vld [vmem:[#allocation7 + $0x30] sm:$0xff]
        %v531 = vld [vmem:[#allocation7 + $0x38] sm:$0xff]
        %v532 = vld [vmem:[#allocation9] sm:$0x1]
        %v533 = vld [vmem:[#allocation10] sm:$0x3]
        %v534 = vld [vmem:[%s6] sm:$0x1]
        %v535 = vld [vmem:[%s6 + $0x1] sm:$0x1]
        %v536 = vld [vmem:[%s6 + $0x2] sm:$0x1]
        %v537 = vld [vmem:[%s6 + $0x3] sm:$0x1]
        %v538 = vld [vmem:[%s6 + $0x4] sm:$0x1]
        %v539 = vld [vmem:[%s6 + $0x5] sm:$0x1]
        %v540 = vld [vmem:[%s6 + $0x6] sm:$0x1]
        %v541 = vld [vmem:[%s6 + $0x7] sm:$0x1]
        %v542 = vld [vmem:[%s6 + $0x8] sm:$0x1]
        %v543 = vld [vmem:[%s6 + $0xa] sm:$0x1]
        %v544 = vld [vmem:[%s6 + $0xb] sm:$0x1]
        %v545 = vld [vmem:[%s6 + $0x9] sm:$0x1]
        %v546 = vld [vmem:[%s6 + $0xc] sm:$0x1]
        %v547 = vld [vmem:[%s6 + $0xd] sm:$0x1]
        %v548 = vld [vmem:[%s6 + $0xe] sm:$0x1]
        %v549 = vld [vmem:[#allocation4] sm:$0xff]
        %v550 = vld [vmem:[#allocation4 + $0x8] sm:$0xff]
        %v551 = vld [vmem:[#allocation4 + $0x10] sm:$0x1f]
        %v552 = vld [vmem:[%s362] sm:$0xff]
        %v553 = vld [vmem:[%s362 + $0x8] sm:$0xff]
        %v554 = vld [vmem:[%s362 + $0x10] sm:$0xff]
        %v555 = vld [vmem:[%s362 + $0x18] sm:$0xff]
        %v556 = vld [vmem:[%s362 + $0x20] sm:$0xff]
        %v557 = vld [vmem:[%s362 + $0x28] sm:$0xff]
        %v558 = vld [vmem:[%s362 + $0x30] sm:$0xff]
        %v559 = vld [vmem:[%s362 + $0x38] sm:$0xff]
        %v560 = vmax.f32 %v552, 0.0
        %v561 = vmax.f32 %v553, 0.0
        %v562 = vmax.f32 %v554, 0.0
        %v563 = vmax.f32 %v555, 0.0
        %v564 = vmax.f32 %v556, 0.0
        %v565 = vmax.f32 %v557, 0.0
        %v566 = vmax.f32 %v558, 0.0
        %v567 = vmax.f32 %v559, 0.0
        %v568 = vlaneseq
        %v569 = vshrl.u32 %v568, 7
        %v570 = vsub.s32 0, %v569
        %v571 = vrot.slane %v534, %v570
        %vm572 = vcmask 523264
        %v574 = vsel %vm572, %v560, 0
        %v577 = vsel %vm572, %v561, 0
        %v580 = vsel %vm572, %v562, 0
        %v583 = vsel %vm572, %v563, 0
        %v586 = vsel %vm572, %v564, 0
        %v589 = vsel %vm572, %v565, 0
        %v592 = vsel %vm572, %v566, 0
        %v595 = vsel %vm572, %v567, 0
        %597 = vmatprep.subr.mxu0 0.0
        %598 = vmatpush1.msra.mxu0 0.0
        %599 = vmatprep.subr.mxu0 0.0
        %600 = vmatpush1.msra.mxu0 0.0
        %601 = vmatprep.subr.mxu0 0.0
        %602 = vmatpush1.msra.mxu0 0.0
        %603 = vmatprep.subr.mxu0 0.0
        %604 = vmatpush1.msra.mxu0 0.0
        %605 = vmatprep.subr.mxu0 0.0
        %606 = vmatpush1.msra.mxu0 0.0
        %607 = vmatprep.subr.mxu0 0.0
        %608 = vmatpush1.msra.mxu0 0.0
        %609 = vmatprep.subr.mxu0 0.0
        %610 = vmatpush1.msra.mxu0 0.0
        %611 = vmatprep.subr.mxu0 0.0
        %612 = vmatpush1.msra.mxu0 0.0
        %613 = vmatprep.subr.mxu0 0.0
        %614 = vmatpush1.msra.mxu0 %v429
        %615 = vmatprep.subr.mxu0 0.0
        %616 = vmatpush1.msra.mxu0 %v428
        %617 = vmatprep.subr.mxu0 0.0
        %618 = vmatpush1.msra.mxu0 %v427
        %619 = vmatprep.subr.mxu0 0.0
        %620 = vmatpush1.msra.mxu0 %v426
        %621 = vmatprep.subr.mxu0 0.0
        %622 = vmatpush1.msra.mxu0 %v425
        %623 = vmatprep.subr.mxu0 0.0
        %624 = vmatpush1.msra.mxu0 %v424
        %625 = vmatprep.subr.mxu0 0.0
        %626 = vmatpush1.msra.mxu0 %v423
        %627 = vmatprep.subr.mxu0 0.0
        %628 = vmatpush1.msra.mxu0 %v422
        %629 = vmatprep.subr.mxu0 0.0
        %630 = vmatpush2.msra.mxu0 0.0
        %631 = vmatprep.subr.mxu0 0.0
        %632 = vmatpush2.msra.mxu0 0.0
        %633 = vmatprep.subr.mxu0 0.0
        %634 = vmatpush2.msra.mxu0 0.0
        %635 = vmatprep.subr.mxu0 0.0
        %636 = vmatpush2.msra.mxu0 0.0
        %637 = vmatprep.subr.mxu0 0.0
        %638 = vmatpush2.msra.mxu0 0.0
        %639 = vmatprep.subr.mxu0 0.0
        %640 = vmatpush2.msra.mxu0 0.0
        %641 = vmatprep.subr.mxu0 0.0
        %642 = vmatpush2.msra.mxu0 0.0
        %643 = vmatprep.subr.mxu0 0.0
        %644 = vmatpush2.msra.mxu0 0.0
        %645 = vmatprep.subr.mxu0 0.0
        %646 = vmatpush2.msra.mxu0 0.0
        %647 = vmatprep.subr.mxu0 0.0
        %648 = vmatpush2.msra.mxu0 0.0
        %649 = vmatprep.subr.mxu0 0.0
        %650 = vmatpush2.msra.mxu0 0.0
        %651 = vmatprep.subr.mxu0 0.0
        %652 = vmatpush2.msra.mxu0 0.0
        %653 = vmatprep.subr.mxu0 0.0
        %654 = vmatpush2.msra.mxu0 0.0
        %655 = vmatprep.subr.mxu0 0.0
        %656 = vmatpush2.msra.mxu0 0.0
        %657 = vmatprep.subr.mxu0 0.0
        %658 = vmatpush2.msra.mxu0 0.0
        %659 = vmatprep.subr.mxu0 0.0
        %660 = vmatpush2.msra.mxu0 0.0
        %661 = vmatprep.mubr.f32.mxu0 0.0
        %662 = vmatmul.mubr.f32.gmra.mxu0 %v574
        %v663 = vpop.f32.mrf.mxu0
        %v664 = vadd.f32 %v571, %v663
        %v665 = vpop.f32.mrf.mxu0
        %666 = vmatprep.mubr.f32.mxu0 0.0
        %667 = vmatmul.mubr.f32.gmra.mxu0 %v577
        %v668 = vpop.f32.mrf.mxu0
        %v669 = vadd.f32 %v571, %v668
        %v670 = vpop.f32.mrf.mxu0
        %671 = vmatprep.mubr.f32.mxu0 0.0
        %672 = vmatmul.mubr.f32.gmra.mxu0 %v580
        %v673 = vpop.f32.mrf.mxu0
        %v674 = vadd.f32 %v571, %v673
        %v675 = vpop.f32.mrf.mxu0
        %676 = vmatprep.mubr.f32.mxu0 0.0
        %677 = vmatmul.mubr.f32.gmra.mxu0 %v583
        %v678 = vpop.f32.mrf.mxu0
        %v679 = vadd.f32 %v571, %v678
        %v680 = vpop.f32.mrf.mxu0
        %681 = vmatprep.mubr.f32.mxu0 0.0
        %682 = vmatmul.mubr.f32.gmra.mxu0 %v586
        %v683 = vpop.f32.mrf.mxu0
        %v684 = vadd.f32 %v571, %v683
        %v685 = vpop.f32.mrf.mxu0
        %686 = vmatprep.mubr.f32.mxu0 0.0
        %687 = vmatmul.mubr.f32.gmra.mxu0 %v589
        %v688 = vpop.f32.mrf.mxu0
        %v689 = vadd.f32 %v571, %v688
        %v690 = vpop.f32.mrf.mxu0
        %691 = vmatprep.mubr.f32.mxu0 0.0
        %692 = vmatmul.mubr.f32.gmra.mxu0 %v592
        %v693 = vpop.f32.mrf.mxu0
        %v694 = vadd.f32 %v571, %v693
        %v695 = vpop.f32.mrf.mxu0
        %696 = vmatprep.mubr.f32.mxu0 0.0
        %697 = vmatmul.mubr.f32.gmra.mxu0 %v595
        %v698 = vpop.f32.mrf.mxu0
        %v699 = vadd.f32 %v571, %v698
        %v700 = vpop.f32.mrf.mxu0
        %701 = vdwg.mxu0
        %v702 = vmax.f32 %v664, 0.0
        %v703 = vmax.f32 %v669, 0.0
        %v704 = vmax.f32 %v674, 0.0
        %v705 = vmax.f32 %v679, 0.0
        %v706 = vmax.f32 %v684, 0.0
        %v707 = vmax.f32 %v689, 0.0
        %v708 = vmax.f32 %v694, 0.0
        %v709 = vmax.f32 %v699, 0.0
        %v710 = vadd.f32 %v702, %v524
        %v711 = vadd.f32 %v703, %v525
        %v712 = vadd.f32 %v704, %v526
        %v713 = vadd.f32 %v705, %v527
        %v714 = vadd.f32 %v706, %v528
        %v715 = vadd.f32 %v707, %v529
        %v716 = vadd.f32 %v708, %v530
        %v717 = vadd.f32 %v709, %v531
        %v718 = vsel %vm572, %v710, 0.0
        %719 = vadd.xlane.f32.xlu0 %v718
        %v720 = vpop.xlane.xlu0 %719
        %v721 = vsel %vm572, %v711, 0.0
        %722 = vadd.xlane.f32.xlu0 %v721
        %v723 = vpop.xlane.xlu0 %722
        %v724 = vsel %vm572, %v712, 0.0
        %725 = vadd.xlane.f32.xlu0 %v724
        %v726 = vpop.xlane.xlu0 %725
        %v727 = vsel %vm572, %v713, 0.0
        %728 = vadd.xlane.f32.xlu0 %v727
        %v729 = vpop.xlane.xlu0 %728
        %v730 = vsel %vm572, %v714, 0.0
        %731 = vadd.xlane.f32.xlu0 %v730
        %v732 = vpop.xlane.xlu0 %731
        %v733 = vsel %vm572, %v715, 0.0
        %734 = vadd.xlane.f32.xlu0 %v733
        %v735 = vpop.xlane.xlu0 %734
        %v736 = vsel %vm572, %v716, 0.0
        %737 = vadd.xlane.f32.xlu0 %v736
        %v738 = vpop.xlane.xlu0 %737
        %v739 = vsel %vm572, %v717, 0.0
        %740 = vadd.xlane.f32.xlu0 %v739
        %v741 = vpop.xlane.xlu0 %740
        %v742 = vrcp.pop 64.0
        %v743 = vmul.f32 %v720, %v742
        %v744 = vmul.f32 %v723, %v742
        %v745 = vmul.f32 %v726, %v742
        %v746 = vmul.f32 %v729, %v742
        %v747 = vmul.f32 %v732, %v742
        %v748 = vmul.f32 %v735, %v742
        %v749 = vmul.f32 %v738, %v742
        %v750 = vmul.f32 %v741, %v742
        %v751 = vmul.f32 %v710, %v710
        %v752 = vmul.f32 %v711, %v711
        %v753 = vmul.f32 %v712, %v712
        %v754 = vmul.f32 %v713, %v713
        %v755 = vmul.f32 %v714, %v714
        %v756 = vmul.f32 %v715, %v715
        %v757 = vmul.f32 %v716, %v716
        %v758 = vmul.f32 %v717, %v717
        %v759 = vsel %vm572, %v751, 0.0
        %760 = vadd.xlane.f32.xlu0 %v759
        %v761 = vpop.xlane.xlu0 %760
        %v762 = vsel %vm572, %v752, 0.0
        %763 = vadd.xlane.f32.xlu0 %v762
        %v764 = vpop.xlane.xlu0 %763
        %v765 = vsel %vm572, %v753, 0.0
        %766 = vadd.xlane.f32.xlu0 %v765
        %v767 = vpop.xlane.xlu0 %766
        %v768 = vsel %vm572, %v754, 0.0
        %769 = vadd.xlane.f32.xlu0 %v768
        %v770 = vpop.xlane.xlu0 %769
        %v771 = vsel %vm572, %v755, 0.0
        %772 = vadd.xlane.f32.xlu0 %v771
        %v773 = vpop.xlane.xlu0 %772
        %v774 = vsel %vm572, %v756, 0.0
        %775 = vadd.xlane.f32.xlu0 %v774
        %v776 = vpop.xlane.xlu0 %775
        %v777 = vsel %vm572, %v757, 0.0
        %778 = vadd.xlane.f32.xlu0 %v777
        %v779 = vpop.xlane.xlu0 %778
        %v780 = vsel %vm572, %v758, 0.0
        %781 = vadd.xlane.f32.xlu0 %v780
        %v782 = vpop.xlane.xlu0 %781
        %v783 = vmul.f32 %v761, %v742
        %v784 = vmul.f32 %v764, %v742
        %v785 = vmul.f32 %v767, %v742
        %v786 = vmul.f32 %v770, %v742
        %v787 = vmul.f32 %v773, %v742
        %v788 = vmul.f32 %v776, %v742
        %v789 = vmul.f32 %v779, %v742
        %v790 = vmul.f32 %v782, %v742
        %v791 = vmul.f32 %v743, %v743
        %v792 = vmul.f32 %v744, %v744
        %v793 = vmul.f32 %v745, %v745
        %v794 = vmul.f32 %v746, %v746
        %v795 = vmul.f32 %v747, %v747
        %v796 = vmul.f32 %v748, %v748
        %v797 = vmul.f32 %v749, %v749
        %v798 = vmul.f32 %v750, %v750
        %v799 = vsub.f32 %v783, %v791
        %v800 = vsub.f32 %v784, %v792
        %v801 = vsub.f32 %v785, %v793
        %v802 = vsub.f32 %v786, %v794
        %v803 = vsub.f32 %v787, %v795
        %v804 = vsub.f32 %v788, %v796
        %v805 = vsub.f32 %v789, %v797
        %v806 = vsub.f32 %v790, %v798
        %v807 = vsub.f32 %v710, %v743
        %v808 = vsub.f32 %v711, %v744
        %v809 = vsub.f32 %v712, %v745
        %v810 = vsub.f32 %v713, %v746
        %v811 = vsub.f32 %v714, %v747
        %v812 = vsub.f32 %v715, %v748
        %v813 = vsub.f32 %v716, %v749
        %v814 = vsub.f32 %v717, %v750
        %v815 = vadd.f32 %v799, 1e-05
        %v816 = vadd.f32 %v800, 1e-05
        %v817 = vadd.f32 %v801, 1e-05
        %v818 = vadd.f32 %v802, 1e-05
        %v819 = vadd.f32 %v803, 1e-05
        %v820 = vadd.f32 %v804, 1e-05
        %v821 = vadd.f32 %v805, 1e-05
        %v822 = vadd.f32 %v806, 1e-05
        %v823 = vrsqrt.pop %v815
        %v824 = vrsqrt.pop %v816
        %v825 = vrsqrt.pop %v817
        %v826 = vrsqrt.pop %v818
        %v827 = vrsqrt.pop %v819
        %v828 = vrsqrt.pop %v820
        %v829 = vrsqrt.pop %v821
        %v830 = vrsqrt.pop %v822
        %v831 = vmul.f32 %v807, %v823
        %v832 = vmul.f32 %v808, %v824
        %v833 = vmul.f32 %v809, %v825
        %v834 = vmul.f32 %v810, %v826
        %v835 = vmul.f32 %v811, %v827
        %v836 = vmul.f32 %v812, %v828
        %v837 = vmul.f32 %v813, %v829
        %v838 = vmul.f32 %v814, %v830
        %v839 = vlaneseq
        %v840 = vshrl.u32 %v839, 7
        %v841 = vsub.s32 0, %v840
        %v842 = vrot.slane %v535, %v841
        %v843 = vmul.f32 %v831, %v842
        %v844 = vmul.f32 %v832, %v842
        %v845 = vmul.f32 %v833, %v842
        %v846 = vmul.f32 %v834, %v842
        %v847 = vmul.f32 %v835, %v842
        %v848 = vmul.f32 %v836, %v842
        %v849 = vmul.f32 %v837, %v842
        %v850 = vmul.f32 %v838, %v842
        %v851 = vlaneseq
        %v852 = vshrl.u32 %v851, 7
        %v853 = vsub.s32 0, %v852
        %v854 = vrot.slane %v536, %v853
        %v855 = vadd.f32 %v843, %v854
        %v856 = vadd.f32 %v844, %v854
        %v857 = vadd.f32 %v845, %v854
        %v858 = vadd.f32 %v846, %v854
        %v859 = vadd.f32 %v847, %v854
        %v860 = vadd.f32 %v848, %v854
        %v861 = vadd.f32 %v849, %v854
        %v862 = vadd.f32 %v850, %v854
        %v863 = vlaneseq
        %v864 = vshrl.u32 %v863, 7
        %v865 = vsub.s32 0, %v864
        %v866 = vrot.slane %v537, %v865
        %v868 = vsel %vm572, %v855, 0
        %v871 = vsel %vm572, %v856, 0
        %v874 = vsel %vm572, %v857, 0
        %v877 = vsel %vm572, %v858, 0
        %v880 = vsel %vm572, %v859, 0
        %v883 = vsel %vm572, %v860, 0
        %v886 = vsel %vm572, %v861, 0
        %v889 = vsel %vm572, %v862, 0
        %891 = vmatprep.subr.mxu0 0.0
        %892 = vmatpush1.msra.mxu0 0.0
        %893 = vmatprep.subr.mxu0 0.0
        %894 = vmatpush1.msra.mxu0 0.0
        %895 = vmatprep.subr.mxu0 0.0
        %896 = vmatpush1.msra.mxu0 0.0
        %897 = vmatprep.subr.mxu0 0.0
        %898 = vmatpush1.msra.mxu0 0.0
        %899 = vmatprep.subr.mxu0 0.0
        %900 = vmatpush1.msra.mxu0 0.0
        %901 = vmatprep.subr.mxu0 0.0
        %902 = vmatpush1.msra.mxu0 0.0
        %903 = vmatprep.subr.mxu0 0.0
        %904 = vmatpush1.msra.mxu0 0.0
        %905 = vmatprep.subr.mxu0 0.0
        %906 = vmatpush1.msra.mxu0 0.0
        %907 = vmatprep.subr.mxu0 0.0
        %908 = vmatpush1.msra.mxu0 %v438
        %909 = vmatprep.subr.mxu0 0.0
        %910 = vmatpush1.msra.mxu0 %v437
        %911 = vmatprep.subr.mxu0 0.0
        %912 = vmatpush1.msra.mxu0 %v436
        %913 = vmatprep.subr.mxu0 0.0
        %914 = vmatpush1.msra.mxu0 %v435
        %915 = vmatprep.subr.mxu0 0.0
        %916 = vmatpush1.msra.mxu0 %v434
        %917 = vmatprep.subr.mxu0 0.0
        %918 = vmatpush1.msra.mxu0 %v433
        %919 = vmatprep.subr.mxu0 0.0
        %920 = vmatpush1.msra.mxu0 %v432
        %921 = vmatprep.subr.mxu0 0.0
        %922 = vmatpush1.msra.mxu0 %v431
        %923 = vmatprep.subr.mxu0 0.0
        %924 = vmatpush2.msra.mxu0 0.0
        %925 = vmatprep.subr.mxu0 0.0
        %926 = vmatpush2.msra.mxu0 0.0
        %927 = vmatprep.subr.mxu0 0.0
        %928 = vmatpush2.msra.mxu0 0.0
        %929 = vmatprep.subr.mxu0 0.0
        %930 = vmatpush2.msra.mxu0 0.0
        %931 = vmatprep.subr.mxu0 0.0
        %932 = vmatpush2.msra.mxu0 0.0
        %933 = vmatprep.subr.mxu0 0.0
        %934 = vmatpush2.msra.mxu0 0.0
        %935 = vmatprep.subr.mxu0 0.0
        %936 = vmatpush2.msra.mxu0 0.0
        %937 = vmatprep.subr.mxu0 0.0
        %938 = vmatpush2.msra.mxu0 0.0
        %939 = vmatprep.subr.mxu0 0.0
        %940 = vmatpush2.msra.mxu0 0.0
        %941 = vmatprep.subr.mxu0 0.0
        %942 = vmatpush2.msra.mxu0 0.0
        %943 = vmatprep.subr.mxu0 0.0
        %944 = vmatpush2.msra.mxu0 0.0
        %945 = vmatprep.subr.mxu0 0.0
        %946 = vmatpush2.msra.mxu0 0.0
        %947 = vmatprep.subr.mxu0 0.0
        %948 = vmatpush2.msra.mxu0 0.0
        %949 = vmatprep.subr.mxu0 0.0
        %950 = vmatpush2.msra.mxu0 0.0
        %951 = vmatprep.subr.mxu0 0.0
        %952 = vmatpush2.msra.mxu0 0.0
        %953 = vmatprep.subr.mxu0 0.0
        %954 = vmatpush2.msra.mxu0 0.0
        %955 = vmatprep.mubr.f32.mxu0 0.0
        %956 = vmatmul.mubr.f32.gmra.mxu0 %v868
        %v957 = vpop.f32.mrf.mxu0
        %v958 = vadd.f32 %v866, %v957
        %v959 = vpop.f32.mrf.mxu0
        %960 = vmatprep.mubr.f32.mxu0 0.0
        %961 = vmatmul.mubr.f32.gmra.mxu0 %v871
        %v962 = vpop.f32.mrf.mxu0
        %v963 = vadd.f32 %v866, %v962
        %v964 = vpop.f32.mrf.mxu0
        %965 = vmatprep.mubr.f32.mxu0 0.0
        %966 = vmatmul.mubr.f32.gmra.mxu0 %v874
        %v967 = vpop.f32.mrf.mxu0
        %v968 = vadd.f32 %v866, %v967
        %v969 = vpop.f32.mrf.mxu0
        %970 = vmatprep.mubr.f32.mxu0 0.0
        %971 = vmatmul.mubr.f32.gmra.mxu0 %v877
        %v972 = vpop.f32.mrf.mxu0
        %v973 = vadd.f32 %v866, %v972
        %v974 = vpop.f32.mrf.mxu0
        %975 = vmatprep.mubr.f32.mxu0 0.0
        %976 = vmatmul.mubr.f32.gmra.mxu0 %v880
        %v977 = vpop.f32.mrf.mxu0
        %v978 = vadd.f32 %v866, %v977
        %v979 = vpop.f32.mrf.mxu0
        %980 = vmatprep.mubr.f32.mxu0 0.0
        %981 = vmatmul.mubr.f32.gmra.mxu0 %v883
        %v982 = vpop.f32.mrf.mxu0
        %v983 = vadd.f32 %v866, %v982
        %v984 = vpop.f32.mrf.mxu0
        %985 = vmatprep.mubr.f32.mxu0 0.0
        %986 = vmatmul.mubr.f32.gmra.mxu0 %v886
        %v987 = vpop.f32.mrf.mxu0
        %v988 = vadd.f32 %v866, %v987
        %v989 = vpop.f32.mrf.mxu0
        %990 = vmatprep.mubr.f32.mxu0 0.0
        %991 = vmatmul.mubr.f32.gmra.mxu0 %v889
        %v992 = vpop.f32.mrf.mxu0
        %v993 = vadd.f32 %v866, %v992
        %v994 = vpop.f32.mrf.mxu0
        %995 = vdwg.mxu0
        %v996 = vmax.f32 %v958, 0.0
        %v997 = vmax.f32 %v963, 0.0
        %v998 = vmax.f32 %v968, 0.0
        %v999 = vmax.f32 %v973, 0.0
        %v1000 = vmax.f32 %v978, 0.0
        %v1001 = vmax.f32 %v983, 0.0
        %v1002 = vmax.f32 %v988, 0.0
        %v1003 = vmax.f32 %v993, 0.0
        %v1004 = vlaneseq
        %v1005 = vshrl.u32 %v1004, 7
        %v1006 = vsub.s32 0, %v1005
        %v1007 = vrot.slane %v538, %v1006
        %v1009 = vsel %vm572, %v996, 0
        %v1012 = vsel %vm572, %v997, 0
        %v1015 = vsel %vm572, %v998, 0
        %v1018 = vsel %vm572, %v999, 0
        %v1021 = vsel %vm572, %v1000, 0
        %v1024 = vsel %vm572, %v1001, 0
        %v1027 = vsel %vm572, %v1002, 0
        %v1030 = vsel %vm572, %v1003, 0
        %1032 = vmatprep.subr.mxu0 0.0
        %1033 = vmatpush1.msra.mxu0 0.0
        %1034 = vmatprep.subr.mxu0 0.0
        %1035 = vmatpush1.msra.mxu0 0.0
        %1036 = vmatprep.subr.mxu0 0.0
        %1037 = vmatpush1.msra.mxu0 0.0
        %1038 = vmatprep.subr.mxu0 0.0
        %1039 = vmatpush1.msra.mxu0 0.0
        %1040 = vmatprep.subr.mxu0 0.0
        %1041 = vmatpush1.msra.mxu0 0.0
        %1042 = vmatprep.subr.mxu0 0.0
        %1043 = vmatpush1.msra.mxu0 0.0
        %1044 = vmatprep.subr.mxu0 0.0
        %1045 = vmatpush1.msra.mxu0 0.0
        %1046 = vmatprep.subr.mxu0 0.0
        %1047 = vmatpush1.msra.mxu0 0.0
        %1048 = vmatprep.subr.mxu0 0.0
        %1049 = vmatpush1.msra.mxu0 %v447
        %1050 = vmatprep.subr.mxu0 0.0
        %1051 = vmatpush1.msra.mxu0 %v446
        %1052 = vmatprep.subr.mxu0 0.0
        %1053 = vmatpush1.msra.mxu0 %v445
        %1054 = vmatprep.subr.mxu0 0.0
        %1055 = vmatpush1.msra.mxu0 %v444
        %1056 = vmatprep.subr.mxu0 0.0
        %1057 = vmatpush1.msra.mxu0 %v443
        %1058 = vmatprep.subr.mxu0 0.0
        %1059 = vmatpush1.msra.mxu0 %v442
        %1060 = vmatprep.subr.mxu0 0.0
        %1061 = vmatpush1.msra.mxu0 %v441
        %1062 = vmatprep.subr.mxu0 0.0
        %1063 = vmatpush1.msra.mxu0 %v440
        %1064 = vmatprep.subr.mxu0 0.0
        %1065 = vmatpush2.msra.mxu0 0.0
        %1066 = vmatprep.subr.mxu0 0.0
        %1067 = vmatpush2.msra.mxu0 0.0
        %1068 = vmatprep.subr.mxu0 0.0
        %1069 = vmatpush2.msra.mxu0 0.0
        %1070 = vmatprep.subr.mxu0 0.0
        %1071 = vmatpush2.msra.mxu0 0.0
        %1072 = vmatprep.subr.mxu0 0.0
        %1073 = vmatpush2.msra.mxu0 0.0
        %1074 = vmatprep.subr.mxu0 0.0
        %1075 = vmatpush2.msra.mxu0 0.0
        %1076 = vmatprep.subr.mxu0 0.0
        %1077 = vmatpush2.msra.mxu0 0.0
        %1078 = vmatprep.subr.mxu0 0.0
        %1079 = vmatpush2.msra.mxu0 0.0
        %1080 = vmatprep.subr.mxu0 0.0
        %1081 = vmatpush2.msra.mxu0 0.0
        %1082 = vmatprep.subr.mxu0 0.0
        %1083 = vmatpush2.msra.mxu0 0.0
        %1084 = vmatprep.subr.mxu0 0.0
        %1085 = vmatpush2.msra.mxu0 0.0
        %1086 = vmatprep.subr.mxu0 0.0
        %1087 = vmatpush2.msra.mxu0 0.0
        %1088 = vmatprep.subr.mxu0 0.0
        %1089 = vmatpush2.msra.mxu0 0.0
        %1090 = vmatprep.subr.mxu0 0.0
        %1091 = vmatpush2.msra.mxu0 0.0
        %1092 = vmatprep.subr.mxu0 0.0
        %1093 = vmatpush2.msra.mxu0 0.0
        %1094 = vmatprep.subr.mxu0 0.0
        %1095 = vmatpush2.msra.mxu0 0.0
        %1096 = vmatprep.mubr.f32.mxu0 0.0
        %1097 = vmatmul.mubr.f32.gmra.mxu0 %v1009
        %v1098 = vpop.f32.mrf.mxu0
        %v1099 = vadd.f32 %v1007, %v1098
        %v1100 = vpop.f32.mrf.mxu0
        %1101 = vmatprep.mubr.f32.mxu0 0.0
        %1102 = vmatmul.mubr.f32.gmra.mxu0 %v1012
        %v1103 = vpop.f32.mrf.mxu0
        %v1104 = vadd.f32 %v1007, %v1103
        %v1105 = vpop.f32.mrf.mxu0
        %1106 = vmatprep.mubr.f32.mxu0 0.0
        %1107 = vmatmul.mubr.f32.gmra.mxu0 %v1015
        %v1108 = vpop.f32.mrf.mxu0
        %v1109 = vadd.f32 %v1007, %v1108
        %v1110 = vpop.f32.mrf.mxu0
        %1111 = vmatprep.mubr.f32.mxu0 0.0
        %1112 = vmatmul.mubr.f32.gmra.mxu0 %v1018
        %v1113 = vpop.f32.mrf.mxu0
        %v1114 = vadd.f32 %v1007, %v1113
        %v1115 = vpop.f32.mrf.mxu0
        %1116 = vmatprep.mubr.f32.mxu0 0.0
        %1117 = vmatmul.mubr.f32.gmra.mxu0 %v1021
        %v1118 = vpop.f32.mrf.mxu0
        %v1119 = vadd.f32 %v1007, %v1118
        %v1120 = vpop.f32.mrf.mxu0
        %1121 = vmatprep.mubr.f32.mxu0 0.0
        %1122 = vmatmul.mubr.f32.gmra.mxu0 %v1024
        %v1123 = vpop.f32.mrf.mxu0
        %v1124 = vadd.f32 %v1007, %v1123
        %v1125 = vpop.f32.mrf.mxu0
        %1126 = vmatprep.mubr.f32.mxu0 0.0
        %1127 = vmatmul.mubr.f32.gmra.mxu0 %v1027
        %v1128 = vpop.f32.mrf.mxu0
        %v1129 = vadd.f32 %v1007, %v1128
        %v1130 = vpop.f32.mrf.mxu0
        %1131 = vmatprep.mubr.f32.mxu0 0.0
        %1132 = vmatmul.mubr.f32.gmra.mxu0 %v1030
        %v1133 = vpop.f32.mrf.mxu0
        %v1134 = vadd.f32 %v1007, %v1133
        %v1135 = vpop.f32.mrf.mxu0
        %1136 = vdwg.mxu0
        %v1137 = vsel %vm572, %v1099, 0.0
        %1138 = vadd.xlane.f32.xlu0 %v1137
        %v1139 = vpop.xlane.xlu0 %1138
        %v1140 = vsel %vm572, %v1104, 0.0
        %1141 = vadd.xlane.f32.xlu0 %v1140
        %v1142 = vpop.xlane.xlu0 %1141
        %v1143 = vsel %vm572, %v1109, 0.0
        %1144 = vadd.xlane.f32.xlu0 %v1143
        %v1145 = vpop.xlane.xlu0 %1144
        %v1146 = vsel %vm572, %v1114, 0.0
        %1147 = vadd.xlane.f32.xlu0 %v1146
        %v1148 = vpop.xlane.xlu0 %1147
        %v1149 = vsel %vm572, %v1119, 0.0
        %1150 = vadd.xlane.f32.xlu0 %v1149
        %v1151 = vpop.xlane.xlu0 %1150
        %v1152 = vsel %vm572, %v1124, 0.0
        %1153 = vadd.xlane.f32.xlu0 %v1152
        %v1154 = vpop.xlane.xlu0 %1153
        %v1155 = vsel %vm572, %v1129, 0.0
        %1156 = vadd.xlane.f32.xlu0 %v1155
        %v1157 = vpop.xlane.xlu0 %1156
        %v1158 = vsel %vm572, %v1134, 0.0
        %1159 = vadd.xlane.f32.xlu0 %v1158
        %v1160 = vpop.xlane.xlu0 %1159
        %v1161 = vmul.f32 %v1139, %v742
        %v1162 = vmul.f32 %v1142, %v742
        %v1163 = vmul.f32 %v1145, %v742
        %v1164 = vmul.f32 %v1148, %v742
        %v1165 = vmul.f32 %v1151, %v742
        %v1166 = vmul.f32 %v1154, %v742
        %v1167 = vmul.f32 %v1157, %v742
        %v1168 = vmul.f32 %v1160, %v742
        %v1169 = vmul.f32 %v1099, %v1099
        %v1170 = vmul.f32 %v1104, %v1104
        %v1171 = vmul.f32 %v1109, %v1109
        %v1172 = vmul.f32 %v1114, %v1114
        %v1173 = vmul.f32 %v1119, %v1119
        %v1174 = vmul.f32 %v1124, %v1124
        %v1175 = vmul.f32 %v1129, %v1129
        %v1176 = vmul.f32 %v1134, %v1134
        %v1177 = vsel %vm572, %v1169, 0.0
        %1178 = vadd.xlane.f32.xlu0 %v1177
        %v1179 = vpop.xlane.xlu0 %1178
        %v1180 = vsel %vm572, %v1170, 0.0
        %1181 = vadd.xlane.f32.xlu0 %v1180
        %v1182 = vpop.xlane.xlu0 %1181
        %v1183 = vsel %vm572, %v1171, 0.0
        %1184 = vadd.xlane.f32.xlu0 %v1183
        %v1185 = vpop.xlane.xlu0 %1184
        %v1186 = vsel %vm572, %v1172, 0.0
        %1187 = vadd.xlane.f32.xlu0 %v1186
        %v1188 = vpop.xlane.xlu0 %1187
        %v1189 = vsel %vm572, %v1173, 0.0
        %1190 = vadd.xlane.f32.xlu0 %v1189
        %v1191 = vpop.xlane.xlu0 %1190
        %v1192 = vsel %vm572, %v1174, 0.0
        %1193 = vadd.xlane.f32.xlu0 %v1192
        %v1194 = vpop.xlane.xlu0 %1193
        %v1195 = vsel %vm572, %v1175, 0.0
        %1196 = vadd.xlane.f32.xlu0 %v1195
        %v1197 = vpop.xlane.xlu0 %1196
        %v1198 = vsel %vm572, %v1176, 0.0
        %1199 = vadd.xlane.f32.xlu0 %v1198
        %v1200 = vpop.xlane.xlu0 %1199
        %v1201 = vmul.f32 %v1179, %v742
        %v1202 = vmul.f32 %v1182, %v742
        %v1203 = vmul.f32 %v1185, %v742
        %v1204 = vmul.f32 %v1188, %v742
        %v1205 = vmul.f32 %v1191, %v742
        %v1206 = vmul.f32 %v1194, %v742
        %v1207 = vmul.f32 %v1197, %v742
        %v1208 = vmul.f32 %v1200, %v742
        %v1209 = vmul.f32 %v1161, %v1161
        %v1210 = vmul.f32 %v1162, %v1162
        %v1211 = vmul.f32 %v1163, %v1163
        %v1212 = vmul.f32 %v1164, %v1164
        %v1213 = vmul.f32 %v1165, %v1165
        %v1214 = vmul.f32 %v1166, %v1166
        %v1215 = vmul.f32 %v1167, %v1167
        %v1216 = vmul.f32 %v1168, %v1168
        %v1217 = vsub.f32 %v1201, %v1209
        %v1218 = vsub.f32 %v1202, %v1210
        %v1219 = vsub.f32 %v1203, %v1211
        %v1220 = vsub.f32 %v1204, %v1212
        %v1221 = vsub.f32 %v1205, %v1213
        %v1222 = vsub.f32 %v1206, %v1214
        %v1223 = vsub.f32 %v1207, %v1215
        %v1224 = vsub.f32 %v1208, %v1216
        %v1225 = vsub.f32 %v1099, %v1161
        %v1226 = vsub.f32 %v1104, %v1162
        %v1227 = vsub.f32 %v1109, %v1163
        %v1228 = vsub.f32 %v1114, %v1164
        %v1229 = vsub.f32 %v1119, %v1165
        %v1230 = vsub.f32 %v1124, %v1166
        %v1231 = vsub.f32 %v1129, %v1167
        %v1232 = vsub.f32 %v1134, %v1168
        %v1233 = vadd.f32 %v1217, 1e-05
        %v1234 = vadd.f32 %v1218, 1e-05
        %v1235 = vadd.f32 %v1219, 1e-05
        %v1236 = vadd.f32 %v1220, 1e-05
        %v1237 = vadd.f32 %v1221, 1e-05
        %v1238 = vadd.f32 %v1222, 1e-05
        %v1239 = vadd.f32 %v1223, 1e-05
        %v1240 = vadd.f32 %v1224, 1e-05
        %v1241 = vrsqrt.pop %v1233
        %v1242 = vrsqrt.pop %v1234
        %v1243 = vrsqrt.pop %v1235
        %v1244 = vrsqrt.pop %v1236
        %v1245 = vrsqrt.pop %v1237
        %v1246 = vrsqrt.pop %v1238
        %v1247 = vrsqrt.pop %v1239
        %v1248 = vrsqrt.pop %v1240
        %v1249 = vmul.f32 %v1225, %v1241
        %v1250 = vmul.f32 %v1226, %v1242
        %v1251 = vmul.f32 %v1227, %v1243
        %v1252 = vmul.f32 %v1228, %v1244
        %v1253 = vmul.f32 %v1229, %v1245
        %v1254 = vmul.f32 %v1230, %v1246
        %v1255 = vmul.f32 %v1231, %v1247
        %v1256 = vmul.f32 %v1232, %v1248
        %v1257 = vlaneseq
        %v1258 = vshrl.u32 %v1257, 7
        %v1259 = vsub.s32 0, %v1258
        %v1260 = vrot.slane %v539, %v1259
        %v1261 = vmul.f32 %v1249, %v1260
        %v1262 = vmul.f32 %v1250, %v1260
        %v1263 = vmul.f32 %v1251, %v1260
        %v1264 = vmul.f32 %v1252, %v1260
        %v1265 = vmul.f32 %v1253, %v1260
        %v1266 = vmul.f32 %v1254, %v1260
        %v1267 = vmul.f32 %v1255, %v1260
        %v1268 = vmul.f32 %v1256, %v1260
        %v1269 = vlaneseq
        %v1270 = vshrl.u32 %v1269, 7
        %v1271 = vsub.s32 0, %v1270
        %v1272 = vrot.slane %v540, %v1271
        %v1273 = vadd.f32 %v1261, %v1272
        %v1274 = vadd.f32 %v1262, %v1272
        %v1275 = vadd.f32 %v1263, %v1272
        %v1276 = vadd.f32 %v1264, %v1272
        %v1277 = vadd.f32 %v1265, %v1272
        %v1278 = vadd.f32 %v1266, %v1272
        %v1279 = vadd.f32 %v1267, %v1272
        %v1280 = vadd.f32 %v1268, %v1272
        %v1282 = vlaneseq
        %v1283 = vshrl.u32 %v1282, 7
        %v1284 = vsub.s32 0, %v1283
        %v1285 = vrot.slane %v532, %v1284
        %v1288 = vsel %vm572, %v1273, 0
        %v1291 = vsel %vm572, %v1274, 0
        %v1294 = vsel %vm572, %v1275, 0
        %v1297 = vsel %vm572, %v1276, 0
        %v1300 = vsel %vm572, %v1277, 0
        %v1303 = vsel %vm572, %v1278, 0
        %v1306 = vsel %vm572, %v1279, 0
        %v1309 = vsel %vm572, %v1280, 0
        %1311 = vmatprep.subr.mxu0 0.0
        %1312 = vmatpush1.msra.mxu0 0.0
        %1313 = vmatprep.subr.mxu0 0.0
        %1314 = vmatpush1.msra.mxu0 0.0
        %1315 = vmatprep.subr.mxu0 0.0
        %1316 = vmatpush1.msra.mxu0 0.0
        %1317 = vmatprep.subr.mxu0 0.0
        %1318 = vmatpush1.msra.mxu0 0.0
        %1319 = vmatprep.subr.mxu0 0.0
        %1320 = vmatpush1.msra.mxu0 0.0
        %1321 = vmatprep.subr.mxu0 0.0
        %1322 = vmatpush1.msra.mxu0 0.0
        %1323 = vmatprep.subr.mxu0 0.0
        %1324 = vmatpush1.msra.mxu0 0.0
        %1325 = vmatprep.subr.mxu0 0.0
        %1326 = vmatpush1.msra.mxu0 0.0
        %1327 = vmatprep.subr.mxu0 0.0
        %1328 = vmatpush1.msra.mxu0 %v491
        %1329 = vmatprep.subr.mxu0 0.0
        %1330 = vmatpush1.msra.mxu0 %v490
        %1331 = vmatprep.subr.mxu0 0.0
        %1332 = vmatpush1.msra.mxu0 %v489
        %1333 = vmatprep.subr.mxu0 0.0
        %1334 = vmatpush1.msra.mxu0 %v488
        %1335 = vmatprep.subr.mxu0 0.0
        %1336 = vmatpush1.msra.mxu0 %v487
        %1337 = vmatprep.subr.mxu0 0.0
        %1338 = vmatpush1.msra.mxu0 %v486
        %1339 = vmatprep.subr.mxu0 0.0
        %1340 = vmatpush1.msra.mxu0 %v485
        %1341 = vmatprep.subr.mxu0 0.0
        %1342 = vmatpush1.msra.mxu0 %v484
        %1343 = vmatprep.subr.mxu0 0.0
        %1344 = vmatpush2.msra.mxu0 0.0
        %1345 = vmatprep.subr.mxu0 0.0
        %1346 = vmatpush2.msra.mxu0 0.0
        %1347 = vmatprep.subr.mxu0 0.0
        %1348 = vmatpush2.msra.mxu0 0.0
        %1349 = vmatprep.subr.mxu0 0.0
        %1350 = vmatpush2.msra.mxu0 0.0
        %1351 = vmatprep.subr.mxu0 0.0
        %1352 = vmatpush2.msra.mxu0 0.0
        %1353 = vmatprep.subr.mxu0 0.0
        %1354 = vmatpush2.msra.mxu0 0.0
        %1355 = vmatprep.subr.mxu0 0.0
        %1356 = vmatpush2.msra.mxu0 0.0
        %1357 = vmatprep.subr.mxu0 0.0
        %1358 = vmatpush2.msra.mxu0 0.0
        %1359 = vmatprep.subr.mxu0 0.0
        %1360 = vmatpush2.msra.mxu0 0.0
        %1361 = vmatprep.subr.mxu0 0.0
        %1362 = vmatpush2.msra.mxu0 0.0
        %1363 = vmatprep.subr.mxu0 0.0
        %1364 = vmatpush2.msra.mxu0 0.0
        %1365 = vmatprep.subr.mxu0 0.0
        %1366 = vmatpush2.msra.mxu0 0.0
        %1367 = vmatprep.subr.mxu0 0.0
        %1368 = vmatpush2.msra.mxu0 0.0
        %1369 = vmatprep.subr.mxu0 0.0
        %1370 = vmatpush2.msra.mxu0 0.0
        %1371 = vmatprep.subr.mxu0 0.0
        %1372 = vmatpush2.msra.mxu0 0.0
        %1373 = vmatprep.subr.mxu0 0.0
        %1374 = vmatpush2.msra.mxu0 0.0
        %1375 = vmatprep.mubr.f32.mxu0 0.0
        %1376 = vmatmul.mubr.f32.gmra.mxu0 %v1288
        %v1377 = vpop.f32.mrf.mxu0
        %v1378 = vadd.f32 %v1285, %v1377
        %v1379 = vpop.f32.mrf.mxu0
        %1380 = vmatprep.mubr.f32.mxu0 0.0
        %1381 = vmatmul.mubr.f32.gmra.mxu0 %v1291
        %v1382 = vpop.f32.mrf.mxu0
        %v1383 = vadd.f32 %v1285, %v1382
        %v1384 = vpop.f32.mrf.mxu0
        %1385 = vmatprep.mubr.f32.mxu0 0.0
        %1386 = vmatmul.mubr.f32.gmra.mxu0 %v1294
        %v1387 = vpop.f32.mrf.mxu0
        %v1388 = vadd.f32 %v1285, %v1387
        %v1389 = vpop.f32.mrf.mxu0
        %1390 = vmatprep.mubr.f32.mxu0 0.0
        %1391 = vmatmul.mubr.f32.gmra.mxu0 %v1297
        %v1392 = vpop.f32.mrf.mxu0
        %v1393 = vadd.f32 %v1285, %v1392
        %v1394 = vpop.f32.mrf.mxu0
        %1395 = vmatprep.mubr.f32.mxu0 0.0
        %1396 = vmatmul.mubr.f32.gmra.mxu0 %v1300
        %v1397 = vpop.f32.mrf.mxu0
        %v1398 = vadd.f32 %v1285, %v1397
        %v1399 = vpop.f32.mrf.mxu0
        %1400 = vmatprep.mubr.f32.mxu0 0.0
        %1401 = vmatmul.mubr.f32.gmra.mxu0 %v1303
        %v1402 = vpop.f32.mrf.mxu0
        %v1403 = vadd.f32 %v1285, %v1402
        %v1404 = vpop.f32.mrf.mxu0
        %1405 = vmatprep.mubr.f32.mxu0 0.0
        %1406 = vmatmul.mubr.f32.gmra.mxu0 %v1306
        %v1407 = vpop.f32.mrf.mxu0
        %v1408 = vadd.f32 %v1285, %v1407
        %v1409 = vpop.f32.mrf.mxu0
        %1410 = vmatprep.mubr.f32.mxu0 0.0
        %1411 = vmatmul.mubr.f32.gmra.mxu0 %v1309
        %v1412 = vpop.f32.mrf.mxu0
        %v1413 = vadd.f32 %v1285, %v1412
        %v1414 = vpop.f32.mrf.mxu0
        %1415 = vdwg.mxu0
        %v1416 = vsel %vm572, %v549, 0.0
        %1417 = vadd.xlane.f32.xlu0 %v1416
        %v1418 = vpop.xlane.xlu0 %1417
        %v1419 = vsel %vm572, %v550, 0.0
        %1420 = vadd.xlane.f32.xlu0 %v1419
        %v1421 = vpop.xlane.xlu0 %1420
        %vm1422 = vcmask 520192
        %v1423 = vsel %vm1422, %v551, 0.0
        %1424 = vadd.xlane.f32.xlu0 %v1423
        %v1425 = vpop.xlane.xlu0 %1424
        %v1426 = vmul.f32 %v1418, %v742
        %v1427 = vmul.f32 %v1421, %v742
        %v1428 = vmul.f32 %v1425, %v742
        %v1429 = vmul.f32 %v549, %v549
        %v1430 = vmul.f32 %v550, %v550
        %v1431 = vmul.f32 %v551, %v551
        %v1432 = vsel %vm572, %v1429, 0.0
        %1433 = vadd.xlane.f32.xlu0 %v1432
        %v1434 = vpop.xlane.xlu0 %1433
        %v1435 = vsel %vm572, %v1430, 0.0
        %1436 = vadd.xlane.f32.xlu0 %v1435
        %v1437 = vpop.xlane.xlu0 %1436
        %v1438 = vsel %vm1422, %v1431, 0.0
        %1439 = vadd.xlane.f32.xlu0 %v1438
        %v1440 = vpop.xlane.xlu0 %1439
        %v1441 = vmul.f32 %v1434, %v742
        %v1442 = vmul.f32 %v1437, %v742
        %v1443 = vmul.f32 %v1440, %v742
        %v1444 = vmul.f32 %v1426, %v1426
        %v1445 = vmul.f32 %v1427, %v1427
        %v1446 = vmul.f32 %v1428, %v1428
        %v1447 = vsub.f32 %v1441, %v1444
        %v1448 = vsub.f32 %v1442, %v1445
        %v1449 = vsub.f32 %v1443, %v1446
        %v1450 = vsub.f32 %v549, %v1426
        %v1451 = vsub.f32 %v550, %v1427
        %v1452 = vsub.f32 %v551, %v1428
        %v1453 = vadd.f32 %v1447, 1e-05
        %v1454 = vadd.f32 %v1448, 1e-05
        %v1455 = vadd.f32 %v1449, 1e-05
        %v1456 = vrsqrt.pop %v1453
        %v1457 = vrsqrt.pop %v1454
        %v1458 = vrsqrt.pop %v1455
        %v1459 = vmul.f32 %v1450, %v1456
        %v1460 = vmul.f32 %v1451, %v1457
        %v1461 = vmul.f32 %v1452, %v1458
        %v1462 = vlaneseq
        %v1463 = vshrl.u32 %v1462, 7
        %v1464 = vsub.s32 0, %v1463
        %v1465 = vrot.slane %v541, %v1464
        %v1466 = vmul.f32 %v1459, %v1465
        %v1467 = vmul.f32 %v1460, %v1465
        %v1468 = vmul.f32 %v1461, %v1465
        %v1469 = vlaneseq
        %v1470 = vshrl.u32 %v1469, 7
        %v1471 = vsub.s32 0, %v1470
        %v1472 = vrot.slane %v542, %v1471
        %v1473 = vadd.f32 %v1466, %v1472
        %v1474 = vadd.f32 %v1467, %v1472
        %v1475 = vadd.f32 %v1468, %v1472
        %v1476 = vlaneseq
        %v1477 = vshrl.u32 %v1476, 7
        %v1478 = vsub.s32 0, %v1477
        %v1479 = vrot.slane %v545, %v1478
        %v1481 = vsel %vm572, %v1473, 0
        %v1484 = vsel %vm572, %v1474, 0
        %v1487 = vsel %vm572, %v1475, 0
        %1489 = vmatprep.subr.mxu0 0.0
        %1490 = vmatpush1.msra.mxu0 0.0
        %1491 = vmatprep.subr.mxu0 0.0
        %1492 = vmatpush1.msra.mxu0 0.0
        %1493 = vmatprep.subr.mxu0 0.0
        %1494 = vmatpush1.msra.mxu0 0.0
        %1495 = vmatprep.subr.mxu0 0.0
        %1496 = vmatpush1.msra.mxu0 0.0
        %1497 = vmatprep.subr.mxu0 0.0
        %1498 = vmatpush1.msra.mxu0 0.0
        %1499 = vmatprep.subr.mxu0 0.0
        %1500 = vmatpush1.msra.mxu0 0.0
        %1501 = vmatprep.subr.mxu0 0.0
        %1502 = vmatpush1.msra.mxu0 0.0
        %1503 = vmatprep.subr.mxu0 0.0
        %1504 = vmatpush1.msra.mxu0 0.0
        %1505 = vmatprep.subr.mxu0 0.0
        %1506 = vmatpush1.msra.mxu0 %v456
        %1507 = vmatprep.subr.mxu0 0.0
        %1508 = vmatpush1.msra.mxu0 %v455
        %1509 = vmatprep.subr.mxu0 0.0
        %1510 = vmatpush1.msra.mxu0 %v454
        %1511 = vmatprep.subr.mxu0 0.0
        %1512 = vmatpush1.msra.mxu0 %v453
        %1513 = vmatprep.subr.mxu0 0.0
        %1514 = vmatpush1.msra.mxu0 %v452
        %1515 = vmatprep.subr.mxu0 0.0
        %1516 = vmatpush1.msra.mxu0 %v451
        %1517 = vmatprep.subr.mxu0 0.0
        %1518 = vmatpush1.msra.mxu0 %v450
        %1519 = vmatprep.subr.mxu0 0.0
        %1520 = vmatpush1.msra.mxu0 %v449
        %1521 = vmatprep.subr.mxu0 0.0
        %1522 = vmatpush2.msra.mxu0 0.0
        %1523 = vmatprep.subr.mxu0 0.0
        %1524 = vmatpush2.msra.mxu0 0.0
        %1525 = vmatprep.subr.mxu0 0.0
        %1526 = vmatpush2.msra.mxu0 0.0
        %1527 = vmatprep.subr.mxu0 0.0
        %1528 = vmatpush2.msra.mxu0 0.0
        %1529 = vmatprep.subr.mxu0 0.0
        %1530 = vmatpush2.msra.mxu0 0.0
        %1531 = vmatprep.subr.mxu0 0.0
        %1532 = vmatpush2.msra.mxu0 0.0
        %1533 = vmatprep.subr.mxu0 0.0
        %1534 = vmatpush2.msra.mxu0 0.0
        %1535 = vmatprep.subr.mxu0 0.0
        %1536 = vmatpush2.msra.mxu0 0.0
        %1537 = vmatprep.subr.mxu0 0.0
        %1538 = vmatpush2.msra.mxu0 0.0
        %1539 = vmatprep.subr.mxu0 0.0
        %1540 = vmatpush2.msra.mxu0 0.0
        %1541 = vmatprep.subr.mxu0 0.0
        %1542 = vmatpush2.msra.mxu0 0.0
        %1543 = vmatprep.subr.mxu0 0.0
        %1544 = vmatpush2.msra.mxu0 0.0
        %1545 = vmatprep.subr.mxu0 0.0
        %1546 = vmatpush2.msra.mxu0 0.0
        %1547 = vmatprep.subr.mxu0 0.0
        %1548 = vmatpush2.msra.mxu0 0.0
        %1549 = vmatprep.subr.mxu0 0.0
        %1550 = vmatpush2.msra.mxu0 0.0
        %1551 = vmatprep.subr.mxu0 0.0
        %1552 = vmatpush2.msra.mxu0 0.0
        %1553 = vmatprep.mubr.f32.mxu0 0.0
        %1554 = vmatmul.mubr.f32.gmra.mxu0 %v1481
        %v1555 = vpop.f32.mrf.mxu0
        %v1556 = vadd.f32 %v1479, %v1555
        %v1557 = vpop.f32.mrf.mxu0
        %1558 = vmatprep.mubr.f32.mxu0 0.0
        %1559 = vmatmul.mubr.f32.gmra.mxu0 %v1484
        %v1560 = vpop.f32.mrf.mxu0
        %v1561 = vadd.f32 %v1479, %v1560
        %v1562 = vpop.f32.mrf.mxu0
        %1563 = vmatprep.mubr.f32.mxu0 0.0
        %1564 = vmatmul.mubr.f32.gmra.mxu0 %v1487
        %v1565 = vpop.f32.mrf.mxu0
        %v1566 = vadd.f32 %v1479, %v1565
        %v1567 = vpop.f32.mrf.mxu0
        %1568 = vdwg.mxu0
        %v1570 = vsel %vm572, %v1556, 0
        %v1573 = vsel %vm572, %v1561, 0
        %v1576 = vsel %vm572, %v1566, 0
        %v1579 = vsel %vm572, %v1378, 0
        %v1582 = vsel %vm572, %v1383, 0
        %v1585 = vsel %vm572, %v1388, 0
        %v1588 = vsel %vm572, %v1393, 0
        %v1591 = vsel %vm572, %v1398, 0
        %v1594 = vsel %vm572, %v1403, 0
        %v1597 = vsel %vm572, %v1408, 0
        %v1600 = vsel %vm572, %v1413, 0
        %1602 = vmatprep.subr.mxu0 0.0
        %1603 = vmatpush1.xpose.msra.mxu0 0.0
        %1604 = vmatprep.subr.mxu0 0.0
        %1605 = vmatpush1.xpose.msra.mxu0 0.0
        %1606 = vmatprep.subr.mxu0 0.0
        %1607 = vmatpush1.xpose.msra.mxu0 0.0
        %1608 = vmatprep.subr.mxu0 0.0
        %1609 = vmatpush1.xpose.msra.mxu0 0.0
        %1610 = vmatprep.subr.mxu0 0.0
        %1611 = vmatpush1.xpose.msra.mxu0 0.0
        %1612 = vmatprep.subr.mxu0 0.0
        %1613 = vmatpush1.xpose.msra.mxu0 0.0
        %1614 = vmatprep.subr.mxu0 0.0
        %1615 = vmatpush1.xpose.msra.mxu0 0.0
        %1616 = vmatprep.subr.mxu0 0.0
        %1617 = vmatpush1.xpose.msra.mxu0 0.0
        %1618 = vmatprep.subr.mxu0 0.0
        %1619 = vmatpush1.xpose.msra.mxu0 %v1600
        %1620 = vmatprep.subr.mxu0 0.0
        %1621 = vmatpush1.xpose.msra.mxu0 %v1597
        %1622 = vmatprep.subr.mxu0 0.0
        %1623 = vmatpush1.xpose.msra.mxu0 %v1594
        %1624 = vmatprep.subr.mxu0 0.0
        %1625 = vmatpush1.xpose.msra.mxu0 %v1591
        %1626 = vmatprep.subr.mxu0 0.0
        %1627 = vmatpush1.xpose.msra.mxu0 %v1588
        %1628 = vmatprep.subr.mxu0 0.0
        %1629 = vmatpush1.xpose.msra.mxu0 %v1585
        %1630 = vmatprep.subr.mxu0 0.0
        %1631 = vmatpush1.xpose.msra.mxu0 %v1582
        %1632 = vmatprep.subr.mxu0 0.0
        %1633 = vmatpush1.xpose.msra.mxu0 %v1579
        %1634 = vmatprep.subr.mxu0 0.0
        %1635 = vmatpush2.xpose.msra.mxu0 0.0
        %1636 = vmatprep.subr.mxu0 0.0
        %1637 = vmatpush2.xpose.msra.mxu0 0.0
        %1638 = vmatprep.subr.mxu0 0.0
        %1639 = vmatpush2.xpose.msra.mxu0 0.0
        %1640 = vmatprep.subr.mxu0 0.0
        %1641 = vmatpush2.xpose.msra.mxu0 0.0
        %1642 = vmatprep.subr.mxu0 0.0
        %1643 = vmatpush2.xpose.msra.mxu0 0.0
        %1644 = vmatprep.subr.mxu0 0.0
        %1645 = vmatpush2.xpose.msra.mxu0 0.0
        %1646 = vmatprep.subr.mxu0 0.0
        %1647 = vmatpush2.xpose.msra.mxu0 0.0
        %1648 = vmatprep.subr.mxu0 0.0
        %1649 = vmatpush2.xpose.msra.mxu0 0.0
        %1650 = vmatprep.subr.mxu0 0.0
        %1651 = vmatpush2.xpose.msra.mxu0 0.0
        %1652 = vmatprep.subr.mxu0 0.0
        %1653 = vmatpush2.xpose.msra.mxu0 0.0
        %1654 = vmatprep.subr.mxu0 0.0
        %1655 = vmatpush2.xpose.msra.mxu0 0.0
        %1656 = vmatprep.subr.mxu0 0.0
        %1657 = vmatpush2.xpose.msra.mxu0 0.0
        %1658 = vmatprep.subr.mxu0 0.0
        %1659 = vmatpush2.xpose.msra.mxu0 0.0
        %1660 = vmatprep.subr.mxu0 0.0
        %1661 = vmatpush2.xpose.msra.mxu0 0.0
        %1662 = vmatprep.subr.mxu0 0.0
        %1663 = vmatpush2.xpose.msra.mxu0 0.0
        %1664 = vmatprep.subr.mxu0 0.0
        %1665 = vmatpush2.xpose.msra.mxu0 0.0
        %1666 = vmatprep.mubr.f32.mxu0 0.0
        %1667 = vmatmul.mubr.f32.gmra.mxu0 %v1570
        %v1668 = vpop.f32.mrf.mxu0
        %v1669 = vadd.f32 0.0, %v1668
        %v1670 = vpop.f32.mrf.mxu0
        %1671 = vmatprep.mubr.f32.mxu0 0.0
        %1672 = vmatmul.mubr.f32.gmra.mxu0 %v1573
        %v1673 = vpop.f32.mrf.mxu0
        %v1674 = vadd.f32 0.0, %v1673
        %v1675 = vpop.f32.mrf.mxu0
        %1676 = vmatprep.mubr.f32.mxu0 0.0
        %1677 = vmatmul.mubr.f32.gmra.mxu0 %v1576
        %v1678 = vpop.f32.mrf.mxu0
        %v1679 = vadd.f32 0.0, %v1678
        %v1680 = vpop.f32.mrf.mxu0
        %1681 = vdwg.mxu0
        %v1682 = vmul.f32 %v1669, 0.125
        %v1683 = vmul.f32 %v1674, 0.125
        %v1684 = vmul.f32 %v1679, 0.125
        %v1685 = vsel %vm572, %v1682, -inf
        %v1686 = vsel %vm572, %v1683, -inf
        %v1687 = vsel %vm1422, %v1684, -inf
        %v1688 = vmax.f32 %v1685, %v1686
        %v1689 = vmax.f32 %v1688, %v1687
        %v1690 = vrot.slane %v1689, 4
        %v1691 = vmax.f32 %v1689, %v1690
        %v1692 = vrot.slane %v1691, 2
        %v1693 = vmax.f32 %v1691, %v1692
        %v1694 = vrot.slane %v1693, 1
        %v1695 = vmax.f32 %v1693, %v1694
        %v1696 = vsub.f32 %v1682, %v1695
        %v1697 = vsub.f32 %v1683, %v1695
        %v1698 = vsub.f32 %v1684, %v1695
        %v1699 = vmul.f32 %v1696, 1.442695
        %v1700 = vpow.pop %v1699
        %v1701 = vmul.f32 %v1697, 1.442695
        %v1702 = vpow.pop %v1701
        %v1703 = vmul.f32 %v1698, 1.442695
        %v1704 = vpow.pop %v1703
        %v1705 = vsel %vm572, %v1700, 0.0
        %v1706 = vsel %vm572, %v1702, 0.0
        %v1707 = vadd.f32 %v1705, %v1706
        %v1708 = vsel %vm1422, %v1704, 0.0
        %v1709 = vadd.f32 %v1707, %v1708
        %v1710 = vrot.slane %v1709, 4
        %v1711 = vadd.f32 %v1709, %v1710
        %v1712 = vrot.slane %v1711, 2
        %v1713 = vadd.f32 %v1711, %v1712
        %v1714 = vrot.slane %v1713, 1
        %v1715 = vadd.f32 %v1713, %v1714
        %v1716 = vrcp.pop %v1715
        %v1717 = vmul.f32 %v1700, %v1716
        %v1718 = vmul.f32 %v1702, %v1716
        %v1719 = vmul.f32 %v1704, %v1716
        %v1720 = vadd.f32 %v1717, 1e-08
        %v1721 = vadd.f32 %v1718, 1e-08
        %v1722 = vadd.f32 %v1719, 1e-08
        %v1723 = vsel %vm572, %v1720, 0.0
        %1724 = vadd.xlane.f32.xlu0 %v1723
        %v1725 = vpop.xlane.xlu0 %1724
        %v1726 = vsel %vm572, %v1721, 0.0
        %1727 = vadd.xlane.f32.xlu0 %v1726
        %v1728 = vpop.xlane.xlu0 %1727
        %v1729 = vsel %vm1422, %v1722, 0.0
        %1730 = vadd.xlane.f32.xlu0 %v1729
        %v1731 = vpop.xlane.xlu0 %1730
        %v1732 = vrcp.pop %v1725
        %v1733 = vrcp.pop %v1728
        %v1734 = vrcp.pop %v1731
        %v1735 = vmul.f32 %v1720, %v1732
        %v1736 = vmul.f32 %v1721, %v1733
        %v1737 = vmul.f32 %v1722, %v1734
        %1738 = vrot.lane.b32.xlu0 %v1378, 64
        %v1739 = vpop.permute.xlu0 %1738
        %1740 = vrot.lane.b32.xlu0 %v1383, 64
        %v1741 = vpop.permute.xlu0 %1740
        %1742 = vrot.lane.b32.xlu0 %v1388, 64
        %v1743 = vpop.permute.xlu0 %1742
        %1744 = vrot.lane.b32.xlu0 %v1393, 64
        %v1745 = vpop.permute.xlu0 %1744
        %1746 = vrot.lane.b32.xlu0 %v1398, 64
        %v1747 = vpop.permute.xlu0 %1746
        %1748 = vrot.lane.b32.xlu0 %v1403, 64
        %v1749 = vpop.permute.xlu0 %1748
        %1750 = vrot.lane.b32.xlu0 %v1408, 64
        %v1751 = vpop.permute.xlu0 %1750
        %1752 = vrot.lane.b32.xlu0 %v1413, 64
        %v1753 = vpop.permute.xlu0 %1752
        %v1763 = vsel %vm572, %v1735, 0
        %v1766 = vsel %vm572, %v1736, 0
        %v1769 = vsel %vm572, %v1737, 0
        %1771 = vmatprep.subr.mxu0 0.0
        %1772 = vmatpush1.msra.mxu0 0.0
        %1773 = vmatprep.subr.mxu0 0.0
        %1774 = vmatpush1.msra.mxu0 0.0
        %1775 = vmatprep.subr.mxu0 0.0
        %1776 = vmatpush1.msra.mxu0 0.0
        %1777 = vmatprep.subr.mxu0 0.0
        %1778 = vmatpush1.msra.mxu0 0.0
        %1779 = vmatprep.subr.mxu0 0.0
        %1780 = vmatpush1.msra.mxu0 0.0
        %1781 = vmatprep.subr.mxu0 0.0
        %1782 = vmatpush1.msra.mxu0 0.0
        %1783 = vmatprep.subr.mxu0 0.0
        %1784 = vmatpush1.msra.mxu0 0.0
        %1785 = vmatprep.subr.mxu0 0.0
        %1786 = vmatpush1.msra.mxu0 0.0
        %1787 = vmatprep.subr.mxu0 0.0
        %1788 = vmatpush1.msra.mxu0 %v1753
        %1789 = vmatprep.subr.mxu0 0.0
        %1790 = vmatpush1.msra.mxu0 %v1751
        %1791 = vmatprep.subr.mxu0 0.0
        %1792 = vmatpush1.msra.mxu0 %v1749
        %1793 = vmatprep.subr.mxu0 0.0
        %1794 = vmatpush1.msra.mxu0 %v1747
        %1795 = vmatprep.subr.mxu0 0.0
        %1796 = vmatpush1.msra.mxu0 %v1745
        %1797 = vmatprep.subr.mxu0 0.0
        %1798 = vmatpush1.msra.mxu0 %v1743
        %1799 = vmatprep.subr.mxu0 0.0
        %1800 = vmatpush1.msra.mxu0 %v1741
        %1801 = vmatprep.subr.mxu0 0.0
        %1802 = vmatpush1.msra.mxu0 %v1739
        %1803 = vmatprep.subr.mxu0 0.0
        %1804 = vmatpush2.msra.mxu0 0.0
        %1805 = vmatprep.subr.mxu0 0.0
        %1806 = vmatpush2.msra.mxu0 0.0
        %1807 = vmatprep.subr.mxu0 0.0
        %1808 = vmatpush2.msra.mxu0 0.0
        %1809 = vmatprep.subr.mxu0 0.0
        %1810 = vmatpush2.msra.mxu0 0.0
        %1811 = vmatprep.subr.mxu0 0.0
        %1812 = vmatpush2.msra.mxu0 0.0
        %1813 = vmatprep.subr.mxu0 0.0
        %1814 = vmatpush2.msra.mxu0 0.0
        %1815 = vmatprep.subr.mxu0 0.0
        %1816 = vmatpush2.msra.mxu0 0.0
        %1817 = vmatprep.subr.mxu0 0.0
        %1818 = vmatpush2.msra.mxu0 0.0
        %1819 = vmatprep.subr.mxu0 0.0
        %1820 = vmatpush2.msra.mxu0 0.0
        %1821 = vmatprep.subr.mxu0 0.0
        %1822 = vmatpush2.msra.mxu0 0.0
        %1823 = vmatprep.subr.mxu0 0.0
        %1824 = vmatpush2.msra.mxu0 0.0
        %1825 = vmatprep.subr.mxu0 0.0
        %1826 = vmatpush2.msra.mxu0 0.0
        %1827 = vmatprep.subr.mxu0 0.0
        %1828 = vmatpush2.msra.mxu0 0.0
        %1829 = vmatprep.subr.mxu0 0.0
        %1830 = vmatpush2.msra.mxu0 0.0
        %1831 = vmatprep.subr.mxu0 0.0
        %1832 = vmatpush2.msra.mxu0 0.0
        %1833 = vmatprep.subr.mxu0 0.0
        %1834 = vmatpush2.msra.mxu0 0.0
        %1835 = vmatprep.mubr.f32.mxu0 0.0
        %1836 = vmatmul.mubr.f32.gmra.mxu0 %v1763
        %v1837 = vpop.f32.mrf.mxu0
        %v1838 = vadd.f32 0.0, %v1837
        %v1839 = vpop.f32.mrf.mxu0
        %1840 = vmatprep.mubr.f32.mxu0 0.0
        %1841 = vmatmul.mubr.f32.gmra.mxu0 %v1766
        %v1842 = vpop.f32.mrf.mxu0
        %v1843 = vadd.f32 0.0, %v1842
        %v1844 = vpop.f32.mrf.mxu0
        %1845 = vmatprep.mubr.f32.mxu0 0.0
        %1846 = vmatmul.mubr.f32.gmra.mxu0 %v1769
        %v1847 = vpop.f32.mrf.mxu0
        %v1848 = vadd.f32 0.0, %v1847
        %v1849 = vpop.f32.mrf.mxu0
        %1850 = vdwg.mxu0
        %1854 = vrot.lane.b32.xlu0 %v549, 64
        %v1855 = vpop.permute.xlu0 %1854
        %1856 = vrot.lane.b32.xlu0 %v550, 64
        %v1857 = vpop.permute.xlu0 %1856
        %1858 = vrot.lane.b32.xlu0 %v551, 64
        %v1859 = vpop.permute.xlu0 %1858
        %v1863 = vsel %vm572, %v1838, %v1855
        %v1864 = vsel %vm572, %v1843, %v1857
        %v1865 = vsel %vm572, %v1848, %v1859
        %v1867 = vlaneseq
        %v1868 = vshrl.u32 %v1867, 7
        %v1869 = vsub.s32 0, %v1868
        %v1870 = vrot.slane %v533, %v1869
        %v1871 = vlaneseq
        %v1872 = vshrl.u32 %v1871, 7
        %v1873 = vsub.s32 1, %v1872
        %v1874 = vrot.slane %v533, %v1873
        %1877 = vmatprep.subr.mxu0 %v523
        %1878 = vmatpush1.msra.mxu0 %v522
        %1879 = vmatprep.subr.mxu0 %v521
        %1880 = vmatpush1.msra.mxu0 %v520
        %1881 = vmatprep.subr.mxu0 %v519
        %1882 = vmatpush1.msra.mxu0 %v518
        %1883 = vmatprep.subr.mxu0 %v517
        %1884 = vmatpush1.msra.mxu0 %v516
        %1885 = vmatprep.subr.mxu0 %v515
        %1886 = vmatpush1.msra.mxu0 %v514
        %1887 = vmatprep.subr.mxu0 %v513
        %1888 = vmatpush1.msra.mxu0 %v512
        %1889 = vmatprep.subr.mxu0 %v511
        %1890 = vmatpush1.msra.mxu0 %v510
        %1891 = vmatprep.subr.mxu0 %v509
        %1892 = vmatpush1.msra.mxu0 %v508
        %1893 = vmatprep.subr.mxu0 %v507
        %1894 = vmatpush1.msra.mxu0 %v506
        %1895 = vmatprep.subr.mxu0 %v505
        %1896 = vmatpush1.msra.mxu0 %v504
        %1897 = vmatprep.subr.mxu0 %v503
        %1898 = vmatpush1.msra.mxu0 %v502
        %1899 = vmatprep.subr.mxu0 %v501
        %1900 = vmatpush1.msra.mxu0 %v500
        %1901 = vmatprep.subr.mxu0 %v499
        %1902 = vmatpush1.msra.mxu0 %v498
        %1903 = vmatprep.subr.mxu0 %v497
        %1904 = vmatpush1.msra.mxu0 %v496
        %1905 = vmatprep.subr.mxu0 %v495
        %1906 = vmatpush1.msra.mxu0 %v494
        %1907 = vmatprep.subr.mxu0 %v493
        %1908 = vmatpush1.msra.mxu0 %v492
        %1909 = vmatprep.subr.mxu0 0.0
        %1910 = vmatpush2.msra.mxu0 0.0
        %1911 = vmatprep.subr.mxu0 0.0
        %1912 = vmatpush2.msra.mxu0 0.0
        %1913 = vmatprep.subr.mxu0 0.0
        %1914 = vmatpush2.msra.mxu0 0.0
        %1915 = vmatprep.subr.mxu0 0.0
        %1916 = vmatpush2.msra.mxu0 0.0
        %1917 = vmatprep.subr.mxu0 0.0
        %1918 = vmatpush2.msra.mxu0 0.0
        %1919 = vmatprep.subr.mxu0 0.0
        %1920 = vmatpush2.msra.mxu0 0.0
        %1921 = vmatprep.subr.mxu0 0.0
        %1922 = vmatpush2.msra.mxu0 0.0
        %1923 = vmatprep.subr.mxu0 0.0
        %1924 = vmatpush2.msra.mxu0 0.0
        %1925 = vmatprep.subr.mxu0 0.0
        %1926 = vmatpush2.msra.mxu0 0.0
        %1927 = vmatprep.subr.mxu0 0.0
        %1928 = vmatpush2.msra.mxu0 0.0
        %1929 = vmatprep.subr.mxu0 0.0
        %1930 = vmatpush2.msra.mxu0 0.0
        %1931 = vmatprep.subr.mxu0 0.0
        %1932 = vmatpush2.msra.mxu0 0.0
        %1933 = vmatprep.subr.mxu0 0.0
        %1934 = vmatpush2.msra.mxu0 0.0
        %1935 = vmatprep.subr.mxu0 0.0
        %1936 = vmatpush2.msra.mxu0 0.0
        %1937 = vmatprep.subr.mxu0 0.0
        %1938 = vmatpush2.msra.mxu0 0.0
        %1939 = vmatprep.subr.mxu0 0.0
        %1940 = vmatpush2.msra.mxu0 0.0
        %1941 = vmatprep.mubr.f32.mxu0 0.0
        %1942 = vmatmul.mubr.f32.gmra.mxu0 %v1863
        %v1943 = vpop.f32.mrf.mxu0
        %v1944 = vadd.f32 %v1870, %v1943
        %v1945 = vpop.f32.mrf.mxu0
        %v1946 = vadd.f32 %v1874, %v1945
        %1947 = vmatprep.mubr.f32.mxu0 0.0
        %1948 = vmatmul.mubr.f32.gmra.mxu0 %v1864
        %v1949 = vpop.f32.mrf.mxu0
        %v1950 = vadd.f32 %v1870, %v1949
        %v1951 = vpop.f32.mrf.mxu0
        %v1952 = vadd.f32 %v1874, %v1951
        %1953 = vmatprep.mubr.f32.mxu0 0.0
        %1954 = vmatmul.mubr.f32.gmra.mxu0 %v1865
        %v1955 = vpop.f32.mrf.mxu0
        %v1956 = vadd.f32 %v1870, %v1955
        %v1957 = vpop.f32.mrf.mxu0
        %v1958 = vadd.f32 %v1874, %v1957
        %1959 = vdwg.mxu0
        %v1960 = vlaneseq
        %v1961 = vshrl.u32 %v1960, 7
        %v1962 = vsub.s32 0, %v1961
        %v1963 = vrot.slane %v548, %v1962
        %v1964 = vsel %vm572, %v549, 0
        %v1966 = vsel %vm572, %v550, 0
        %v1968 = vsel %vm572, %v551, 0
        %1970 = vmatprep.subr.mxu0 0.0
        %1971 = vmatpush1.msra.mxu0 0.0
        %1972 = vmatprep.subr.mxu0 0.0
        %1973 = vmatpush1.msra.mxu0 0.0
        %1974 = vmatprep.subr.mxu0 0.0
        %1975 = vmatpush1.msra.mxu0 0.0
        %1976 = vmatprep.subr.mxu0 0.0
        %1977 = vmatpush1.msra.mxu0 0.0
        %1978 = vmatprep.subr.mxu0 0.0
        %1979 = vmatpush1.msra.mxu0 0.0
        %1980 = vmatprep.subr.mxu0 0.0
        %1981 = vmatpush1.msra.mxu0 0.0
        %1982 = vmatprep.subr.mxu0 0.0
        %1983 = vmatpush1.msra.mxu0 0.0
        %1984 = vmatprep.subr.mxu0 0.0
        %1985 = vmatpush1.msra.mxu0 0.0
        %1986 = vmatprep.subr.mxu0 0.0
        %1987 = vmatpush1.msra.mxu0 %v483
        %1988 = vmatprep.subr.mxu0 0.0
        %1989 = vmatpush1.msra.mxu0 %v482
        %1990 = vmatprep.subr.mxu0 0.0
        %1991 = vmatpush1.msra.mxu0 %v481
        %1992 = vmatprep.subr.mxu0 0.0
        %1993 = vmatpush1.msra.mxu0 %v480
        %1994 = vmatprep.subr.mxu0 0.0
        %1995 = vmatpush1.msra.mxu0 %v479
        %1996 = vmatprep.subr.mxu0 0.0
        %1997 = vmatpush1.msra.mxu0 %v478
        %1998 = vmatprep.subr.mxu0 0.0
        %1999 = vmatpush1.msra.mxu0 %v477
        %2000 = vmatprep.subr.mxu0 0.0
        %2001 = vmatpush1.msra.mxu0 %v476
        %2002 = vmatprep.subr.mxu0 0.0
        %2003 = vmatpush2.msra.mxu0 0.0
        %2004 = vmatprep.subr.mxu0 0.0
        %2005 = vmatpush2.msra.mxu0 0.0
        %2006 = vmatprep.subr.mxu0 0.0
        %2007 = vmatpush2.msra.mxu0 0.0
        %2008 = vmatprep.subr.mxu0 0.0
        %2009 = vmatpush2.msra.mxu0 0.0
        %2010 = vmatprep.subr.mxu0 0.0
        %2011 = vmatpush2.msra.mxu0 0.0
        %2012 = vmatprep.subr.mxu0 0.0
        %2013 = vmatpush2.msra.mxu0 0.0
        %2014 = vmatprep.subr.mxu0 0.0
        %2015 = vmatpush2.msra.mxu0 0.0
        %2016 = vmatprep.subr.mxu0 0.0
        %2017 = vmatpush2.msra.mxu0 0.0
        %2018 = vmatprep.subr.mxu0 0.0
        %2019 = vmatpush2.msra.mxu0 0.0
        %2020 = vmatprep.subr.mxu0 0.0
        %2021 = vmatpush2.msra.mxu0 0.0
        %2022 = vmatprep.subr.mxu0 0.0
        %2023 = vmatpush2.msra.mxu0 0.0
        %2024 = vmatprep.subr.mxu0 0.0
        %2025 = vmatpush2.msra.mxu0 0.0
        %2026 = vmatprep.subr.mxu0 0.0
        %2027 = vmatpush2.msra.mxu0 0.0
        %2028 = vmatprep.subr.mxu0 0.0
        %2029 = vmatpush2.msra.mxu0 0.0
        %2030 = vmatprep.subr.mxu0 0.0
        %2031 = vmatpush2.msra.mxu0 0.0
        %2032 = vmatprep.subr.mxu0 0.0
        %2033 = vmatpush2.msra.mxu0 0.0
        %2034 = vmatprep.mubr.f32.mxu0 0.0
        %2035 = vmatmul.mubr.f32.gmra.mxu0 %v1964
        %v2036 = vpop.f32.mrf.mxu0
        %v2037 = vadd.f32 %v1963, %v2036
        %v2038 = vpop.f32.mrf.mxu0
        %2039 = vmatprep.mubr.f32.mxu0 0.0
        %2040 = vmatmul.mubr.f32.gmra.mxu0 %v1966
        %v2041 = vpop.f32.mrf.mxu0
        %v2042 = vadd.f32 %v1963, %v2041
        %v2043 = vpop.f32.mrf.mxu0
        %2044 = vmatprep.mubr.f32.mxu0 0.0
        %2045 = vmatmul.mubr.f32.gmra.mxu0 %v1968
        %v2046 = vpop.f32.mrf.mxu0
        %v2047 = vadd.f32 %v1963, %v2046
        %v2048 = vpop.f32.mrf.mxu0
        %2049 = vdwg.mxu0
        %v2050 = vxor.u32 %v1944, 2147483648
        %v2051 = vxor.u32 %v1950, 2147483648
        %v2052 = vxor.u32 %v1956, 2147483648
        %v2053 = vmul.f32 %v2050, 1.442695
        %v2054 = vpow.pop %v2053
        %v2055 = vmul.f32 %v2051, 1.442695
        %v2056 = vpow.pop %v2055
        %v2057 = vmul.f32 %v2052, 1.442695
        %v2058 = vpow.pop %v2057
        %v2059 = vadd.f32 %v2054, 1.0
        %v2060 = vadd.f32 %v2056, 1.0
        %v2061 = vadd.f32 %v2058, 1.0
        %v2062 = vrcp.pop %v2059
        %v2063 = vmul.f32 1.0, %v2062
        %v2064 = vrcp.pop %v2060
        %v2065 = vmul.f32 1.0, %v2064
        %v2066 = vrcp.pop %v2061
        %v2067 = vmul.f32 1.0, %v2066
        %v2068 = vsub.f32 %v2063, 1.0
        %v2069 = vsub.f32 %v2065, 1.0
        %v2070 = vsub.f32 %v2067, 1.0
        %v2071 = vmul.f32 %v2068, %v2037
        %v2072 = vmul.f32 %v2069, %v2042
        %v2073 = vmul.f32 %v2070, %v2047
        %v2074 = vadd.f32 %v1946, %v2071
        %v2075 = vadd.f32 %v1952, %v2072
        %v2076 = vadd.f32 %v1958, %v2073
        %v2077 = vtanh.pop %v2074
        %v2078 = vtanh.pop %v2075
        %v2079 = vtanh.pop %v2076
        %v2080 = vsub.f32 1.0, %v2063
        %v2081 = vsub.f32 1.0, %v2065
        %v2082 = vsub.f32 1.0, %v2067
        %2086 = vrot.lane.b32.xlu0 %v2077, 64
        %v2087 = vpop.permute.xlu0 %2086
        %2088 = vrot.lane.b32.xlu0 %v2078, 64
        %v2089 = vpop.permute.xlu0 %2088
        %2090 = vrot.lane.b32.xlu0 %v2079, 64
        %v2091 = vpop.permute.xlu0 %2090
        %v2095 = vmul.f32 %v2080, %v2087
        %v2096 = vmul.f32 %v2081, %v2089
        %v2097 = vmul.f32 %v2082, %v2091
        %v2098 = vmul.f32 %v2063, %v1855
        %v2099 = vmul.f32 %v2065, %v1857
        %v2100 = vmul.f32 %v2067, %v1859
        %v2101 = vadd.f32 %v2095, %v2098
        %v2102 = vadd.f32 %v2096, %v2099
        %v2103 = vadd.f32 %v2097, %v2100
        %2107 = vrot.lane.b32.xlu0 %v2101, 64
        %v2108 = vpop.permute.xlu0 %2107
        %2109 = vrot.lane.b32.xlu0 %v2102, 64
        %v2110 = vpop.permute.xlu0 %2109
        %2111 = vrot.lane.b32.xlu0 %v2103, 64
        %v2112 = vpop.permute.xlu0 %2111
        %v2116 = vsel %vm572, %v2108, 0.0
        %2117 = vadd.xlane.f32.xlu0 %v2116
        %v2118 = vpop.xlane.xlu0 %2117
        %v2119 = vsel %vm572, %v2110, 0.0
        %2120 = vadd.xlane.f32.xlu0 %v2119
        %v2121 = vpop.xlane.xlu0 %2120
        %v2122 = vsel %vm1422, %v2112, 0.0
        %2123 = vadd.xlane.f32.xlu0 %v2122
        %v2124 = vpop.xlane.xlu0 %2123
        %v2125 = vmul.f32 %v2118, %v742
        %v2126 = vmul.f32 %v2121, %v742
        %v2127 = vmul.f32 %v2124, %v742
        %v2128 = vmul.f32 %v2101, %v2101
        %v2129 = vmul.f32 %v2102, %v2102
        %v2130 = vmul.f32 %v2103, %v2103
        %2134 = vrot.lane.b32.xlu0 %v2128, 64
        %v2135 = vpop.permute.xlu0 %2134
        %2136 = vrot.lane.b32.xlu0 %v2129, 64
        %v2137 = vpop.permute.xlu0 %2136
        %2138 = vrot.lane.b32.xlu0 %v2130, 64
        %v2139 = vpop.permute.xlu0 %2138
        %v2143 = vsel %vm572, %v2135, 0.0
        %2144 = vadd.xlane.f32.xlu0 %v2143
        %v2145 = vpop.xlane.xlu0 %2144
        %v2146 = vsel %vm572, %v2137, 0.0
        %2147 = vadd.xlane.f32.xlu0 %v2146
        %v2148 = vpop.xlane.xlu0 %2147
        %v2149 = vsel %vm1422, %v2139, 0.0
        %2150 = vadd.xlane.f32.xlu0 %v2149
        %v2151 = vpop.xlane.xlu0 %2150
        %v2152 = vmul.f32 %v2145, %v742
        %v2153 = vmul.f32 %v2148, %v742
        %v2154 = vmul.f32 %v2151, %v742
        %v2155 = vmul.f32 %v2125, %v2125
        %v2156 = vmul.f32 %v2126, %v2126
        %v2157 = vmul.f32 %v2127, %v2127
        %v2158 = vsub.f32 %v2152, %v2155
        %v2159 = vsub.f32 %v2153, %v2156
        %v2160 = vsub.f32 %v2154, %v2157
        %v2161 = vsub.f32 %v2101, %v2125
        %v2162 = vsub.f32 %v2102, %v2126
        %v2163 = vsub.f32 %v2103, %v2127
        %v2164 = vadd.f32 %v2158, 1e-05
        %v2165 = vadd.f32 %v2159, 1e-05
        %v2166 = vadd.f32 %v2160, 1e-05
        %v2167 = vrsqrt.pop %v2164
        %v2168 = vrsqrt.pop %v2165
        %v2169 = vrsqrt.pop %v2166
        %v2170 = vmul.f32 %v2161, %v2167
        %v2171 = vmul.f32 %v2162, %v2168
        %v2172 = vmul.f32 %v2163, %v2169
        %v2173 = vlaneseq
        %v2174 = vshrl.u32 %v2173, 7
        %v2175 = vsub.s32 0, %v2174
        %v2176 = vrot.slane %v543, %v2175
        %2178 = vrot.lane.b32.xlu0 %v2176, 64
        %v2179 = vpop.permute.xlu0 %2178
        %v2181 = vmul.f32 %v2170, %v2179
        %v2182 = vmul.f32 %v2171, %v2179
        %v2183 = vmul.f32 %v2172, %v2179
        %v2184 = vlaneseq
        %v2185 = vshrl.u32 %v2184, 7
        %v2186 = vsub.s32 0, %v2185
        %v2187 = vrot.slane %v544, %v2186
        %2189 = vrot.lane.b32.xlu0 %v2187, 64
        %v2190 = vpop.permute.xlu0 %2189
        %v2192 = vadd.f32 %v2181, %v2190
        %v2193 = vadd.f32 %v2182, %v2190
        %v2194 = vadd.f32 %v2183, %v2190
        %v2195 = vlaneseq
        %v2196 = vshrl.u32 %v2195, 7
        %v2197 = vsub.s32 0, %v2196
        %v2198 = vrot.slane %v546, %v2197
        %2202 = vrot.lane.b32.xlu0 %v2192, 64
        %v2203 = vpop.permute.xlu0 %2202
        %2204 = vrot.lane.b32.xlu0 %v2193, 64
        %v2205 = vpop.permute.xlu0 %2204
        %2206 = vrot.lane.b32.xlu0 %v2194, 64
        %v2207 = vpop.permute.xlu0 %2206
        %v2208 = vsel %vm572, %v2203, 0
        %v2210 = vsel %vm572, %v2205, 0
        %v2212 = vsel %vm572, %v2207, 0
        %2214 = vmatprep.subr.mxu0 0.0
        %2215 = vmatpush1.msra.mxu0 0.0
        %2216 = vmatprep.subr.mxu0 0.0
        %2217 = vmatpush1.msra.mxu0 0.0
        %2218 = vmatprep.subr.mxu0 0.0
        %2219 = vmatpush1.msra.mxu0 0.0
        %2220 = vmatprep.subr.mxu0 0.0
        %2221 = vmatpush1.msra.mxu0 0.0
        %2222 = vmatprep.subr.mxu0 0.0
        %2223 = vmatpush1.msra.mxu0 0.0
        %2224 = vmatprep.subr.mxu0 0.0
        %2225 = vmatpush1.msra.mxu0 0.0
        %2226 = vmatprep.subr.mxu0 0.0
        %2227 = vmatpush1.msra.mxu0 0.0
        %2228 = vmatprep.subr.mxu0 0.0
        %2229 = vmatpush1.msra.mxu0 0.0
        %2230 = vmatprep.subr.mxu0 0.0
        %2231 = vmatpush1.msra.mxu0 %v465
        %2232 = vmatprep.subr.mxu0 0.0
        %2233 = vmatpush1.msra.mxu0 %v464
        %2234 = vmatprep.subr.mxu0 0.0
        %2235 = vmatpush1.msra.mxu0 %v463
        %2236 = vmatprep.subr.mxu0 0.0
        %2237 = vmatpush1.msra.mxu0 %v462
        %2238 = vmatprep.subr.mxu0 0.0
        %2239 = vmatpush1.msra.mxu0 %v461
        %2240 = vmatprep.subr.mxu0 0.0
        %2241 = vmatpush1.msra.mxu0 %v460
        %2242 = vmatprep.subr.mxu0 0.0
        %2243 = vmatpush1.msra.mxu0 %v459
        %2244 = vmatprep.subr.mxu0 0.0
        %2245 = vmatpush1.msra.mxu0 %v458
        %2246 = vmatprep.subr.mxu0 0.0
        %2247 = vmatpush2.msra.mxu0 0.0
        %2248 = vmatprep.subr.mxu0 0.0
        %2249 = vmatpush2.msra.mxu0 0.0
        %2250 = vmatprep.subr.mxu0 0.0
        %2251 = vmatpush2.msra.mxu0 0.0
        %2252 = vmatprep.subr.mxu0 0.0
        %2253 = vmatpush2.msra.mxu0 0.0
        %2254 = vmatprep.subr.mxu0 0.0
        %2255 = vmatpush2.msra.mxu0 0.0
        %2256 = vmatprep.subr.mxu0 0.0
        %2257 = vmatpush2.msra.mxu0 0.0
        %2258 = vmatprep.subr.mxu0 0.0
        %2259 = vmatpush2.msra.mxu0 0.0
        %2260 = vmatprep.subr.mxu0 0.0
        %2261 = vmatpush2.msra.mxu0 0.0
        %2262 = vmatprep.subr.mxu0 0.0
        %2263 = vmatpush2.msra.mxu0 0.0
        %2264 = vmatprep.subr.mxu0 0.0
        %2265 = vmatpush2.msra.mxu0 0.0
        %2266 = vmatprep.subr.mxu0 0.0
        %2267 = vmatpush2.msra.mxu0 0.0
        %2268 = vmatprep.subr.mxu0 0.0
        %2269 = vmatpush2.msra.mxu0 0.0
        %2270 = vmatprep.subr.mxu0 0.0
        %2271 = vmatpush2.msra.mxu0 0.0
        %2272 = vmatprep.subr.mxu0 0.0
        %2273 = vmatpush2.msra.mxu0 0.0
        %2274 = vmatprep.subr.mxu0 0.0
        %2275 = vmatpush2.msra.mxu0 0.0
        %2276 = vmatprep.subr.mxu0 0.0
        %2277 = vmatpush2.msra.mxu0 0.0
        %2278 = vmatprep.mubr.f32.mxu0 0.0
        %2279 = vmatmul.mubr.f32.gmra.mxu0 %v2208
        %v2280 = vpop.f32.mrf.mxu0
        %v2281 = vadd.f32 %v2198, %v2280
        %v2282 = vpop.f32.mrf.mxu0
        %2283 = vmatprep.mubr.f32.mxu0 0.0
        %2284 = vmatmul.mubr.f32.gmra.mxu0 %v2210
        %v2285 = vpop.f32.mrf.mxu0
        %v2286 = vadd.f32 %v2198, %v2285
        %v2287 = vpop.f32.mrf.mxu0
        %2288 = vmatprep.mubr.f32.mxu0 0.0
        %2289 = vmatmul.mubr.f32.gmra.mxu0 %v2212
        %v2290 = vpop.f32.mrf.mxu0
        %v2291 = vadd.f32 %v2198, %v2290
        %v2292 = vpop.f32.mrf.mxu0
        %2293 = vdwg.mxu0
        %v2294 = vmax.f32 %v2281, 0.0
        %v2295 = vmax.f32 %v2286, 0.0
        %v2296 = vmax.f32 %v2291, 0.0
        %v2297 = vlaneseq
        %v2298 = vshrl.u32 %v2297, 7
        %v2299 = vsub.s32 0, %v2298
        %v2300 = vrot.slane %v547, %v2299
        %v2302 = vsel %vm572, %v2294, 0
        %v2305 = vsel %vm572, %v2295, 0
        %v2308 = vsel %vm572, %v2296, 0
        %2310 = vmatprep.subr.mxu0 0.0
        %2311 = vmatpush1.msra.mxu0 0.0
        %2312 = vmatprep.subr.mxu0 0.0
        %2313 = vmatpush1.msra.mxu0 0.0
        %2314 = vmatprep.subr.mxu0 0.0
        %2315 = vmatpush1.msra.mxu0 0.0
        %2316 = vmatprep.subr.mxu0 0.0
        %2317 = vmatpush1.msra.mxu0 0.0
        %2318 = vmatprep.subr.mxu0 0.0
        %2319 = vmatpush1.msra.mxu0 0.0
        %2320 = vmatprep.subr.mxu0 0.0
        %2321 = vmatpush1.msra.mxu0 0.0
        %2322 = vmatprep.subr.mxu0 0.0
        %2323 = vmatpush1.msra.mxu0 0.0
        %2324 = vmatprep.subr.mxu0 0.0
        %2325 = vmatpush1.msra.mxu0 0.0
        %2326 = vmatprep.subr.mxu0 0.0
        %2327 = vmatpush1.msra.mxu0 %v474
        %2328 = vmatprep.subr.mxu0 0.0
        %2329 = vmatpush1.msra.mxu0 %v473
        %2330 = vmatprep.subr.mxu0 0.0
        %2331 = vmatpush1.msra.mxu0 %v472
        %2332 = vmatprep.subr.mxu0 0.0
        %2333 = vmatpush1.msra.mxu0 %v471
        %2334 = vmatprep.subr.mxu0 0.0
        %2335 = vmatpush1.msra.mxu0 %v470
        %2336 = vmatprep.subr.mxu0 0.0
        %2337 = vmatpush1.msra.mxu0 %v469
        %2338 = vmatprep.subr.mxu0 0.0
        %2339 = vmatpush1.msra.mxu0 %v468
        %2340 = vmatprep.subr.mxu0 0.0
        %2341 = vmatpush1.msra.mxu0 %v467
        %2342 = vmatprep.subr.mxu0 0.0
        %2343 = vmatpush2.msra.mxu0 0.0
        %2344 = vmatprep.subr.mxu0 0.0
        %2345 = vmatpush2.msra.mxu0 0.0
        %2346 = vmatprep.subr.mxu0 0.0
        %2347 = vmatpush2.msra.mxu0 0.0
        %2348 = vmatprep.subr.mxu0 0.0
        %2349 = vmatpush2.msra.mxu0 0.0
        %2350 = vmatprep.subr.mxu0 0.0
        %2351 = vmatpush2.msra.mxu0 0.0
        %2352 = vmatprep.subr.mxu0 0.0
        %2353 = vmatpush2.msra.mxu0 0.0
        %2354 = vmatprep.subr.mxu0 0.0
        %2355 = vmatpush2.msra.mxu0 0.0
        %2356 = vmatprep.subr.mxu0 0.0
        %2357 = vmatpush2.msra.mxu0 0.0
        %2358 = vmatprep.subr.mxu0 0.0
        %2359 = vmatpush2.msra.mxu0 0.0
        %2360 = vmatprep.subr.mxu0 0.0
        %2361 = vmatpush2.msra.mxu0 0.0
        %2362 = vmatprep.subr.mxu0 0.0
        %2363 = vmatpush2.msra.mxu0 0.0
        %2364 = vmatprep.subr.mxu0 0.0
        %2365 = vmatpush2.msra.mxu0 0.0
        %2366 = vmatprep.subr.mxu0 0.0
        %2367 = vmatpush2.msra.mxu0 0.0
        %2368 = vmatprep.subr.mxu0 0.0
        %2369 = vmatpush2.msra.mxu0 0.0
        %2370 = vmatprep.subr.mxu0 0.0
        %2371 = vmatpush2.msra.mxu0 0.0
        %2372 = vmatprep.subr.mxu0 0.0
        %2373 = vmatpush2.msra.mxu0 0.0
        %2374 = vmatprep.mubr.f32.mxu0 0.0
        %2375 = vmatmul.mubr.f32.gmra.mxu0 %v2302
        %v2376 = vpop.f32.mrf.mxu0
        %v2377 = vadd.f32 %v2300, %v2376
        %v2378 = vpop.f32.mrf.mxu0
        %2379 = vmatprep.mubr.f32.mxu0 0.0
        %2380 = vmatmul.mubr.f32.gmra.mxu0 %v2305
        %v2381 = vpop.f32.mrf.mxu0
        %v2382 = vadd.f32 %v2300, %v2381
        %v2383 = vpop.f32.mrf.mxu0
        %2384 = vmatprep.mubr.f32.mxu0 0.0
        %2385 = vmatmul.mubr.f32.gmra.mxu0 %v2308
        %v2386 = vpop.f32.mrf.mxu0
        %v2387 = vadd.f32 %v2300, %v2386
        %v2388 = vpop.f32.mrf.mxu0
        %2389 = vdwg.mxu0
        %2393 = vrot.lane.b32.xlu0 %v2377, 64
        %v2394 = vpop.permute.xlu0 %2393
        %2395 = vrot.lane.b32.xlu0 %v2382, 64
        %v2396 = vpop.permute.xlu0 %2395
        %2397 = vrot.lane.b32.xlu0 %v2387, 64
        %v2398 = vpop.permute.xlu0 %2397
        %v2402 = vadd.f32 %v2101, %v2394
        %v2403 = vadd.f32 %v2102, %v2396
        %v2404 = vadd.f32 %v2103, %v2398
        %2408 = vrot.lane.b32.xlu0 %v2402, 64
        %v2409 = vpop.permute.xlu0 %2408
        %2410 = vrot.lane.b32.xlu0 %v2403, 64
        %v2411 = vpop.permute.xlu0 %2410
        %2412 = vrot.lane.b32.xlu0 %v2404, 64
        %v2413 = vpop.permute.xlu0 %2412
        %v2417 = vsel %vm572, %v2409, 0.0
        %2418 = vadd.xlane.f32.xlu0 %v2417
        %v2419 = vpop.xlane.xlu0 %2418
        %v2420 = vsel %vm572, %v2411, 0.0
        %2421 = vadd.xlane.f32.xlu0 %v2420
        %v2422 = vpop.xlane.xlu0 %2421
        %v2423 = vsel %vm1422, %v2413, 0.0
        %2424 = vadd.xlane.f32.xlu0 %v2423
        %v2425 = vpop.xlane.xlu0 %2424
        %v2426 = vmul.f32 %v2419, %v742
        %v2427 = vmul.f32 %v2422, %v742
        %v2428 = vmul.f32 %v2425, %v742
        %v2429 = vmul.f32 %v2402, %v2402
        %v2430 = vmul.f32 %v2403, %v2403
        %v2431 = vmul.f32 %v2404, %v2404
        %2435 = vrot.lane.b32.xlu0 %v2429, 64
        %v2436 = vpop.permute.xlu0 %2435
        %2437 = vrot.lane.b32.xlu0 %v2430, 64
        %v2438 = vpop.permute.xlu0 %2437
        %2439 = vrot.lane.b32.xlu0 %v2431, 64
        %v2440 = vpop.permute.xlu0 %2439
        %v2444 = vsel %vm572, %v2436, 0.0
        %2445 = vadd.xlane.f32.xlu0 %v2444
        %v2446 = vpop.xlane.xlu0 %2445
        %v2447 = vsel %vm572, %v2438, 0.0
        %2448 = vadd.xlane.f32.xlu0 %v2447
        %v2449 = vpop.xlane.xlu0 %2448
        %v2450 = vsel %vm1422, %v2440, 0.0
        %2451 = vadd.xlane.f32.xlu0 %v2450
        %v2452 = vpop.xlane.xlu0 %2451
        %v2453 = vmul.f32 %v2446, %v742
        %v2454 = vmul.f32 %v2449, %v742
        %v2455 = vmul.f32 %v2452, %v742
        %v2456 = vmul.f32 %v2426, %v2426
        %v2457 = vmul.f32 %v2427, %v2427
        %v2458 = vmul.f32 %v2428, %v2428
        %v2459 = vsub.f32 %v2453, %v2456
        %v2460 = vsub.f32 %v2454, %v2457
        %v2461 = vsub.f32 %v2455, %v2458
        %v2462 = vsub.f32 %v2402, %v2426
        %v2463 = vsub.f32 %v2403, %v2427
        %v2464 = vsub.f32 %v2404, %v2428
        %v2465 = vadd.f32 %v2459, 1e-05
        %v2466 = vadd.f32 %v2460, 1e-05
        %v2467 = vadd.f32 %v2461, 1e-05
        %v2468 = vrsqrt.pop %v2465
        %v2469 = vrsqrt.pop %v2466
        %v2470 = vrsqrt.pop %v2467
        %v2471 = vmul.f32 %v2462, %v2468
        %v2472 = vmul.f32 %v2463, %v2469
        %v2473 = vmul.f32 %v2464, %v2470
        %2475 = vrot.lane.b32.xlu0 %v1465, 64
        %v2476 = vpop.permute.xlu0 %2475
        %v2478 = vmul.f32 %v2471, %v2476
        %v2479 = vmul.f32 %v2472, %v2476
        %v2480 = vmul.f32 %v2473, %v2476
        %2482 = vrot.lane.b32.xlu0 %v1472, 64
        %v2483 = vpop.permute.xlu0 %2482
        %v2485 = vadd.f32 %v2478, %v2483
        %v2486 = vadd.f32 %v2479, %v2483
        %v2487 = vadd.f32 %v2480, %v2483
        %2491 = vrot.lane.b32.xlu0 %v2485, 64
        %v2492 = vpop.permute.xlu0 %2491
        %2493 = vrot.lane.b32.xlu0 %v2486, 64
        %v2494 = vpop.permute.xlu0 %2493
        %2495 = vrot.lane.b32.xlu0 %v2487, 64
        %v2496 = vpop.permute.xlu0 %2495
        %v2497 = vsel %vm572, %v2492, 0
        %v2499 = vsel %vm572, %v2494, 0
        %v2501 = vsel %vm572, %v2496, 0
        %2503 = vmatprep.subr.mxu0 0.0
        %2504 = vmatpush1.msra.mxu0 0.0
        %2505 = vmatprep.subr.mxu0 0.0
        %2506 = vmatpush1.msra.mxu0 0.0
        %2507 = vmatprep.subr.mxu0 0.0
        %2508 = vmatpush1.msra.mxu0 0.0
        %2509 = vmatprep.subr.mxu0 0.0
        %2510 = vmatpush1.msra.mxu0 0.0
        %2511 = vmatprep.subr.mxu0 0.0
        %2512 = vmatpush1.msra.mxu0 0.0
        %2513 = vmatprep.subr.mxu0 0.0
        %2514 = vmatpush1.msra.mxu0 0.0
        %2515 = vmatprep.subr.mxu0 0.0
        %2516 = vmatpush1.msra.mxu0 0.0
        %2517 = vmatprep.subr.mxu0 0.0
        %2518 = vmatpush1.msra.mxu0 0.0
        %2519 = vmatprep.subr.mxu0 0.0
        %2520 = vmatpush1.msra.mxu0 %v456
        %2521 = vmatprep.subr.mxu0 0.0
        %2522 = vmatpush1.msra.mxu0 %v455
        %2523 = vmatprep.subr.mxu0 0.0
        %2524 = vmatpush1.msra.mxu0 %v454
        %2525 = vmatprep.subr.mxu0 0.0
        %2526 = vmatpush1.msra.mxu0 %v453
        %2527 = vmatprep.subr.mxu0 0.0
        %2528 = vmatpush1.msra.mxu0 %v452
        %2529 = vmatprep.subr.mxu0 0.0
        %2530 = vmatpush1.msra.mxu0 %v451
        %2531 = vmatprep.subr.mxu0 0.0
        %2532 = vmatpush1.msra.mxu0 %v450
        %2533 = vmatprep.subr.mxu0 0.0
        %2534 = vmatpush1.msra.mxu0 %v449
        %2535 = vmatprep.subr.mxu0 0.0
        %2536 = vmatpush2.msra.mxu0 0.0
        %2537 = vmatprep.subr.mxu0 0.0
        %2538 = vmatpush2.msra.mxu0 0.0
        %2539 = vmatprep.subr.mxu0 0.0
        %2540 = vmatpush2.msra.mxu0 0.0
        %2541 = vmatprep.subr.mxu0 0.0
        %2542 = vmatpush2.msra.mxu0 0.0
        %2543 = vmatprep.subr.mxu0 0.0
        %2544 = vmatpush2.msra.mxu0 0.0
        %2545 = vmatprep.subr.mxu0 0.0
        %2546 = vmatpush2.msra.mxu0 0.0
        %2547 = vmatprep.subr.mxu0 0.0
        %2548 = vmatpush2.msra.mxu0 0.0
        %2549 = vmatprep.subr.mxu0 0.0
        %2550 = vmatpush2.msra.mxu0 0.0
        %2551 = vmatprep.subr.mxu0 0.0
        %2552 = vmatpush2.msra.mxu0 0.0
        %2553 = vmatprep.subr.mxu0 0.0
        %2554 = vmatpush2.msra.mxu0 0.0
        %2555 = vmatprep.subr.mxu0 0.0
        %2556 = vmatpush2.msra.mxu0 0.0
        %2557 = vmatprep.subr.mxu0 0.0
        %2558 = vmatpush2.msra.mxu0 0.0
        %2559 = vmatprep.subr.mxu0 0.0
        %2560 = vmatpush2.msra.mxu0 0.0
        %2561 = vmatprep.subr.mxu0 0.0
        %2562 = vmatpush2.msra.mxu0 0.0
        %2563 = vmatprep.subr.mxu0 0.0
        %2564 = vmatpush2.msra.mxu0 0.0
        %2565 = vmatprep.subr.mxu0 0.0
        %2566 = vmatpush2.msra.mxu0 0.0
        %2567 = vmatprep.mubr.f32.mxu0 0.0
        %2568 = vmatmul.mubr.f32.gmra.mxu0 %v2497
        %v2569 = vpop.f32.mrf.mxu0
        %v2570 = vadd.f32 %v1479, %v2569
        %v2571 = vpop.f32.mrf.mxu0
        %2572 = vmatprep.mubr.f32.mxu0 0.0
        %2573 = vmatmul.mubr.f32.gmra.mxu0 %v2499
        %v2574 = vpop.f32.mrf.mxu0
        %v2575 = vadd.f32 %v1479, %v2574
        %v2576 = vpop.f32.mrf.mxu0
        %2577 = vmatprep.mubr.f32.mxu0 0.0
        %2578 = vmatmul.mubr.f32.gmra.mxu0 %v2501
        %v2579 = vpop.f32.mrf.mxu0
        %v2580 = vadd.f32 %v1479, %v2579
        %v2581 = vpop.f32.mrf.mxu0
        %2582 = vdwg.mxu0
        %v2584 = vsel %vm572, %v2570, 0
        %v2587 = vsel %vm572, %v2575, 0
        %v2590 = vsel %vm572, %v2580, 0
        %2592 = vmatprep.subr.mxu0 0.0
        %2593 = vmatpush1.xpose.msra.mxu0 0.0
        %2594 = vmatprep.subr.mxu0 0.0
        %2595 = vmatpush1.xpose.msra.mxu0 0.0
        %2596 = vmatprep.subr.mxu0 0.0
        %2597 = vmatpush1.xpose.msra.mxu0 0.0
        %2598 = vmatprep.subr.mxu0 0.0
        %2599 = vmatpush1.xpose.msra.mxu0 0.0
        %2600 = vmatprep.subr.mxu0 0.0
        %2601 = vmatpush1.xpose.msra.mxu0 0.0
        %2602 = vmatprep.subr.mxu0 0.0
        %2603 = vmatpush1.xpose.msra.mxu0 0.0
        %2604 = vmatprep.subr.mxu0 0.0
        %2605 = vmatpush1.xpose.msra.mxu0 0.0
        %2606 = vmatprep.subr.mxu0 0.0
        %2607 = vmatpush1.xpose.msra.mxu0 0.0
        %2608 = vmatprep.subr.mxu0 0.0
        %2609 = vmatpush1.xpose.msra.mxu0 %v1600
        %2610 = vmatprep.subr.mxu0 0.0
        %2611 = vmatpush1.xpose.msra.mxu0 %v1597
        %2612 = vmatprep.subr.mxu0 0.0
        %2613 = vmatpush1.xpose.msra.mxu0 %v1594
        %2614 = vmatprep.subr.mxu0 0.0
        %2615 = vmatpush1.xpose.msra.mxu0 %v1591
        %2616 = vmatprep.subr.mxu0 0.0
        %2617 = vmatpush1.xpose.msra.mxu0 %v1588
        %2618 = vmatprep.subr.mxu0 0.0
        %2619 = vmatpush1.xpose.msra.mxu0 %v1585
        %2620 = vmatprep.subr.mxu0 0.0
        %2621 = vmatpush1.xpose.msra.mxu0 %v1582
        %2622 = vmatprep.subr.mxu0 0.0
        %2623 = vmatpush1.xpose.msra.mxu0 %v1579
        %2624 = vmatprep.subr.mxu0 0.0
        %2625 = vmatpush2.xpose.msra.mxu0 0.0
        %2626 = vmatprep.subr.mxu0 0.0
        %2627 = vmatpush2.xpose.msra.mxu0 0.0
        %2628 = vmatprep.subr.mxu0 0.0
        %2629 = vmatpush2.xpose.msra.mxu0 0.0
        %2630 = vmatprep.subr.mxu0 0.0
        %2631 = vmatpush2.xpose.msra.mxu0 0.0
        %2632 = vmatprep.subr.mxu0 0.0
        %2633 = vmatpush2.xpose.msra.mxu0 0.0
        %2634 = vmatprep.subr.mxu0 0.0
        %2635 = vmatpush2.xpose.msra.mxu0 0.0
        %2636 = vmatprep.subr.mxu0 0.0
        %2637 = vmatpush2.xpose.msra.mxu0 0.0
        %2638 = vmatprep.subr.mxu0 0.0
        %2639 = vmatpush2.xpose.msra.mxu0 0.0
        %2640 = vmatprep.subr.mxu0 0.0
        %2641 = vmatpush2.xpose.msra.mxu0 0.0
        %2642 = vmatprep.subr.mxu0 0.0
        %2643 = vmatpush2.xpose.msra.mxu0 0.0
        %2644 = vmatprep.subr.mxu0 0.0
        %2645 = vmatpush2.xpose.msra.mxu0 0.0
        %2646 = vmatprep.subr.mxu0 0.0
        %2647 = vmatpush2.xpose.msra.mxu0 0.0
        %2648 = vmatprep.subr.mxu0 0.0
        %2649 = vmatpush2.xpose.msra.mxu0 0.0
        %2650 = vmatprep.subr.mxu0 0.0
        %2651 = vmatpush2.xpose.msra.mxu0 0.0
        %2652 = vmatprep.subr.mxu0 0.0
        %2653 = vmatpush2.xpose.msra.mxu0 0.0
        %2654 = vmatprep.subr.mxu0 0.0
        %2655 = vmatpush2.xpose.msra.mxu0 0.0
        %2656 = vmatprep.mubr.f32.mxu0 0.0
        %2657 = vmatmul.mubr.f32.gmra.mxu0 %v2584
        %v2658 = vpop.f32.mrf.mxu0
        %v2659 = vadd.f32 0.0, %v2658
        %v2660 = vpop.f32.mrf.mxu0
        %2661 = vmatprep.mubr.f32.mxu0 0.0
        %2662 = vmatmul.mubr.f32.gmra.mxu0 %v2587
        %v2663 = vpop.f32.mrf.mxu0
        %v2664 = vadd.f32 0.0, %v2663
        %v2665 = vpop.f32.mrf.mxu0
        %2666 = vmatprep.mubr.f32.mxu0 0.0
        %2667 = vmatmul.mubr.f32.gmra.mxu0 %v2590
        %v2668 = vpop.f32.mrf.mxu0
        %v2669 = vadd.f32 0.0, %v2668
        %v2670 = vpop.f32.mrf.mxu0
        %2671 = vdwg.mxu0
        %v2672 = vmul.f32 %v2659, 0.125
        %v2673 = vmul.f32 %v2664, 0.125
        %v2674 = vmul.f32 %v2669, 0.125
        %v2675 = vsel %vm572, %v2672, -inf
        %v2676 = vsel %vm572, %v2673, -inf
        %v2677 = vsel %vm1422, %v2674, -inf
        %v2678 = vmax.f32 %v2675, %v2676
        %v2679 = vmax.f32 %v2678, %v2677
        %v2680 = vrot.slane %v2679, 4
        %v2681 = vmax.f32 %v2679, %v2680
        %v2682 = vrot.slane %v2681, 2
        %v2683 = vmax.f32 %v2681, %v2682
        %v2684 = vrot.slane %v2683, 1
        %v2685 = vmax.f32 %v2683, %v2684
        %v2686 = vsub.f32 %v2672, %v2685
        %v2687 = vsub.f32 %v2673, %v2685
        %v2688 = vsub.f32 %v2674, %v2685
        %v2689 = vmul.f32 %v2686, 1.442695
        %v2690 = vpow.pop %v2689
        %v2691 = vmul.f32 %v2687, 1.442695
        %v2692 = vpow.pop %v2691
        %v2693 = vmul.f32 %v2688, 1.442695
        %v2694 = vpow.pop %v2693
        %v2695 = vsel %vm572, %v2690, 0.0
        %v2696 = vsel %vm572, %v2692, 0.0
        %v2697 = vadd.f32 %v2695, %v2696
        %v2698 = vsel %vm1422, %v2694, 0.0
        %v2699 = vadd.f32 %v2697, %v2698
        %v2700 = vrot.slane %v2699, 4
        %v2701 = vadd.f32 %v2699, %v2700
        %v2702 = vrot.slane %v2701, 2
        %v2703 = vadd.f32 %v2701, %v2702
        %v2704 = vrot.slane %v2703, 1
        %v2705 = vadd.f32 %v2703, %v2704
        %v2706 = vrcp.pop %v2705
        %v2707 = vmul.f32 %v2690, %v2706
        %v2708 = vmul.f32 %v2692, %v2706
        %v2709 = vmul.f32 %v2694, %v2706
        %v2710 = vadd.f32 %v2707, 1e-08
        %v2711 = vadd.f32 %v2708, 1e-08
        %v2712 = vadd.f32 %v2709, 1e-08
        %v2713 = vsel %vm572, %v2710, 0.0
        %2714 = vadd.xlane.f32.xlu0 %v2713
        %v2715 = vpop.xlane.xlu0 %2714
        %v2716 = vsel %vm572, %v2711, 0.0
        %2717 = vadd.xlane.f32.xlu0 %v2716
        %v2718 = vpop.xlane.xlu0 %2717
        %v2719 = vsel %vm1422, %v2712, 0.0
        %2720 = vadd.xlane.f32.xlu0 %v2719
        %v2721 = vpop.xlane.xlu0 %2720
        %v2722 = vrcp.pop %v2715
        %v2723 = vrcp.pop %v2718
        %v2724 = vrcp.pop %v2721
        %v2725 = vmul.f32 %v2710, %v2722
        %v2726 = vmul.f32 %v2711, %v2723
        %v2727 = vmul.f32 %v2712, %v2724
        %v2729 = vsel %vm572, %v2725, 0
        %v2732 = vsel %vm572, %v2726, 0
        %v2735 = vsel %vm572, %v2727, 0
        %2737 = vmatprep.subr.mxu0 0.0
        %2738 = vmatpush1.msra.mxu0 0.0
        %2739 = vmatprep.subr.mxu0 0.0
        %2740 = vmatpush1.msra.mxu0 0.0
        %2741 = vmatprep.subr.mxu0 0.0
        %2742 = vmatpush1.msra.mxu0 0.0
        %2743 = vmatprep.subr.mxu0 0.0
        %2744 = vmatpush1.msra.mxu0 0.0
        %2745 = vmatprep.subr.mxu0 0.0
        %2746 = vmatpush1.msra.mxu0 0.0
        %2747 = vmatprep.subr.mxu0 0.0
        %2748 = vmatpush1.msra.mxu0 0.0
        %2749 = vmatprep.subr.mxu0 0.0
        %2750 = vmatpush1.msra.mxu0 0.0
        %2751 = vmatprep.subr.mxu0 0.0
        %2752 = vmatpush1.msra.mxu0 0.0
        %2753 = vmatprep.subr.mxu0 0.0
        %2754 = vmatpush1.msra.mxu0 %v1753
        %2755 = vmatprep.subr.mxu0 0.0
        %2756 = vmatpush1.msra.mxu0 %v1751
        %2757 = vmatprep.subr.mxu0 0.0
        %2758 = vmatpush1.msra.mxu0 %v1749
        %2759 = vmatprep.subr.mxu0 0.0
        %2760 = vmatpush1.msra.mxu0 %v1747
        %2761 = vmatprep.subr.mxu0 0.0
        %2762 = vmatpush1.msra.mxu0 %v1745
        %2763 = vmatprep.subr.mxu0 0.0
        %2764 = vmatpush1.msra.mxu0 %v1743
        %2765 = vmatprep.subr.mxu0 0.0
        %2766 = vmatpush1.msra.mxu0 %v1741
        %2767 = vmatprep.subr.mxu0 0.0
        %2768 = vmatpush1.msra.mxu0 %v1739
        %2769 = vmatprep.subr.mxu0 0.0
        %2770 = vmatpush2.msra.mxu0 0.0
        %2771 = vmatprep.subr.mxu0 0.0
        %2772 = vmatpush2.msra.mxu0 0.0
        %2773 = vmatprep.subr.mxu0 0.0
        %2774 = vmatpush2.msra.mxu0 0.0
        %2775 = vmatprep.subr.mxu0 0.0
        %2776 = vmatpush2.msra.mxu0 0.0
        %2777 = vmatprep.subr.mxu0 0.0
        %2778 = vmatpush2.msra.mxu0 0.0
        %2779 = vmatprep.subr.mxu0 0.0
        %2780 = vmatpush2.msra.mxu0 0.0
        %2781 = vmatprep.subr.mxu0 0.0
        %2782 = vmatpush2.msra.mxu0 0.0
        %2783 = vmatprep.subr.mxu0 0.0
        %2784 = vmatpush2.msra.mxu0 0.0
        %2785 = vmatprep.subr.mxu0 0.0
        %2786 = vmatpush2.msra.mxu0 0.0
        %2787 = vmatprep.subr.mxu0 0.0
        %2788 = vmatpush2.msra.mxu0 0.0
        %2789 = vmatprep.subr.mxu0 0.0
        %2790 = vmatpush2.msra.mxu0 0.0
        %2791 = vmatprep.subr.mxu0 0.0
        %2792 = vmatpush2.msra.mxu0 0.0
        %2793 = vmatprep.subr.mxu0 0.0
        %2794 = vmatpush2.msra.mxu0 0.0
        %2795 = vmatprep.subr.mxu0 0.0
        %2796 = vmatpush2.msra.mxu0 0.0
        %2797 = vmatprep.subr.mxu0 0.0
        %2798 = vmatpush2.msra.mxu0 0.0
        %2799 = vmatprep.subr.mxu0 0.0
        %2800 = vmatpush2.msra.mxu0 0.0
        %2801 = vmatprep.mubr.f32.mxu0 0.0
        %2802 = vmatmul.mubr.f32.gmra.mxu0 %v2729
        %v2803 = vpop.f32.mrf.mxu0
        %v2804 = vadd.f32 0.0, %v2803
        %v2805 = vpop.f32.mrf.mxu0
        %2806 = vmatprep.mubr.f32.mxu0 0.0
        %2807 = vmatmul.mubr.f32.gmra.mxu0 %v2732
        %v2808 = vpop.f32.mrf.mxu0
        %v2809 = vadd.f32 0.0, %v2808
        %v2810 = vpop.f32.mrf.mxu0
        %2811 = vmatprep.mubr.f32.mxu0 0.0
        %2812 = vmatmul.mubr.f32.gmra.mxu0 %v2735
        %v2813 = vpop.f32.mrf.mxu0
        %v2814 = vadd.f32 0.0, %v2813
        %v2815 = vpop.f32.mrf.mxu0
        %2816 = vdwg.mxu0
        %v2817 = vsel %vm572, %v2804, %v2402
        %v2818 = vsel %vm572, %v2809, %v2403
        %v2819 = vsel %vm572, %v2814, %v2404
        %2820 = vmatprep.subr.mxu0 %v523
        %2821 = vmatpush1.msra.mxu0 %v522
        %2822 = vmatprep.subr.mxu0 %v521
        %2823 = vmatpush1.msra.mxu0 %v520
        %2824 = vmatprep.subr.mxu0 %v519
        %2825 = vmatpush1.msra.mxu0 %v518
        %2826 = vmatprep.subr.mxu0 %v517
        %2827 = vmatpush1.msra.mxu0 %v516
        %2828 = vmatprep.subr.mxu0 %v515
        %2829 = vmatpush1.msra.mxu0 %v514
        %2830 = vmatprep.subr.mxu0 %v513
        %2831 = vmatpush1.msra.mxu0 %v512
        %2832 = vmatprep.subr.mxu0 %v511
        %2833 = vmatpush1.msra.mxu0 %v510
        %2834 = vmatprep.subr.mxu0 %v509
        %2835 = vmatpush1.msra.mxu0 %v508
        %2836 = vmatprep.subr.mxu0 %v507
        %2837 = vmatpush1.msra.mxu0 %v506
        %2838 = vmatprep.subr.mxu0 %v505
        %2839 = vmatpush1.msra.mxu0 %v504
        %2840 = vmatprep.subr.mxu0 %v503
        %2841 = vmatpush1.msra.mxu0 %v502
        %2842 = vmatprep.subr.mxu0 %v501
        %2843 = vmatpush1.msra.mxu0 %v500
        %2844 = vmatprep.subr.mxu0 %v499
        %2845 = vmatpush1.msra.mxu0 %v498
        %2846 = vmatprep.subr.mxu0 %v497
        %2847 = vmatpush1.msra.mxu0 %v496
        %2848 = vmatprep.subr.mxu0 %v495
        %2849 = vmatpush1.msra.mxu0 %v494
        %2850 = vmatprep.subr.mxu0 %v493
        %2851 = vmatpush1.msra.mxu0 %v492
        %2852 = vmatprep.subr.mxu0 0.0
        %2853 = vmatpush2.msra.mxu0 0.0
        %2854 = vmatprep.subr.mxu0 0.0
        %2855 = vmatpush2.msra.mxu0 0.0
        %2856 = vmatprep.subr.mxu0 0.0
        %2857 = vmatpush2.msra.mxu0 0.0
        %2858 = vmatprep.subr.mxu0 0.0
        %2859 = vmatpush2.msra.mxu0 0.0
        %2860 = vmatprep.subr.mxu0 0.0
        %2861 = vmatpush2.msra.mxu0 0.0
        %2862 = vmatprep.subr.mxu0 0.0
        %2863 = vmatpush2.msra.mxu0 0.0
        %2864 = vmatprep.subr.mxu0 0.0
        %2865 = vmatpush2.msra.mxu0 0.0
        %2866 = vmatprep.subr.mxu0 0.0
        %2867 = vmatpush2.msra.mxu0 0.0
        %2868 = vmatprep.subr.mxu0 0.0
        %2869 = vmatpush2.msra.mxu0 0.0
        %2870 = vmatprep.subr.mxu0 0.0
        %2871 = vmatpush2.msra.mxu0 0.0
        %2872 = vmatprep.subr.mxu0 0.0
        %2873 = vmatpush2.msra.mxu0 0.0
        %2874 = vmatprep.subr.mxu0 0.0
        %2875 = vmatpush2.msra.mxu0 0.0
        %2876 = vmatprep.subr.mxu0 0.0
        %2877 = vmatpush2.msra.mxu0 0.0
        %2878 = vmatprep.subr.mxu0 0.0
        %2879 = vmatpush2.msra.mxu0 0.0
        %2880 = vmatprep.subr.mxu0 0.0
        %2881 = vmatpush2.msra.mxu0 0.0
        %2882 = vmatprep.subr.mxu0 0.0
        %2883 = vmatpush2.msra.mxu0 0.0
        %2884 = vmatprep.mubr.f32.mxu0 0.0
        %2885 = vmatmul.mubr.f32.gmra.mxu0 %v2817
        %v2886 = vpop.f32.mrf.mxu0
        %v2887 = vadd.f32 %v1870, %v2886
        %v2888 = vpop.f32.mrf.mxu0
        %v2889 = vadd.f32 %v1874, %v2888
        %2890 = vmatprep.mubr.f32.mxu0 0.0
        %2891 = vmatmul.mubr.f32.gmra.mxu0 %v2818
        %v2892 = vpop.f32.mrf.mxu0
        %v2893 = vadd.f32 %v1870, %v2892
        %v2894 = vpop.f32.mrf.mxu0
        %v2895 = vadd.f32 %v1874, %v2894
        %2896 = vmatprep.mubr.f32.mxu0 0.0
        %2897 = vmatmul.mubr.f32.gmra.mxu0 %v2819
        %v2898 = vpop.f32.mrf.mxu0
        %v2899 = vadd.f32 %v1870, %v2898
        %v2900 = vpop.f32.mrf.mxu0
        %v2901 = vadd.f32 %v1874, %v2900
        %2902 = vdwg.mxu0
        %v2903 = vsel %vm572, %v2409, 0
        %v2905 = vsel %vm572, %v2411, 0
        %v2907 = vsel %vm572, %v2413, 0
        %2909 = vmatprep.subr.mxu0 0.0
        %2910 = vmatpush1.msra.mxu0 0.0
        %2911 = vmatprep.subr.mxu0 0.0
        %2912 = vmatpush1.msra.mxu0 0.0
        %2913 = vmatprep.subr.mxu0 0.0
        %2914 = vmatpush1.msra.mxu0 0.0
        %2915 = vmatprep.subr.mxu0 0.0
        %2916 = vmatpush1.msra.mxu0 0.0
        %2917 = vmatprep.subr.mxu0 0.0
        %2918 = vmatpush1.msra.mxu0 0.0
        %2919 = vmatprep.subr.mxu0 0.0
        %2920 = vmatpush1.msra.mxu0 0.0
        %2921 = vmatprep.subr.mxu0 0.0
        %2922 = vmatpush1.msra.mxu0 0.0
        %2923 = vmatprep.subr.mxu0 0.0
        %2924 = vmatpush1.msra.mxu0 0.0
        %2925 = vmatprep.subr.mxu0 0.0
        %2926 = vmatpush1.msra.mxu0 %v483
        %2927 = vmatprep.subr.mxu0 0.0
        %2928 = vmatpush1.msra.mxu0 %v482
        %2929 = vmatprep.subr.mxu0 0.0
        %2930 = vmatpush1.msra.mxu0 %v481
        %2931 = vmatprep.subr.mxu0 0.0
        %2932 = vmatpush1.msra.mxu0 %v480
        %2933 = vmatprep.subr.mxu0 0.0
        %2934 = vmatpush1.msra.mxu0 %v479
        %2935 = vmatprep.subr.mxu0 0.0
        %2936 = vmatpush1.msra.mxu0 %v478
        %2937 = vmatprep.subr.mxu0 0.0
        %2938 = vmatpush1.msra.mxu0 %v477
        %2939 = vmatprep.subr.mxu0 0.0
        %2940 = vmatpush1.msra.mxu0 %v476
        %2941 = vmatprep.subr.mxu0 0.0
        %2942 = vmatpush2.msra.mxu0 0.0
        %2943 = vmatprep.subr.mxu0 0.0
        %2944 = vmatpush2.msra.mxu0 0.0
        %2945 = vmatprep.subr.mxu0 0.0
        %2946 = vmatpush2.msra.mxu0 0.0
        %2947 = vmatprep.subr.mxu0 0.0
        %2948 = vmatpush2.msra.mxu0 0.0
        %2949 = vmatprep.subr.mxu0 0.0
        %2950 = vmatpush2.msra.mxu0 0.0
        %2951 = vmatprep.subr.mxu0 0.0
        %2952 = vmatpush2.msra.mxu0 0.0
        %2953 = vmatprep.subr.mxu0 0.0
        %2954 = vmatpush2.msra.mxu0 0.0
        %2955 = vmatprep.subr.mxu0 0.0
        %2956 = vmatpush2.msra.mxu0 0.0
        %2957 = vmatprep.subr.mxu0 0.0
        %2958 = vmatpush2.msra.mxu0 0.0
        %2959 = vmatprep.subr.mxu0 0.0
        %2960 = vmatpush2.msra.mxu0 0.0
        %2961 = vmatprep.subr.mxu0 0.0
        %2962 = vmatpush2.msra.mxu0 0.0
        %2963 = vmatprep.subr.mxu0 0.0
        %2964 = vmatpush2.msra.mxu0 0.0
        %2965 = vmatprep.subr.mxu0 0.0
        %2966 = vmatpush2.msra.mxu0 0.0
        %2967 = vmatprep.subr.mxu0 0.0
        %2968 = vmatpush2.msra.mxu0 0.0
        %2969 = vmatprep.subr.mxu0 0.0
        %2970 = vmatpush2.msra.mxu0 0.0
        %2971 = vmatprep.subr.mxu0 0.0
        %2972 = vmatpush2.msra.mxu0 0.0
        %2973 = vmatprep.mubr.f32.mxu0 0.0
        %2974 = vmatmul.mubr.f32.gmra.mxu0 %v2903
        %v2975 = vpop.f32.mrf.mxu0
        %v2976 = vadd.f32 %v1963, %v2975
        %v2977 = vpop.f32.mrf.mxu0
        %2978 = vmatprep.mubr.f32.mxu0 0.0
        %2979 = vmatmul.mubr.f32.gmra.mxu0 %v2905
        %v2980 = vpop.f32.mrf.mxu0
        %v2981 = vadd.f32 %v1963, %v2980
        %v2982 = vpop.f32.mrf.mxu0
        %2983 = vmatprep.mubr.f32.mxu0 0.0
        %2984 = vmatmul.mubr.f32.gmra.mxu0 %v2907
        %v2985 = vpop.f32.mrf.mxu0
        %v2986 = vadd.f32 %v1963, %v2985
        %v2987 = vpop.f32.mrf.mxu0
        %2988 = vdwg.mxu0
        %v2989 = vxor.u32 %v2887, 2147483648
        %v2990 = vxor.u32 %v2893, 2147483648
        %v2991 = vxor.u32 %v2899, 2147483648
        %v2992 = vmul.f32 %v2989, 1.442695
        %v2993 = vpow.pop %v2992
        %v2994 = vmul.f32 %v2990, 1.442695
        %v2995 = vpow.pop %v2994
        %v2996 = vmul.f32 %v2991, 1.442695
        %v2997 = vpow.pop %v2996
        %v2998 = vadd.f32 %v2993, 1.0
        %v2999 = vadd.f32 %v2995, 1.0
        %v3000 = vadd.f32 %v2997, 1.0
        %v3001 = vrcp.pop %v2998
        %v3002 = vmul.f32 1.0, %v3001
        %v3003 = vrcp.pop %v2999
        %v3004 = vmul.f32 1.0, %v3003
        %v3005 = vrcp.pop %v3000
        %v3006 = vmul.f32 1.0, %v3005
        %v3007 = vsub.f32 %v3002, 1.0
        %v3008 = vsub.f32 %v3004, 1.0
        %v3009 = vsub.f32 %v3006, 1.0
        %v3010 = vmul.f32 %v3007, %v2976
        %v3011 = vmul.f32 %v3008, %v2981
        %v3012 = vmul.f32 %v3009, %v2986
        %v3013 = vadd.f32 %v2889, %v3010
        %v3014 = vadd.f32 %v2895, %v3011
        %v3015 = vadd.f32 %v2901, %v3012
        %v3016 = vtanh.pop %v3013
        %v3017 = vtanh.pop %v3014
        %v3018 = vtanh.pop %v3015
        %v3019 = vsub.f32 1.0, %v3002
        %v3020 = vsub.f32 1.0, %v3004
        %v3021 = vsub.f32 1.0, %v3006
        %3025 = vrot.lane.b32.xlu0 %v3016, 64
        %v3026 = vpop.permute.xlu0 %3025
        %3027 = vrot.lane.b32.xlu0 %v3017, 64
        %v3028 = vpop.permute.xlu0 %3027
        %3029 = vrot.lane.b32.xlu0 %v3018, 64
        %v3030 = vpop.permute.xlu0 %3029
        %v3034 = vmul.f32 %v3019, %v3026
        %v3035 = vmul.f32 %v3020, %v3028
        %v3036 = vmul.f32 %v3021, %v3030
        %v3037 = vmul.f32 %v3002, %v2402
        %v3038 = vmul.f32 %v3004, %v2403
        %v3039 = vmul.f32 %v3006, %v2404
        %v3040 = vadd.f32 %v3034, %v3037
        %v3041 = vadd.f32 %v3035, %v3038
        %v3042 = vadd.f32 %v3036, %v3039
        %3046 = vrot.lane.b32.xlu0 %v3040, 64
        %v3047 = vpop.permute.xlu0 %3046
        %3048 = vrot.lane.b32.xlu0 %v3041, 64
        %v3049 = vpop.permute.xlu0 %3048
        %3050 = vrot.lane.b32.xlu0 %v3042, 64
        %v3051 = vpop.permute.xlu0 %3050
        %v3055 = vsel %vm572, %v3047, 0.0
        %3056 = vadd.xlane.f32.xlu0 %v3055
        %v3057 = vpop.xlane.xlu0 %3056
        %v3058 = vsel %vm572, %v3049, 0.0
        %3059 = vadd.xlane.f32.xlu0 %v3058
        %v3060 = vpop.xlane.xlu0 %3059
        %v3061 = vsel %vm1422, %v3051, 0.0
        %3062 = vadd.xlane.f32.xlu0 %v3061
        %v3063 = vpop.xlane.xlu0 %3062
        %v3064 = vmul.f32 %v3057, %v742
        %v3065 = vmul.f32 %v3060, %v742
        %v3066 = vmul.f32 %v3063, %v742
        %v3067 = vmul.f32 %v3040, %v3040
        %v3068 = vmul.f32 %v3041, %v3041
        %v3069 = vmul.f32 %v3042, %v3042
        %3073 = vrot.lane.b32.xlu0 %v3067, 64
        %v3074 = vpop.permute.xlu0 %3073
        %3075 = vrot.lane.b32.xlu0 %v3068, 64
        %v3076 = vpop.permute.xlu0 %3075
        %3077 = vrot.lane.b32.xlu0 %v3069, 64
        %v3078 = vpop.permute.xlu0 %3077
        %v3082 = vsel %vm572, %v3074, 0.0
        %3083 = vadd.xlane.f32.xlu0 %v3082
        %v3084 = vpop.xlane.xlu0 %3083
        %v3085 = vsel %vm572, %v3076, 0.0
        %3086 = vadd.xlane.f32.xlu0 %v3085
        %v3087 = vpop.xlane.xlu0 %3086
        %v3088 = vsel %vm1422, %v3078, 0.0
        %3089 = vadd.xlane.f32.xlu0 %v3088
        %v3090 = vpop.xlane.xlu0 %3089
        %v3091 = vmul.f32 %v3084, %v742
        %v3092 = vmul.f32 %v3087, %v742
        %v3093 = vmul.f32 %v3090, %v742
        %v3094 = vmul.f32 %v3064, %v3064
        %v3095 = vmul.f32 %v3065, %v3065
        %v3096 = vmul.f32 %v3066, %v3066
        %v3097 = vsub.f32 %v3091, %v3094
        %v3098 = vsub.f32 %v3092, %v3095
        %v3099 = vsub.f32 %v3093, %v3096
        %v3100 = vsub.f32 %v3040, %v3064
        %v3101 = vsub.f32 %v3041, %v3065
        %v3102 = vsub.f32 %v3042, %v3066
        %v3103 = vadd.f32 %v3097, 1e-05
        %v3104 = vadd.f32 %v3098, 1e-05
        %v3105 = vadd.f32 %v3099, 1e-05
        %v3106 = vrsqrt.pop %v3103
        %v3107 = vrsqrt.pop %v3104
        %v3108 = vrsqrt.pop %v3105
        %v3109 = vmul.f32 %v3100, %v3106
        %v3110 = vmul.f32 %v3101, %v3107
        %v3111 = vmul.f32 %v3102, %v3108
        %v3112 = vmul.f32 %v3109, %v2179
        %v3113 = vmul.f32 %v3110, %v2179
        %v3114 = vmul.f32 %v3111, %v2179
        %v3115 = vadd.f32 %v3112, %v2190
        %v3116 = vadd.f32 %v3113, %v2190
        %v3117 = vadd.f32 %v3114, %v2190
        %3121 = vrot.lane.b32.xlu0 %v3115, 64
        %v3122 = vpop.permute.xlu0 %3121
        %3123 = vrot.lane.b32.xlu0 %v3116, 64
        %v3124 = vpop.permute.xlu0 %3123
        %3125 = vrot.lane.b32.xlu0 %v3117, 64
        %v3126 = vpop.permute.xlu0 %3125
        %v3127 = vsel %vm572, %v3122, 0
        %v3129 = vsel %vm572, %v3124, 0
        %v3131 = vsel %vm572, %v3126, 0
        %3133 = vmatprep.subr.mxu0 0.0
        %3134 = vmatpush1.msra.mxu0 0.0
        %3135 = vmatprep.subr.mxu0 0.0
        %3136 = vmatpush1.msra.mxu0 0.0
        %3137 = vmatprep.subr.mxu0 0.0
        %3138 = vmatpush1.msra.mxu0 0.0
        %3139 = vmatprep.subr.mxu0 0.0
        %3140 = vmatpush1.msra.mxu0 0.0
        %3141 = vmatprep.subr.mxu0 0.0
        %3142 = vmatpush1.msra.mxu0 0.0
        %3143 = vmatprep.subr.mxu0 0.0
        %3144 = vmatpush1.msra.mxu0 0.0
        %3145 = vmatprep.subr.mxu0 0.0
        %3146 = vmatpush1.msra.mxu0 0.0
        %3147 = vmatprep.subr.mxu0 0.0
        %3148 = vmatpush1.msra.mxu0 0.0
        %3149 = vmatprep.subr.mxu0 0.0
        %3150 = vmatpush1.msra.mxu0 %v465
        %3151 = vmatprep.subr.mxu0 0.0
        %3152 = vmatpush1.msra.mxu0 %v464
        %3153 = vmatprep.subr.mxu0 0.0
        %3154 = vmatpush1.msra.mxu0 %v463
        %3155 = vmatprep.subr.mxu0 0.0
        %3156 = vmatpush1.msra.mxu0 %v462
        %3157 = vmatprep.subr.mxu0 0.0
        %3158 = vmatpush1.msra.mxu0 %v461
        %3159 = vmatprep.subr.mxu0 0.0
        %3160 = vmatpush1.msra.mxu0 %v460
        %3161 = vmatprep.subr.mxu0 0.0
        %3162 = vmatpush1.msra.mxu0 %v459
        %3163 = vmatprep.subr.mxu0 0.0
        %3164 = vmatpush1.msra.mxu0 %v458
        %3165 = vmatprep.subr.mxu0 0.0
        %3166 = vmatpush2.msra.mxu0 0.0
        %3167 = vmatprep.subr.mxu0 0.0
        %3168 = vmatpush2.msra.mxu0 0.0
        %3169 = vmatprep.subr.mxu0 0.0
        %3170 = vmatpush2.msra.mxu0 0.0
        %3171 = vmatprep.subr.mxu0 0.0
        %3172 = vmatpush2.msra.mxu0 0.0
        %3173 = vmatprep.subr.mxu0 0.0
        %3174 = vmatpush2.msra.mxu0 0.0
        %3175 = vmatprep.subr.mxu0 0.0
        %3176 = vmatpush2.msra.mxu0 0.0
        %3177 = vmatprep.subr.mxu0 0.0
        %3178 = vmatpush2.msra.mxu0 0.0
        %3179 = vmatprep.subr.mxu0 0.0
        %3180 = vmatpush2.msra.mxu0 0.0
        %3181 = vmatprep.subr.mxu0 0.0
        %3182 = vmatpush2.msra.mxu0 0.0
        %3183 = vmatprep.subr.mxu0 0.0
        %3184 = vmatpush2.msra.mxu0 0.0
        %3185 = vmatprep.subr.mxu0 0.0
        %3186 = vmatpush2.msra.mxu0 0.0
        %3187 = vmatprep.subr.mxu0 0.0
        %3188 = vmatpush2.msra.mxu0 0.0
        %3189 = vmatprep.subr.mxu0 0.0
        %3190 = vmatpush2.msra.mxu0 0.0
        %3191 = vmatprep.subr.mxu0 0.0
        %3192 = vmatpush2.msra.mxu0 0.0
        %3193 = vmatprep.subr.mxu0 0.0
        %3194 = vmatpush2.msra.mxu0 0.0
        %3195 = vmatprep.subr.mxu0 0.0
        %3196 = vmatpush2.msra.mxu0 0.0
        %3197 = vmatprep.mubr.f32.mxu0 0.0
        %3198 = vmatmul.mubr.f32.gmra.mxu0 %v3127
        %v3199 = vpop.f32.mrf.mxu0
        %v3200 = vadd.f32 %v2198, %v3199
        %v3201 = vpop.f32.mrf.mxu0
        %3202 = vmatprep.mubr.f32.mxu0 0.0
        %3203 = vmatmul.mubr.f32.gmra.mxu0 %v3129
        %v3204 = vpop.f32.mrf.mxu0
        %v3205 = vadd.f32 %v2198, %v3204
        %v3206 = vpop.f32.mrf.mxu0
        %3207 = vmatprep.mubr.f32.mxu0 0.0
        %3208 = vmatmul.mubr.f32.gmra.mxu0 %v3131
        %v3209 = vpop.f32.mrf.mxu0
        %v3210 = vadd.f32 %v2198, %v3209
        %v3211 = vpop.f32.mrf.mxu0
        %3212 = vdwg.mxu0
        %v3213 = vmax.f32 %v3200, 0.0
        %v3214 = vmax.f32 %v3205, 0.0
        %v3215 = vmax.f32 %v3210, 0.0
        %v3217 = vsel %vm572, %v3213, 0
        %v3220 = vsel %vm572, %v3214, 0
        %v3223 = vsel %vm572, %v3215, 0
        %3225 = vmatprep.subr.mxu0 0.0
        %3226 = vmatpush1.msra.mxu0 0.0
        %3227 = vmatprep.subr.mxu0 0.0
        %3228 = vmatpush1.msra.mxu0 0.0
        %3229 = vmatprep.subr.mxu0 0.0
        %3230 = vmatpush1.msra.mxu0 0.0
        %3231 = vmatprep.subr.mxu0 0.0
        %3232 = vmatpush1.msra.mxu0 0.0
        %3233 = vmatprep.subr.mxu0 0.0
        %3234 = vmatpush1.msra.mxu0 0.0
        %3235 = vmatprep.subr.mxu0 0.0
        %3236 = vmatpush1.msra.mxu0 0.0
        %3237 = vmatprep.subr.mxu0 0.0
        %3238 = vmatpush1.msra.mxu0 0.0
        %3239 = vmatprep.subr.mxu0 0.0
        %3240 = vmatpush1.msra.mxu0 0.0
        %3241 = vmatprep.subr.mxu0 0.0
        %3242 = vmatpush1.msra.mxu0 %v474
        %3243 = vmatprep.subr.mxu0 0.0
        %3244 = vmatpush1.msra.mxu0 %v473
        %3245 = vmatprep.subr.mxu0 0.0
        %3246 = vmatpush1.msra.mxu0 %v472
        %3247 = vmatprep.subr.mxu0 0.0
        %3248 = vmatpush1.msra.mxu0 %v471
        %3249 = vmatprep.subr.mxu0 0.0
        %3250 = vmatpush1.msra.mxu0 %v470
        %3251 = vmatprep.subr.mxu0 0.0
        %3252 = vmatpush1.msra.mxu0 %v469
        %3253 = vmatprep.subr.mxu0 0.0
        %3254 = vmatpush1.msra.mxu0 %v468
        %3255 = vmatprep.subr.mxu0 0.0
        %3256 = vmatpush1.msra.mxu0 %v467
        %3257 = vmatprep.subr.mxu0 0.0
        %3258 = vmatpush2.msra.mxu0 0.0
        %3259 = vmatprep.subr.mxu0 0.0
        %3260 = vmatpush2.msra.mxu0 0.0
        %3261 = vmatprep.subr.mxu0 0.0
        %3262 = vmatpush2.msra.mxu0 0.0
        %3263 = vmatprep.subr.mxu0 0.0
        %3264 = vmatpush2.msra.mxu0 0.0
        %3265 = vmatprep.subr.mxu0 0.0
        %3266 = vmatpush2.msra.mxu0 0.0
        %3267 = vmatprep.subr.mxu0 0.0
        %3268 = vmatpush2.msra.mxu0 0.0
        %3269 = vmatprep.subr.mxu0 0.0
        %3270 = vmatpush2.msra.mxu0 0.0
        %3271 = vmatprep.subr.mxu0 0.0
        %3272 = vmatpush2.msra.mxu0 0.0
        %3273 = vmatprep.subr.mxu0 0.0
        %3274 = vmatpush2.msra.mxu0 0.0
        %3275 = vmatprep.subr.mxu0 0.0
        %3276 = vmatpush2.msra.mxu0 0.0
        %3277 = vmatprep.subr.mxu0 0.0
        %3278 = vmatpush2.msra.mxu0 0.0
        %3279 = vmatprep.subr.mxu0 0.0
        %3280 = vmatpush2.msra.mxu0 0.0
        %3281 = vmatprep.subr.mxu0 0.0
        %3282 = vmatpush2.msra.mxu0 0.0
        %3283 = vmatprep.subr.mxu0 0.0
        %3284 = vmatpush2.msra.mxu0 0.0
        %3285 = vmatprep.subr.mxu0 0.0
        %3286 = vmatpush2.msra.mxu0 0.0
        %3287 = vmatprep.subr.mxu0 0.0
        %3288 = vmatpush2.msra.mxu0 0.0
        %3289 = vmatprep.mubr.f32.mxu0 0.0
        %3290 = vmatmul.mubr.f32.gmra.mxu0 %v3217
        %v3291 = vpop.f32.mrf.mxu0
        %v3292 = vadd.f32 %v2300, %v3291
        %v3293 = vpop.f32.mrf.mxu0
        %3294 = vmatprep.mubr.f32.mxu0 0.0
        %3295 = vmatmul.mubr.f32.gmra.mxu0 %v3220
        %v3296 = vpop.f32.mrf.mxu0
        %v3297 = vadd.f32 %v2300, %v3296
        %v3298 = vpop.f32.mrf.mxu0
        %3299 = vmatprep.mubr.f32.mxu0 0.0
        %3300 = vmatmul.mubr.f32.gmra.mxu0 %v3223
        %v3301 = vpop.f32.mrf.mxu0
        %v3302 = vadd.f32 %v2300, %v3301
        %v3303 = vpop.f32.mrf.mxu0
        %3304 = vdwg.mxu0
        %3308 = vrot.lane.b32.xlu0 %v3292, 64
        %v3309 = vpop.permute.xlu0 %3308
        %3310 = vrot.lane.b32.xlu0 %v3297, 64
        %v3311 = vpop.permute.xlu0 %3310
        %3312 = vrot.lane.b32.xlu0 %v3302, 64
        %v3313 = vpop.permute.xlu0 %3312
        %v3317 = vadd.f32 %v3040, %v3309
        %v3318 = vadd.f32 %v3041, %v3311
        %v3319 = vadd.f32 %v3042, %v3313
        %3323 = vrot.lane.b32.xlu0 %v3317, 64
        %v3324 = vpop.permute.xlu0 %3323
        %3325 = vrot.lane.b32.xlu0 %v3318, 64
        %v3326 = vpop.permute.xlu0 %3325
        %3327 = vrot.lane.b32.xlu0 %v3319, 64
        %v3328 = vpop.permute.xlu0 %3327
        %3335 = vrot.lane.b32.xlu0 %v2710, 64
        %v3336 = vpop.permute.xlu0 %3335
        %3337 = vrot.lane.b32.xlu0 %v2711, 64
        %v3338 = vpop.permute.xlu0 %3337
        %3339 = vrot.lane.b32.xlu0 %v2712, 64
        %v3340 = vpop.permute.xlu0 %3339
        %v3344 = vsel %vm572, %v3324, %v3336
        %v3345 = vsel %vm572, %v3326, %v3338
        %v3346 = vsel %vm572, %v3328, %v3340
        %3347 = vst [vmem:[%s421] sm:$0xff] %v3344
        %3348 = vst [vmem:[%s421 + $0x8] sm:$0xff] %v3345
        %3349 = vst [vmem:[%s421 + $0x10] sm:$0x1f] %v3346
        %s3350 = scalar_lea.vmem %s362, 64 [#allocation2]
        %v3351 = vld [vmem:[%s3350] sm:$0xff]
        %v3352 = vld [vmem:[%s3350 + $0x8] sm:$0xff]
        %v3353 = vld [vmem:[%s3350 + $0x10] sm:$0xff]
        %v3354 = vld [vmem:[%s3350 + $0x18] sm:$0xff]
        %v3355 = vld [vmem:[%s3350 + $0x20] sm:$0xff]
        %v3356 = vld [vmem:[%s3350 + $0x28] sm:$0xff]
        %v3357 = vld [vmem:[%s3350 + $0x30] sm:$0xff]
        %v3358 = vld [vmem:[%s3350 + $0x38] sm:$0xff]
        %v3359 = vmax.f32 %v3351, 0.0
        %v3360 = vmax.f32 %v3352, 0.0
        %v3361 = vmax.f32 %v3353, 0.0
        %v3362 = vmax.f32 %v3354, 0.0
        %v3363 = vmax.f32 %v3355, 0.0
        %v3364 = vmax.f32 %v3356, 0.0
        %v3365 = vmax.f32 %v3357, 0.0
        %v3366 = vmax.f32 %v3358, 0.0
        %v3368 = vsel %vm572, %v3359, 0
        %v3371 = vsel %vm572, %v3360, 0
        %v3374 = vsel %vm572, %v3361, 0
        %v3377 = vsel %vm572, %v3362, 0
        %v3380 = vsel %vm572, %v3363, 0
        %v3383 = vsel %vm572, %v3364, 0
        %v3386 = vsel %vm572, %v3365, 0
        %v3389 = vsel %vm572, %v3366, 0
        %3391 = vmatprep.subr.mxu0 0.0
        %3392 = vmatpush1.msra.mxu0 0.0
        %3393 = vmatprep.subr.mxu0 0.0
        %3394 = vmatpush1.msra.mxu0 0.0
        %3395 = vmatprep.subr.mxu0 0.0
        %3396 = vmatpush1.msra.mxu0 0.0
        %3397 = vmatprep.subr.mxu0 0.0
        %3398 = vmatpush1.msra.mxu0 0.0
        %3399 = vmatprep.subr.mxu0 0.0
        %3400 = vmatpush1.msra.mxu0 0.0
        %3401 = vmatprep.subr.mxu0 0.0
        %3402 = vmatpush1.msra.mxu0 0.0
        %3403 = vmatprep.subr.mxu0 0.0
        %3404 = vmatpush1.msra.mxu0 0.0
        %3405 = vmatprep.subr.mxu0 0.0
        %3406 = vmatpush1.msra.mxu0 0.0
        %3407 = vmatprep.subr.mxu0 0.0
        %3408 = vmatpush1.msra.mxu0 %v429
        %3409 = vmatprep.subr.mxu0 0.0
        %3410 = vmatpush1.msra.mxu0 %v428
        %3411 = vmatprep.subr.mxu0 0.0
        %3412 = vmatpush1.msra.mxu0 %v427
        %3413 = vmatprep.subr.mxu0 0.0
        %3414 = vmatpush1.msra.mxu0 %v426
        %3415 = vmatprep.subr.mxu0 0.0
        %3416 = vmatpush1.msra.mxu0 %v425
        %3417 = vmatprep.subr.mxu0 0.0
        %3418 = vmatpush1.msra.mxu0 %v424
        %3419 = vmatprep.subr.mxu0 0.0
        %3420 = vmatpush1.msra.mxu0 %v423
        %3421 = vmatprep.subr.mxu0 0.0
        %3422 = vmatpush1.msra.mxu0 %v422
        %3423 = vmatprep.subr.mxu0 0.0
        %3424 = vmatpush2.msra.mxu0 0.0
        %3425 = vmatprep.subr.mxu0 0.0
        %3426 = vmatpush2.msra.mxu0 0.0
        %3427 = vmatprep.subr.mxu0 0.0
        %3428 = vmatpush2.msra.mxu0 0.0
        %3429 = vmatprep.subr.mxu0 0.0
        %3430 = vmatpush2.msra.mxu0 0.0
        %3431 = vmatprep.subr.mxu0 0.0
        %3432 = vmatpush2.msra.mxu0 0.0
        %3433 = vmatprep.subr.mxu0 0.0
        %3434 = vmatpush2.msra.mxu0 0.0
        %3435 = vmatprep.subr.mxu0 0.0
        %3436 = vmatpush2.msra.mxu0 0.0
        %3437 = vmatprep.subr.mxu0 0.0
        %3438 = vmatpush2.msra.mxu0 0.0
        %3439 = vmatprep.subr.mxu0 0.0
        %3440 = vmatpush2.msra.mxu0 0.0
        %3441 = vmatprep.subr.mxu0 0.0
        %3442 = vmatpush2.msra.mxu0 0.0
        %3443 = vmatprep.subr.mxu0 0.0
        %3444 = vmatpush2.msra.mxu0 0.0
        %3445 = vmatprep.subr.mxu0 0.0
        %3446 = vmatpush2.msra.mxu0 0.0
        %3447 = vmatprep.subr.mxu0 0.0
        %3448 = vmatpush2.msra.mxu0 0.0
        %3449 = vmatprep.subr.mxu0 0.0
        %3450 = vmatpush2.msra.mxu0 0.0
        %3451 = vmatprep.subr.mxu0 0.0
        %3452 = vmatpush2.msra.mxu0 0.0
        %3453 = vmatprep.subr.mxu0 0.0
        %3454 = vmatpush2.msra.mxu0 0.0
        %3455 = vmatprep.mubr.f32.mxu0 0.0
        %3456 = vmatmul.mubr.f32.gmra.mxu0 %v3368
        %v3457 = vpop.f32.mrf.mxu0
        %v3458 = vadd.f32 %v571, %v3457
        %v3459 = vpop.f32.mrf.mxu0
        %3460 = vmatprep.mubr.f32.mxu0 0.0
        %3461 = vmatmul.mubr.f32.gmra.mxu0 %v3371
        %v3462 = vpop.f32.mrf.mxu0
        %v3463 = vadd.f32 %v571, %v3462
        %v3464 = vpop.f32.mrf.mxu0
        %3465 = vmatprep.mubr.f32.mxu0 0.0
        %3466 = vmatmul.mubr.f32.gmra.mxu0 %v3374
        %v3467 = vpop.f32.mrf.mxu0
        %v3468 = vadd.f32 %v571, %v3467
        %v3469 = vpop.f32.mrf.mxu0
        %3470 = vmatprep.mubr.f32.mxu0 0.0
        %3471 = vmatmul.mubr.f32.gmra.mxu0 %v3377
        %v3472 = vpop.f32.mrf.mxu0
        %v3473 = vadd.f32 %v571, %v3472
        %v3474 = vpop.f32.mrf.mxu0
        %3475 = vmatprep.mubr.f32.mxu0 0.0
        %3476 = vmatmul.mubr.f32.gmra.mxu0 %v3380
        %v3477 = vpop.f32.mrf.mxu0
        %v3478 = vadd.f32 %v571, %v3477
        %v3479 = vpop.f32.mrf.mxu0
        %3480 = vmatprep.mubr.f32.mxu0 0.0
        %3481 = vmatmul.mubr.f32.gmra.mxu0 %v3383
        %v3482 = vpop.f32.mrf.mxu0
        %v3483 = vadd.f32 %v571, %v3482
        %v3484 = vpop.f32.mrf.mxu0
        %3485 = vmatprep.mubr.f32.mxu0 0.0
        %3486 = vmatmul.mubr.f32.gmra.mxu0 %v3386
        %v3487 = vpop.f32.mrf.mxu0
        %v3488 = vadd.f32 %v571, %v3487
        %v3489 = vpop.f32.mrf.mxu0
        %3490 = vmatprep.mubr.f32.mxu0 0.0
        %3491 = vmatmul.mubr.f32.gmra.mxu0 %v3389
        %v3492 = vpop.f32.mrf.mxu0
        %v3493 = vadd.f32 %v571, %v3492
        %v3494 = vpop.f32.mrf.mxu0
        %3495 = vdwg.mxu0
        %v3496 = vmax.f32 %v3458, 0.0
        %v3497 = vmax.f32 %v3463, 0.0
        %v3498 = vmax.f32 %v3468, 0.0
        %v3499 = vmax.f32 %v3473, 0.0
        %v3500 = vmax.f32 %v3478, 0.0
        %v3501 = vmax.f32 %v3483, 0.0
        %v3502 = vmax.f32 %v3488, 0.0
        %v3503 = vmax.f32 %v3493, 0.0
        %v3504 = vadd.f32 %v3496, %v524
        %v3505 = vadd.f32 %v3497, %v525
        %v3506 = vadd.f32 %v3498, %v526
        %v3507 = vadd.f32 %v3499, %v527
        %v3508 = vadd.f32 %v3500, %v528
        %v3509 = vadd.f32 %v3501, %v529
        %v3510 = vadd.f32 %v3502, %v530
        %v3511 = vadd.f32 %v3503, %v531
        %v3512 = vsel %vm572, %v3504, 0.0
        %3513 = vadd.xlane.f32.xlu0 %v3512
        %v3514 = vpop.xlane.xlu0 %3513
        %v3515 = vsel %vm572, %v3505, 0.0
        %3516 = vadd.xlane.f32.xlu0 %v3515
        %v3517 = vpop.xlane.xlu0 %3516
        %v3518 = vsel %vm572, %v3506, 0.0
        %3519 = vadd.xlane.f32.xlu0 %v3518
        %v3520 = vpop.xlane.xlu0 %3519
        %v3521 = vsel %vm572, %v3507, 0.0
        %3522 = vadd.xlane.f32.xlu0 %v3521
        %v3523 = vpop.xlane.xlu0 %3522
        %v3524 = vsel %vm572, %v3508, 0.0
        %3525 = vadd.xlane.f32.xlu0 %v3524
        %v3526 = vpop.xlane.xlu0 %3525
        %v3527 = vsel %vm572, %v3509, 0.0
        %3528 = vadd.xlane.f32.xlu0 %v3527
        %v3529 = vpop.xlane.xlu0 %3528
        %v3530 = vsel %vm572, %v3510, 0.0
        %3531 = vadd.xlane.f32.xlu0 %v3530
        %v3532 = vpop.xlane.xlu0 %3531
        %v3533 = vsel %vm572, %v3511, 0.0
        %3534 = vadd.xlane.f32.xlu0 %v3533
        %v3535 = vpop.xlane.xlu0 %3534
        %v3536 = vmul.f32 %v3514, %v742
        %v3537 = vmul.f32 %v3517, %v742
        %v3538 = vmul.f32 %v3520, %v742
        %v3539 = vmul.f32 %v3523, %v742
        %v3540 = vmul.f32 %v3526, %v742
        %v3541 = vmul.f32 %v3529, %v742
        %v3542 = vmul.f32 %v3532, %v742
        %v3543 = vmul.f32 %v3535, %v742
        %v3544 = vmul.f32 %v3504, %v3504
        %v3545 = vmul.f32 %v3505, %v3505
        %v3546 = vmul.f32 %v3506, %v3506
        %v3547 = vmul.f32 %v3507, %v3507
        %v3548 = vmul.f32 %v3508, %v3508
        %v3549 = vmul.f32 %v3509, %v3509
        %v3550 = vmul.f32 %v3510, %v3510
        %v3551 = vmul.f32 %v3511, %v3511
        %v3552 = vsel %vm572, %v3544, 0.0
        %3553 = vadd.xlane.f32.xlu0 %v3552
        %v3554 = vpop.xlane.xlu0 %3553
        %v3555 = vsel %vm572, %v3545, 0.0
        %3556 = vadd.xlane.f32.xlu0 %v3555
        %v3557 = vpop.xlane.xlu0 %3556
        %v3558 = vsel %vm572, %v3546, 0.0
        %3559 = vadd.xlane.f32.xlu0 %v3558
        %v3560 = vpop.xlane.xlu0 %3559
        %v3561 = vsel %vm572, %v3547, 0.0
        %3562 = vadd.xlane.f32.xlu0 %v3561
        %v3563 = vpop.xlane.xlu0 %3562
        %v3564 = vsel %vm572, %v3548, 0.0
        %3565 = vadd.xlane.f32.xlu0 %v3564
        %v3566 = vpop.xlane.xlu0 %3565
        %v3567 = vsel %vm572, %v3549, 0.0
        %3568 = vadd.xlane.f32.xlu0 %v3567
        %v3569 = vpop.xlane.xlu0 %3568
        %v3570 = vsel %vm572, %v3550, 0.0
        %3571 = vadd.xlane.f32.xlu0 %v3570
        %v3572 = vpop.xlane.xlu0 %3571
        %v3573 = vsel %vm572, %v3551, 0.0
        %3574 = vadd.xlane.f32.xlu0 %v3573
        %v3575 = vpop.xlane.xlu0 %3574
        %v3576 = vmul.f32 %v3554, %v742
        %v3577 = vmul.f32 %v3557, %v742
        %v3578 = vmul.f32 %v3560, %v742
        %v3579 = vmul.f32 %v3563, %v742
        %v3580 = vmul.f32 %v3566, %v742
        %v3581 = vmul.f32 %v3569, %v742
        %v3582 = vmul.f32 %v3572, %v742
        %v3583 = vmul.f32 %v3575, %v742
        %v3584 = vmul.f32 %v3536, %v3536
        %v3585 = vmul.f32 %v3537, %v3537
        %v3586 = vmul.f32 %v3538, %v3538
        %v3587 = vmul.f32 %v3539, %v3539
        %v3588 = vmul.f32 %v3540, %v3540
        %v3589 = vmul.f32 %v3541, %v3541
        %v3590 = vmul.f32 %v3542, %v3542
        %v3591 = vmul.f32 %v3543, %v3543
        %v3592 = vsub.f32 %v3576, %v3584
        %v3593 = vsub.f32 %v3577, %v3585
        %v3594 = vsub.f32 %v3578, %v3586
        %v3595 = vsub.f32 %v3579, %v3587
        %v3596 = vsub.f32 %v3580, %v3588
        %v3597 = vsub.f32 %v3581, %v3589
        %v3598 = vsub.f32 %v3582, %v3590
        %v3599 = vsub.f32 %v3583, %v3591
        %v3600 = vsub.f32 %v3504, %v3536
        %v3601 = vsub.f32 %v3505, %v3537
        %v3602 = vsub.f32 %v3506, %v3538
        %v3603 = vsub.f32 %v3507, %v3539
        %v3604 = vsub.f32 %v3508, %v3540
        %v3605 = vsub.f32 %v3509, %v3541
        %v3606 = vsub.f32 %v3510, %v3542
        %v3607 = vsub.f32 %v3511, %v3543
        %v3608 = vadd.f32 %v3592, 1e-05
        %v3609 = vadd.f32 %v3593, 1e-05
        %v3610 = vadd.f32 %v3594, 1e-05
        %v3611 = vadd.f32 %v3595, 1e-05
        %v3612 = vadd.f32 %v3596, 1e-05
        %v3613 = vadd.f32 %v3597, 1e-05
        %v3614 = vadd.f32 %v3598, 1e-05
        %v3615 = vadd.f32 %v3599, 1e-05
        %v3616 = vrsqrt.pop %v3608
        %v3617 = vrsqrt.pop %v3609
        %v3618 = vrsqrt.pop %v3610
        %v3619 = vrsqrt.pop %v3611
        %v3620 = vrsqrt.pop %v3612
        %v3621 = vrsqrt.pop %v3613
        %v3622 = vrsqrt.pop %v3614
        %v3623 = vrsqrt.pop %v3615
        %v3624 = vmul.f32 %v3600, %v3616
        %v3625 = vmul.f32 %v3601, %v3617
        %v3626 = vmul.f32 %v3602, %v3618
        %v3627 = vmul.f32 %v3603, %v3619
        %v3628 = vmul.f32 %v3604, %v3620
        %v3629 = vmul.f32 %v3605, %v3621
        %v3630 = vmul.f32 %v3606, %v3622
        %v3631 = vmul.f32 %v3607, %v3623
        %v3632 = vmul.f32 %v3624, %v842
        %v3633 = vmul.f32 %v3625, %v842
        %v3634 = vmul.f32 %v3626, %v842
        %v3635 = vmul.f32 %v3627, %v842
        %v3636 = vmul.f32 %v3628, %v842
        %v3637 = vmul.f32 %v3629, %v842
        %v3638 = vmul.f32 %v3630, %v842
        %v3639 = vmul.f32 %v3631, %v842
        %v3640 = vadd.f32 %v3632, %v854
        %v3641 = vadd.f32 %v3633, %v854
        %v3642 = vadd.f32 %v3634, %v854
        %v3643 = vadd.f32 %v3635, %v854
        %v3644 = vadd.f32 %v3636, %v854
        %v3645 = vadd.f32 %v3637, %v854
        %v3646 = vadd.f32 %v3638, %v854
        %v3647 = vadd.f32 %v3639, %v854
        %v3649 = vsel %vm572, %v3640, 0
        %v3652 = vsel %vm572, %v3641, 0
        %v3655 = vsel %vm572, %v3642, 0
        %v3658 = vsel %vm572, %v3643, 0
        %v3661 = vsel %vm572, %v3644, 0
        %v3664 = vsel %vm572, %v3645, 0
        %v3667 = vsel %vm572, %v3646, 0
        %v3670 = vsel %vm572, %v3647, 0
        %3672 = vmatprep.subr.mxu0 0.0
        %3673 = vmatpush1.msra.mxu0 0.0
        %3674 = vmatprep.subr.mxu0 0.0
        %3675 = vmatpush1.msra.mxu0 0.0
        %3676 = vmatprep.subr.mxu0 0.0
        %3677 = vmatpush1.msra.mxu0 0.0
        %3678 = vmatprep.subr.mxu0 0.0
        %3679 = vmatpush1.msra.mxu0 0.0
        %3680 = vmatprep.subr.mxu0 0.0
        %3681 = vmatpush1.msra.mxu0 0.0
        %3682 = vmatprep.subr.mxu0 0.0
        %3683 = vmatpush1.msra.mxu0 0.0
        %3684 = vmatprep.subr.mxu0 0.0
        %3685 = vmatpush1.msra.mxu0 0.0
        %3686 = vmatprep.subr.mxu0 0.0
        %3687 = vmatpush1.msra.mxu0 0.0
        %3688 = vmatprep.subr.mxu0 0.0
        %3689 = vmatpush1.msra.mxu0 %v438
        %3690 = vmatprep.subr.mxu0 0.0
        %3691 = vmatpush1.msra.mxu0 %v437
        %3692 = vmatprep.subr.mxu0 0.0
        %3693 = vmatpush1.msra.mxu0 %v436
        %3694 = vmatprep.subr.mxu0 0.0
        %3695 = vmatpush1.msra.mxu0 %v435
        %3696 = vmatprep.subr.mxu0 0.0
        %3697 = vmatpush1.msra.mxu0 %v434
        %3698 = vmatprep.subr.mxu0 0.0
        %3699 = vmatpush1.msra.mxu0 %v433
        %3700 = vmatprep.subr.mxu0 0.0
        %3701 = vmatpush1.msra.mxu0 %v432
        %3702 = vmatprep.subr.mxu0 0.0
        %3703 = vmatpush1.msra.mxu0 %v431
        %3704 = vmatprep.subr.mxu0 0.0
        %3705 = vmatpush2.msra.mxu0 0.0
        %3706 = vmatprep.subr.mxu0 0.0
        %3707 = vmatpush2.msra.mxu0 0.0
        %3708 = vmatprep.subr.mxu0 0.0
        %3709 = vmatpush2.msra.mxu0 0.0
        %3710 = vmatprep.subr.mxu0 0.0
        %3711 = vmatpush2.msra.mxu0 0.0
        %3712 = vmatprep.subr.mxu0 0.0
        %3713 = vmatpush2.msra.mxu0 0.0
        %3714 = vmatprep.subr.mxu0 0.0
        %3715 = vmatpush2.msra.mxu0 0.0
        %3716 = vmatprep.subr.mxu0 0.0
        %3717 = vmatpush2.msra.mxu0 0.0
        %3718 = vmatprep.subr.mxu0 0.0
        %3719 = vmatpush2.msra.mxu0 0.0
        %3720 = vmatprep.subr.mxu0 0.0
        %3721 = vmatpush2.msra.mxu0 0.0
        %3722 = vmatprep.subr.mxu0 0.0
        %3723 = vmatpush2.msra.mxu0 0.0
        %3724 = vmatprep.subr.mxu0 0.0
        %3725 = vmatpush2.msra.mxu0 0.0
        %3726 = vmatprep.subr.mxu0 0.0
        %3727 = vmatpush2.msra.mxu0 0.0
        %3728 = vmatprep.subr.mxu0 0.0
        %3729 = vmatpush2.msra.mxu0 0.0
        %3730 = vmatprep.subr.mxu0 0.0
        %3731 = vmatpush2.msra.mxu0 0.0
        %3732 = vmatprep.subr.mxu0 0.0
        %3733 = vmatpush2.msra.mxu0 0.0
        %3734 = vmatprep.subr.mxu0 0.0
        %3735 = vmatpush2.msra.mxu0 0.0
        %3736 = vmatprep.mubr.f32.mxu0 0.0
        %3737 = vmatmul.mubr.f32.gmra.mxu0 %v3649
        %v3738 = vpop.f32.mrf.mxu0
        %v3739 = vadd.f32 %v866, %v3738
        %v3740 = vpop.f32.mrf.mxu0
        %3741 = vmatprep.mubr.f32.mxu0 0.0
        %3742 = vmatmul.mubr.f32.gmra.mxu0 %v3652
        %v3743 = vpop.f32.mrf.mxu0
        %v3744 = vadd.f32 %v866, %v3743
        %v3745 = vpop.f32.mrf.mxu0
        %3746 = vmatprep.mubr.f32.mxu0 0.0
        %3747 = vmatmul.mubr.f32.gmra.mxu0 %v3655
        %v3748 = vpop.f32.mrf.mxu0
        %v3749 = vadd.f32 %v866, %v3748
        %v3750 = vpop.f32.mrf.mxu0
        %3751 = vmatprep.mubr.f32.mxu0 0.0
        %3752 = vmatmul.mubr.f32.gmra.mxu0 %v3658
        %v3753 = vpop.f32.mrf.mxu0
        %v3754 = vadd.f32 %v866, %v3753
        %v3755 = vpop.f32.mrf.mxu0
        %3756 = vmatprep.mubr.f32.mxu0 0.0
        %3757 = vmatmul.mubr.f32.gmra.mxu0 %v3661
        %v3758 = vpop.f32.mrf.mxu0
        %v3759 = vadd.f32 %v866, %v3758
        %v3760 = vpop.f32.mrf.mxu0
        %3761 = vmatprep.mubr.f32.mxu0 0.0
        %3762 = vmatmul.mubr.f32.gmra.mxu0 %v3664
        %v3763 = vpop.f32.mrf.mxu0
        %v3764 = vadd.f32 %v866, %v3763
        %v3765 = vpop.f32.mrf.mxu0
        %3766 = vmatprep.mubr.f32.mxu0 0.0
        %3767 = vmatmul.mubr.f32.gmra.mxu0 %v3667
        %v3768 = vpop.f32.mrf.mxu0
        %v3769 = vadd.f32 %v866, %v3768
        %v3770 = vpop.f32.mrf.mxu0
        %3771 = vmatprep.mubr.f32.mxu0 0.0
        %3772 = vmatmul.mubr.f32.gmra.mxu0 %v3670
        %v3773 = vpop.f32.mrf.mxu0
        %v3774 = vadd.f32 %v866, %v3773
        %v3775 = vpop.f32.mrf.mxu0
        %3776 = vdwg.mxu0
        %v3777 = vmax.f32 %v3739, 0.0
        %v3778 = vmax.f32 %v3744, 0.0
        %v3779 = vmax.f32 %v3749, 0.0
        %v3780 = vmax.f32 %v3754, 0.0
        %v3781 = vmax.f32 %v3759, 0.0
        %v3782 = vmax.f32 %v3764, 0.0
        %v3783 = vmax.f32 %v3769, 0.0
        %v3784 = vmax.f32 %v3774, 0.0
        %v3786 = vsel %vm572, %v3777, 0
        %v3789 = vsel %vm572, %v3778, 0
        %v3792 = vsel %vm572, %v3779, 0
        %v3795 = vsel %vm572, %v3780, 0
        %v3798 = vsel %vm572, %v3781, 0
        %v3801 = vsel %vm572, %v3782, 0
        %v3804 = vsel %vm572, %v3783, 0
        %v3807 = vsel %vm572, %v3784, 0
        %3809 = vmatprep.subr.mxu0 0.0
        %3810 = vmatpush1.msra.mxu0 0.0
        %3811 = vmatprep.subr.mxu0 0.0
        %3812 = vmatpush1.msra.mxu0 0.0
        %3813 = vmatprep.subr.mxu0 0.0
        %3814 = vmatpush1.msra.mxu0 0.0
        %3815 = vmatprep.subr.mxu0 0.0
        %3816 = vmatpush1.msra.mxu0 0.0
        %3817 = vmatprep.subr.mxu0 0.0
        %3818 = vmatpush1.msra.mxu0 0.0
        %3819 = vmatprep.subr.mxu0 0.0
        %3820 = vmatpush1.msra.mxu0 0.0
        %3821 = vmatprep.subr.mxu0 0.0
        %3822 = vmatpush1.msra.mxu0 0.0
        %3823 = vmatprep.subr.mxu0 0.0
        %3824 = vmatpush1.msra.mxu0 0.0
        %3825 = vmatprep.subr.mxu0 0.0
        %3826 = vmatpush1.msra.mxu0 %v447
        %3827 = vmatprep.subr.mxu0 0.0
        %3828 = vmatpush1.msra.mxu0 %v446
        %3829 = vmatprep.subr.mxu0 0.0
        %3830 = vmatpush1.msra.mxu0 %v445
        %3831 = vmatprep.subr.mxu0 0.0
        %3832 = vmatpush1.msra.mxu0 %v444
        %3833 = vmatprep.subr.mxu0 0.0
        %3834 = vmatpush1.msra.mxu0 %v443
        %3835 = vmatprep.subr.mxu0 0.0
        %3836 = vmatpush1.msra.mxu0 %v442
        %3837 = vmatprep.subr.mxu0 0.0
        %3838 = vmatpush1.msra.mxu0 %v441
        %3839 = vmatprep.subr.mxu0 0.0
        %3840 = vmatpush1.msra.mxu0 %v440
        %3841 = vmatprep.subr.mxu0 0.0
        %3842 = vmatpush2.msra.mxu0 0.0
        %3843 = vmatprep.subr.mxu0 0.0
        %3844 = vmatpush2.msra.mxu0 0.0
        %3845 = vmatprep.subr.mxu0 0.0
        %3846 = vmatpush2.msra.mxu0 0.0
        %3847 = vmatprep.subr.mxu0 0.0
        %3848 = vmatpush2.msra.mxu0 0.0
        %3849 = vmatprep.subr.mxu0 0.0
        %3850 = vmatpush2.msra.mxu0 0.0
        %3851 = vmatprep.subr.mxu0 0.0
        %3852 = vmatpush2.msra.mxu0 0.0
        %3853 = vmatprep.subr.mxu0 0.0
        %3854 = vmatpush2.msra.mxu0 0.0
        %3855 = vmatprep.subr.mxu0 0.0
        %3856 = vmatpush2.msra.mxu0 0.0
        %3857 = vmatprep.subr.mxu0 0.0
        %3858 = vmatpush2.msra.mxu0 0.0
        %3859 = vmatprep.subr.mxu0 0.0
        %3860 = vmatpush2.msra.mxu0 0.0
        %3861 = vmatprep.subr.mxu0 0.0
        %3862 = vmatpush2.msra.mxu0 0.0
        %3863 = vmatprep.subr.mxu0 0.0
        %3864 = vmatpush2.msra.mxu0 0.0
        %3865 = vmatprep.subr.mxu0 0.0
        %3866 = vmatpush2.msra.mxu0 0.0
        %3867 = vmatprep.subr.mxu0 0.0
        %3868 = vmatpush2.msra.mxu0 0.0
        %3869 = vmatprep.subr.mxu0 0.0
        %3870 = vmatpush2.msra.mxu0 0.0
        %3871 = vmatprep.subr.mxu0 0.0
        %3872 = vmatpush2.msra.mxu0 0.0
        %3873 = vmatprep.mubr.f32.mxu0 0.0
        %3874 = vmatmul.mubr.f32.gmra.mxu0 %v3786
        %v3875 = vpop.f32.mrf.mxu0
        %v3876 = vadd.f32 %v1007, %v3875
        %v3877 = vpop.f32.mrf.mxu0
        %3878 = vmatprep.mubr.f32.mxu0 0.0
        %3879 = vmatmul.mubr.f32.gmra.mxu0 %v3789
        %v3880 = vpop.f32.mrf.mxu0
        %v3881 = vadd.f32 %v1007, %v3880
        %v3882 = vpop.f32.mrf.mxu0
        %3883 = vmatprep.mubr.f32.mxu0 0.0
        %3884 = vmatmul.mubr.f32.gmra.mxu0 %v3792
        %v3885 = vpop.f32.mrf.mxu0
        %v3886 = vadd.f32 %v1007, %v3885
        %v3887 = vpop.f32.mrf.mxu0
        %3888 = vmatprep.mubr.f32.mxu0 0.0
        %3889 = vmatmul.mubr.f32.gmra.mxu0 %v3795
        %v3890 = vpop.f32.mrf.mxu0
        %v3891 = vadd.f32 %v1007, %v3890
        %v3892 = vpop.f32.mrf.mxu0
        %3893 = vmatprep.mubr.f32.mxu0 0.0
        %3894 = vmatmul.mubr.f32.gmra.mxu0 %v3798
        %v3895 = vpop.f32.mrf.mxu0
        %v3896 = vadd.f32 %v1007, %v3895
        %v3897 = vpop.f32.mrf.mxu0
        %3898 = vmatprep.mubr.f32.mxu0 0.0
        %3899 = vmatmul.mubr.f32.gmra.mxu0 %v3801
        %v3900 = vpop.f32.mrf.mxu0
        %v3901 = vadd.f32 %v1007, %v3900
        %v3902 = vpop.f32.mrf.mxu0
        %3903 = vmatprep.mubr.f32.mxu0 0.0
        %3904 = vmatmul.mubr.f32.gmra.mxu0 %v3804
        %v3905 = vpop.f32.mrf.mxu0
        %v3906 = vadd.f32 %v1007, %v3905
        %v3907 = vpop.f32.mrf.mxu0
        %3908 = vmatprep.mubr.f32.mxu0 0.0
        %3909 = vmatmul.mubr.f32.gmra.mxu0 %v3807
        %v3910 = vpop.f32.mrf.mxu0
        %v3911 = vadd.f32 %v1007, %v3910
        %v3912 = vpop.f32.mrf.mxu0
        %3913 = vdwg.mxu0
        %v3914 = vsel %vm572, %v3876, 0.0
        %3915 = vadd.xlane.f32.xlu0 %v3914
        %v3916 = vpop.xlane.xlu0 %3915
        %v3917 = vsel %vm572, %v3881, 0.0
        %3918 = vadd.xlane.f32.xlu0 %v3917
        %v3919 = vpop.xlane.xlu0 %3918
        %v3920 = vsel %vm572, %v3886, 0.0
        %3921 = vadd.xlane.f32.xlu0 %v3920
        %v3922 = vpop.xlane.xlu0 %3921
        %v3923 = vsel %vm572, %v3891, 0.0
        %3924 = vadd.xlane.f32.xlu0 %v3923
        %v3925 = vpop.xlane.xlu0 %3924
        %v3926 = vsel %vm572, %v3896, 0.0
        %3927 = vadd.xlane.f32.xlu0 %v3926
        %v3928 = vpop.xlane.xlu0 %3927
        %v3929 = vsel %vm572, %v3901, 0.0
        %3930 = vadd.xlane.f32.xlu0 %v3929
        %v3931 = vpop.xlane.xlu0 %3930
        %v3932 = vsel %vm572, %v3906, 0.0
        %3933 = vadd.xlane.f32.xlu0 %v3932
        %v3934 = vpop.xlane.xlu0 %3933
        %v3935 = vsel %vm572, %v3911, 0.0
        %3936 = vadd.xlane.f32.xlu0 %v3935
        %v3937 = vpop.xlane.xlu0 %3936
        %v3938 = vmul.f32 %v3916, %v742
        %v3939 = vmul.f32 %v3919, %v742
        %v3940 = vmul.f32 %v3922, %v742
        %v3941 = vmul.f32 %v3925, %v742
        %v3942 = vmul.f32 %v3928, %v742
        %v3943 = vmul.f32 %v3931, %v742
        %v3944 = vmul.f32 %v3934, %v742
        %v3945 = vmul.f32 %v3937, %v742
        %v3946 = vmul.f32 %v3876, %v3876
        %v3947 = vmul.f32 %v3881, %v3881
        %v3948 = vmul.f32 %v3886, %v3886
        %v3949 = vmul.f32 %v3891, %v3891
        %v3950 = vmul.f32 %v3896, %v3896
        %v3951 = vmul.f32 %v3901, %v3901
        %v3952 = vmul.f32 %v3906, %v3906
        %v3953 = vmul.f32 %v3911, %v3911
        %v3954 = vsel %vm572, %v3946, 0.0
        %3955 = vadd.xlane.f32.xlu0 %v3954
        %v3956 = vpop.xlane.xlu0 %3955
        %v3957 = vsel %vm572, %v3947, 0.0
        %3958 = vadd.xlane.f32.xlu0 %v3957
        %v3959 = vpop.xlane.xlu0 %3958
        %v3960 = vsel %vm572, %v3948, 0.0
        %3961 = vadd.xlane.f32.xlu0 %v3960
        %v3962 = vpop.xlane.xlu0 %3961
        %v3963 = vsel %vm572, %v3949, 0.0
        %3964 = vadd.xlane.f32.xlu0 %v3963
        %v3965 = vpop.xlane.xlu0 %3964
        %v3966 = vsel %vm572, %v3950, 0.0
        %3967 = vadd.xlane.f32.xlu0 %v3966
        %v3968 = vpop.xlane.xlu0 %3967
        %v3969 = vsel %vm572, %v3951, 0.0
        %3970 = vadd.xlane.f32.xlu0 %v3969
        %v3971 = vpop.xlane.xlu0 %3970
        %v3972 = vsel %vm572, %v3952, 0.0
        %3973 = vadd.xlane.f32.xlu0 %v3972
        %v3974 = vpop.xlane.xlu0 %3973
        %v3975 = vsel %vm572, %v3953, 0.0
        %3976 = vadd.xlane.f32.xlu0 %v3975
        %v3977 = vpop.xlane.xlu0 %3976
        %v3978 = vmul.f32 %v3956, %v742
        %v3979 = vmul.f32 %v3959, %v742
        %v3980 = vmul.f32 %v3962, %v742
        %v3981 = vmul.f32 %v3965, %v742
        %v3982 = vmul.f32 %v3968, %v742
        %v3983 = vmul.f32 %v3971, %v742
        %v3984 = vmul.f32 %v3974, %v742
        %v3985 = vmul.f32 %v3977, %v742
        %v3986 = vmul.f32 %v3938, %v3938
        %v3987 = vmul.f32 %v3939, %v3939
        %v3988 = vmul.f32 %v3940, %v3940
        %v3989 = vmul.f32 %v3941, %v3941
        %v3990 = vmul.f32 %v3942, %v3942
        %v3991 = vmul.f32 %v3943, %v3943
        %v3992 = vmul.f32 %v3944, %v3944
        %v3993 = vmul.f32 %v3945, %v3945
        %v3994 = vsub.f32 %v3978, %v3986
        %v3995 = vsub.f32 %v3979, %v3987
        %v3996 = vsub.f32 %v3980, %v3988
        %v3997 = vsub.f32 %v3981, %v3989
        %v3998 = vsub.f32 %v3982, %v3990
        %v3999 = vsub.f32 %v3983, %v3991
        %v4000 = vsub.f32 %v3984, %v3992
        %v4001 = vsub.f32 %v3985, %v3993
        %v4002 = vsub.f32 %v3876, %v3938
        %v4003 = vsub.f32 %v3881, %v3939
        %v4004 = vsub.f32 %v3886, %v3940
        %v4005 = vsub.f32 %v3891, %v3941
        %v4006 = vsub.f32 %v3896, %v3942
        %v4007 = vsub.f32 %v3901, %v3943
        %v4008 = vsub.f32 %v3906, %v3944
        %v4009 = vsub.f32 %v3911, %v3945
        %v4010 = vadd.f32 %v3994, 1e-05
        %v4011 = vadd.f32 %v3995, 1e-05
        %v4012 = vadd.f32 %v3996, 1e-05
        %v4013 = vadd.f32 %v3997, 1e-05
        %v4014 = vadd.f32 %v3998, 1e-05
        %v4015 = vadd.f32 %v3999, 1e-05
        %v4016 = vadd.f32 %v4000, 1e-05
        %v4017 = vadd.f32 %v4001, 1e-05
        %v4018 = vrsqrt.pop %v4010
        %v4019 = vrsqrt.pop %v4011
        %v4020 = vrsqrt.pop %v4012
        %v4021 = vrsqrt.pop %v4013
        %v4022 = vrsqrt.pop %v4014
        %v4023 = vrsqrt.pop %v4015
        %v4024 = vrsqrt.pop %v4016
        %v4025 = vrsqrt.pop %v4017
        %v4026 = vmul.f32 %v4002, %v4018
        %v4027 = vmul.f32 %v4003, %v4019
        %v4028 = vmul.f32 %v4004, %v4020
        %v4029 = vmul.f32 %v4005, %v4021
        %v4030 = vmul.f32 %v4006, %v4022
        %v4031 = vmul.f32 %v4007, %v4023
        %v4032 = vmul.f32 %v4008, %v4024
        %v4033 = vmul.f32 %v4009, %v4025
        %v4034 = vmul.f32 %v4026, %v1260
        %v4035 = vmul.f32 %v4027, %v1260
        %v4036 = vmul.f32 %v4028, %v1260
        %v4037 = vmul.f32 %v4029, %v1260
        %v4038 = vmul.f32 %v4030, %v1260
        %v4039 = vmul.f32 %v4031, %v1260
        %v4040 = vmul.f32 %v4032, %v1260
        %v4041 = vmul.f32 %v4033, %v1260
        %v4042 = vadd.f32 %v4034, %v1272
        %v4043 = vadd.f32 %v4035, %v1272
        %v4044 = vadd.f32 %v4036, %v1272
        %v4045 = vadd.f32 %v4037, %v1272
        %v4046 = vadd.f32 %v4038, %v1272
        %v4047 = vadd.f32 %v4039, %v1272
        %v4048 = vadd.f32 %v4040, %v1272
        %v4049 = vadd.f32 %v4041, %v1272
        %v4051 = vsel %vm572, %v4042, 0
        %v4054 = vsel %vm572, %v4043, 0
        %v4057 = vsel %vm572, %v4044, 0
        %v4060 = vsel %vm572, %v4045, 0
        %v4063 = vsel %vm572, %v4046, 0
        %v4066 = vsel %vm572, %v4047, 0
        %v4069 = vsel %vm572, %v4048, 0
        %v4072 = vsel %vm572, %v4049, 0
        %4074 = vmatprep.subr.mxu0 0.0
        %4075 = vmatpush1.msra.mxu0 0.0
        %4076 = vmatprep.subr.mxu0 0.0
        %4077 = vmatpush1.msra.mxu0 0.0
        %4078 = vmatprep.subr.mxu0 0.0
        %4079 = vmatpush1.msra.mxu0 0.0
        %4080 = vmatprep.subr.mxu0 0.0
        %4081 = vmatpush1.msra.mxu0 0.0
        %4082 = vmatprep.subr.mxu0 0.0
        %4083 = vmatpush1.msra.mxu0 0.0
        %4084 = vmatprep.subr.mxu0 0.0
        %4085 = vmatpush1.msra.mxu0 0.0
        %4086 = vmatprep.subr.mxu0 0.0
        %4087 = vmatpush1.msra.mxu0 0.0
        %4088 = vmatprep.subr.mxu0 0.0
        %4089 = vmatpush1.msra.mxu0 0.0
        %4090 = vmatprep.subr.mxu0 0.0
        %4091 = vmatpush1.msra.mxu0 %v491
        %4092 = vmatprep.subr.mxu0 0.0
        %4093 = vmatpush1.msra.mxu0 %v490
        %4094 = vmatprep.subr.mxu0 0.0
        %4095 = vmatpush1.msra.mxu0 %v489
        %4096 = vmatprep.subr.mxu0 0.0
        %4097 = vmatpush1.msra.mxu0 %v488
        %4098 = vmatprep.subr.mxu0 0.0
        %4099 = vmatpush1.msra.mxu0 %v487
        %4100 = vmatprep.subr.mxu0 0.0
        %4101 = vmatpush1.msra.mxu0 %v486
        %4102 = vmatprep.subr.mxu0 0.0
        %4103 = vmatpush1.msra.mxu0 %v485
        %4104 = vmatprep.subr.mxu0 0.0
        %4105 = vmatpush1.msra.mxu0 %v484
        %4106 = vmatprep.subr.mxu0 0.0
        %4107 = vmatpush2.msra.mxu0 0.0
        %4108 = vmatprep.subr.mxu0 0.0
        %4109 = vmatpush2.msra.mxu0 0.0
        %4110 = vmatprep.subr.mxu0 0.0
        %4111 = vmatpush2.msra.mxu0 0.0
        %4112 = vmatprep.subr.mxu0 0.0
        %4113 = vmatpush2.msra.mxu0 0.0
        %4114 = vmatprep.subr.mxu0 0.0
        %4115 = vmatpush2.msra.mxu0 0.0
        %4116 = vmatprep.subr.mxu0 0.0
        %4117 = vmatpush2.msra.mxu0 0.0
        %4118 = vmatprep.subr.mxu0 0.0
        %4119 = vmatpush2.msra.mxu0 0.0
        %4120 = vmatprep.subr.mxu0 0.0
        %4121 = vmatpush2.msra.mxu0 0.0
        %4122 = vmatprep.subr.mxu0 0.0
        %4123 = vmatpush2.msra.mxu0 0.0
        %4124 = vmatprep.subr.mxu0 0.0
        %4125 = vmatpush2.msra.mxu0 0.0
        %4126 = vmatprep.subr.mxu0 0.0
        %4127 = vmatpush2.msra.mxu0 0.0
        %4128 = vmatprep.subr.mxu0 0.0
        %4129 = vmatpush2.msra.mxu0 0.0
        %4130 = vmatprep.subr.mxu0 0.0
        %4131 = vmatpush2.msra.mxu0 0.0
        %4132 = vmatprep.subr.mxu0 0.0
        %4133 = vmatpush2.msra.mxu0 0.0
        %4134 = vmatprep.subr.mxu0 0.0
        %4135 = vmatpush2.msra.mxu0 0.0
        %4136 = vmatprep.subr.mxu0 0.0
        %4137 = vmatpush2.msra.mxu0 0.0
        %4138 = vmatprep.mubr.f32.mxu0 0.0
        %4139 = vmatmul.mubr.f32.gmra.mxu0 %v4051
        %v4140 = vpop.f32.mrf.mxu0
        %v4141 = vadd.f32 %v1285, %v4140
        %v4142 = vpop.f32.mrf.mxu0
        %4143 = vmatprep.mubr.f32.mxu0 0.0
        %4144 = vmatmul.mubr.f32.gmra.mxu0 %v4054
        %v4145 = vpop.f32.mrf.mxu0
        %v4146 = vadd.f32 %v1285, %v4145
        %v4147 = vpop.f32.mrf.mxu0
        %4148 = vmatprep.mubr.f32.mxu0 0.0
        %4149 = vmatmul.mubr.f32.gmra.mxu0 %v4057
        %v4150 = vpop.f32.mrf.mxu0
        %v4151 = vadd.f32 %v1285, %v4150
        %v4152 = vpop.f32.mrf.mxu0
        %4153 = vmatprep.mubr.f32.mxu0 0.0
        %4154 = vmatmul.mubr.f32.gmra.mxu0 %v4060
        %v4155 = vpop.f32.mrf.mxu0
        %v4156 = vadd.f32 %v1285, %v4155
        %v4157 = vpop.f32.mrf.mxu0
        %4158 = vmatprep.mubr.f32.mxu0 0.0
        %4159 = vmatmul.mubr.f32.gmra.mxu0 %v4063
        %v4160 = vpop.f32.mrf.mxu0
        %v4161 = vadd.f32 %v1285, %v4160
        %v4162 = vpop.f32.mrf.mxu0
        %4163 = vmatprep.mubr.f32.mxu0 0.0
        %4164 = vmatmul.mubr.f32.gmra.mxu0 %v4066
        %v4165 = vpop.f32.mrf.mxu0
        %v4166 = vadd.f32 %v1285, %v4165
        %v4167 = vpop.f32.mrf.mxu0
        %4168 = vmatprep.mubr.f32.mxu0 0.0
        %4169 = vmatmul.mubr.f32.gmra.mxu0 %v4069
        %v4170 = vpop.f32.mrf.mxu0
        %v4171 = vadd.f32 %v1285, %v4170
        %v4172 = vpop.f32.mrf.mxu0
        %4173 = vmatprep.mubr.f32.mxu0 0.0
        %4174 = vmatmul.mubr.f32.gmra.mxu0 %v4072
        %v4175 = vpop.f32.mrf.mxu0
        %v4176 = vadd.f32 %v1285, %v4175
        %v4177 = vpop.f32.mrf.mxu0
        %4178 = vdwg.mxu0
        %v4179 = vsel %vm572, %v3324, 0.0
        %4180 = vadd.xlane.f32.xlu0 %v4179
        %v4181 = vpop.xlane.xlu0 %4180
        %v4182 = vsel %vm572, %v3326, 0.0
        %4183 = vadd.xlane.f32.xlu0 %v4182
        %v4184 = vpop.xlane.xlu0 %4183
        %v4185 = vsel %vm1422, %v3328, 0.0
        %4186 = vadd.xlane.f32.xlu0 %v4185
        %v4187 = vpop.xlane.xlu0 %4186
        %v4188 = vmul.f32 %v4181, %v742
        %v4189 = vmul.f32 %v4184, %v742
        %v4190 = vmul.f32 %v4187, %v742
        %v4191 = vmul.f32 %v3317, %v3317
        %v4192 = vmul.f32 %v3318, %v3318
        %v4193 = vmul.f32 %v3319, %v3319
        %4197 = vrot.lane.b32.xlu0 %v4191, 64
        %v4198 = vpop.permute.xlu0 %4197
        %4199 = vrot.lane.b32.xlu0 %v4192, 64
        %v4200 = vpop.permute.xlu0 %4199
        %4201 = vrot.lane.b32.xlu0 %v4193, 64
        %v4202 = vpop.permute.xlu0 %4201
        %v4206 = vsel %vm572, %v4198, 0.0
        %4207 = vadd.xlane.f32.xlu0 %v4206
        %v4208 = vpop.xlane.xlu0 %4207
        %v4209 = vsel %vm572, %v4200, 0.0
        %4210 = vadd.xlane.f32.xlu0 %v4209
        %v4211 = vpop.xlane.xlu0 %4210
        %v4212 = vsel %vm1422, %v4202, 0.0
        %4213 = vadd.xlane.f32.xlu0 %v4212
        %v4214 = vpop.xlane.xlu0 %4213
        %v4215 = vmul.f32 %v4208, %v742
        %v4216 = vmul.f32 %v4211, %v742
        %v4217 = vmul.f32 %v4214, %v742
        %v4218 = vmul.f32 %v4188, %v4188
        %v4219 = vmul.f32 %v4189, %v4189
        %v4220 = vmul.f32 %v4190, %v4190
        %v4221 = vsub.f32 %v4215, %v4218
        %v4222 = vsub.f32 %v4216, %v4219
        %v4223 = vsub.f32 %v4217, %v4220
        %v4224 = vsub.f32 %v3317, %v4188
        %v4225 = vsub.f32 %v3318, %v4189
        %v4226 = vsub.f32 %v3319, %v4190
        %v4227 = vadd.f32 %v4221, 1e-05
        %v4228 = vadd.f32 %v4222, 1e-05
        %v4229 = vadd.f32 %v4223, 1e-05
        %v4230 = vrsqrt.pop %v4227
        %v4231 = vrsqrt.pop %v4228
        %v4232 = vrsqrt.pop %v4229
        %v4233 = vmul.f32 %v4224, %v4230
        %v4234 = vmul.f32 %v4225, %v4231
        %v4235 = vmul.f32 %v4226, %v4232
        %v4236 = vmul.f32 %v4233, %v2476
        %v4237 = vmul.f32 %v4234, %v2476
        %v4238 = vmul.f32 %v4235, %v2476
        %v4239 = vadd.f32 %v4236, %v2483
        %v4240 = vadd.f32 %v4237, %v2483
        %v4241 = vadd.f32 %v4238, %v2483
        %4245 = vrot.lane.b32.xlu0 %v4239, 64
        %v4246 = vpop.permute.xlu0 %4245
        %4247 = vrot.lane.b32.xlu0 %v4240, 64
        %v4248 = vpop.permute.xlu0 %4247
        %4249 = vrot.lane.b32.xlu0 %v4241, 64
        %v4250 = vpop.permute.xlu0 %4249
        %v4251 = vsel %vm572, %v4246, 0
        %v4253 = vsel %vm572, %v4248, 0
        %v4255 = vsel %vm572, %v4250, 0
        %4257 = vmatprep.subr.mxu0 0.0
        %4258 = vmatpush1.msra.mxu0 0.0
        %4259 = vmatprep.subr.mxu0 0.0
        %4260 = vmatpush1.msra.mxu0 0.0
        %4261 = vmatprep.subr.mxu0 0.0
        %4262 = vmatpush1.msra.mxu0 0.0
        %4263 = vmatprep.subr.mxu0 0.0
        %4264 = vmatpush1.msra.mxu0 0.0
        %4265 = vmatprep.subr.mxu0 0.0
        %4266 = vmatpush1.msra.mxu0 0.0
        %4267 = vmatprep.subr.mxu0 0.0
        %4268 = vmatpush1.msra.mxu0 0.0
        %4269 = vmatprep.subr.mxu0 0.0
        %4270 = vmatpush1.msra.mxu0 0.0
        %4271 = vmatprep.subr.mxu0 0.0
        %4272 = vmatpush1.msra.mxu0 0.0
        %4273 = vmatprep.subr.mxu0 0.0
        %4274 = vmatpush1.msra.mxu0 %v456
        %4275 = vmatprep.subr.mxu0 0.0
        %4276 = vmatpush1.msra.mxu0 %v455
        %4277 = vmatprep.subr.mxu0 0.0
        %4278 = vmatpush1.msra.mxu0 %v454
        %4279 = vmatprep.subr.mxu0 0.0
        %4280 = vmatpush1.msra.mxu0 %v453
        %4281 = vmatprep.subr.mxu0 0.0
        %4282 = vmatpush1.msra.mxu0 %v452
        %4283 = vmatprep.subr.mxu0 0.0
        %4284 = vmatpush1.msra.mxu0 %v451
        %4285 = vmatprep.subr.mxu0 0.0
        %4286 = vmatpush1.msra.mxu0 %v450
        %4287 = vmatprep.subr.mxu0 0.0
        %4288 = vmatpush1.msra.mxu0 %v449
        %4289 = vmatprep.subr.mxu0 0.0
        %4290 = vmatpush2.msra.mxu0 0.0
        %4291 = vmatprep.subr.mxu0 0.0
        %4292 = vmatpush2.msra.mxu0 0.0
        %4293 = vmatprep.subr.mxu0 0.0
        %4294 = vmatpush2.msra.mxu0 0.0
        %4295 = vmatprep.subr.mxu0 0.0
        %4296 = vmatpush2.msra.mxu0 0.0
        %4297 = vmatprep.subr.mxu0 0.0
        %4298 = vmatpush2.msra.mxu0 0.0
        %4299 = vmatprep.subr.mxu0 0.0
        %4300 = vmatpush2.msra.mxu0 0.0
        %4301 = vmatprep.subr.mxu0 0.0
        %4302 = vmatpush2.msra.mxu0 0.0
        %4303 = vmatprep.subr.mxu0 0.0
        %4304 = vmatpush2.msra.mxu0 0.0
        %4305 = vmatprep.subr.mxu0 0.0
        %4306 = vmatpush2.msra.mxu0 0.0
        %4307 = vmatprep.subr.mxu0 0.0
        %4308 = vmatpush2.msra.mxu0 0.0
        %4309 = vmatprep.subr.mxu0 0.0
        %4310 = vmatpush2.msra.mxu0 0.0
        %4311 = vmatprep.subr.mxu0 0.0
        %4312 = vmatpush2.msra.mxu0 0.0
        %4313 = vmatprep.subr.mxu0 0.0
        %4314 = vmatpush2.msra.mxu0 0.0
        %4315 = vmatprep.subr.mxu0 0.0
        %4316 = vmatpush2.msra.mxu0 0.0
        %4317 = vmatprep.subr.mxu0 0.0
        %4318 = vmatpush2.msra.mxu0 0.0
        %4319 = vmatprep.subr.mxu0 0.0
        %4320 = vmatpush2.msra.mxu0 0.0
        %4321 = vmatprep.mubr.f32.mxu0 0.0
        %4322 = vmatmul.mubr.f32.gmra.mxu0 %v4251
        %v4323 = vpop.f32.mrf.mxu0
        %v4324 = vadd.f32 %v1479, %v4323
        %v4325 = vpop.f32.mrf.mxu0
        %4326 = vmatprep.mubr.f32.mxu0 0.0
        %4327 = vmatmul.mubr.f32.gmra.mxu0 %v4253
        %v4328 = vpop.f32.mrf.mxu0
        %v4329 = vadd.f32 %v1479, %v4328
        %v4330 = vpop.f32.mrf.mxu0
        %4331 = vmatprep.mubr.f32.mxu0 0.0
        %4332 = vmatmul.mubr.f32.gmra.mxu0 %v4255
        %v4333 = vpop.f32.mrf.mxu0
        %v4334 = vadd.f32 %v1479, %v4333
        %v4335 = vpop.f32.mrf.mxu0
        %4336 = vdwg.mxu0
        %v4338 = vsel %vm572, %v4324, 0
        %v4341 = vsel %vm572, %v4329, 0
        %v4344 = vsel %vm572, %v4334, 0
        %v4347 = vsel %vm572, %v4141, 0
        %v4350 = vsel %vm572, %v4146, 0
        %v4353 = vsel %vm572, %v4151, 0
        %v4356 = vsel %vm572, %v4156, 0
        %v4359 = vsel %vm572, %v4161, 0
        %v4362 = vsel %vm572, %v4166, 0
        %v4365 = vsel %vm572, %v4171, 0
        %v4368 = vsel %vm572, %v4176, 0
        %4370 = vmatprep.subr.mxu0 0.0
        %4371 = vmatpush1.xpose.msra.mxu0 0.0
        %4372 = vmatprep.subr.mxu0 0.0
        %4373 = vmatpush1.xpose.msra.mxu0 0.0
        %4374 = vmatprep.subr.mxu0 0.0
        %4375 = vmatpush1.xpose.msra.mxu0 0.0
        %4376 = vmatprep.subr.mxu0 0.0
        %4377 = vmatpush1.xpose.msra.mxu0 0.0
        %4378 = vmatprep.subr.mxu0 0.0
        %4379 = vmatpush1.xpose.msra.mxu0 0.0
        %4380 = vmatprep.subr.mxu0 0.0
        %4381 = vmatpush1.xpose.msra.mxu0 0.0
        %4382 = vmatprep.subr.mxu0 0.0
        %4383 = vmatpush1.xpose.msra.mxu0 0.0
        %4384 = vmatprep.subr.mxu0 0.0
        %4385 = vmatpush1.xpose.msra.mxu0 0.0
        %4386 = vmatprep.subr.mxu0 0.0
        %4387 = vmatpush1.xpose.msra.mxu0 %v4368
        %4388 = vmatprep.subr.mxu0 0.0
        %4389 = vmatpush1.xpose.msra.mxu0 %v4365
        %4390 = vmatprep.subr.mxu0 0.0
        %4391 = vmatpush1.xpose.msra.mxu0 %v4362
        %4392 = vmatprep.subr.mxu0 0.0
        %4393 = vmatpush1.xpose.msra.mxu0 %v4359
        %4394 = vmatprep.subr.mxu0 0.0
        %4395 = vmatpush1.xpose.msra.mxu0 %v4356
        %4396 = vmatprep.subr.mxu0 0.0
        %4397 = vmatpush1.xpose.msra.mxu0 %v4353
        %4398 = vmatprep.subr.mxu0 0.0
        %4399 = vmatpush1.xpose.msra.mxu0 %v4350
        %4400 = vmatprep.subr.mxu0 0.0
        %4401 = vmatpush1.xpose.msra.mxu0 %v4347
        %4402 = vmatprep.subr.mxu0 0.0
        %4403 = vmatpush2.xpose.msra.mxu0 0.0
        %4404 = vmatprep.subr.mxu0 0.0
        %4405 = vmatpush2.xpose.msra.mxu0 0.0
        %4406 = vmatprep.subr.mxu0 0.0
        %4407 = vmatpush2.xpose.msra.mxu0 0.0
        %4408 = vmatprep.subr.mxu0 0.0
        %4409 = vmatpush2.xpose.msra.mxu0 0.0
        %4410 = vmatprep.subr.mxu0 0.0
        %4411 = vmatpush2.xpose.msra.mxu0 0.0
        %4412 = vmatprep.subr.mxu0 0.0
        %4413 = vmatpush2.xpose.msra.mxu0 0.0
        %4414 = vmatprep.subr.mxu0 0.0
        %4415 = vmatpush2.xpose.msra.mxu0 0.0
        %4416 = vmatprep.subr.mxu0 0.0
        %4417 = vmatpush2.xpose.msra.mxu0 0.0
        %4418 = vmatprep.subr.mxu0 0.0
        %4419 = vmatpush2.xpose.msra.mxu0 0.0
        %4420 = vmatprep.subr.mxu0 0.0
        %4421 = vmatpush2.xpose.msra.mxu0 0.0
        %4422 = vmatprep.subr.mxu0 0.0
        %4423 = vmatpush2.xpose.msra.mxu0 0.0
        %4424 = vmatprep.subr.mxu0 0.0
        %4425 = vmatpush2.xpose.msra.mxu0 0.0
        %4426 = vmatprep.subr.mxu0 0.0
        %4427 = vmatpush2.xpose.msra.mxu0 0.0
        %4428 = vmatprep.subr.mxu0 0.0
        %4429 = vmatpush2.xpose.msra.mxu0 0.0
        %4430 = vmatprep.subr.mxu0 0.0
        %4431 = vmatpush2.xpose.msra.mxu0 0.0
        %4432 = vmatprep.subr.mxu0 0.0
        %4433 = vmatpush2.xpose.msra.mxu0 0.0
        %4434 = vmatprep.mubr.f32.mxu0 0.0
        %4435 = vmatmul.mubr.f32.gmra.mxu0 %v4338
        %v4436 = vpop.f32.mrf.mxu0
        %v4437 = vadd.f32 0.0, %v4436
        %v4438 = vpop.f32.mrf.mxu0
        %4439 = vmatprep.mubr.f32.mxu0 0.0
        %4440 = vmatmul.mubr.f32.gmra.mxu0 %v4341
        %v4441 = vpop.f32.mrf.mxu0
        %v4442 = vadd.f32 0.0, %v4441
        %v4443 = vpop.f32.mrf.mxu0
        %4444 = vmatprep.mubr.f32.mxu0 0.0
        %4445 = vmatmul.mubr.f32.gmra.mxu0 %v4344
        %v4446 = vpop.f32.mrf.mxu0
        %v4447 = vadd.f32 0.0, %v4446
        %v4448 = vpop.f32.mrf.mxu0
        %4449 = vdwg.mxu0
        %v4450 = vmul.f32 %v4437, 0.125
        %v4451 = vmul.f32 %v4442, 0.125
        %v4452 = vmul.f32 %v4447, 0.125
        %v4453 = vsel %vm572, %v4450, -inf
        %v4454 = vsel %vm572, %v4451, -inf
        %v4455 = vsel %vm1422, %v4452, -inf
        %v4456 = vmax.f32 %v4453, %v4454
        %v4457 = vmax.f32 %v4456, %v4455
        %v4458 = vrot.slane %v4457, 4
        %v4459 = vmax.f32 %v4457, %v4458
        %v4460 = vrot.slane %v4459, 2
        %v4461 = vmax.f32 %v4459, %v4460
        %v4462 = vrot.slane %v4461, 1
        %v4463 = vmax.f32 %v4461, %v4462
        %v4464 = vsub.f32 %v4450, %v4463
        %v4465 = vsub.f32 %v4451, %v4463
        %v4466 = vsub.f32 %v4452, %v4463
        %v4467 = vmul.f32 %v4464, 1.442695
        %v4468 = vpow.pop %v4467
        %v4469 = vmul.f32 %v4465, 1.442695
        %v4470 = vpow.pop %v4469
        %v4471 = vmul.f32 %v4466, 1.442695
        %v4472 = vpow.pop %v4471
        %v4473 = vsel %vm572, %v4468, 0.0
        %v4474 = vsel %vm572, %v4470, 0.0
        %v4475 = vadd.f32 %v4473, %v4474
        %v4476 = vsel %vm1422, %v4472, 0.0
        %v4477 = vadd.f32 %v4475, %v4476
        %v4478 = vrot.slane %v4477, 4
        %v4479 = vadd.f32 %v4477, %v4478
        %v4480 = vrot.slane %v4479, 2
        %v4481 = vadd.f32 %v4479, %v4480
        %v4482 = vrot.slane %v4481, 1
        %v4483 = vadd.f32 %v4481, %v4482
        %v4484 = vrcp.pop %v4483
        %v4485 = vmul.f32 %v4468, %v4484
        %v4486 = vmul.f32 %v4470, %v4484
        %v4487 = vmul.f32 %v4472, %v4484
        %v4488 = vadd.f32 %v4485, 1e-08
        %v4489 = vadd.f32 %v4486, 1e-08
        %v4490 = vadd.f32 %v4487, 1e-08
        %v4491 = vsel %vm572, %v4488, 0.0
        %4492 = vadd.xlane.f32.xlu0 %v4491
        %v4493 = vpop.xlane.xlu0 %4492
        %v4494 = vsel %vm572, %v4489, 0.0
        %4495 = vadd.xlane.f32.xlu0 %v4494
        %v4496 = vpop.xlane.xlu0 %4495
        %v4497 = vsel %vm1422, %v4490, 0.0
        %4498 = vadd.xlane.f32.xlu0 %v4497
        %v4499 = vpop.xlane.xlu0 %4498
        %v4500 = vrcp.pop %v4493
        %v4501 = vrcp.pop %v4496
        %v4502 = vrcp.pop %v4499
        %v4503 = vmul.f32 %v4488, %v4500
        %v4504 = vmul.f32 %v4489, %v4501
        %v4505 = vmul.f32 %v4490, %v4502
        %4506 = vrot.lane.b32.xlu0 %v4141, 64
        %v4507 = vpop.permute.xlu0 %4506
        %4508 = vrot.lane.b32.xlu0 %v4146, 64
        %v4509 = vpop.permute.xlu0 %4508
        %4510 = vrot.lane.b32.xlu0 %v4151, 64
        %v4511 = vpop.permute.xlu0 %4510
        %4512 = vrot.lane.b32.xlu0 %v4156, 64
        %v4513 = vpop.permute.xlu0 %4512
        %4514 = vrot.lane.b32.xlu0 %v4161, 64
        %v4515 = vpop.permute.xlu0 %4514
        %4516 = vrot.lane.b32.xlu0 %v4166, 64
        %v4517 = vpop.permute.xlu0 %4516
        %4518 = vrot.lane.b32.xlu0 %v4171, 64
        %v4519 = vpop.permute.xlu0 %4518
        %4520 = vrot.lane.b32.xlu0 %v4176, 64
        %v4521 = vpop.permute.xlu0 %4520
        %v4531 = vsel %vm572, %v4503, 0
        %v4534 = vsel %vm572, %v4504, 0
        %v4537 = vsel %vm572, %v4505, 0
        %4539 = vmatprep.subr.mxu0 0.0
        %4540 = vmatpush1.msra.mxu0 0.0
        %4541 = vmatprep.subr.mxu0 0.0
        %4542 = vmatpush1.msra.mxu0 0.0
        %4543 = vmatprep.subr.mxu0 0.0
        %4544 = vmatpush1.msra.mxu0 0.0
        %4545 = vmatprep.subr.mxu0 0.0
        %4546 = vmatpush1.msra.mxu0 0.0
        %4547 = vmatprep.subr.mxu0 0.0
        %4548 = vmatpush1.msra.mxu0 0.0
        %4549 = vmatprep.subr.mxu0 0.0
        %4550 = vmatpush1.msra.mxu0 0.0
        %4551 = vmatprep.subr.mxu0 0.0
        %4552 = vmatpush1.msra.mxu0 0.0
        %4553 = vmatprep.subr.mxu0 0.0
        %4554 = vmatpush1.msra.mxu0 0.0
        %4555 = vmatprep.subr.mxu0 0.0
        %4556 = vmatpush1.msra.mxu0 %v4521
        %4557 = vmatprep.subr.mxu0 0.0
        %4558 = vmatpush1.msra.mxu0 %v4519
        %4559 = vmatprep.subr.mxu0 0.0
        %4560 = vmatpush1.msra.mxu0 %v4517
        %4561 = vmatprep.subr.mxu0 0.0
        %4562 = vmatpush1.msra.mxu0 %v4515
        %4563 = vmatprep.subr.mxu0 0.0
        %4564 = vmatpush1.msra.mxu0 %v4513
        %4565 = vmatprep.subr.mxu0 0.0
        %4566 = vmatpush1.msra.mxu0 %v4511
        %4567 = vmatprep.subr.mxu0 0.0
        %4568 = vmatpush1.msra.mxu0 %v4509
        %4569 = vmatprep.subr.mxu0 0.0
        %4570 = vmatpush1.msra.mxu0 %v4507
        %4571 = vmatprep.subr.mxu0 0.0
        %4572 = vmatpush2.msra.mxu0 0.0
        %4573 = vmatprep.subr.mxu0 0.0
        %4574 = vmatpush2.msra.mxu0 0.0
        %4575 = vmatprep.subr.mxu0 0.0
        %4576 = vmatpush2.msra.mxu0 0.0
        %4577 = vmatprep.subr.mxu0 0.0
        %4578 = vmatpush2.msra.mxu0 0.0
        %4579 = vmatprep.subr.mxu0 0.0
        %4580 = vmatpush2.msra.mxu0 0.0
        %4581 = vmatprep.subr.mxu0 0.0
        %4582 = vmatpush2.msra.mxu0 0.0
        %4583 = vmatprep.subr.mxu0 0.0
        %4584 = vmatpush2.msra.mxu0 0.0
        %4585 = vmatprep.subr.mxu0 0.0
        %4586 = vmatpush2.msra.mxu0 0.0
        %4587 = vmatprep.subr.mxu0 0.0
        %4588 = vmatpush2.msra.mxu0 0.0
        %4589 = vmatprep.subr.mxu0 0.0
        %4590 = vmatpush2.msra.mxu0 0.0
        %4591 = vmatprep.subr.mxu0 0.0
        %4592 = vmatpush2.msra.mxu0 0.0
        %4593 = vmatprep.subr.mxu0 0.0
        %4594 = vmatpush2.msra.mxu0 0.0
        %4595 = vmatprep.subr.mxu0 0.0
        %4596 = vmatpush2.msra.mxu0 0.0
        %4597 = vmatprep.subr.mxu0 0.0
        %4598 = vmatpush2.msra.mxu0 0.0
        %4599 = vmatprep.subr.mxu0 0.0
        %4600 = vmatpush2.msra.mxu0 0.0
        %4601 = vmatprep.subr.mxu0 0.0
        %4602 = vmatpush2.msra.mxu0 0.0
        %4603 = vmatprep.mubr.f32.mxu0 0.0
        %4604 = vmatmul.mubr.f32.gmra.mxu0 %v4531
        %v4605 = vpop.f32.mrf.mxu0
        %v4606 = vadd.f32 0.0, %v4605
        %v4607 = vpop.f32.mrf.mxu0
        %4608 = vmatprep.mubr.f32.mxu0 0.0
        %4609 = vmatmul.mubr.f32.gmra.mxu0 %v4534
        %v4610 = vpop.f32.mrf.mxu0
        %v4611 = vadd.f32 0.0, %v4610
        %v4612 = vpop.f32.mrf.mxu0
        %4613 = vmatprep.mubr.f32.mxu0 0.0
        %4614 = vmatmul.mubr.f32.gmra.mxu0 %v4537
        %v4615 = vpop.f32.mrf.mxu0
        %v4616 = vadd.f32 0.0, %v4615
        %v4617 = vpop.f32.mrf.mxu0
        %4618 = vdwg.mxu0
        %v4619 = vsel %vm572, %v4606, %v3317
        %v4620 = vsel %vm572, %v4611, %v3318
        %v4621 = vsel %vm572, %v4616, %v3319
        %4622 = vmatprep.subr.mxu0 %v523
        %4623 = vmatpush1.msra.mxu0 %v522
        %4624 = vmatprep.subr.mxu0 %v521
        %4625 = vmatpush1.msra.mxu0 %v520
        %4626 = vmatprep.subr.mxu0 %v519
        %4627 = vmatpush1.msra.mxu0 %v518
        %4628 = vmatprep.subr.mxu0 %v517
        %4629 = vmatpush1.msra.mxu0 %v516
        %4630 = vmatprep.subr.mxu0 %v515
        %4631 = vmatpush1.msra.mxu0 %v514
        %4632 = vmatprep.subr.mxu0 %v513
        %4633 = vmatpush1.msra.mxu0 %v512
        %4634 = vmatprep.subr.mxu0 %v511
        %4635 = vmatpush1.msra.mxu0 %v510
        %4636 = vmatprep.subr.mxu0 %v509
        %4637 = vmatpush1.msra.mxu0 %v508
        %4638 = vmatprep.subr.mxu0 %v507
        %4639 = vmatpush1.msra.mxu0 %v506
        %4640 = vmatprep.subr.mxu0 %v505
        %4641 = vmatpush1.msra.mxu0 %v504
        %4642 = vmatprep.subr.mxu0 %v503
        %4643 = vmatpush1.msra.mxu0 %v502
        %4644 = vmatprep.subr.mxu0 %v501
        %4645 = vmatpush1.msra.mxu0 %v500
        %4646 = vmatprep.subr.mxu0 %v499
        %4647 = vmatpush1.msra.mxu0 %v498
        %4648 = vmatprep.subr.mxu0 %v497
        %4649 = vmatpush1.msra.mxu0 %v496
        %4650 = vmatprep.subr.mxu0 %v495
        %4651 = vmatpush1.msra.mxu0 %v494
        %4652 = vmatprep.subr.mxu0 %v493
        %4653 = vmatpush1.msra.mxu0 %v492
        %4654 = vmatprep.subr.mxu0 0.0
        %4655 = vmatpush2.msra.mxu0 0.0
        %4656 = vmatprep.subr.mxu0 0.0
        %4657 = vmatpush2.msra.mxu0 0.0
        %4658 = vmatprep.subr.mxu0 0.0
        %4659 = vmatpush2.msra.mxu0 0.0
        %4660 = vmatprep.subr.mxu0 0.0
        %4661 = vmatpush2.msra.mxu0 0.0
        %4662 = vmatprep.subr.mxu0 0.0
        %4663 = vmatpush2.msra.mxu0 0.0
        %4664 = vmatprep.subr.mxu0 0.0
        %4665 = vmatpush2.msra.mxu0 0.0
        %4666 = vmatprep.subr.mxu0 0.0
        %4667 = vmatpush2.msra.mxu0 0.0
        %4668 = vmatprep.subr.mxu0 0.0
        %4669 = vmatpush2.msra.mxu0 0.0
        %4670 = vmatprep.subr.mxu0 0.0
        %4671 = vmatpush2.msra.mxu0 0.0
        %4672 = vmatprep.subr.mxu0 0.0
        %4673 = vmatpush2.msra.mxu0 0.0
        %4674 = vmatprep.subr.mxu0 0.0
        %4675 = vmatpush2.msra.mxu0 0.0
        %4676 = vmatprep.subr.mxu0 0.0
        %4677 = vmatpush2.msra.mxu0 0.0
        %4678 = vmatprep.subr.mxu0 0.0
        %4679 = vmatpush2.msra.mxu0 0.0
        %4680 = vmatprep.subr.mxu0 0.0
        %4681 = vmatpush2.msra.mxu0 0.0
        %4682 = vmatprep.subr.mxu0 0.0
        %4683 = vmatpush2.msra.mxu0 0.0
        %4684 = vmatprep.subr.mxu0 0.0
        %4685 = vmatpush2.msra.mxu0 0.0
        %4686 = vmatprep.mubr.f32.mxu0 0.0
        %4687 = vmatmul.mubr.f32.gmra.mxu0 %v4619
        %v4688 = vpop.f32.mrf.mxu0
        %v4689 = vadd.f32 %v1870, %v4688
        %v4690 = vpop.f32.mrf.mxu0
        %v4691 = vadd.f32 %v1874, %v4690
        %4692 = vmatprep.mubr.f32.mxu0 0.0
        %4693 = vmatmul.mubr.f32.gmra.mxu0 %v4620
        %v4694 = vpop.f32.mrf.mxu0
        %v4695 = vadd.f32 %v1870, %v4694
        %v4696 = vpop.f32.mrf.mxu0
        %v4697 = vadd.f32 %v1874, %v4696
        %4698 = vmatprep.mubr.f32.mxu0 0.0
        %4699 = vmatmul.mubr.f32.gmra.mxu0 %v4621
        %v4700 = vpop.f32.mrf.mxu0
        %v4701 = vadd.f32 %v1870, %v4700
        %v4702 = vpop.f32.mrf.mxu0
        %v4703 = vadd.f32 %v1874, %v4702
        %4704 = vdwg.mxu0
        %v4705 = vsel %vm572, %v3324, 0
        %v4707 = vsel %vm572, %v3326, 0
        %v4709 = vsel %vm572, %v3328, 0
        %4711 = vmatprep.subr.mxu0 0.0
        %4712 = vmatpush1.msra.mxu0 0.0
        %4713 = vmatprep.subr.mxu0 0.0
        %4714 = vmatpush1.msra.mxu0 0.0
        %4715 = vmatprep.subr.mxu0 0.0
        %4716 = vmatpush1.msra.mxu0 0.0
        %4717 = vmatprep.subr.mxu0 0.0
        %4718 = vmatpush1.msra.mxu0 0.0
        %4719 = vmatprep.subr.mxu0 0.0
        %4720 = vmatpush1.msra.mxu0 0.0
        %4721 = vmatprep.subr.mxu0 0.0
        %4722 = vmatpush1.msra.mxu0 0.0
        %4723 = vmatprep.subr.mxu0 0.0
        %4724 = vmatpush1.msra.mxu0 0.0
        %4725 = vmatprep.subr.mxu0 0.0
        %4726 = vmatpush1.msra.mxu0 0.0
        %4727 = vmatprep.subr.mxu0 0.0
        %4728 = vmatpush1.msra.mxu0 %v483
        %4729 = vmatprep.subr.mxu0 0.0
        %4730 = vmatpush1.msra.mxu0 %v482
        %4731 = vmatprep.subr.mxu0 0.0
        %4732 = vmatpush1.msra.mxu0 %v481
        %4733 = vmatprep.subr.mxu0 0.0
        %4734 = vmatpush1.msra.mxu0 %v480
        %4735 = vmatprep.subr.mxu0 0.0
        %4736 = vmatpush1.msra.mxu0 %v479
        %4737 = vmatprep.subr.mxu0 0.0
        %4738 = vmatpush1.msra.mxu0 %v478
        %4739 = vmatprep.subr.mxu0 0.0
        %4740 = vmatpush1.msra.mxu0 %v477
        %4741 = vmatprep.subr.mxu0 0.0
        %4742 = vmatpush1.msra.mxu0 %v476
        %4743 = vmatprep.subr.mxu0 0.0
        %4744 = vmatpush2.msra.mxu0 0.0
        %4745 = vmatprep.subr.mxu0 0.0
        %4746 = vmatpush2.msra.mxu0 0.0
        %4747 = vmatprep.subr.mxu0 0.0
        %4748 = vmatpush2.msra.mxu0 0.0
        %4749 = vmatprep.subr.mxu0 0.0
        %4750 = vmatpush2.msra.mxu0 0.0
        %4751 = vmatprep.subr.mxu0 0.0
        %4752 = vmatpush2.msra.mxu0 0.0
        %4753 = vmatprep.subr.mxu0 0.0
        %4754 = vmatpush2.msra.mxu0 0.0
        %4755 = vmatprep.subr.mxu0 0.0
        %4756 = vmatpush2.msra.mxu0 0.0
        %4757 = vmatprep.subr.mxu0 0.0
        %4758 = vmatpush2.msra.mxu0 0.0
        %4759 = vmatprep.subr.mxu0 0.0
        %4760 = vmatpush2.msra.mxu0 0.0
        %4761 = vmatprep.subr.mxu0 0.0
        %4762 = vmatpush2.msra.mxu0 0.0
        %4763 = vmatprep.subr.mxu0 0.0
        %4764 = vmatpush2.msra.mxu0 0.0
        %4765 = vmatprep.subr.mxu0 0.0
        %4766 = vmatpush2.msra.mxu0 0.0
        %4767 = vmatprep.subr.mxu0 0.0
        %4768 = vmatpush2.msra.mxu0 0.0
        %4769 = vmatprep.subr.mxu0 0.0
        %4770 = vmatpush2.msra.mxu0 0.0
        %4771 = vmatprep.subr.mxu0 0.0
        %4772 = vmatpush2.msra.mxu0 0.0
        %4773 = vmatprep.subr.mxu0 0.0
        %4774 = vmatpush2.msra.mxu0 0.0
        %4775 = vmatprep.mubr.f32.mxu0 0.0
        %4776 = vmatmul.mubr.f32.gmra.mxu0 %v4705
        %v4777 = vpop.f32.mrf.mxu0
        %v4778 = vadd.f32 %v1963, %v4777
        %v4779 = vpop.f32.mrf.mxu0
        %4780 = vmatprep.mubr.f32.mxu0 0.0
        %4781 = vmatmul.mubr.f32.gmra.mxu0 %v4707
        %v4782 = vpop.f32.mrf.mxu0
        %v4783 = vadd.f32 %v1963, %v4782
        %v4784 = vpop.f32.mrf.mxu0
        %4785 = vmatprep.mubr.f32.mxu0 0.0
        %4786 = vmatmul.mubr.f32.gmra.mxu0 %v4709
        %v4787 = vpop.f32.mrf.mxu0
        %v4788 = vadd.f32 %v1963, %v4787
        %v4789 = vpop.f32.mrf.mxu0
        %4790 = vdwg.mxu0
        %v4791 = vxor.u32 %v4689, 2147483648
        %v4792 = vxor.u32 %v4695, 2147483648
        %v4793 = vxor.u32 %v4701, 2147483648
        %v4794 = vmul.f32 %v4791, 1.442695
        %v4795 = vpow.pop %v4794
        %v4796 = vmul.f32 %v4792, 1.442695
        %v4797 = vpow.pop %v4796
        %v4798 = vmul.f32 %v4793, 1.442695
        %v4799 = vpow.pop %v4798
        %v4800 = vadd.f32 %v4795, 1.0
        %v4801 = vadd.f32 %v4797, 1.0
        %v4802 = vadd.f32 %v4799, 1.0
        %v4803 = vrcp.pop %v4800
        %v4804 = vmul.f32 1.0, %v4803
        %v4805 = vrcp.pop %v4801
        %v4806 = vmul.f32 1.0, %v4805
        %v4807 = vrcp.pop %v4802
        %v4808 = vmul.f32 1.0, %v4807
        %v4809 = vsub.f32 %v4804, 1.0
        %v4810 = vsub.f32 %v4806, 1.0
        %v4811 = vsub.f32 %v4808, 1.0
        %v4812 = vmul.f32 %v4809, %v4778
        %v4813 = vmul.f32 %v4810, %v4783
        %v4814 = vmul.f32 %v4811, %v4788
        %v4815 = vadd.f32 %v4691, %v4812
        %v4816 = vadd.f32 %v4697, %v4813
        %v4817 = vadd.f32 %v4703, %v4814
        %v4818 = vtanh.pop %v4815
        %v4819 = vtanh.pop %v4816
        %v4820 = vtanh.pop %v4817
        %v4821 = vsub.f32 1.0, %v4804
        %v4822 = vsub.f32 1.0, %v4806
        %v4823 = vsub.f32 1.0, %v4808
        %4827 = vrot.lane.b32.xlu0 %v4818, 64
        %v4828 = vpop.permute.xlu0 %4827
        %4829 = vrot.lane.b32.xlu0 %v4819, 64
        %v4830 = vpop.permute.xlu0 %4829
        %4831 = vrot.lane.b32.xlu0 %v4820, 64
        %v4832 = vpop.permute.xlu0 %4831
        %v4836 = vmul.f32 %v4821, %v4828
        %v4837 = vmul.f32 %v4822, %v4830
        %v4838 = vmul.f32 %v4823, %v4832
        %v4839 = vmul.f32 %v4804, %v3317
        %v4840 = vmul.f32 %v4806, %v3318
        %v4841 = vmul.f32 %v4808, %v3319
        %v4842 = vadd.f32 %v4836, %v4839
        %v4843 = vadd.f32 %v4837, %v4840
        %v4844 = vadd.f32 %v4838, %v4841
        %4848 = vrot.lane.b32.xlu0 %v4842, 64
        %v4849 = vpop.permute.xlu0 %4848
        %4850 = vrot.lane.b32.xlu0 %v4843, 64
        %v4851 = vpop.permute.xlu0 %4850
        %4852 = vrot.lane.b32.xlu0 %v4844, 64
        %v4853 = vpop.permute.xlu0 %4852
        %v4857 = vsel %vm572, %v4849, 0.0
        %4858 = vadd.xlane.f32.xlu0 %v4857
        %v4859 = vpop.xlane.xlu0 %4858
        %v4860 = vsel %vm572, %v4851, 0.0
        %4861 = vadd.xlane.f32.xlu0 %v4860
        %v4862 = vpop.xlane.xlu0 %4861
        %v4863 = vsel %vm1422, %v4853, 0.0
        %4864 = vadd.xlane.f32.xlu0 %v4863
        %v4865 = vpop.xlane.xlu0 %4864
        %v4866 = vmul.f32 %v4859, %v742
        %v4867 = vmul.f32 %v4862, %v742
        %v4868 = vmul.f32 %v4865, %v742
        %v4869 = vmul.f32 %v4842, %v4842
        %v4870 = vmul.f32 %v4843, %v4843
        %v4871 = vmul.f32 %v4844, %v4844
        %4875 = vrot.lane.b32.xlu0 %v4869, 64
        %v4876 = vpop.permute.xlu0 %4875
        %4877 = vrot.lane.b32.xlu0 %v4870, 64
        %v4878 = vpop.permute.xlu0 %4877
        %4879 = vrot.lane.b32.xlu0 %v4871, 64
        %v4880 = vpop.permute.xlu0 %4879
        %v4884 = vsel %vm572, %v4876, 0.0
        %4885 = vadd.xlane.f32.xlu0 %v4884
        %v4886 = vpop.xlane.xlu0 %4885
        %v4887 = vsel %vm572, %v4878, 0.0
        %4888 = vadd.xlane.f32.xlu0 %v4887
        %v4889 = vpop.xlane.xlu0 %4888
        %v4890 = vsel %vm1422, %v4880, 0.0
        %4891 = vadd.xlane.f32.xlu0 %v4890
        %v4892 = vpop.xlane.xlu0 %4891
        %v4893 = vmul.f32 %v4886, %v742
        %v4894 = vmul.f32 %v4889, %v742
        %v4895 = vmul.f32 %v4892, %v742
        %v4896 = vmul.f32 %v4866, %v4866
        %v4897 = vmul.f32 %v4867, %v4867
        %v4898 = vmul.f32 %v4868, %v4868
        %v4899 = vsub.f32 %v4893, %v4896
        %v4900 = vsub.f32 %v4894, %v4897
        %v4901 = vsub.f32 %v4895, %v4898
        %v4902 = vsub.f32 %v4842, %v4866
        %v4903 = vsub.f32 %v4843, %v4867
        %v4904 = vsub.f32 %v4844, %v4868
        %v4905 = vadd.f32 %v4899, 1e-05
        %v4906 = vadd.f32 %v4900, 1e-05
        %v4907 = vadd.f32 %v4901, 1e-05
        %v4908 = vrsqrt.pop %v4905
        %v4909 = vrsqrt.pop %v4906
        %v4910 = vrsqrt.pop %v4907
        %v4911 = vmul.f32 %v4902, %v4908
        %v4912 = vmul.f32 %v4903, %v4909
        %v4913 = vmul.f32 %v4904, %v4910
        %v4914 = vmul.f32 %v4911, %v2179
        %v4915 = vmul.f32 %v4912, %v2179
        %v4916 = vmul.f32 %v4913, %v2179
        %v4917 = vadd.f32 %v4914, %v2190
        %v4918 = vadd.f32 %v4915, %v2190
        %v4919 = vadd.f32 %v4916, %v2190
        %4923 = vrot.lane.b32.xlu0 %v4917, 64
        %v4924 = vpop.permute.xlu0 %4923
        %4925 = vrot.lane.b32.xlu0 %v4918, 64
        %v4926 = vpop.permute.xlu0 %4925
        %4927 = vrot.lane.b32.xlu0 %v4919, 64
        %v4928 = vpop.permute.xlu0 %4927
        %v4929 = vsel %vm572, %v4924, 0
        %v4931 = vsel %vm572, %v4926, 0
        %v4933 = vsel %vm572, %v4928, 0
        %4935 = vmatprep.subr.mxu0 0.0
        %4936 = vmatpush1.msra.mxu0 0.0
        %4937 = vmatprep.subr.mxu0 0.0
        %4938 = vmatpush1.msra.mxu0 0.0
        %4939 = vmatprep.subr.mxu0 0.0
        %4940 = vmatpush1.msra.mxu0 0.0
        %4941 = vmatprep.subr.mxu0 0.0
        %4942 = vmatpush1.msra.mxu0 0.0
        %4943 = vmatprep.subr.mxu0 0.0
        %4944 = vmatpush1.msra.mxu0 0.0
        %4945 = vmatprep.subr.mxu0 0.0
        %4946 = vmatpush1.msra.mxu0 0.0
        %4947 = vmatprep.subr.mxu0 0.0
        %4948 = vmatpush1.msra.mxu0 0.0
        %4949 = vmatprep.subr.mxu0 0.0
        %4950 = vmatpush1.msra.mxu0 0.0
        %4951 = vmatprep.subr.mxu0 0.0
        %4952 = vmatpush1.msra.mxu0 %v465
        %4953 = vmatprep.subr.mxu0 0.0
        %4954 = vmatpush1.msra.mxu0 %v464
        %4955 = vmatprep.subr.mxu0 0.0
        %4956 = vmatpush1.msra.mxu0 %v463
        %4957 = vmatprep.subr.mxu0 0.0
        %4958 = vmatpush1.msra.mxu0 %v462
        %4959 = vmatprep.subr.mxu0 0.0
        %4960 = vmatpush1.msra.mxu0 %v461
        %4961 = vmatprep.subr.mxu0 0.0
        %4962 = vmatpush1.msra.mxu0 %v460
        %4963 = vmatprep.subr.mxu0 0.0
        %4964 = vmatpush1.msra.mxu0 %v459
        %4965 = vmatprep.subr.mxu0 0.0
        %4966 = vmatpush1.msra.mxu0 %v458
        %4967 = vmatprep.subr.mxu0 0.0
        %4968 = vmatpush2.msra.mxu0 0.0
        %4969 = vmatprep.subr.mxu0 0.0
        %4970 = vmatpush2.msra.mxu0 0.0
        %4971 = vmatprep.subr.mxu0 0.0
        %4972 = vmatpush2.msra.mxu0 0.0
        %4973 = vmatprep.subr.mxu0 0.0
        %4974 = vmatpush2.msra.mxu0 0.0
        %4975 = vmatprep.subr.mxu0 0.0
        %4976 = vmatpush2.msra.mxu0 0.0
        %4977 = vmatprep.subr.mxu0 0.0
        %4978 = vmatpush2.msra.mxu0 0.0
        %4979 = vmatprep.subr.mxu0 0.0
        %4980 = vmatpush2.msra.mxu0 0.0
        %4981 = vmatprep.subr.mxu0 0.0
        %4982 = vmatpush2.msra.mxu0 0.0
        %4983 = vmatprep.subr.mxu0 0.0
        %4984 = vmatpush2.msra.mxu0 0.0
        %4985 = vmatprep.subr.mxu0 0.0
        %4986 = vmatpush2.msra.mxu0 0.0
        %4987 = vmatprep.subr.mxu0 0.0
        %4988 = vmatpush2.msra.mxu0 0.0
        %4989 = vmatprep.subr.mxu0 0.0
        %4990 = vmatpush2.msra.mxu0 0.0
        %4991 = vmatprep.subr.mxu0 0.0
        %4992 = vmatpush2.msra.mxu0 0.0
        %4993 = vmatprep.subr.mxu0 0.0
        %4994 = vmatpush2.msra.mxu0 0.0
        %4995 = vmatprep.subr.mxu0 0.0
        %4996 = vmatpush2.msra.mxu0 0.0
        %4997 = vmatprep.subr.mxu0 0.0
        %4998 = vmatpush2.msra.mxu0 0.0
        %4999 = vmatprep.mubr.f32.mxu0 0.0
        %5000 = vmatmul.mubr.f32.gmra.mxu0 %v4929
        %v5001 = vpop.f32.mrf.mxu0
        %v5002 = vadd.f32 %v2198, %v5001
        %v5003 = vpop.f32.mrf.mxu0
        %5004 = vmatprep.mubr.f32.mxu0 0.0
        %5005 = vmatmul.mubr.f32.gmra.mxu0 %v4931
        %v5006 = vpop.f32.mrf.mxu0
        %v5007 = vadd.f32 %v2198, %v5006
        %v5008 = vpop.f32.mrf.mxu0
        %5009 = vmatprep.mubr.f32.mxu0 0.0
        %5010 = vmatmul.mubr.f32.gmra.mxu0 %v4933
        %v5011 = vpop.f32.mrf.mxu0
        %v5012 = vadd.f32 %v2198, %v5011
        %v5013 = vpop.f32.mrf.mxu0
        %5014 = vdwg.mxu0
        %v5015 = vmax.f32 %v5002, 0.0
        %v5016 = vmax.f32 %v5007, 0.0
        %v5017 = vmax.f32 %v5012, 0.0
        %v5019 = vsel %vm572, %v5015, 0
        %v5022 = vsel %vm572, %v5016, 0
        %v5025 = vsel %vm572, %v5017, 0
        %5027 = vmatprep.subr.mxu0 0.0
        %5028 = vmatpush1.msra.mxu0 0.0
        %5029 = vmatprep.subr.mxu0 0.0
        %5030 = vmatpush1.msra.mxu0 0.0
        %5031 = vmatprep.subr.mxu0 0.0
        %5032 = vmatpush1.msra.mxu0 0.0
        %5033 = vmatprep.subr.mxu0 0.0
        %5034 = vmatpush1.msra.mxu0 0.0
        %5035 = vmatprep.subr.mxu0 0.0
        %5036 = vmatpush1.msra.mxu0 0.0
        %5037 = vmatprep.subr.mxu0 0.0
        %5038 = vmatpush1.msra.mxu0 0.0
        %5039 = vmatprep.subr.mxu0 0.0
        %5040 = vmatpush1.msra.mxu0 0.0
        %5041 = vmatprep.subr.mxu0 0.0
        %5042 = vmatpush1.msra.mxu0 0.0
        %5043 = vmatprep.subr.mxu0 0.0
        %5044 = vmatpush1.msra.mxu0 %v474
        %5045 = vmatprep.subr.mxu0 0.0
        %5046 = vmatpush1.msra.mxu0 %v473
        %5047 = vmatprep.subr.mxu0 0.0
        %5048 = vmatpush1.msra.mxu0 %v472
        %5049 = vmatprep.subr.mxu0 0.0
        %5050 = vmatpush1.msra.mxu0 %v471
        %5051 = vmatprep.subr.mxu0 0.0
        %5052 = vmatpush1.msra.mxu0 %v470
        %5053 = vmatprep.subr.mxu0 0.0
        %5054 = vmatpush1.msra.mxu0 %v469
        %5055 = vmatprep.subr.mxu0 0.0
        %5056 = vmatpush1.msra.mxu0 %v468
        %5057 = vmatprep.subr.mxu0 0.0
        %5058 = vmatpush1.msra.mxu0 %v467
        %5059 = vmatprep.subr.mxu0 0.0
        %5060 = vmatpush2.msra.mxu0 0.0
        %5061 = vmatprep.subr.mxu0 0.0
        %5062 = vmatpush2.msra.mxu0 0.0
        %5063 = vmatprep.subr.mxu0 0.0
        %5064 = vmatpush2.msra.mxu0 0.0
        %5065 = vmatprep.subr.mxu0 0.0
        %5066 = vmatpush2.msra.mxu0 0.0
        %5067 = vmatprep.subr.mxu0 0.0
        %5068 = vmatpush2.msra.mxu0 0.0
        %5069 = vmatprep.subr.mxu0 0.0
        %5070 = vmatpush2.msra.mxu0 0.0
        %5071 = vmatprep.subr.mxu0 0.0
        %5072 = vmatpush2.msra.mxu0 0.0
        %5073 = vmatprep.subr.mxu0 0.0
        %5074 = vmatpush2.msra.mxu0 0.0
        %5075 = vmatprep.subr.mxu0 0.0
        %5076 = vmatpush2.msra.mxu0 0.0
        %5077 = vmatprep.subr.mxu0 0.0
        %5078 = vmatpush2.msra.mxu0 0.0
        %5079 = vmatprep.subr.mxu0 0.0
        %5080 = vmatpush2.msra.mxu0 0.0
        %5081 = vmatprep.subr.mxu0 0.0
        %5082 = vmatpush2.msra.mxu0 0.0
        %5083 = vmatprep.subr.mxu0 0.0
        %5084 = vmatpush2.msra.mxu0 0.0
        %5085 = vmatprep.subr.mxu0 0.0
        %5086 = vmatpush2.msra.mxu0 0.0
        %5087 = vmatprep.subr.mxu0 0.0
        %5088 = vmatpush2.msra.mxu0 0.0
        %5089 = vmatprep.subr.mxu0 0.0
        %5090 = vmatpush2.msra.mxu0 0.0
        %5091 = vmatprep.mubr.f32.mxu0 0.0
        %5092 = vmatmul.mubr.f32.gmra.mxu0 %v5019
        %v5093 = vpop.f32.mrf.mxu0
        %v5094 = vadd.f32 %v2300, %v5093
        %v5095 = vpop.f32.mrf.mxu0
        %5096 = vmatprep.mubr.f32.mxu0 0.0
        %5097 = vmatmul.mubr.f32.gmra.mxu0 %v5022
        %v5098 = vpop.f32.mrf.mxu0
        %v5099 = vadd.f32 %v2300, %v5098
        %v5100 = vpop.f32.mrf.mxu0
        %5101 = vmatprep.mubr.f32.mxu0 0.0
        %5102 = vmatmul.mubr.f32.gmra.mxu0 %v5025
        %v5103 = vpop.f32.mrf.mxu0
        %v5104 = vadd.f32 %v2300, %v5103
        %v5105 = vpop.f32.mrf.mxu0
        %5106 = vdwg.mxu0
        %5110 = vrot.lane.b32.xlu0 %v5094, 64
        %v5111 = vpop.permute.xlu0 %5110
        %5112 = vrot.lane.b32.xlu0 %v5099, 64
        %v5113 = vpop.permute.xlu0 %5112
        %5114 = vrot.lane.b32.xlu0 %v5104, 64
        %v5115 = vpop.permute.xlu0 %5114
        %v5119 = vadd.f32 %v4842, %v5111
        %v5120 = vadd.f32 %v4843, %v5113
        %v5121 = vadd.f32 %v4844, %v5115
        %5125 = vrot.lane.b32.xlu0 %v5119, 64
        %v5126 = vpop.permute.xlu0 %5125
        %5127 = vrot.lane.b32.xlu0 %v5120, 64
        %v5128 = vpop.permute.xlu0 %5127
        %5129 = vrot.lane.b32.xlu0 %v5121, 64
        %v5130 = vpop.permute.xlu0 %5129
        %5137 = vrot.lane.b32.xlu0 %v4488, 64
        %v5138 = vpop.permute.xlu0 %5137
        %5139 = vrot.lane.b32.xlu0 %v4489, 64
        %v5140 = vpop.permute.xlu0 %5139
        %5141 = vrot.lane.b32.xlu0 %v4490, 64
        %v5142 = vpop.permute.xlu0 %5141
        %v5146 = vsel %vm572, %v5126, %v5138
        %v5147 = vsel %vm572, %v5128, %v5140
        %v5148 = vsel %vm572, %v5130, %v5142
        %s5149 = scalar_lea.vmem %s421, 24
        %5150 = vst [vmem:[%s5149] sm:$0xff] %v5146
        %5151 = vst [vmem:[%s5149 + $0x8] sm:$0xff] %v5147
        %5152 = vst [vmem:[%s5149 + $0x10] sm:$0x1f] %v5148
        %s5153 = scalar_lea.vmem %s362, 128 [#allocation2]
        %v5154 = vld [vmem:[%s5153] sm:$0xff]
        %v5155 = vld [vmem:[%s5153 + $0x8] sm:$0xff]
        %v5156 = vld [vmem:[%s5153 + $0x10] sm:$0xff]
        %v5157 = vld [vmem:[%s5153 + $0x18] sm:$0xff]
        %v5158 = vld [vmem:[%s5153 + $0x20] sm:$0xff]
        %v5159 = vld [vmem:[%s5153 + $0x28] sm:$0xff]
        %v5160 = vld [vmem:[%s5153 + $0x30] sm:$0xff]
        %v5161 = vld [vmem:[%s5153 + $0x38] sm:$0xff]
        %v5162 = vmax.f32 %v5154, 0.0
        %v5163 = vmax.f32 %v5155, 0.0
        %v5164 = vmax.f32 %v5156, 0.0
        %v5165 = vmax.f32 %v5157, 0.0
        %v5166 = vmax.f32 %v5158, 0.0
        %v5167 = vmax.f32 %v5159, 0.0
        %v5168 = vmax.f32 %v5160, 0.0
        %v5169 = vmax.f32 %v5161, 0.0
        %v5171 = vsel %vm572, %v5162, 0
        %v5174 = vsel %vm572, %v5163, 0
        %v5177 = vsel %vm572, %v5164, 0
        %v5180 = vsel %vm572, %v5165, 0
        %v5183 = vsel %vm572, %v5166, 0
        %v5186 = vsel %vm572, %v5167, 0
        %v5189 = vsel %vm572, %v5168, 0
        %v5192 = vsel %vm572, %v5169, 0
        %5194 = vmatprep.subr.mxu0 0.0
        %5195 = vmatpush1.msra.mxu0 0.0
        %5196 = vmatprep.subr.mxu0 0.0
        %5197 = vmatpush1.msra.mxu0 0.0
        %5198 = vmatprep.subr.mxu0 0.0
        %5199 = vmatpush1.msra.mxu0 0.0
        %5200 = vmatprep.subr.mxu0 0.0
        %5201 = vmatpush1.msra.mxu0 0.0
        %5202 = vmatprep.subr.mxu0 0.0
        %5203 = vmatpush1.msra.mxu0 0.0
        %5204 = vmatprep.subr.mxu0 0.0
        %5205 = vmatpush1.msra.mxu0 0.0
        %5206 = vmatprep.subr.mxu0 0.0
        %5207 = vmatpush1.msra.mxu0 0.0
        %5208 = vmatprep.subr.mxu0 0.0
        %5209 = vmatpush1.msra.mxu0 0.0
        %5210 = vmatprep.subr.mxu0 0.0
        %5211 = vmatpush1.msra.mxu0 %v429
        %5212 = vmatprep.subr.mxu0 0.0
        %5213 = vmatpush1.msra.mxu0 %v428
        %5214 = vmatprep.subr.mxu0 0.0
        %5215 = vmatpush1.msra.mxu0 %v427
        %5216 = vmatprep.subr.mxu0 0.0
        %5217 = vmatpush1.msra.mxu0 %v426
        %5218 = vmatprep.subr.mxu0 0.0
        %5219 = vmatpush1.msra.mxu0 %v425
        %5220 = vmatprep.subr.mxu0 0.0
        %5221 = vmatpush1.msra.mxu0 %v424
        %5222 = vmatprep.subr.mxu0 0.0
        %5223 = vmatpush1.msra.mxu0 %v423
        %5224 = vmatprep.subr.mxu0 0.0
        %5225 = vmatpush1.msra.mxu0 %v422
        %5226 = vmatprep.subr.mxu0 0.0
        %5227 = vmatpush2.msra.mxu0 0.0
        %5228 = vmatprep.subr.mxu0 0.0
        %5229 = vmatpush2.msra.mxu0 0.0
        %5230 = vmatprep.subr.mxu0 0.0
        %5231 = vmatpush2.msra.mxu0 0.0
        %5232 = vmatprep.subr.mxu0 0.0
        %5233 = vmatpush2.msra.mxu0 0.0
        %5234 = vmatprep.subr.mxu0 0.0
        %5235 = vmatpush2.msra.mxu0 0.0
        %5236 = vmatprep.subr.mxu0 0.0
        %5237 = vmatpush2.msra.mxu0 0.0
        %5238 = vmatprep.subr.mxu0 0.0
        %5239 = vmatpush2.msra.mxu0 0.0
        %5240 = vmatprep.subr.mxu0 0.0
        %5241 = vmatpush2.msra.mxu0 0.0
        %5242 = vmatprep.subr.mxu0 0.0
        %5243 = vmatpush2.msra.mxu0 0.0
        %5244 = vmatprep.subr.mxu0 0.0
        %5245 = vmatpush2.msra.mxu0 0.0
        %5246 = vmatprep.subr.mxu0 0.0
        %5247 = vmatpush2.msra.mxu0 0.0
        %5248 = vmatprep.subr.mxu0 0.0
        %5249 = vmatpush2.msra.mxu0 0.0
        %5250 = vmatprep.subr.mxu0 0.0
        %5251 = vmatpush2.msra.mxu0 0.0
        %5252 = vmatprep.subr.mxu0 0.0
        %5253 = vmatpush2.msra.mxu0 0.0
        %5254 = vmatprep.subr.mxu0 0.0
        %5255 = vmatpush2.msra.mxu0 0.0
        %5256 = vmatprep.subr.mxu0 0.0
        %5257 = vmatpush2.msra.mxu0 0.0
        %5258 = vmatprep.mubr.f32.mxu0 0.0
        %5259 = vmatmul.mubr.f32.gmra.mxu0 %v5171
        %v5260 = vpop.f32.mrf.mxu0
        %v5261 = vadd.f32 %v571, %v5260
        %v5262 = vpop.f32.mrf.mxu0
        %5263 = vmatprep.mubr.f32.mxu0 0.0
        %5264 = vmatmul.mubr.f32.gmra.mxu0 %v5174
        %v5265 = vpop.f32.mrf.mxu0
        %v5266 = vadd.f32 %v571, %v5265
        %v5267 = vpop.f32.mrf.mxu0
        %5268 = vmatprep.mubr.f32.mxu0 0.0
        %5269 = vmatmul.mubr.f32.gmra.mxu0 %v5177
        %v5270 = vpop.f32.mrf.mxu0
        %v5271 = vadd.f32 %v571, %v5270
        %v5272 = vpop.f32.mrf.mxu0
        %5273 = vmatprep.mubr.f32.mxu0 0.0
        %5274 = vmatmul.mubr.f32.gmra.mxu0 %v5180
        %v5275 = vpop.f32.mrf.mxu0
        %v5276 = vadd.f32 %v571, %v5275
        %v5277 = vpop.f32.mrf.mxu0
        %5278 = vmatprep.mubr.f32.mxu0 0.0
        %5279 = vmatmul.mubr.f32.gmra.mxu0 %v5183
        %v5280 = vpop.f32.mrf.mxu0
        %v5281 = vadd.f32 %v571, %v5280
        %v5282 = vpop.f32.mrf.mxu0
        %5283 = vmatprep.mubr.f32.mxu0 0.0
        %5284 = vmatmul.mubr.f32.gmra.mxu0 %v5186
        %v5285 = vpop.f32.mrf.mxu0
        %v5286 = vadd.f32 %v571, %v5285
        %v5287 = vpop.f32.mrf.mxu0
        %5288 = vmatprep.mubr.f32.mxu0 0.0
        %5289 = vmatmul.mubr.f32.gmra.mxu0 %v5189
        %v5290 = vpop.f32.mrf.mxu0
        %v5291 = vadd.f32 %v571, %v5290
        %v5292 = vpop.f32.mrf.mxu0
        %5293 = vmatprep.mubr.f32.mxu0 0.0
        %5294 = vmatmul.mubr.f32.gmra.mxu0 %v5192
        %v5295 = vpop.f32.mrf.mxu0
        %v5296 = vadd.f32 %v571, %v5295
        %v5297 = vpop.f32.mrf.mxu0
        %5298 = vdwg.mxu0
        %v5299 = vmax.f32 %v5261, 0.0
        %v5300 = vmax.f32 %v5266, 0.0
        %v5301 = vmax.f32 %v5271, 0.0
        %v5302 = vmax.f32 %v5276, 0.0
        %v5303 = vmax.f32 %v5281, 0.0
        %v5304 = vmax.f32 %v5286, 0.0
        %v5305 = vmax.f32 %v5291, 0.0
        %v5306 = vmax.f32 %v5296, 0.0
        %v5307 = vadd.f32 %v5299, %v524
        %v5308 = vadd.f32 %v5300, %v525
        %v5309 = vadd.f32 %v5301, %v526
        %v5310 = vadd.f32 %v5302, %v527
        %v5311 = vadd.f32 %v5303, %v528
        %v5312 = vadd.f32 %v5304, %v529
        %v5313 = vadd.f32 %v5305, %v530
        %v5314 = vadd.f32 %v5306, %v531
        %v5315 = vsel %vm572, %v5307, 0.0
        %5316 = vadd.xlane.f32.xlu0 %v5315
        %v5317 = vpop.xlane.xlu0 %5316
        %v5318 = vsel %vm572, %v5308, 0.0
        %5319 = vadd.xlane.f32.xlu0 %v5318
        %v5320 = vpop.xlane.xlu0 %5319
        %v5321 = vsel %vm572, %v5309, 0.0
        %5322 = vadd.xlane.f32.xlu0 %v5321
        %v5323 = vpop.xlane.xlu0 %5322
        %v5324 = vsel %vm572, %v5310, 0.0
        %5325 = vadd.xlane.f32.xlu0 %v5324
        %v5326 = vpop.xlane.xlu0 %5325
        %v5327 = vsel %vm572, %v5311, 0.0
        %5328 = vadd.xlane.f32.xlu0 %v5327
        %v5329 = vpop.xlane.xlu0 %5328
        %v5330 = vsel %vm572, %v5312, 0.0
        %5331 = vadd.xlane.f32.xlu0 %v5330
        %v5332 = vpop.xlane.xlu0 %5331
        %v5333 = vsel %vm572, %v5313, 0.0
        %5334 = vadd.xlane.f32.xlu0 %v5333
        %v5335 = vpop.xlane.xlu0 %5334
        %v5336 = vsel %vm572, %v5314, 0.0
        %5337 = vadd.xlane.f32.xlu0 %v5336
        %v5338 = vpop.xlane.xlu0 %5337
        %v5339 = vmul.f32 %v5317, %v742
        %v5340 = vmul.f32 %v5320, %v742
        %v5341 = vmul.f32 %v5323, %v742
        %v5342 = vmul.f32 %v5326, %v742
        %v5343 = vmul.f32 %v5329, %v742
        %v5344 = vmul.f32 %v5332, %v742
        %v5345 = vmul.f32 %v5335, %v742
        %v5346 = vmul.f32 %v5338, %v742
        %v5347 = vmul.f32 %v5307, %v5307
        %v5348 = vmul.f32 %v5308, %v5308
        %v5349 = vmul.f32 %v5309, %v5309
        %v5350 = vmul.f32 %v5310, %v5310
        %v5351 = vmul.f32 %v5311, %v5311
        %v5352 = vmul.f32 %v5312, %v5312
        %v5353 = vmul.f32 %v5313, %v5313
        %v5354 = vmul.f32 %v5314, %v5314
        %v5355 = vsel %vm572, %v5347, 0.0
        %5356 = vadd.xlane.f32.xlu0 %v5355
        %v5357 = vpop.xlane.xlu0 %5356
        %v5358 = vsel %vm572, %v5348, 0.0
        %5359 = vadd.xlane.f32.xlu0 %v5358
        %v5360 = vpop.xlane.xlu0 %5359
        %v5361 = vsel %vm572, %v5349, 0.0
        %5362 = vadd.xlane.f32.xlu0 %v5361
        %v5363 = vpop.xlane.xlu0 %5362
        %v5364 = vsel %vm572, %v5350, 0.0
        %5365 = vadd.xlane.f32.xlu0 %v5364
        %v5366 = vpop.xlane.xlu0 %5365
        %v5367 = vsel %vm572, %v5351, 0.0
        %5368 = vadd.xlane.f32.xlu0 %v5367
        %v5369 = vpop.xlane.xlu0 %5368
        %v5370 = vsel %vm572, %v5352, 0.0
        %5371 = vadd.xlane.f32.xlu0 %v5370
        %v5372 = vpop.xlane.xlu0 %5371
        %v5373 = vsel %vm572, %v5353, 0.0
        %5374 = vadd.xlane.f32.xlu0 %v5373
        %v5375 = vpop.xlane.xlu0 %5374
        %v5376 = vsel %vm572, %v5354, 0.0
        %5377 = vadd.xlane.f32.xlu0 %v5376
        %v5378 = vpop.xlane.xlu0 %5377
        %v5379 = vmul.f32 %v5357, %v742
        %v5380 = vmul.f32 %v5360, %v742
        %v5381 = vmul.f32 %v5363, %v742
        %v5382 = vmul.f32 %v5366, %v742
        %v5383 = vmul.f32 %v5369, %v742
        %v5384 = vmul.f32 %v5372, %v742
        %v5385 = vmul.f32 %v5375, %v742
        %v5386 = vmul.f32 %v5378, %v742
        %v5387 = vmul.f32 %v5339, %v5339
        %v5388 = vmul.f32 %v5340, %v5340
        %v5389 = vmul.f32 %v5341, %v5341
        %v5390 = vmul.f32 %v5342, %v5342
        %v5391 = vmul.f32 %v5343, %v5343
        %v5392 = vmul.f32 %v5344, %v5344
        %v5393 = vmul.f32 %v5345, %v5345
        %v5394 = vmul.f32 %v5346, %v5346
        %v5395 = vsub.f32 %v5379, %v5387
        %v5396 = vsub.f32 %v5380, %v5388
        %v5397 = vsub.f32 %v5381, %v5389
        %v5398 = vsub.f32 %v5382, %v5390
        %v5399 = vsub.f32 %v5383, %v5391
        %v5400 = vsub.f32 %v5384, %v5392
        %v5401 = vsub.f32 %v5385, %v5393
        %v5402 = vsub.f32 %v5386, %v5394
        %v5403 = vsub.f32 %v5307, %v5339
        %v5404 = vsub.f32 %v5308, %v5340
        %v5405 = vsub.f32 %v5309, %v5341
        %v5406 = vsub.f32 %v5310, %v5342
        %v5407 = vsub.f32 %v5311, %v5343
        %v5408 = vsub.f32 %v5312, %v5344
        %v5409 = vsub.f32 %v5313, %v5345
        %v5410 = vsub.f32 %v5314, %v5346
        %v5411 = vadd.f32 %v5395, 1e-05
        %v5412 = vadd.f32 %v5396, 1e-05
        %v5413 = vadd.f32 %v5397, 1e-05
        %v5414 = vadd.f32 %v5398, 1e-05
        %v5415 = vadd.f32 %v5399, 1e-05
        %v5416 = vadd.f32 %v5400, 1e-05
        %v5417 = vadd.f32 %v5401, 1e-05
        %v5418 = vadd.f32 %v5402, 1e-05
        %v5419 = vrsqrt.pop %v5411
        %v5420 = vrsqrt.pop %v5412
        %v5421 = vrsqrt.pop %v5413
        %v5422 = vrsqrt.pop %v5414
        %v5423 = vrsqrt.pop %v5415
        %v5424 = vrsqrt.pop %v5416
        %v5425 = vrsqrt.pop %v5417
        %v5426 = vrsqrt.pop %v5418
        %v5427 = vmul.f32 %v5403, %v5419
        %v5428 = vmul.f32 %v5404, %v5420
        %v5429 = vmul.f32 %v5405, %v5421
        %v5430 = vmul.f32 %v5406, %v5422
        %v5431 = vmul.f32 %v5407, %v5423
        %v5432 = vmul.f32 %v5408, %v5424
        %v5433 = vmul.f32 %v5409, %v5425
        %v5434 = vmul.f32 %v5410, %v5426
        %v5435 = vmul.f32 %v5427, %v842
        %v5436 = vmul.f32 %v5428, %v842
        %v5437 = vmul.f32 %v5429, %v842
        %v5438 = vmul.f32 %v5430, %v842
        %v5439 = vmul.f32 %v5431, %v842
        %v5440 = vmul.f32 %v5432, %v842
        %v5441 = vmul.f32 %v5433, %v842
        %v5442 = vmul.f32 %v5434, %v842
        %v5443 = vadd.f32 %v5435, %v854
        %v5444 = vadd.f32 %v5436, %v854
        %v5445 = vadd.f32 %v5437, %v854
        %v5446 = vadd.f32 %v5438, %v854
        %v5447 = vadd.f32 %v5439, %v854
        %v5448 = vadd.f32 %v5440, %v854
        %v5449 = vadd.f32 %v5441, %v854
        %v5450 = vadd.f32 %v5442, %v854
        %v5452 = vsel %vm572, %v5443, 0
        %v5455 = vsel %vm572, %v5444, 0
        %v5458 = vsel %vm572, %v5445, 0
        %v5461 = vsel %vm572, %v5446, 0
        %v5464 = vsel %vm572, %v5447, 0
        %v5467 = vsel %vm572, %v5448, 0
        %v5470 = vsel %vm572, %v5449, 0
        %v5473 = vsel %vm572, %v5450, 0
        %5475 = vmatprep.subr.mxu0 0.0
        %5476 = vmatpush1.msra.mxu0 0.0
        %5477 = vmatprep.subr.mxu0 0.0
        %5478 = vmatpush1.msra.mxu0 0.0
        %5479 = vmatprep.subr.mxu0 0.0
        %5480 = vmatpush1.msra.mxu0 0.0
        %5481 = vmatprep.subr.mxu0 0.0
        %5482 = vmatpush1.msra.mxu0 0.0
        %5483 = vmatprep.subr.mxu0 0.0
        %5484 = vmatpush1.msra.mxu0 0.0
        %5485 = vmatprep.subr.mxu0 0.0
        %5486 = vmatpush1.msra.mxu0 0.0
        %5487 = vmatprep.subr.mxu0 0.0
        %5488 = vmatpush1.msra.mxu0 0.0
        %5489 = vmatprep.subr.mxu0 0.0
        %5490 = vmatpush1.msra.mxu0 0.0
        %5491 = vmatprep.subr.mxu0 0.0
        %5492 = vmatpush1.msra.mxu0 %v438
        %5493 = vmatprep.subr.mxu0 0.0
        %5494 = vmatpush1.msra.mxu0 %v437
        %5495 = vmatprep.subr.mxu0 0.0
        %5496 = vmatpush1.msra.mxu0 %v436
        %5497 = vmatprep.subr.mxu0 0.0
        %5498 = vmatpush1.msra.mxu0 %v435
        %5499 = vmatprep.subr.mxu0 0.0
        %5500 = vmatpush1.msra.mxu0 %v434
        %5501 = vmatprep.subr.mxu0 0.0
        %5502 = vmatpush1.msra.mxu0 %v433
        %5503 = vmatprep.subr.mxu0 0.0
        %5504 = vmatpush1.msra.mxu0 %v432
        %5505 = vmatprep.subr.mxu0 0.0
        %5506 = vmatpush1.msra.mxu0 %v431
        %5507 = vmatprep.subr.mxu0 0.0
        %5508 = vmatpush2.msra.mxu0 0.0
        %5509 = vmatprep.subr.mxu0 0.0
        %5510 = vmatpush2.msra.mxu0 0.0
        %5511 = vmatprep.subr.mxu0 0.0
        %5512 = vmatpush2.msra.mxu0 0.0
        %5513 = vmatprep.subr.mxu0 0.0
        %5514 = vmatpush2.msra.mxu0 0.0
        %5515 = vmatprep.subr.mxu0 0.0
        %5516 = vmatpush2.msra.mxu0 0.0
        %5517 = vmatprep.subr.mxu0 0.0
        %5518 = vmatpush2.msra.mxu0 0.0
        %5519 = vmatprep.subr.mxu0 0.0
        %5520 = vmatpush2.msra.mxu0 0.0
        %5521 = vmatprep.subr.mxu0 0.0
        %5522 = vmatpush2.msra.mxu0 0.0
        %5523 = vmatprep.subr.mxu0 0.0
        %5524 = vmatpush2.msra.mxu0 0.0
        %5525 = vmatprep.subr.mxu0 0.0
        %5526 = vmatpush2.msra.mxu0 0.0
        %5527 = vmatprep.subr.mxu0 0.0
        %5528 = vmatpush2.msra.mxu0 0.0
        %5529 = vmatprep.subr.mxu0 0.0
        %5530 = vmatpush2.msra.mxu0 0.0
        %5531 = vmatprep.subr.mxu0 0.0
        %5532 = vmatpush2.msra.mxu0 0.0
        %5533 = vmatprep.subr.mxu0 0.0
        %5534 = vmatpush2.msra.mxu0 0.0
        %5535 = vmatprep.subr.mxu0 0.0
        %5536 = vmatpush2.msra.mxu0 0.0
        %5537 = vmatprep.subr.mxu0 0.0
        %5538 = vmatpush2.msra.mxu0 0.0
        %5539 = vmatprep.mubr.f32.mxu0 0.0
        %5540 = vmatmul.mubr.f32.gmra.mxu0 %v5452
        %v5541 = vpop.f32.mrf.mxu0
        %v5542 = vadd.f32 %v866, %v5541
        %v5543 = vpop.f32.mrf.mxu0
        %5544 = vmatprep.mubr.f32.mxu0 0.0
        %5545 = vmatmul.mubr.f32.gmra.mxu0 %v5455
        %v5546 = vpop.f32.mrf.mxu0
        %v5547 = vadd.f32 %v866, %v5546
        %v5548 = vpop.f32.mrf.mxu0
        %5549 = vmatprep.mubr.f32.mxu0 0.0
        %5550 = vmatmul.mubr.f32.gmra.mxu0 %v5458
        %v5551 = vpop.f32.mrf.mxu0
        %v5552 = vadd.f32 %v866, %v5551
        %v5553 = vpop.f32.mrf.mxu0
        %5554 = vmatprep.mubr.f32.mxu0 0.0
        %5555 = vmatmul.mubr.f32.gmra.mxu0 %v5461
        %v5556 = vpop.f32.mrf.mxu0
        %v5557 = vadd.f32 %v866, %v5556
        %v5558 = vpop.f32.mrf.mxu0
        %5559 = vmatprep.mubr.f32.mxu0 0.0
        %5560 = vmatmul.mubr.f32.gmra.mxu0 %v5464
        %v5561 = vpop.f32.mrf.mxu0
        %v5562 = vadd.f32 %v866, %v5561
        %v5563 = vpop.f32.mrf.mxu0
        %5564 = vmatprep.mubr.f32.mxu0 0.0
        %5565 = vmatmul.mubr.f32.gmra.mxu0 %v5467
        %v5566 = vpop.f32.mrf.mxu0
        %v5567 = vadd.f32 %v866, %v5566
        %v5568 = vpop.f32.mrf.mxu0
        %5569 = vmatprep.mubr.f32.mxu0 0.0
        %5570 = vmatmul.mubr.f32.gmra.mxu0 %v5470
        %v5571 = vpop.f32.mrf.mxu0
        %v5572 = vadd.f32 %v866, %v5571
        %v5573 = vpop.f32.mrf.mxu0
        %5574 = vmatprep.mubr.f32.mxu0 0.0
        %5575 = vmatmul.mubr.f32.gmra.mxu0 %v5473
        %v5576 = vpop.f32.mrf.mxu0
        %v5577 = vadd.f32 %v866, %v5576
        %v5578 = vpop.f32.mrf.mxu0
        %5579 = vdwg.mxu0
        %v5580 = vmax.f32 %v5542, 0.0
        %v5581 = vmax.f32 %v5547, 0.0
        %v5582 = vmax.f32 %v5552, 0.0
        %v5583 = vmax.f32 %v5557, 0.0
        %v5584 = vmax.f32 %v5562, 0.0
        %v5585 = vmax.f32 %v5567, 0.0
        %v5586 = vmax.f32 %v5572, 0.0
        %v5587 = vmax.f32 %v5577, 0.0
        %v5589 = vsel %vm572, %v5580, 0
        %v5592 = vsel %vm572, %v5581, 0
        %v5595 = vsel %vm572, %v5582, 0
        %v5598 = vsel %vm572, %v5583, 0
        %v5601 = vsel %vm572, %v5584, 0
        %v5604 = vsel %vm572, %v5585, 0
        %v5607 = vsel %vm572, %v5586, 0
        %v5610 = vsel %vm572, %v5587, 0
        %5612 = vmatprep.subr.mxu0 0.0
        %5613 = vmatpush1.msra.mxu0 0.0
        %5614 = vmatprep.subr.mxu0 0.0
        %5615 = vmatpush1.msra.mxu0 0.0
        %5616 = vmatprep.subr.mxu0 0.0
        %5617 = vmatpush1.msra.mxu0 0.0
        %5618 = vmatprep.subr.mxu0 0.0
        %5619 = vmatpush1.msra.mxu0 0.0
        %5620 = vmatprep.subr.mxu0 0.0
        %5621 = vmatpush1.msra.mxu0 0.0
        %5622 = vmatprep.subr.mxu0 0.0
        %5623 = vmatpush1.msra.mxu0 0.0
        %5624 = vmatprep.subr.mxu0 0.0
        %5625 = vmatpush1.msra.mxu0 0.0
        %5626 = vmatprep.subr.mxu0 0.0
        %5627 = vmatpush1.msra.mxu0 0.0
        %5628 = vmatprep.subr.mxu0 0.0
        %5629 = vmatpush1.msra.mxu0 %v447
        %5630 = vmatprep.subr.mxu0 0.0
        %5631 = vmatpush1.msra.mxu0 %v446
        %5632 = vmatprep.subr.mxu0 0.0
        %5633 = vmatpush1.msra.mxu0 %v445
        %5634 = vmatprep.subr.mxu0 0.0
        %5635 = vmatpush1.msra.mxu0 %v444
        %5636 = vmatprep.subr.mxu0 0.0
        %5637 = vmatpush1.msra.mxu0 %v443
        %5638 = vmatprep.subr.mxu0 0.0
        %5639 = vmatpush1.msra.mxu0 %v442
        %5640 = vmatprep.subr.mxu0 0.0
        %5641 = vmatpush1.msra.mxu0 %v441
        %5642 = vmatprep.subr.mxu0 0.0
        %5643 = vmatpush1.msra.mxu0 %v440
        %5644 = vmatprep.subr.mxu0 0.0
        %5645 = vmatpush2.msra.mxu0 0.0
        %5646 = vmatprep.subr.mxu0 0.0
        %5647 = vmatpush2.msra.mxu0 0.0
        %5648 = vmatprep.subr.mxu0 0.0
        %5649 = vmatpush2.msra.mxu0 0.0
        %5650 = vmatprep.subr.mxu0 0.0
        %5651 = vmatpush2.msra.mxu0 0.0
        %5652 = vmatprep.subr.mxu0 0.0
        %5653 = vmatpush2.msra.mxu0 0.0
        %5654 = vmatprep.subr.mxu0 0.0
        %5655 = vmatpush2.msra.mxu0 0.0
        %5656 = vmatprep.subr.mxu0 0.0
        %5657 = vmatpush2.msra.mxu0 0.0
        %5658 = vmatprep.subr.mxu0 0.0
        %5659 = vmatpush2.msra.mxu0 0.0
        %5660 = vmatprep.subr.mxu0 0.0
        %5661 = vmatpush2.msra.mxu0 0.0
        %5662 = vmatprep.subr.mxu0 0.0
        %5663 = vmatpush2.msra.mxu0 0.0
        %5664 = vmatprep.subr.mxu0 0.0
        %5665 = vmatpush2.msra.mxu0 0.0
        %5666 = vmatprep.subr.mxu0 0.0
        %5667 = vmatpush2.msra.mxu0 0.0
        %5668 = vmatprep.subr.mxu0 0.0
        %5669 = vmatpush2.msra.mxu0 0.0
        %5670 = vmatprep.subr.mxu0 0.0
        %5671 = vmatpush2.msra.mxu0 0.0
        %5672 = vmatprep.subr.mxu0 0.0
        %5673 = vmatpush2.msra.mxu0 0.0
        %5674 = vmatprep.subr.mxu0 0.0
        %5675 = vmatpush2.msra.mxu0 0.0
        %5676 = vmatprep.mubr.f32.mxu0 0.0
        %5677 = vmatmul.mubr.f32.gmra.mxu0 %v5589
        %v5678 = vpop.f32.mrf.mxu0
        %v5679 = vadd.f32 %v1007, %v5678
        %v5680 = vpop.f32.mrf.mxu0
        %5681 = vmatprep.mubr.f32.mxu0 0.0
        %5682 = vmatmul.mubr.f32.gmra.mxu0 %v5592
        %v5683 = vpop.f32.mrf.mxu0
        %v5684 = vadd.f32 %v1007, %v5683
        %v5685 = vpop.f32.mrf.mxu0
        %5686 = vmatprep.mubr.f32.mxu0 0.0
        %5687 = vmatmul.mubr.f32.gmra.mxu0 %v5595
        %v5688 = vpop.f32.mrf.mxu0
        %v5689 = vadd.f32 %v1007, %v5688
        %v5690 = vpop.f32.mrf.mxu0
        %5691 = vmatprep.mubr.f32.mxu0 0.0
        %5692 = vmatmul.mubr.f32.gmra.mxu0 %v5598
        %v5693 = vpop.f32.mrf.mxu0
        %v5694 = vadd.f32 %v1007, %v5693
        %v5695 = vpop.f32.mrf.mxu0
        %5696 = vmatprep.mubr.f32.mxu0 0.0
        %5697 = vmatmul.mubr.f32.gmra.mxu0 %v5601
        %v5698 = vpop.f32.mrf.mxu0
        %v5699 = vadd.f32 %v1007, %v5698
        %v5700 = vpop.f32.mrf.mxu0
        %5701 = vmatprep.mubr.f32.mxu0 0.0
        %5702 = vmatmul.mubr.f32.gmra.mxu0 %v5604
        %v5703 = vpop.f32.mrf.mxu0
        %v5704 = vadd.f32 %v1007, %v5703
        %v5705 = vpop.f32.mrf.mxu0
        %5706 = vmatprep.mubr.f32.mxu0 0.0
        %5707 = vmatmul.mubr.f32.gmra.mxu0 %v5607
        %v5708 = vpop.f32.mrf.mxu0
        %v5709 = vadd.f32 %v1007, %v5708
        %v5710 = vpop.f32.mrf.mxu0
        %5711 = vmatprep.mubr.f32.mxu0 0.0
        %5712 = vmatmul.mubr.f32.gmra.mxu0 %v5610
        %v5713 = vpop.f32.mrf.mxu0
        %v5714 = vadd.f32 %v1007, %v5713
        %v5715 = vpop.f32.mrf.mxu0
        %5716 = vdwg.mxu0
        %v5717 = vsel %vm572, %v5679, 0.0
        %5718 = vadd.xlane.f32.xlu0 %v5717
        %v5719 = vpop.xlane.xlu0 %5718
        %v5720 = vsel %vm572, %v5684, 0.0
        %5721 = vadd.xlane.f32.xlu0 %v5720
        %v5722 = vpop.xlane.xlu0 %5721
        %v5723 = vsel %vm572, %v5689, 0.0
        %5724 = vadd.xlane.f32.xlu0 %v5723
        %v5725 = vpop.xlane.xlu0 %5724
        %v5726 = vsel %vm572, %v5694, 0.0
        %5727 = vadd.xlane.f32.xlu0 %v5726
        %v5728 = vpop.xlane.xlu0 %5727
        %v5729 = vsel %vm572, %v5699, 0.0
        %5730 = vadd.xlane.f32.xlu0 %v5729
        %v5731 = vpop.xlane.xlu0 %5730
        %v5732 = vsel %vm572, %v5704, 0.0
        %5733 = vadd.xlane.f32.xlu0 %v5732
        %v5734 = vpop.xlane.xlu0 %5733
        %v5735 = vsel %vm572, %v5709, 0.0
        %5736 = vadd.xlane.f32.xlu0 %v5735
        %v5737 = vpop.xlane.xlu0 %5736
        %v5738 = vsel %vm572, %v5714, 0.0
        %5739 = vadd.xlane.f32.xlu0 %v5738
        %v5740 = vpop.xlane.xlu0 %5739
        %v5741 = vmul.f32 %v5719, %v742
        %v5742 = vmul.f32 %v5722, %v742
        %v5743 = vmul.f32 %v5725, %v742
        %v5744 = vmul.f32 %v5728, %v742
        %v5745 = vmul.f32 %v5731, %v742
        %v5746 = vmul.f32 %v5734, %v742
        %v5747 = vmul.f32 %v5737, %v742
        %v5748 = vmul.f32 %v5740, %v742
        %v5749 = vmul.f32 %v5679, %v5679
        %v5750 = vmul.f32 %v5684, %v5684
        %v5751 = vmul.f32 %v5689, %v5689
        %v5752 = vmul.f32 %v5694, %v5694
        %v5753 = vmul.f32 %v5699, %v5699
        %v5754 = vmul.f32 %v5704, %v5704
        %v5755 = vmul.f32 %v5709, %v5709
        %v5756 = vmul.f32 %v5714, %v5714
        %v5757 = vsel %vm572, %v5749, 0.0
        %5758 = vadd.xlane.f32.xlu0 %v5757
        %v5759 = vpop.xlane.xlu0 %5758
        %v5760 = vsel %vm572, %v5750, 0.0
        %5761 = vadd.xlane.f32.xlu0 %v5760
        %v5762 = vpop.xlane.xlu0 %5761
        %v5763 = vsel %vm572, %v5751, 0.0
        %5764 = vadd.xlane.f32.xlu0 %v5763
        %v5765 = vpop.xlane.xlu0 %5764
        %v5766 = vsel %vm572, %v5752, 0.0
        %5767 = vadd.xlane.f32.xlu0 %v5766
        %v5768 = vpop.xlane.xlu0 %5767
        %v5769 = vsel %vm572, %v5753, 0.0
        %5770 = vadd.xlane.f32.xlu0 %v5769
        %v5771 = vpop.xlane.xlu0 %5770
        %v5772 = vsel %vm572, %v5754, 0.0
        %5773 = vadd.xlane.f32.xlu0 %v5772
        %v5774 = vpop.xlane.xlu0 %5773
        %v5775 = vsel %vm572, %v5755, 0.0
        %5776 = vadd.xlane.f32.xlu0 %v5775
        %v5777 = vpop.xlane.xlu0 %5776
        %v5778 = vsel %vm572, %v5756, 0.0
        %5779 = vadd.xlane.f32.xlu0 %v5778
        %v5780 = vpop.xlane.xlu0 %5779
        %v5781 = vmul.f32 %v5759, %v742
        %v5782 = vmul.f32 %v5762, %v742
        %v5783 = vmul.f32 %v5765, %v742
        %v5784 = vmul.f32 %v5768, %v742
        %v5785 = vmul.f32 %v5771, %v742
        %v5786 = vmul.f32 %v5774, %v742
        %v5787 = vmul.f32 %v5777, %v742
        %v5788 = vmul.f32 %v5780, %v742
        %v5789 = vmul.f32 %v5741, %v5741
        %v5790 = vmul.f32 %v5742, %v5742
        %v5791 = vmul.f32 %v5743, %v5743
        %v5792 = vmul.f32 %v5744, %v5744
        %v5793 = vmul.f32 %v5745, %v5745
        %v5794 = vmul.f32 %v5746, %v5746
        %v5795 = vmul.f32 %v5747, %v5747
        %v5796 = vmul.f32 %v5748, %v5748
        %v5797 = vsub.f32 %v5781, %v5789
        %v5798 = vsub.f32 %v5782, %v5790
        %v5799 = vsub.f32 %v5783, %v5791
        %v5800 = vsub.f32 %v5784, %v5792
        %v5801 = vsub.f32 %v5785, %v5793
        %v5802 = vsub.f32 %v5786, %v5794
        %v5803 = vsub.f32 %v5787, %v5795
        %v5804 = vsub.f32 %v5788, %v5796
        %v5805 = vsub.f32 %v5679, %v5741
        %v5806 = vsub.f32 %v5684, %v5742
        %v5807 = vsub.f32 %v5689, %v5743
        %v5808 = vsub.f32 %v5694, %v5744
        %v5809 = vsub.f32 %v5699, %v5745
        %v5810 = vsub.f32 %v5704, %v5746
        %v5811 = vsub.f32 %v5709, %v5747
        %v5812 = vsub.f32 %v5714, %v5748
        %v5813 = vadd.f32 %v5797, 1e-05
        %v5814 = vadd.f32 %v5798, 1e-05
        %v5815 = vadd.f32 %v5799, 1e-05
        %v5816 = vadd.f32 %v5800, 1e-05
        %v5817 = vadd.f32 %v5801, 1e-05
        %v5818 = vadd.f32 %v5802, 1e-05
        %v5819 = vadd.f32 %v5803, 1e-05
        %v5820 = vadd.f32 %v5804, 1e-05
        %v5821 = vrsqrt.pop %v5813
        %v5822 = vrsqrt.pop %v5814
        %v5823 = vrsqrt.pop %v5815
        %v5824 = vrsqrt.pop %v5816
        %v5825 = vrsqrt.pop %v5817
        %v5826 = vrsqrt.pop %v5818
        %v5827 = vrsqrt.pop %v5819
        %v5828 = vrsqrt.pop %v5820
        %v5829 = vmul.f32 %v5805, %v5821
        %v5830 = vmul.f32 %v5806, %v5822
        %v5831 = vmul.f32 %v5807, %v5823
        %v5832 = vmul.f32 %v5808, %v5824
        %v5833 = vmul.f32 %v5809, %v5825
        %v5834 = vmul.f32 %v5810, %v5826
        %v5835 = vmul.f32 %v5811, %v5827
        %v5836 = vmul.f32 %v5812, %v5828
        %v5837 = vmul.f32 %v5829, %v1260
        %v5838 = vmul.f32 %v5830, %v1260
        %v5839 = vmul.f32 %v5831, %v1260
        %v5840 = vmul.f32 %v5832, %v1260
        %v5841 = vmul.f32 %v5833, %v1260
        %v5842 = vmul.f32 %v5834, %v1260
        %v5843 = vmul.f32 %v5835, %v1260
        %v5844 = vmul.f32 %v5836, %v1260
        %v5845 = vadd.f32 %v5837, %v1272
        %v5846 = vadd.f32 %v5838, %v1272
        %v5847 = vadd.f32 %v5839, %v1272
        %v5848 = vadd.f32 %v5840, %v1272
        %v5849 = vadd.f32 %v5841, %v1272
        %v5850 = vadd.f32 %v5842, %v1272
        %v5851 = vadd.f32 %v5843, %v1272
        %v5852 = vadd.f32 %v5844, %v1272
        %v5854 = vsel %vm572, %v5845, 0
        %v5857 = vsel %vm572, %v5846, 0
        %v5860 = vsel %vm572, %v5847, 0
        %v5863 = vsel %vm572, %v5848, 0
        %v5866 = vsel %vm572, %v5849, 0
        %v5869 = vsel %vm572, %v5850, 0
        %v5872 = vsel %vm572, %v5851, 0
        %v5875 = vsel %vm572, %v5852, 0
        %5877 = vmatprep.subr.mxu0 0.0
        %5878 = vmatpush1.msra.mxu0 0.0
        %5879 = vmatprep.subr.mxu0 0.0
        %5880 = vmatpush1.msra.mxu0 0.0
        %5881 = vmatprep.subr.mxu0 0.0
        %5882 = vmatpush1.msra.mxu0 0.0
        %5883 = vmatprep.subr.mxu0 0.0
        %5884 = vmatpush1.msra.mxu0 0.0
        %5885 = vmatprep.subr.mxu0 0.0
        %5886 = vmatpush1.msra.mxu0 0.0
        %5887 = vmatprep.subr.mxu0 0.0
        %5888 = vmatpush1.msra.mxu0 0.0
        %5889 = vmatprep.subr.mxu0 0.0
        %5890 = vmatpush1.msra.mxu0 0.0
        %5891 = vmatprep.subr.mxu0 0.0
        %5892 = vmatpush1.msra.mxu0 0.0
        %5893 = vmatprep.subr.mxu0 0.0
        %5894 = vmatpush1.msra.mxu0 %v491
        %5895 = vmatprep.subr.mxu0 0.0
        %5896 = vmatpush1.msra.mxu0 %v490
        %5897 = vmatprep.subr.mxu0 0.0
        %5898 = vmatpush1.msra.mxu0 %v489
        %5899 = vmatprep.subr.mxu0 0.0
        %5900 = vmatpush1.msra.mxu0 %v488
        %5901 = vmatprep.subr.mxu0 0.0
        %5902 = vmatpush1.msra.mxu0 %v487
        %5903 = vmatprep.subr.mxu0 0.0
        %5904 = vmatpush1.msra.mxu0 %v486
        %5905 = vmatprep.subr.mxu0 0.0
        %5906 = vmatpush1.msra.mxu0 %v485
        %5907 = vmatprep.subr.mxu0 0.0
        %5908 = vmatpush1.msra.mxu0 %v484
        %5909 = vmatprep.subr.mxu0 0.0
        %5910 = vmatpush2.msra.mxu0 0.0
        %5911 = vmatprep.subr.mxu0 0.0
        %5912 = vmatpush2.msra.mxu0 0.0
        %5913 = vmatprep.subr.mxu0 0.0
        %5914 = vmatpush2.msra.mxu0 0.0
        %5915 = vmatprep.subr.mxu0 0.0
        %5916 = vmatpush2.msra.mxu0 0.0
        %5917 = vmatprep.subr.mxu0 0.0
        %5918 = vmatpush2.msra.mxu0 0.0
        %5919 = vmatprep.subr.mxu0 0.0
        %5920 = vmatpush2.msra.mxu0 0.0
        %5921 = vmatprep.subr.mxu0 0.0
        %5922 = vmatpush2.msra.mxu0 0.0
        %5923 = vmatprep.subr.mxu0 0.0
        %5924 = vmatpush2.msra.mxu0 0.0
        %5925 = vmatprep.subr.mxu0 0.0
        %5926 = vmatpush2.msra.mxu0 0.0
        %5927 = vmatprep.subr.mxu0 0.0
        %5928 = vmatpush2.msra.mxu0 0.0
        %5929 = vmatprep.subr.mxu0 0.0
        %5930 = vmatpush2.msra.mxu0 0.0
        %5931 = vmatprep.subr.mxu0 0.0
        %5932 = vmatpush2.msra.mxu0 0.0
        %5933 = vmatprep.subr.mxu0 0.0
        %5934 = vmatpush2.msra.mxu0 0.0
        %5935 = vmatprep.subr.mxu0 0.0
        %5936 = vmatpush2.msra.mxu0 0.0
        %5937 = vmatprep.subr.mxu0 0.0
        %5938 = vmatpush2.msra.mxu0 0.0
        %5939 = vmatprep.subr.mxu0 0.0
        %5940 = vmatpush2.msra.mxu0 0.0
        %5941 = vmatprep.mubr.f32.mxu0 0.0
        %5942 = vmatmul.mubr.f32.gmra.mxu0 %v5854
        %v5943 = vpop.f32.mrf.mxu0
        %v5944 = vadd.f32 %v1285, %v5943
        %v5945 = vpop.f32.mrf.mxu0
        %5946 = vmatprep.mubr.f32.mxu0 0.0
        %5947 = vmatmul.mubr.f32.gmra.mxu0 %v5857
        %v5948 = vpop.f32.mrf.mxu0
        %v5949 = vadd.f32 %v1285, %v5948
        %v5950 = vpop.f32.mrf.mxu0
        %5951 = vmatprep.mubr.f32.mxu0 0.0
        %5952 = vmatmul.mubr.f32.gmra.mxu0 %v5860
        %v5953 = vpop.f32.mrf.mxu0
        %v5954 = vadd.f32 %v1285, %v5953
        %v5955 = vpop.f32.mrf.mxu0
        %5956 = vmatprep.mubr.f32.mxu0 0.0
        %5957 = vmatmul.mubr.f32.gmra.mxu0 %v5863
        %v5958 = vpop.f32.mrf.mxu0
        %v5959 = vadd.f32 %v1285, %v5958
        %v5960 = vpop.f32.mrf.mxu0
        %5961 = vmatprep.mubr.f32.mxu0 0.0
        %5962 = vmatmul.mubr.f32.gmra.mxu0 %v5866
        %v5963 = vpop.f32.mrf.mxu0
        %v5964 = vadd.f32 %v1285, %v5963
        %v5965 = vpop.f32.mrf.mxu0
        %5966 = vmatprep.mubr.f32.mxu0 0.0
        %5967 = vmatmul.mubr.f32.gmra.mxu0 %v5869
        %v5968 = vpop.f32.mrf.mxu0
        %v5969 = vadd.f32 %v1285, %v5968
        %v5970 = vpop.f32.mrf.mxu0
        %5971 = vmatprep.mubr.f32.mxu0 0.0
        %5972 = vmatmul.mubr.f32.gmra.mxu0 %v5872
        %v5973 = vpop.f32.mrf.mxu0
        %v5974 = vadd.f32 %v1285, %v5973
        %v5975 = vpop.f32.mrf.mxu0
        %5976 = vmatprep.mubr.f32.mxu0 0.0
        %5977 = vmatmul.mubr.f32.gmra.mxu0 %v5875
        %v5978 = vpop.f32.mrf.mxu0
        %v5979 = vadd.f32 %v1285, %v5978
        %v5980 = vpop.f32.mrf.mxu0
        %5981 = vdwg.mxu0
        %v5982 = vsel %vm572, %v5126, 0.0
        %5983 = vadd.xlane.f32.xlu0 %v5982
        %v5984 = vpop.xlane.xlu0 %5983
        %v5985 = vsel %vm572, %v5128, 0.0
        %5986 = vadd.xlane.f32.xlu0 %v5985
        %v5987 = vpop.xlane.xlu0 %5986
        %v5988 = vsel %vm1422, %v5130, 0.0
        %5989 = vadd.xlane.f32.xlu0 %v5988
        %v5990 = vpop.xlane.xlu0 %5989
        %v5991 = vmul.f32 %v5984, %v742
        %v5992 = vmul.f32 %v5987, %v742
        %v5993 = vmul.f32 %v5990, %v742
        %v5994 = vmul.f32 %v5119, %v5119
        %v5995 = vmul.f32 %v5120, %v5120
        %v5996 = vmul.f32 %v5121, %v5121
        %6000 = vrot.lane.b32.xlu0 %v5994, 64
        %v6001 = vpop.permute.xlu0 %6000
        %6002 = vrot.lane.b32.xlu0 %v5995, 64
        %v6003 = vpop.permute.xlu0 %6002
        %6004 = vrot.lane.b32.xlu0 %v5996, 64
        %v6005 = vpop.permute.xlu0 %6004
        %v6009 = vsel %vm572, %v6001, 0.0
        %6010 = vadd.xlane.f32.xlu0 %v6009
        %v6011 = vpop.xlane.xlu0 %6010
        %v6012 = vsel %vm572, %v6003, 0.0
        %6013 = vadd.xlane.f32.xlu0 %v6012
        %v6014 = vpop.xlane.xlu0 %6013
        %v6015 = vsel %vm1422, %v6005, 0.0
        %6016 = vadd.xlane.f32.xlu0 %v6015
        %v6017 = vpop.xlane.xlu0 %6016
        %v6018 = vmul.f32 %v6011, %v742
        %v6019 = vmul.f32 %v6014, %v742
        %v6020 = vmul.f32 %v6017, %v742
        %v6021 = vmul.f32 %v5991, %v5991
        %v6022 = vmul.f32 %v5992, %v5992
        %v6023 = vmul.f32 %v5993, %v5993
        %v6024 = vsub.f32 %v6018, %v6021
        %v6025 = vsub.f32 %v6019, %v6022
        %v6026 = vsub.f32 %v6020, %v6023
        %v6027 = vsub.f32 %v5119, %v5991
        %v6028 = vsub.f32 %v5120, %v5992
        %v6029 = vsub.f32 %v5121, %v5993
        %v6030 = vadd.f32 %v6024, 1e-05
        %v6031 = vadd.f32 %v6025, 1e-05
        %v6032 = vadd.f32 %v6026, 1e-05
        %v6033 = vrsqrt.pop %v6030
        %v6034 = vrsqrt.pop %v6031
        %v6035 = vrsqrt.pop %v6032
        %v6036 = vmul.f32 %v6027, %v6033
        %v6037 = vmul.f32 %v6028, %v6034
        %v6038 = vmul.f32 %v6029, %v6035
        %v6039 = vmul.f32 %v6036, %v2476
        %v6040 = vmul.f32 %v6037, %v2476
        %v6041 = vmul.f32 %v6038, %v2476
        %v6042 = vadd.f32 %v6039, %v2483
        %v6043 = vadd.f32 %v6040, %v2483
        %v6044 = vadd.f32 %v6041, %v2483
        %6048 = vrot.lane.b32.xlu0 %v6042, 64
        %v6049 = vpop.permute.xlu0 %6048
        %6050 = vrot.lane.b32.xlu0 %v6043, 64
        %v6051 = vpop.permute.xlu0 %6050
        %6052 = vrot.lane.b32.xlu0 %v6044, 64
        %v6053 = vpop.permute.xlu0 %6052
        %v6054 = vsel %vm572, %v6049, 0
        %v6056 = vsel %vm572, %v6051, 0
        %v6058 = vsel %vm572, %v6053, 0
        %6060 = vmatprep.subr.mxu0 0.0
        %6061 = vmatpush1.msra.mxu0 0.0
        %6062 = vmatprep.subr.mxu0 0.0
        %6063 = vmatpush1.msra.mxu0 0.0
        %6064 = vmatprep.subr.mxu0 0.0
        %6065 = vmatpush1.msra.mxu0 0.0
        %6066 = vmatprep.subr.mxu0 0.0
        %6067 = vmatpush1.msra.mxu0 0.0
        %6068 = vmatprep.subr.mxu0 0.0
        %6069 = vmatpush1.msra.mxu0 0.0
        %6070 = vmatprep.subr.mxu0 0.0
        %6071 = vmatpush1.msra.mxu0 0.0
        %6072 = vmatprep.subr.mxu0 0.0
        %6073 = vmatpush1.msra.mxu0 0.0
        %6074 = vmatprep.subr.mxu0 0.0
        %6075 = vmatpush1.msra.mxu0 0.0
        %6076 = vmatprep.subr.mxu0 0.0
        %6077 = vmatpush1.msra.mxu0 %v456
        %6078 = vmatprep.subr.mxu0 0.0
        %6079 = vmatpush1.msra.mxu0 %v455
        %6080 = vmatprep.subr.mxu0 0.0
        %6081 = vmatpush1.msra.mxu0 %v454
        %6082 = vmatprep.subr.mxu0 0.0
        %6083 = vmatpush1.msra.mxu0 %v453
        %6084 = vmatprep.subr.mxu0 0.0
        %6085 = vmatpush1.msra.mxu0 %v452
        %6086 = vmatprep.subr.mxu0 0.0
        %6087 = vmatpush1.msra.mxu0 %v451
        %6088 = vmatprep.subr.mxu0 0.0
        %6089 = vmatpush1.msra.mxu0 %v450
        %6090 = vmatprep.subr.mxu0 0.0
        %6091 = vmatpush1.msra.mxu0 %v449
        %6092 = vmatprep.subr.mxu0 0.0
        %6093 = vmatpush2.msra.mxu0 0.0
        %6094 = vmatprep.subr.mxu0 0.0
        %6095 = vmatpush2.msra.mxu0 0.0
        %6096 = vmatprep.subr.mxu0 0.0
        %6097 = vmatpush2.msra.mxu0 0.0
        %6098 = vmatprep.subr.mxu0 0.0
        %6099 = vmatpush2.msra.mxu0 0.0
        %6100 = vmatprep.subr.mxu0 0.0
        %6101 = vmatpush2.msra.mxu0 0.0
        %6102 = vmatprep.subr.mxu0 0.0
        %6103 = vmatpush2.msra.mxu0 0.0
        %6104 = vmatprep.subr.mxu0 0.0
        %6105 = vmatpush2.msra.mxu0 0.0
        %6106 = vmatprep.subr.mxu0 0.0
        %6107 = vmatpush2.msra.mxu0 0.0
        %6108 = vmatprep.subr.mxu0 0.0
        %6109 = vmatpush2.msra.mxu0 0.0
        %6110 = vmatprep.subr.mxu0 0.0
        %6111 = vmatpush2.msra.mxu0 0.0
        %6112 = vmatprep.subr.mxu0 0.0
        %6113 = vmatpush2.msra.mxu0 0.0
        %6114 = vmatprep.subr.mxu0 0.0
        %6115 = vmatpush2.msra.mxu0 0.0
        %6116 = vmatprep.subr.mxu0 0.0
        %6117 = vmatpush2.msra.mxu0 0.0
        %6118 = vmatprep.subr.mxu0 0.0
        %6119 = vmatpush2.msra.mxu0 0.0
        %6120 = vmatprep.subr.mxu0 0.0
        %6121 = vmatpush2.msra.mxu0 0.0
        %6122 = vmatprep.subr.mxu0 0.0
        %6123 = vmatpush2.msra.mxu0 0.0
        %6124 = vmatprep.mubr.f32.mxu0 0.0
        %6125 = vmatmul.mubr.f32.gmra.mxu0 %v6054
        %v6126 = vpop.f32.mrf.mxu0
        %v6127 = vadd.f32 %v1479, %v6126
        %v6128 = vpop.f32.mrf.mxu0
        %6129 = vmatprep.mubr.f32.mxu0 0.0
        %6130 = vmatmul.mubr.f32.gmra.mxu0 %v6056
        %v6131 = vpop.f32.mrf.mxu0
        %v6132 = vadd.f32 %v1479, %v6131
        %v6133 = vpop.f32.mrf.mxu0
        %6134 = vmatprep.mubr.f32.mxu0 0.0
        %6135 = vmatmul.mubr.f32.gmra.mxu0 %v6058
        %v6136 = vpop.f32.mrf.mxu0
        %v6137 = vadd.f32 %v1479, %v6136
        %v6138 = vpop.f32.mrf.mxu0
        %6139 = vdwg.mxu0
        %v6141 = vsel %vm572, %v6127, 0
        %v6144 = vsel %vm572, %v6132, 0
        %v6147 = vsel %vm572, %v6137, 0
        %v6150 = vsel %vm572, %v5944, 0
        %v6153 = vsel %vm572, %v5949, 0
        %v6156 = vsel %vm572, %v5954, 0
        %v6159 = vsel %vm572, %v5959, 0
        %v6162 = vsel %vm572, %v5964, 0
        %v6165 = vsel %vm572, %v5969, 0
        %v6168 = vsel %vm572, %v5974, 0
        %v6171 = vsel %vm572, %v5979, 0
        %6173 = vmatprep.subr.mxu0 0.0
        %6174 = vmatpush1.xpose.msra.mxu0 0.0
        %6175 = vmatprep.subr.mxu0 0.0
        %6176 = vmatpush1.xpose.msra.mxu0 0.0
        %6177 = vmatprep.subr.mxu0 0.0
        %6178 = vmatpush1.xpose.msra.mxu0 0.0
        %6179 = vmatprep.subr.mxu0 0.0
        %6180 = vmatpush1.xpose.msra.mxu0 0.0
        %6181 = vmatprep.subr.mxu0 0.0
        %6182 = vmatpush1.xpose.msra.mxu0 0.0
        %6183 = vmatprep.subr.mxu0 0.0
        %6184 = vmatpush1.xpose.msra.mxu0 0.0
        %6185 = vmatprep.subr.mxu0 0.0
        %6186 = vmatpush1.xpose.msra.mxu0 0.0
        %6187 = vmatprep.subr.mxu0 0.0
        %6188 = vmatpush1.xpose.msra.mxu0 0.0
        %6189 = vmatprep.subr.mxu0 0.0
        %6190 = vmatpush1.xpose.msra.mxu0 %v6171
        %6191 = vmatprep.subr.mxu0 0.0
        %6192 = vmatpush1.xpose.msra.mxu0 %v6168
        %6193 = vmatprep.subr.mxu0 0.0
        %6194 = vmatpush1.xpose.msra.mxu0 %v6165
        %6195 = vmatprep.subr.mxu0 0.0
        %6196 = vmatpush1.xpose.msra.mxu0 %v6162
        %6197 = vmatprep.subr.mxu0 0.0
        %6198 = vmatpush1.xpose.msra.mxu0 %v6159
        %6199 = vmatprep.subr.mxu0 0.0
        %6200 = vmatpush1.xpose.msra.mxu0 %v6156
        %6201 = vmatprep.subr.mxu0 0.0
        %6202 = vmatpush1.xpose.msra.mxu0 %v6153
        %6203 = vmatprep.subr.mxu0 0.0
        %6204 = vmatpush1.xpose.msra.mxu0 %v6150
        %6205 = vmatprep.subr.mxu0 0.0
        %6206 = vmatpush2.xpose.msra.mxu0 0.0
        %6207 = vmatprep.subr.mxu0 0.0
        %6208 = vmatpush2.xpose.msra.mxu0 0.0
        %6209 = vmatprep.subr.mxu0 0.0
        %6210 = vmatpush2.xpose.msra.mxu0 0.0
        %6211 = vmatprep.subr.mxu0 0.0
        %6212 = vmatpush2.xpose.msra.mxu0 0.0
        %6213 = vmatprep.subr.mxu0 0.0
        %6214 = vmatpush2.xpose.msra.mxu0 0.0
        %6215 = vmatprep.subr.mxu0 0.0
        %6216 = vmatpush2.xpose.msra.mxu0 0.0
        %6217 = vmatprep.subr.mxu0 0.0
        %6218 = vmatpush2.xpose.msra.mxu0 0.0
        %6219 = vmatprep.subr.mxu0 0.0
        %6220 = vmatpush2.xpose.msra.mxu0 0.0
        %6221 = vmatprep.subr.mxu0 0.0
        %6222 = vmatpush2.xpose.msra.mxu0 0.0
        %6223 = vmatprep.subr.mxu0 0.0
        %6224 = vmatpush2.xpose.msra.mxu0 0.0
        %6225 = vmatprep.subr.mxu0 0.0
        %6226 = vmatpush2.xpose.msra.mxu0 0.0
        %6227 = vmatprep.subr.mxu0 0.0
        %6228 = vmatpush2.xpose.msra.mxu0 0.0
        %6229 = vmatprep.subr.mxu0 0.0
        %6230 = vmatpush2.xpose.msra.mxu0 0.0
        %6231 = vmatprep.subr.mxu0 0.0
        %6232 = vmatpush2.xpose.msra.mxu0 0.0
        %6233 = vmatprep.subr.mxu0 0.0
        %6234 = vmatpush2.xpose.msra.mxu0 0.0
        %6235 = vmatprep.subr.mxu0 0.0
        %6236 = vmatpush2.xpose.msra.mxu0 0.0
        %6237 = vmatprep.mubr.f32.mxu0 0.0
        %6238 = vmatmul.mubr.f32.gmra.mxu0 %v6141
        %v6239 = vpop.f32.mrf.mxu0
        %v6240 = vadd.f32 0.0, %v6239
        %v6241 = vpop.f32.mrf.mxu0
        %6242 = vmatprep.mubr.f32.mxu0 0.0
        %6243 = vmatmul.mubr.f32.gmra.mxu0 %v6144
        %v6244 = vpop.f32.mrf.mxu0
        %v6245 = vadd.f32 0.0, %v6244
        %v6246 = vpop.f32.mrf.mxu0
        %6247 = vmatprep.mubr.f32.mxu0 0.0
        %6248 = vmatmul.mubr.f32.gmra.mxu0 %v6147
        %v6249 = vpop.f32.mrf.mxu0
        %v6250 = vadd.f32 0.0, %v6249
        %v6251 = vpop.f32.mrf.mxu0
        %6252 = vdwg.mxu0
        %v6253 = vmul.f32 %v6240, 0.125
        %v6254 = vmul.f32 %v6245, 0.125
        %v6255 = vmul.f32 %v6250, 0.125
        %v6256 = vsel %vm572, %v6253, -inf
        %v6257 = vsel %vm572, %v6254, -inf
        %v6258 = vsel %vm1422, %v6255, -inf
        %v6259 = vmax.f32 %v6256, %v6257
        %v6260 = vmax.f32 %v6259, %v6258
        %v6261 = vrot.slane %v6260, 4
        %v6262 = vmax.f32 %v6260, %v6261
        %v6263 = vrot.slane %v6262, 2
        %v6264 = vmax.f32 %v6262, %v6263
        %v6265 = vrot.slane %v6264, 1
        %v6266 = vmax.f32 %v6264, %v6265
        %v6267 = vsub.f32 %v6253, %v6266
        %v6268 = vsub.f32 %v6254, %v6266
        %v6269 = vsub.f32 %v6255, %v6266
        %v6270 = vmul.f32 %v6267, 1.442695
        %v6271 = vpow.pop %v6270
        %v6272 = vmul.f32 %v6268, 1.442695
        %v6273 = vpow.pop %v6272
        %v6274 = vmul.f32 %v6269, 1.442695
        %v6275 = vpow.pop %v6274
        %v6276 = vsel %vm572, %v6271, 0.0
        %v6277 = vsel %vm572, %v6273, 0.0
        %v6278 = vadd.f32 %v6276, %v6277
        %v6279 = vsel %vm1422, %v6275, 0.0
        %v6280 = vadd.f32 %v6278, %v6279
        %v6281 = vrot.slane %v6280, 4
        %v6282 = vadd.f32 %v6280, %v6281
        %v6283 = vrot.slane %v6282, 2
        %v6284 = vadd.f32 %v6282, %v6283
        %v6285 = vrot.slane %v6284, 1
        %v6286 = vadd.f32 %v6284, %v6285
        %v6287 = vrcp.pop %v6286
        %v6288 = vmul.f32 %v6271, %v6287
        %v6289 = vmul.f32 %v6273, %v6287
        %v6290 = vmul.f32 %v6275, %v6287
        %v6291 = vadd.f32 %v6288, 1e-08
        %v6292 = vadd.f32 %v6289, 1e-08
        %v6293 = vadd.f32 %v6290, 1e-08
        %v6294 = vsel %vm572, %v6291, 0.0
        %6295 = vadd.xlane.f32.xlu0 %v6294
        %v6296 = vpop.xlane.xlu0 %6295
        %v6297 = vsel %vm572, %v6292, 0.0
        %6298 = vadd.xlane.f32.xlu0 %v6297
        %v6299 = vpop.xlane.xlu0 %6298
        %v6300 = vsel %vm1422, %v6293, 0.0
        %6301 = vadd.xlane.f32.xlu0 %v6300
        %v6302 = vpop.xlane.xlu0 %6301
        %v6303 = vrcp.pop %v6296
        %v6304 = vrcp.pop %v6299
        %v6305 = vrcp.pop %v6302
        %v6306 = vmul.f32 %v6291, %v6303
        %v6307 = vmul.f32 %v6292, %v6304
        %v6308 = vmul.f32 %v6293, %v6305
        %6309 = vrot.lane.b32.xlu0 %v5944, 64
        %v6310 = vpop.permute.xlu0 %6309
        %6311 = vrot.lane.b32.xlu0 %v5949, 64
        %v6312 = vpop.permute.xlu0 %6311
        %6313 = vrot.lane.b32.xlu0 %v5954, 64
        %v6314 = vpop.permute.xlu0 %6313
        %6315 = vrot.lane.b32.xlu0 %v5959, 64
        %v6316 = vpop.permute.xlu0 %6315
        %6317 = vrot.lane.b32.xlu0 %v5964, 64
        %v6318 = vpop.permute.xlu0 %6317
        %6319 = vrot.lane.b32.xlu0 %v5969, 64
        %v6320 = vpop.permute.xlu0 %6319
        %6321 = vrot.lane.b32.xlu0 %v5974, 64
        %v6322 = vpop.permute.xlu0 %6321
        %6323 = vrot.lane.b32.xlu0 %v5979, 64
        %v6324 = vpop.permute.xlu0 %6323
        %v6334 = vsel %vm572, %v6306, 0
        %v6337 = vsel %vm572, %v6307, 0
        %v6340 = vsel %vm572, %v6308, 0
        %6342 = vmatprep.subr.mxu0 0.0
        %6343 = vmatpush1.msra.mxu0 0.0
        %6344 = vmatprep.subr.mxu0 0.0
        %6345 = vmatpush1.msra.mxu0 0.0
        %6346 = vmatprep.subr.mxu0 0.0
        %6347 = vmatpush1.msra.mxu0 0.0
        %6348 = vmatprep.subr.mxu0 0.0
        %6349 = vmatpush1.msra.mxu0 0.0
        %6350 = vmatprep.subr.mxu0 0.0
        %6351 = vmatpush1.msra.mxu0 0.0
        %6352 = vmatprep.subr.mxu0 0.0
        %6353 = vmatpush1.msra.mxu0 0.0
        %6354 = vmatprep.subr.mxu0 0.0
        %6355 = vmatpush1.msra.mxu0 0.0
        %6356 = vmatprep.subr.mxu0 0.0
        %6357 = vmatpush1.msra.mxu0 0.0
        %6358 = vmatprep.subr.mxu0 0.0
        %6359 = vmatpush1.msra.mxu0 %v6324
        %6360 = vmatprep.subr.mxu0 0.0
        %6361 = vmatpush1.msra.mxu0 %v6322
        %6362 = vmatprep.subr.mxu0 0.0
        %6363 = vmatpush1.msra.mxu0 %v6320
        %6364 = vmatprep.subr.mxu0 0.0
        %6365 = vmatpush1.msra.mxu0 %v6318
        %6366 = vmatprep.subr.mxu0 0.0
        %6367 = vmatpush1.msra.mxu0 %v6316
        %6368 = vmatprep.subr.mxu0 0.0
        %6369 = vmatpush1.msra.mxu0 %v6314
        %6370 = vmatprep.subr.mxu0 0.0
        %6371 = vmatpush1.msra.mxu0 %v6312
        %6372 = vmatprep.subr.mxu0 0.0
        %6373 = vmatpush1.msra.mxu0 %v6310
        %6374 = vmatprep.subr.mxu0 0.0
        %6375 = vmatpush2.msra.mxu0 0.0
        %6376 = vmatprep.subr.mxu0 0.0
        %6377 = vmatpush2.msra.mxu0 0.0
        %6378 = vmatprep.subr.mxu0 0.0
        %6379 = vmatpush2.msra.mxu0 0.0
        %6380 = vmatprep.subr.mxu0 0.0
        %6381 = vmatpush2.msra.mxu0 0.0
        %6382 = vmatprep.subr.mxu0 0.0
        %6383 = vmatpush2.msra.mxu0 0.0
        %6384 = vmatprep.subr.mxu0 0.0
        %6385 = vmatpush2.msra.mxu0 0.0
        %6386 = vmatprep.subr.mxu0 0.0
        %6387 = vmatpush2.msra.mxu0 0.0
        %6388 = vmatprep.subr.mxu0 0.0
        %6389 = vmatpush2.msra.mxu0 0.0
        %6390 = vmatprep.subr.mxu0 0.0
        %6391 = vmatpush2.msra.mxu0 0.0
        %6392 = vmatprep.subr.mxu0 0.0
        %6393 = vmatpush2.msra.mxu0 0.0
        %6394 = vmatprep.subr.mxu0 0.0
        %6395 = vmatpush2.msra.mxu0 0.0
        %6396 = vmatprep.subr.mxu0 0.0
        %6397 = vmatpush2.msra.mxu0 0.0
        %6398 = vmatprep.subr.mxu0 0.0
        %6399 = vmatpush2.msra.mxu0 0.0
        %6400 = vmatprep.subr.mxu0 0.0
        %6401 = vmatpush2.msra.mxu0 0.0
        %6402 = vmatprep.subr.mxu0 0.0
        %6403 = vmatpush2.msra.mxu0 0.0
        %6404 = vmatprep.subr.mxu0 0.0
        %6405 = vmatpush2.msra.mxu0 0.0
        %6406 = vmatprep.mubr.f32.mxu0 0.0
        %6407 = vmatmul.mubr.f32.gmra.mxu0 %v6334
        %v6408 = vpop.f32.mrf.mxu0
        %v6409 = vadd.f32 0.0, %v6408
        %v6410 = vpop.f32.mrf.mxu0
        %6411 = vmatprep.mubr.f32.mxu0 0.0
        %6412 = vmatmul.mubr.f32.gmra.mxu0 %v6337
        %v6413 = vpop.f32.mrf.mxu0
        %v6414 = vadd.f32 0.0, %v6413
        %v6415 = vpop.f32.mrf.mxu0
        %6416 = vmatprep.mubr.f32.mxu0 0.0
        %6417 = vmatmul.mubr.f32.gmra.mxu0 %v6340
        %v6418 = vpop.f32.mrf.mxu0
        %v6419 = vadd.f32 0.0, %v6418
        %v6420 = vpop.f32.mrf.mxu0
        %6421 = vdwg.mxu0
        %v6422 = vsel %vm572, %v6409, %v5119
        %v6423 = vsel %vm572, %v6414, %v5120
        %v6424 = vsel %vm572, %v6419, %v5121
        %6425 = vmatprep.subr.mxu0 %v523
        %6426 = vmatpush1.msra.mxu0 %v522
        %6427 = vmatprep.subr.mxu0 %v521
        %6428 = vmatpush1.msra.mxu0 %v520
        %6429 = vmatprep.subr.mxu0 %v519
        %6430 = vmatpush1.msra.mxu0 %v518
        %6431 = vmatprep.subr.mxu0 %v517
        %6432 = vmatpush1.msra.mxu0 %v516
        %6433 = vmatprep.subr.mxu0 %v515
        %6434 = vmatpush1.msra.mxu0 %v514
        %6435 = vmatprep.subr.mxu0 %v513
        %6436 = vmatpush1.msra.mxu0 %v512
        %6437 = vmatprep.subr.mxu0 %v511
        %6438 = vmatpush1.msra.mxu0 %v510
        %6439 = vmatprep.subr.mxu0 %v509
        %6440 = vmatpush1.msra.mxu0 %v508
        %6441 = vmatprep.subr.mxu0 %v507
        %6442 = vmatpush1.msra.mxu0 %v506
        %6443 = vmatprep.subr.mxu0 %v505
        %6444 = vmatpush1.msra.mxu0 %v504
        %6445 = vmatprep.subr.mxu0 %v503
        %6446 = vmatpush1.msra.mxu0 %v502
        %6447 = vmatprep.subr.mxu0 %v501
        %6448 = vmatpush1.msra.mxu0 %v500
        %6449 = vmatprep.subr.mxu0 %v499
        %6450 = vmatpush1.msra.mxu0 %v498
        %6451 = vmatprep.subr.mxu0 %v497
        %6452 = vmatpush1.msra.mxu0 %v496
        %6453 = vmatprep.subr.mxu0 %v495
        %6454 = vmatpush1.msra.mxu0 %v494
        %6455 = vmatprep.subr.mxu0 %v493
        %6456 = vmatpush1.msra.mxu0 %v492
        %6457 = vmatprep.subr.mxu0 0.0
        %6458 = vmatpush2.msra.mxu0 0.0
        %6459 = vmatprep.subr.mxu0 0.0
        %6460 = vmatpush2.msra.mxu0 0.0
        %6461 = vmatprep.subr.mxu0 0.0
        %6462 = vmatpush2.msra.mxu0 0.0
        %6463 = vmatprep.subr.mxu0 0.0
        %6464 = vmatpush2.msra.mxu0 0.0
        %6465 = vmatprep.subr.mxu0 0.0
        %6466 = vmatpush2.msra.mxu0 0.0
        %6467 = vmatprep.subr.mxu0 0.0
        %6468 = vmatpush2.msra.mxu0 0.0
        %6469 = vmatprep.subr.mxu0 0.0
        %6470 = vmatpush2.msra.mxu0 0.0
        %6471 = vmatprep.subr.mxu0 0.0
        %6472 = vmatpush2.msra.mxu0 0.0
        %6473 = vmatprep.subr.mxu0 0.0
        %6474 = vmatpush2.msra.mxu0 0.0
        %6475 = vmatprep.subr.mxu0 0.0
        %6476 = vmatpush2.msra.mxu0 0.0
        %6477 = vmatprep.subr.mxu0 0.0
        %6478 = vmatpush2.msra.mxu0 0.0
        %6479 = vmatprep.subr.mxu0 0.0
        %6480 = vmatpush2.msra.mxu0 0.0
        %6481 = vmatprep.subr.mxu0 0.0
        %6482 = vmatpush2.msra.mxu0 0.0
        %6483 = vmatprep.subr.mxu0 0.0
        %6484 = vmatpush2.msra.mxu0 0.0
        %6485 = vmatprep.subr.mxu0 0.0
        %6486 = vmatpush2.msra.mxu0 0.0
        %6487 = vmatprep.subr.mxu0 0.0
        %6488 = vmatpush2.msra.mxu0 0.0
        %6489 = vmatprep.mubr.f32.mxu0 0.0
        %6490 = vmatmul.mubr.f32.gmra.mxu0 %v6422
        %v6491 = vpop.f32.mrf.mxu0
        %v6492 = vadd.f32 %v1870, %v6491
        %v6493 = vpop.f32.mrf.mxu0
        %v6494 = vadd.f32 %v1874, %v6493
        %6495 = vmatprep.mubr.f32.mxu0 0.0
        %6496 = vmatmul.mubr.f32.gmra.mxu0 %v6423
        %v6497 = vpop.f32.mrf.mxu0
        %v6498 = vadd.f32 %v1870, %v6497
        %v6499 = vpop.f32.mrf.mxu0
        %v6500 = vadd.f32 %v1874, %v6499
        %6501 = vmatprep.mubr.f32.mxu0 0.0
        %6502 = vmatmul.mubr.f32.gmra.mxu0 %v6424
        %v6503 = vpop.f32.mrf.mxu0
        %v6504 = vadd.f32 %v1870, %v6503
        %v6505 = vpop.f32.mrf.mxu0
        %v6506 = vadd.f32 %v1874, %v6505
        %6507 = vdwg.mxu0
        %v6508 = vsel %vm572, %v5126, 0
        %v6510 = vsel %vm572, %v5128, 0
        %v6512 = vsel %vm572, %v5130, 0
        %6514 = vmatprep.subr.mxu0 0.0
        %6515 = vmatpush1.msra.mxu0 0.0
        %6516 = vmatprep.subr.mxu0 0.0
        %6517 = vmatpush1.msra.mxu0 0.0
        %6518 = vmatprep.subr.mxu0 0.0
        %6519 = vmatpush1.msra.mxu0 0.0
        %6520 = vmatprep.subr.mxu0 0.0
        %6521 = vmatpush1.msra.mxu0 0.0
        %6522 = vmatprep.subr.mxu0 0.0
        %6523 = vmatpush1.msra.mxu0 0.0
        %6524 = vmatprep.subr.mxu0 0.0
        %6525 = vmatpush1.msra.mxu0 0.0
        %6526 = vmatprep.subr.mxu0 0.0
        %6527 = vmatpush1.msra.mxu0 0.0
        %6528 = vmatprep.subr.mxu0 0.0
        %6529 = vmatpush1.msra.mxu0 0.0
        %6530 = vmatprep.subr.mxu0 0.0
        %6531 = vmatpush1.msra.mxu0 %v483
        %6532 = vmatprep.subr.mxu0 0.0
        %6533 = vmatpush1.msra.mxu0 %v482
        %6534 = vmatprep.subr.mxu0 0.0
        %6535 = vmatpush1.msra.mxu0 %v481
        %6536 = vmatprep.subr.mxu0 0.0
        %6537 = vmatpush1.msra.mxu0 %v480
        %6538 = vmatprep.subr.mxu0 0.0
        %6539 = vmatpush1.msra.mxu0 %v479
        %6540 = vmatprep.subr.mxu0 0.0
        %6541 = vmatpush1.msra.mxu0 %v478
        %6542 = vmatprep.subr.mxu0 0.0
        %6543 = vmatpush1.msra.mxu0 %v477
        %6544 = vmatprep.subr.mxu0 0.0
        %6545 = vmatpush1.msra.mxu0 %v476
        %6546 = vmatprep.subr.mxu0 0.0
        %6547 = vmatpush2.msra.mxu0 0.0
        %6548 = vmatprep.subr.mxu0 0.0
        %6549 = vmatpush2.msra.mxu0 0.0
        %6550 = vmatprep.subr.mxu0 0.0
        %6551 = vmatpush2.msra.mxu0 0.0
        %6552 = vmatprep.subr.mxu0 0.0
        %6553 = vmatpush2.msra.mxu0 0.0
        %6554 = vmatprep.subr.mxu0 0.0
        %6555 = vmatpush2.msra.mxu0 0.0
        %6556 = vmatprep.subr.mxu0 0.0
        %6557 = vmatpush2.msra.mxu0 0.0
        %6558 = vmatprep.subr.mxu0 0.0
        %6559 = vmatpush2.msra.mxu0 0.0
        %6560 = vmatprep.subr.mxu0 0.0
        %6561 = vmatpush2.msra.mxu0 0.0
        %6562 = vmatprep.subr.mxu0 0.0
        %6563 = vmatpush2.msra.mxu0 0.0
        %6564 = vmatprep.subr.mxu0 0.0
        %6565 = vmatpush2.msra.mxu0 0.0
        %6566 = vmatprep.subr.mxu0 0.0
        %6567 = vmatpush2.msra.mxu0 0.0
        %6568 = vmatprep.subr.mxu0 0.0
        %6569 = vmatpush2.msra.mxu0 0.0
        %6570 = vmatprep.subr.mxu0 0.0
        %6571 = vmatpush2.msra.mxu0 0.0
        %6572 = vmatprep.subr.mxu0 0.0
        %6573 = vmatpush2.msra.mxu0 0.0
        %6574 = vmatprep.subr.mxu0 0.0
        %6575 = vmatpush2.msra.mxu0 0.0
        %6576 = vmatprep.subr.mxu0 0.0
        %6577 = vmatpush2.msra.mxu0 0.0
        %6578 = vmatprep.mubr.f32.mxu0 0.0
        %6579 = vmatmul.mubr.f32.gmra.mxu0 %v6508
        %v6580 = vpop.f32.mrf.mxu0
        %v6581 = vadd.f32 %v1963, %v6580
        %v6582 = vpop.f32.mrf.mxu0
        %6583 = vmatprep.mubr.f32.mxu0 0.0
        %6584 = vmatmul.mubr.f32.gmra.mxu0 %v6510
        %v6585 = vpop.f32.mrf.mxu0
        %v6586 = vadd.f32 %v1963, %v6585
        %v6587 = vpop.f32.mrf.mxu0
        %6588 = vmatprep.mubr.f32.mxu0 0.0
        %6589 = vmatmul.mubr.f32.gmra.mxu0 %v6512
        %v6590 = vpop.f32.mrf.mxu0
        %v6591 = vadd.f32 %v1963, %v6590
        %v6592 = vpop.f32.mrf.mxu0
        %6593 = vdwg.mxu0
        %v6594 = vxor.u32 %v6492, 2147483648
        %v6595 = vxor.u32 %v6498, 2147483648
        %v6596 = vxor.u32 %v6504, 2147483648
        %v6597 = vmul.f32 %v6594, 1.442695
        %v6598 = vpow.pop %v6597
        %v6599 = vmul.f32 %v6595, 1.442695
        %v6600 = vpow.pop %v6599
        %v6601 = vmul.f32 %v6596, 1.442695
        %v6602 = vpow.pop %v6601
        %v6603 = vadd.f32 %v6598, 1.0
        %v6604 = vadd.f32 %v6600, 1.0
        %v6605 = vadd.f32 %v6602, 1.0
        %v6606 = vrcp.pop %v6603
        %v6607 = vmul.f32 1.0, %v6606
        %v6608 = vrcp.pop %v6604
        %v6609 = vmul.f32 1.0, %v6608
        %v6610 = vrcp.pop %v6605
        %v6611 = vmul.f32 1.0, %v6610
        %v6612 = vsub.f32 %v6607, 1.0
        %v6613 = vsub.f32 %v6609, 1.0
        %v6614 = vsub.f32 %v6611, 1.0
        %v6615 = vmul.f32 %v6612, %v6581
        %v6616 = vmul.f32 %v6613, %v6586
        %v6617 = vmul.f32 %v6614, %v6591
        %v6618 = vadd.f32 %v6494, %v6615
        %v6619 = vadd.f32 %v6500, %v6616
        %v6620 = vadd.f32 %v6506, %v6617
        %v6621 = vtanh.pop %v6618
        %v6622 = vtanh.pop %v6619
        %v6623 = vtanh.pop %v6620
        %v6624 = vsub.f32 1.0, %v6607
        %v6625 = vsub.f32 1.0, %v6609
        %v6626 = vsub.f32 1.0, %v6611
        %6630 = vrot.lane.b32.xlu0 %v6621, 64
        %v6631 = vpop.permute.xlu0 %6630
        %6632 = vrot.lane.b32.xlu0 %v6622, 64
        %v6633 = vpop.permute.xlu0 %6632
        %6634 = vrot.lane.b32.xlu0 %v6623, 64
        %v6635 = vpop.permute.xlu0 %6634
        %v6639 = vmul.f32 %v6624, %v6631
        %v6640 = vmul.f32 %v6625, %v6633
        %v6641 = vmul.f32 %v6626, %v6635
        %v6642 = vmul.f32 %v6607, %v5119
        %v6643 = vmul.f32 %v6609, %v5120
        %v6644 = vmul.f32 %v6611, %v5121
        %v6645 = vadd.f32 %v6639, %v6642
        %v6646 = vadd.f32 %v6640, %v6643
        %v6647 = vadd.f32 %v6641, %v6644
        %6651 = vrot.lane.b32.xlu0 %v6645, 64
        %v6652 = vpop.permute.xlu0 %6651
        %6653 = vrot.lane.b32.xlu0 %v6646, 64
        %v6654 = vpop.permute.xlu0 %6653
        %6655 = vrot.lane.b32.xlu0 %v6647, 64
        %v6656 = vpop.permute.xlu0 %6655
        %v6660 = vsel %vm572, %v6652, 0.0
        %6661 = vadd.xlane.f32.xlu0 %v6660
        %v6662 = vpop.xlane.xlu0 %6661
        %v6663 = vsel %vm572, %v6654, 0.0
        %6664 = vadd.xlane.f32.xlu0 %v6663
        %v6665 = vpop.xlane.xlu0 %6664
        %v6666 = vsel %vm1422, %v6656, 0.0
        %6667 = vadd.xlane.f32.xlu0 %v6666
        %v6668 = vpop.xlane.xlu0 %6667
        %v6669 = vmul.f32 %v6662, %v742
        %v6670 = vmul.f32 %v6665, %v742
        %v6671 = vmul.f32 %v6668, %v742
        %v6672 = vmul.f32 %v6645, %v6645
        %v6673 = vmul.f32 %v6646, %v6646
        %v6674 = vmul.f32 %v6647, %v6647
        %6678 = vrot.lane.b32.xlu0 %v6672, 64
        %v6679 = vpop.permute.xlu0 %6678
        %6680 = vrot.lane.b32.xlu0 %v6673, 64
        %v6681 = vpop.permute.xlu0 %6680
        %6682 = vrot.lane.b32.xlu0 %v6674, 64
        %v6683 = vpop.permute.xlu0 %6682
        %v6687 = vsel %vm572, %v6679, 0.0
        %6688 = vadd.xlane.f32.xlu0 %v6687
        %v6689 = vpop.xlane.xlu0 %6688
        %v6690 = vsel %vm572, %v6681, 0.0
        %6691 = vadd.xlane.f32.xlu0 %v6690
        %v6692 = vpop.xlane.xlu0 %6691
        %v6693 = vsel %vm1422, %v6683, 0.0
        %6694 = vadd.xlane.f32.xlu0 %v6693
        %v6695 = vpop.xlane.xlu0 %6694
        %v6696 = vmul.f32 %v6689, %v742
        %v6697 = vmul.f32 %v6692, %v742
        %v6698 = vmul.f32 %v6695, %v742
        %v6699 = vmul.f32 %v6669, %v6669
        %v6700 = vmul.f32 %v6670, %v6670
        %v6701 = vmul.f32 %v6671, %v6671
        %v6702 = vsub.f32 %v6696, %v6699
        %v6703 = vsub.f32 %v6697, %v6700
        %v6704 = vsub.f32 %v6698, %v6701
        %v6705 = vsub.f32 %v6645, %v6669
        %v6706 = vsub.f32 %v6646, %v6670
        %v6707 = vsub.f32 %v6647, %v6671
        %v6708 = vadd.f32 %v6702, 1e-05
        %v6709 = vadd.f32 %v6703, 1e-05
        %v6710 = vadd.f32 %v6704, 1e-05
        %v6711 = vrsqrt.pop %v6708
        %v6712 = vrsqrt.pop %v6709
        %v6713 = vrsqrt.pop %v6710
        %v6714 = vmul.f32 %v6705, %v6711
        %v6715 = vmul.f32 %v6706, %v6712
        %v6716 = vmul.f32 %v6707, %v6713
        %v6717 = vmul.f32 %v6714, %v2179
        %v6718 = vmul.f32 %v6715, %v2179
        %v6719 = vmul.f32 %v6716, %v2179
        %v6720 = vadd.f32 %v6717, %v2190
        %v6721 = vadd.f32 %v6718, %v2190
        %v6722 = vadd.f32 %v6719, %v2190
        %6726 = vrot.lane.b32.xlu0 %v6720, 64
        %v6727 = vpop.permute.xlu0 %6726
        %6728 = vrot.lane.b32.xlu0 %v6721, 64
        %v6729 = vpop.permute.xlu0 %6728
        %6730 = vrot.lane.b32.xlu0 %v6722, 64
        %v6731 = vpop.permute.xlu0 %6730
        %v6732 = vsel %vm572, %v6727, 0
        %v6734 = vsel %vm572, %v6729, 0
        %v6736 = vsel %vm572, %v6731, 0
        %6738 = vmatprep.subr.mxu0 0.0
        %6739 = vmatpush1.msra.mxu0 0.0
        %6740 = vmatprep.subr.mxu0 0.0
        %6741 = vmatpush1.msra.mxu0 0.0
        %6742 = vmatprep.subr.mxu0 0.0
        %6743 = vmatpush1.msra.mxu0 0.0
        %6744 = vmatprep.subr.mxu0 0.0
        %6745 = vmatpush1.msra.mxu0 0.0
        %6746 = vmatprep.subr.mxu0 0.0
        %6747 = vmatpush1.msra.mxu0 0.0
        %6748 = vmatprep.subr.mxu0 0.0
        %6749 = vmatpush1.msra.mxu0 0.0
        %6750 = vmatprep.subr.mxu0 0.0
        %6751 = vmatpush1.msra.mxu0 0.0
        %6752 = vmatprep.subr.mxu0 0.0
        %6753 = vmatpush1.msra.mxu0 0.0
        %6754 = vmatprep.subr.mxu0 0.0
        %6755 = vmatpush1.msra.mxu0 %v465
        %6756 = vmatprep.subr.mxu0 0.0
        %6757 = vmatpush1.msra.mxu0 %v464
        %6758 = vmatprep.subr.mxu0 0.0
        %6759 = vmatpush1.msra.mxu0 %v463
        %6760 = vmatprep.subr.mxu0 0.0
        %6761 = vmatpush1.msra.mxu0 %v462
        %6762 = vmatprep.subr.mxu0 0.0
        %6763 = vmatpush1.msra.mxu0 %v461
        %6764 = vmatprep.subr.mxu0 0.0
        %6765 = vmatpush1.msra.mxu0 %v460
        %6766 = vmatprep.subr.mxu0 0.0
        %6767 = vmatpush1.msra.mxu0 %v459
        %6768 = vmatprep.subr.mxu0 0.0
        %6769 = vmatpush1.msra.mxu0 %v458
        %6770 = vmatprep.subr.mxu0 0.0
        %6771 = vmatpush2.msra.mxu0 0.0
        %6772 = vmatprep.subr.mxu0 0.0
        %6773 = vmatpush2.msra.mxu0 0.0
        %6774 = vmatprep.subr.mxu0 0.0
        %6775 = vmatpush2.msra.mxu0 0.0
        %6776 = vmatprep.subr.mxu0 0.0
        %6777 = vmatpush2.msra.mxu0 0.0
        %6778 = vmatprep.subr.mxu0 0.0
        %6779 = vmatpush2.msra.mxu0 0.0
        %6780 = vmatprep.subr.mxu0 0.0
        %6781 = vmatpush2.msra.mxu0 0.0
        %6782 = vmatprep.subr.mxu0 0.0
        %6783 = vmatpush2.msra.mxu0 0.0
        %6784 = vmatprep.subr.mxu0 0.0
        %6785 = vmatpush2.msra.mxu0 0.0
        %6786 = vmatprep.subr.mxu0 0.0
        %6787 = vmatpush2.msra.mxu0 0.0
        %6788 = vmatprep.subr.mxu0 0.0
        %6789 = vmatpush2.msra.mxu0 0.0
        %6790 = vmatprep.subr.mxu0 0.0
        %6791 = vmatpush2.msra.mxu0 0.0
        %6792 = vmatprep.subr.mxu0 0.0
        %6793 = vmatpush2.msra.mxu0 0.0
        %6794 = vmatprep.subr.mxu0 0.0
        %6795 = vmatpush2.msra.mxu0 0.0
        %6796 = vmatprep.subr.mxu0 0.0
        %6797 = vmatpush2.msra.mxu0 0.0
        %6798 = vmatprep.subr.mxu0 0.0
        %6799 = vmatpush2.msra.mxu0 0.0
        %6800 = vmatprep.subr.mxu0 0.0
        %6801 = vmatpush2.msra.mxu0 0.0
        %6802 = vmatprep.mubr.f32.mxu0 0.0
        %6803 = vmatmul.mubr.f32.gmra.mxu0 %v6732
        %v6804 = vpop.f32.mrf.mxu0
        %v6805 = vadd.f32 %v2198, %v6804
        %v6806 = vpop.f32.mrf.mxu0
        %6807 = vmatprep.mubr.f32.mxu0 0.0
        %6808 = vmatmul.mubr.f32.gmra.mxu0 %v6734
        %v6809 = vpop.f32.mrf.mxu0
        %v6810 = vadd.f32 %v2198, %v6809
        %v6811 = vpop.f32.mrf.mxu0
        %6812 = vmatprep.mubr.f32.mxu0 0.0
        %6813 = vmatmul.mubr.f32.gmra.mxu0 %v6736
        %v6814 = vpop.f32.mrf.mxu0
        %v6815 = vadd.f32 %v2198, %v6814
        %v6816 = vpop.f32.mrf.mxu0
        %6817 = vdwg.mxu0
        %v6818 = vmax.f32 %v6805, 0.0
        %v6819 = vmax.f32 %v6810, 0.0
        %v6820 = vmax.f32 %v6815, 0.0
        %v6822 = vsel %vm572, %v6818, 0
        %v6825 = vsel %vm572, %v6819, 0
        %v6828 = vsel %vm572, %v6820, 0
        %6830 = vmatprep.subr.mxu0 0.0
        %6831 = vmatpush1.msra.mxu0 0.0
        %6832 = vmatprep.subr.mxu0 0.0
        %6833 = vmatpush1.msra.mxu0 0.0
        %6834 = vmatprep.subr.mxu0 0.0
        %6835 = vmatpush1.msra.mxu0 0.0
        %6836 = vmatprep.subr.mxu0 0.0
        %6837 = vmatpush1.msra.mxu0 0.0
        %6838 = vmatprep.subr.mxu0 0.0
        %6839 = vmatpush1.msra.mxu0 0.0
        %6840 = vmatprep.subr.mxu0 0.0
        %6841 = vmatpush1.msra.mxu0 0.0
        %6842 = vmatprep.subr.mxu0 0.0
        %6843 = vmatpush1.msra.mxu0 0.0
        %6844 = vmatprep.subr.mxu0 0.0
        %6845 = vmatpush1.msra.mxu0 0.0
        %6846 = vmatprep.subr.mxu0 0.0
        %6847 = vmatpush1.msra.mxu0 %v474
        %6848 = vmatprep.subr.mxu0 0.0
        %6849 = vmatpush1.msra.mxu0 %v473
        %6850 = vmatprep.subr.mxu0 0.0
        %6851 = vmatpush1.msra.mxu0 %v472
        %6852 = vmatprep.subr.mxu0 0.0
        %6853 = vmatpush1.msra.mxu0 %v471
        %6854 = vmatprep.subr.mxu0 0.0
        %6855 = vmatpush1.msra.mxu0 %v470
        %6856 = vmatprep.subr.mxu0 0.0
        %6857 = vmatpush1.msra.mxu0 %v469
        %6858 = vmatprep.subr.mxu0 0.0
        %6859 = vmatpush1.msra.mxu0 %v468
        %6860 = vmatprep.subr.mxu0 0.0
        %6861 = vmatpush1.msra.mxu0 %v467
        %6862 = vmatprep.subr.mxu0 0.0
        %6863 = vmatpush2.msra.mxu0 0.0
        %6864 = vmatprep.subr.mxu0 0.0
        %6865 = vmatpush2.msra.mxu0 0.0
        %6866 = vmatprep.subr.mxu0 0.0
        %6867 = vmatpush2.msra.mxu0 0.0
        %6868 = vmatprep.subr.mxu0 0.0
        %6869 = vmatpush2.msra.mxu0 0.0
        %6870 = vmatprep.subr.mxu0 0.0
        %6871 = vmatpush2.msra.mxu0 0.0
        %6872 = vmatprep.subr.mxu0 0.0
        %6873 = vmatpush2.msra.mxu0 0.0
        %6874 = vmatprep.subr.mxu0 0.0
        %6875 = vmatpush2.msra.mxu0 0.0
        %6876 = vmatprep.subr.mxu0 0.0
        %6877 = vmatpush2.msra.mxu0 0.0
        %6878 = vmatprep.subr.mxu0 0.0
        %6879 = vmatpush2.msra.mxu0 0.0
        %6880 = vmatprep.subr.mxu0 0.0
        %6881 = vmatpush2.msra.mxu0 0.0
        %6882 = vmatprep.subr.mxu0 0.0
        %6883 = vmatpush2.msra.mxu0 0.0
        %6884 = vmatprep.subr.mxu0 0.0
        %6885 = vmatpush2.msra.mxu0 0.0
        %6886 = vmatprep.subr.mxu0 0.0
        %6887 = vmatpush2.msra.mxu0 0.0
        %6888 = vmatprep.subr.mxu0 0.0
        %6889 = vmatpush2.msra.mxu0 0.0
        %6890 = vmatprep.subr.mxu0 0.0
        %6891 = vmatpush2.msra.mxu0 0.0
        %6892 = vmatprep.subr.mxu0 0.0
        %6893 = vmatpush2.msra.mxu0 0.0
        %6894 = vmatprep.mubr.f32.mxu0 0.0
        %6895 = vmatmul.mubr.f32.gmra.mxu0 %v6822
        %v6896 = vpop.f32.mrf.mxu0
        %v6897 = vadd.f32 %v2300, %v6896
        %v6898 = vpop.f32.mrf.mxu0
        %6899 = vmatprep.mubr.f32.mxu0 0.0
        %6900 = vmatmul.mubr.f32.gmra.mxu0 %v6825
        %v6901 = vpop.f32.mrf.mxu0
        %v6902 = vadd.f32 %v2300, %v6901
        %v6903 = vpop.f32.mrf.mxu0
        %6904 = vmatprep.mubr.f32.mxu0 0.0
        %6905 = vmatmul.mubr.f32.gmra.mxu0 %v6828
        %v6906 = vpop.f32.mrf.mxu0
        %v6907 = vadd.f32 %v2300, %v6906
        %v6908 = vpop.f32.mrf.mxu0
        %6909 = vdwg.mxu0
        %6913 = vrot.lane.b32.xlu0 %v6897, 64
        %v6914 = vpop.permute.xlu0 %6913
        %6915 = vrot.lane.b32.xlu0 %v6902, 64
        %v6916 = vpop.permute.xlu0 %6915
        %6917 = vrot.lane.b32.xlu0 %v6907, 64
        %v6918 = vpop.permute.xlu0 %6917
        %v6922 = vadd.f32 %v6645, %v6914
        %v6923 = vadd.f32 %v6646, %v6916
        %v6924 = vadd.f32 %v6647, %v6918
        %6928 = vrot.lane.b32.xlu0 %v6922, 64
        %v6929 = vpop.permute.xlu0 %6928
        %6930 = vrot.lane.b32.xlu0 %v6923, 64
        %v6931 = vpop.permute.xlu0 %6930
        %6932 = vrot.lane.b32.xlu0 %v6924, 64
        %v6933 = vpop.permute.xlu0 %6932
        %6940 = vrot.lane.b32.xlu0 %v6291, 64
        %v6941 = vpop.permute.xlu0 %6940
        %6942 = vrot.lane.b32.xlu0 %v6292, 64
        %v6943 = vpop.permute.xlu0 %6942
        %6944 = vrot.lane.b32.xlu0 %v6293, 64
        %v6945 = vpop.permute.xlu0 %6944
        %v6949 = vsel %vm572, %v6929, %v6941
        %v6950 = vsel %vm572, %v6931, %v6943
        %v6951 = vsel %vm572, %v6933, %v6945
        %s6952 = scalar_lea.vmem %s421, 48
        %6953 = vst [vmem:[%s6952] sm:$0xff] %v6949
        %6954 = vst [vmem:[%s6952 + $0x8] sm:$0xff] %v6950
        %6955 = vst [vmem:[%s6952 + $0x10] sm:$0x1f] %v6951
        %s6956 = scalar_lea.vmem %s362, 192 [#allocation2]
        %v6957 = vld [vmem:[%s6956] sm:$0xff]
        %v6958 = vld [vmem:[%s6956 + $0x8] sm:$0xff]
        %v6959 = vld [vmem:[%s6956 + $0x10] sm:$0xff]
        %v6960 = vld [vmem:[%s6956 + $0x18] sm:$0xff]
        %v6961 = vld [vmem:[%s6956 + $0x20] sm:$0xff]
        %v6962 = vld [vmem:[%s6956 + $0x28] sm:$0xff]
        %v6963 = vld [vmem:[%s6956 + $0x30] sm:$0xff]
        %v6964 = vld [vmem:[%s6956 + $0x38] sm:$0xff]
        %v6965 = vmax.f32 %v6957, 0.0
        %v6966 = vmax.f32 %v6958, 0.0
        %v6967 = vmax.f32 %v6959, 0.0
        %v6968 = vmax.f32 %v6960, 0.0
        %v6969 = vmax.f32 %v6961, 0.0
        %v6970 = vmax.f32 %v6962, 0.0
        %v6971 = vmax.f32 %v6963, 0.0
        %v6972 = vmax.f32 %v6964, 0.0
        %v6974 = vsel %vm572, %v6965, 0
        %v6977 = vsel %vm572, %v6966, 0
        %v6980 = vsel %vm572, %v6967, 0
        %v6983 = vsel %vm572, %v6968, 0
        %v6986 = vsel %vm572, %v6969, 0
        %v6989 = vsel %vm572, %v6970, 0
        %v6992 = vsel %vm572, %v6971, 0
        %v6995 = vsel %vm572, %v6972, 0
        %6997 = vmatprep.subr.mxu0 0.0
        %6998 = vmatpush1.msra.mxu0 0.0
        %6999 = vmatprep.subr.mxu0 0.0
        %7000 = vmatpush1.msra.mxu0 0.0
        %7001 = vmatprep.subr.mxu0 0.0
        %7002 = vmatpush1.msra.mxu0 0.0
        %7003 = vmatprep.subr.mxu0 0.0
        %7004 = vmatpush1.msra.mxu0 0.0
        %7005 = vmatprep.subr.mxu0 0.0
        %7006 = vmatpush1.msra.mxu0 0.0
        %7007 = vmatprep.subr.mxu0 0.0
        %7008 = vmatpush1.msra.mxu0 0.0
        %7009 = vmatprep.subr.mxu0 0.0
        %7010 = vmatpush1.msra.mxu0 0.0
        %7011 = vmatprep.subr.mxu0 0.0
        %7012 = vmatpush1.msra.mxu0 0.0
        %7013 = vmatprep.subr.mxu0 0.0
        %7014 = vmatpush1.msra.mxu0 %v429
        %7015 = vmatprep.subr.mxu0 0.0
        %7016 = vmatpush1.msra.mxu0 %v428
        %7017 = vmatprep.subr.mxu0 0.0
        %7018 = vmatpush1.msra.mxu0 %v427
        %7019 = vmatprep.subr.mxu0 0.0
        %7020 = vmatpush1.msra.mxu0 %v426
        %7021 = vmatprep.subr.mxu0 0.0
        %7022 = vmatpush1.msra.mxu0 %v425
        %7023 = vmatprep.subr.mxu0 0.0
        %7024 = vmatpush1.msra.mxu0 %v424
        %7025 = vmatprep.subr.mxu0 0.0
        %7026 = vmatpush1.msra.mxu0 %v423
        %7027 = vmatprep.subr.mxu0 0.0
        %7028 = vmatpush1.msra.mxu0 %v422
        %7029 = vmatprep.subr.mxu0 0.0
        %7030 = vmatpush2.msra.mxu0 0.0
        %7031 = vmatprep.subr.mxu0 0.0
        %7032 = vmatpush2.msra.mxu0 0.0
        %7033 = vmatprep.subr.mxu0 0.0
        %7034 = vmatpush2.msra.mxu0 0.0
        %7035 = vmatprep.subr.mxu0 0.0
        %7036 = vmatpush2.msra.mxu0 0.0
        %7037 = vmatprep.subr.mxu0 0.0
        %7038 = vmatpush2.msra.mxu0 0.0
        %7039 = vmatprep.subr.mxu0 0.0
        %7040 = vmatpush2.msra.mxu0 0.0
        %7041 = vmatprep.subr.mxu0 0.0
        %7042 = vmatpush2.msra.mxu0 0.0
        %7043 = vmatprep.subr.mxu0 0.0
        %7044 = vmatpush2.msra.mxu0 0.0
        %7045 = vmatprep.subr.mxu0 0.0
        %7046 = vmatpush2.msra.mxu0 0.0
        %7047 = vmatprep.subr.mxu0 0.0
        %7048 = vmatpush2.msra.mxu0 0.0
        %7049 = vmatprep.subr.mxu0 0.0
        %7050 = vmatpush2.msra.mxu0 0.0
        %7051 = vmatprep.subr.mxu0 0.0
        %7052 = vmatpush2.msra.mxu0 0.0
        %7053 = vmatprep.subr.mxu0 0.0
        %7054 = vmatpush2.msra.mxu0 0.0
        %7055 = vmatprep.subr.mxu0 0.0
        %7056 = vmatpush2.msra.mxu0 0.0
        %7057 = vmatprep.subr.mxu0 0.0
        %7058 = vmatpush2.msra.mxu0 0.0
        %7059 = vmatprep.subr.mxu0 0.0
        %7060 = vmatpush2.msra.mxu0 0.0
        %7061 = vmatprep.mubr.f32.mxu0 0.0
        %7062 = vmatmul.mubr.f32.gmra.mxu0 %v6974
        %v7063 = vpop.f32.mrf.mxu0
        %v7064 = vadd.f32 %v571, %v7063
        %v7065 = vpop.f32.mrf.mxu0
        %7066 = vmatprep.mubr.f32.mxu0 0.0
        %7067 = vmatmul.mubr.f32.gmra.mxu0 %v6977
        %v7068 = vpop.f32.mrf.mxu0
        %v7069 = vadd.f32 %v571, %v7068
        %v7070 = vpop.f32.mrf.mxu0
        %7071 = vmatprep.mubr.f32.mxu0 0.0
        %7072 = vmatmul.mubr.f32.gmra.mxu0 %v6980
        %v7073 = vpop.f32.mrf.mxu0
        %v7074 = vadd.f32 %v571, %v7073
        %v7075 = vpop.f32.mrf.mxu0
        %7076 = vmatprep.mubr.f32.mxu0 0.0
        %7077 = vmatmul.mubr.f32.gmra.mxu0 %v6983
        %v7078 = vpop.f32.mrf.mxu0
        %v7079 = vadd.f32 %v571, %v7078
        %v7080 = vpop.f32.mrf.mxu0
        %7081 = vmatprep.mubr.f32.mxu0 0.0
        %7082 = vmatmul.mubr.f32.gmra.mxu0 %v6986
        %v7083 = vpop.f32.mrf.mxu0
        %v7084 = vadd.f32 %v571, %v7083
        %v7085 = vpop.f32.mrf.mxu0
        %7086 = vmatprep.mubr.f32.mxu0 0.0
        %7087 = vmatmul.mubr.f32.gmra.mxu0 %v6989
        %v7088 = vpop.f32.mrf.mxu0
        %v7089 = vadd.f32 %v571, %v7088
        %v7090 = vpop.f32.mrf.mxu0
        %7091 = vmatprep.mubr.f32.mxu0 0.0
        %7092 = vmatmul.mubr.f32.gmra.mxu0 %v6992
        %v7093 = vpop.f32.mrf.mxu0
        %v7094 = vadd.f32 %v571, %v7093
        %v7095 = vpop.f32.mrf.mxu0
        %7096 = vmatprep.mubr.f32.mxu0 0.0
        %7097 = vmatmul.mubr.f32.gmra.mxu0 %v6995
        %v7098 = vpop.f32.mrf.mxu0
        %v7099 = vadd.f32 %v571, %v7098
        %v7100 = vpop.f32.mrf.mxu0
        %7101 = vdwg.mxu0
        %v7102 = vmax.f32 %v7064, 0.0
        %v7103 = vmax.f32 %v7069, 0.0
        %v7104 = vmax.f32 %v7074, 0.0
        %v7105 = vmax.f32 %v7079, 0.0
        %v7106 = vmax.f32 %v7084, 0.0
        %v7107 = vmax.f32 %v7089, 0.0
        %v7108 = vmax.f32 %v7094, 0.0
        %v7109 = vmax.f32 %v7099, 0.0
        %v7110 = vadd.f32 %v7102, %v524
        %v7111 = vadd.f32 %v7103, %v525
        %v7112 = vadd.f32 %v7104, %v526
        %v7113 = vadd.f32 %v7105, %v527
        %v7114 = vadd.f32 %v7106, %v528
        %v7115 = vadd.f32 %v7107, %v529
        %v7116 = vadd.f32 %v7108, %v530
        %v7117 = vadd.f32 %v7109, %v531
        %v7118 = vsel %vm572, %v7110, 0.0
        %7119 = vadd.xlane.f32.xlu0 %v7118
        %v7120 = vpop.xlane.xlu0 %7119
        %v7121 = vsel %vm572, %v7111, 0.0
        %7122 = vadd.xlane.f32.xlu0 %v7121
        %v7123 = vpop.xlane.xlu0 %7122
        %v7124 = vsel %vm572, %v7112, 0.0
        %7125 = vadd.xlane.f32.xlu0 %v7124
        %v7126 = vpop.xlane.xlu0 %7125
        %v7127 = vsel %vm572, %v7113, 0.0
        %7128 = vadd.xlane.f32.xlu0 %v7127
        %v7129 = vpop.xlane.xlu0 %7128
        %v7130 = vsel %vm572, %v7114, 0.0
        %7131 = vadd.xlane.f32.xlu0 %v7130
        %v7132 = vpop.xlane.xlu0 %7131
        %v7133 = vsel %vm572, %v7115, 0.0
        %7134 = vadd.xlane.f32.xlu0 %v7133
        %v7135 = vpop.xlane.xlu0 %7134
        %v7136 = vsel %vm572, %v7116, 0.0
        %7137 = vadd.xlane.f32.xlu0 %v7136
        %v7138 = vpop.xlane.xlu0 %7137
        %v7139 = vsel %vm572, %v7117, 0.0
        %7140 = vadd.xlane.f32.xlu0 %v7139
        %v7141 = vpop.xlane.xlu0 %7140
        %v7142 = vmul.f32 %v7120, %v742
        %v7143 = vmul.f32 %v7123, %v742
        %v7144 = vmul.f32 %v7126, %v742
        %v7145 = vmul.f32 %v7129, %v742
        %v7146 = vmul.f32 %v7132, %v742
        %v7147 = vmul.f32 %v7135, %v742
        %v7148 = vmul.f32 %v7138, %v742
        %v7149 = vmul.f32 %v7141, %v742
        %v7150 = vmul.f32 %v7110, %v7110
        %v7151 = vmul.f32 %v7111, %v7111
        %v7152 = vmul.f32 %v7112, %v7112
        %v7153 = vmul.f32 %v7113, %v7113
        %v7154 = vmul.f32 %v7114, %v7114
        %v7155 = vmul.f32 %v7115, %v7115
        %v7156 = vmul.f32 %v7116, %v7116
        %v7157 = vmul.f32 %v7117, %v7117
        %v7158 = vsel %vm572, %v7150, 0.0
        %7159 = vadd.xlane.f32.xlu0 %v7158
        %v7160 = vpop.xlane.xlu0 %7159
        %v7161 = vsel %vm572, %v7151, 0.0
        %7162 = vadd.xlane.f32.xlu0 %v7161
        %v7163 = vpop.xlane.xlu0 %7162
        %v7164 = vsel %vm572, %v7152, 0.0
        %7165 = vadd.xlane.f32.xlu0 %v7164
        %v7166 = vpop.xlane.xlu0 %7165
        %v7167 = vsel %vm572, %v7153, 0.0
        %7168 = vadd.xlane.f32.xlu0 %v7167
        %v7169 = vpop.xlane.xlu0 %7168
        %v7170 = vsel %vm572, %v7154, 0.0
        %7171 = vadd.xlane.f32.xlu0 %v7170
        %v7172 = vpop.xlane.xlu0 %7171
        %v7173 = vsel %vm572, %v7155, 0.0
        %7174 = vadd.xlane.f32.xlu0 %v7173
        %v7175 = vpop.xlane.xlu0 %7174
        %v7176 = vsel %vm572, %v7156, 0.0
        %7177 = vadd.xlane.f32.xlu0 %v7176
        %v7178 = vpop.xlane.xlu0 %7177
        %v7179 = vsel %vm572, %v7157, 0.0
        %7180 = vadd.xlane.f32.xlu0 %v7179
        %v7181 = vpop.xlane.xlu0 %7180
        %v7182 = vmul.f32 %v7160, %v742
        %v7183 = vmul.f32 %v7163, %v742
        %v7184 = vmul.f32 %v7166, %v742
        %v7185 = vmul.f32 %v7169, %v742
        %v7186 = vmul.f32 %v7172, %v742
        %v7187 = vmul.f32 %v7175, %v742
        %v7188 = vmul.f32 %v7178, %v742
        %v7189 = vmul.f32 %v7181, %v742
        %v7190 = vmul.f32 %v7142, %v7142
        %v7191 = vmul.f32 %v7143, %v7143
        %v7192 = vmul.f32 %v7144, %v7144
        %v7193 = vmul.f32 %v7145, %v7145
        %v7194 = vmul.f32 %v7146, %v7146
        %v7195 = vmul.f32 %v7147, %v7147
        %v7196 = vmul.f32 %v7148, %v7148
        %v7197 = vmul.f32 %v7149, %v7149
        %v7198 = vsub.f32 %v7182, %v7190
        %v7199 = vsub.f32 %v7183, %v7191
        %v7200 = vsub.f32 %v7184, %v7192
        %v7201 = vsub.f32 %v7185, %v7193
        %v7202 = vsub.f32 %v7186, %v7194
        %v7203 = vsub.f32 %v7187, %v7195
        %v7204 = vsub.f32 %v7188, %v7196
        %v7205 = vsub.f32 %v7189, %v7197
        %v7206 = vsub.f32 %v7110, %v7142
        %v7207 = vsub.f32 %v7111, %v7143
        %v7208 = vsub.f32 %v7112, %v7144
        %v7209 = vsub.f32 %v7113, %v7145
        %v7210 = vsub.f32 %v7114, %v7146
        %v7211 = vsub.f32 %v7115, %v7147
        %v7212 = vsub.f32 %v7116, %v7148
        %v7213 = vsub.f32 %v7117, %v7149
        %v7214 = vadd.f32 %v7198, 1e-05
        %v7215 = vadd.f32 %v7199, 1e-05
        %v7216 = vadd.f32 %v7200, 1e-05
        %v7217 = vadd.f32 %v7201, 1e-05
        %v7218 = vadd.f32 %v7202, 1e-05
        %v7219 = vadd.f32 %v7203, 1e-05
        %v7220 = vadd.f32 %v7204, 1e-05
        %v7221 = vadd.f32 %v7205, 1e-05
        %v7222 = vrsqrt.pop %v7214
        %v7223 = vrsqrt.pop %v7215
        %v7224 = vrsqrt.pop %v7216
        %v7225 = vrsqrt.pop %v7217
        %v7226 = vrsqrt.pop %v7218
        %v7227 = vrsqrt.pop %v7219
        %v7228 = vrsqrt.pop %v7220
        %v7229 = vrsqrt.pop %v7221
        %v7230 = vmul.f32 %v7206, %v7222
        %v7231 = vmul.f32 %v7207, %v7223
        %v7232 = vmul.f32 %v7208, %v7224
        %v7233 = vmul.f32 %v7209, %v7225
        %v7234 = vmul.f32 %v7210, %v7226
        %v7235 = vmul.f32 %v7211, %v7227
        %v7236 = vmul.f32 %v7212, %v7228
        %v7237 = vmul.f32 %v7213, %v7229
        %v7238 = vmul.f32 %v7230, %v842
        %v7239 = vmul.f32 %v7231, %v842
        %v7240 = vmul.f32 %v7232, %v842
        %v7241 = vmul.f32 %v7233, %v842
        %v7242 = vmul.f32 %v7234, %v842
        %v7243 = vmul.f32 %v7235, %v842
        %v7244 = vmul.f32 %v7236, %v842
        %v7245 = vmul.f32 %v7237, %v842
        %v7246 = vadd.f32 %v7238, %v854
        %v7247 = vadd.f32 %v7239, %v854
        %v7248 = vadd.f32 %v7240, %v854
        %v7249 = vadd.f32 %v7241, %v854
        %v7250 = vadd.f32 %v7242, %v854
        %v7251 = vadd.f32 %v7243, %v854
        %v7252 = vadd.f32 %v7244, %v854
        %v7253 = vadd.f32 %v7245, %v854
        %v7255 = vsel %vm572, %v7246, 0
        %v7258 = vsel %vm572, %v7247, 0
        %v7261 = vsel %vm572, %v7248, 0
        %v7264 = vsel %vm572, %v7249, 0
        %v7267 = vsel %vm572, %v7250, 0
        %v7270 = vsel %vm572, %v7251, 0
        %v7273 = vsel %vm572, %v7252, 0
        %v7276 = vsel %vm572, %v7253, 0
        %7278 = vmatprep.subr.mxu0 0.0
        %7279 = vmatpush1.msra.mxu0 0.0
        %7280 = vmatprep.subr.mxu0 0.0
        %7281 = vmatpush1.msra.mxu0 0.0
        %7282 = vmatprep.subr.mxu0 0.0
        %7283 = vmatpush1.msra.mxu0 0.0
        %7284 = vmatprep.subr.mxu0 0.0
        %7285 = vmatpush1.msra.mxu0 0.0
        %7286 = vmatprep.subr.mxu0 0.0
        %7287 = vmatpush1.msra.mxu0 0.0
        %7288 = vmatprep.subr.mxu0 0.0
        %7289 = vmatpush1.msra.mxu0 0.0
        %7290 = vmatprep.subr.mxu0 0.0
        %7291 = vmatpush1.msra.mxu0 0.0
        %7292 = vmatprep.subr.mxu0 0.0
        %7293 = vmatpush1.msra.mxu0 0.0
        %7294 = vmatprep.subr.mxu0 0.0
        %7295 = vmatpush1.msra.mxu0 %v438
        %7296 = vmatprep.subr.mxu0 0.0
        %7297 = vmatpush1.msra.mxu0 %v437
        %7298 = vmatprep.subr.mxu0 0.0
        %7299 = vmatpush1.msra.mxu0 %v436
        %7300 = vmatprep.subr.mxu0 0.0
        %7301 = vmatpush1.msra.mxu0 %v435
        %7302 = vmatprep.subr.mxu0 0.0
        %7303 = vmatpush1.msra.mxu0 %v434
        %7304 = vmatprep.subr.mxu0 0.0
        %7305 = vmatpush1.msra.mxu0 %v433
        %7306 = vmatprep.subr.mxu0 0.0
        %7307 = vmatpush1.msra.mxu0 %v432
        %7308 = vmatprep.subr.mxu0 0.0
        %7309 = vmatpush1.msra.mxu0 %v431
        %7310 = vmatprep.subr.mxu0 0.0
        %7311 = vmatpush2.msra.mxu0 0.0
        %7312 = vmatprep.subr.mxu0 0.0
        %7313 = vmatpush2.msra.mxu0 0.0
        %7314 = vmatprep.subr.mxu0 0.0
        %7315 = vmatpush2.msra.mxu0 0.0
        %7316 = vmatprep.subr.mxu0 0.0
        %7317 = vmatpush2.msra.mxu0 0.0
        %7318 = vmatprep.subr.mxu0 0.0
        %7319 = vmatpush2.msra.mxu0 0.0
        %7320 = vmatprep.subr.mxu0 0.0
        %7321 = vmatpush2.msra.mxu0 0.0
        %7322 = vmatprep.subr.mxu0 0.0
        %7323 = vmatpush2.msra.mxu0 0.0
        %7324 = vmatprep.subr.mxu0 0.0
        %7325 = vmatpush2.msra.mxu0 0.0
        %7326 = vmatprep.subr.mxu0 0.0
        %7327 = vmatpush2.msra.mxu0 0.0
        %7328 = vmatprep.subr.mxu0 0.0
        %7329 = vmatpush2.msra.mxu0 0.0
        %7330 = vmatprep.subr.mxu0 0.0
        %7331 = vmatpush2.msra.mxu0 0.0
        %7332 = vmatprep.subr.mxu0 0.0
        %7333 = vmatpush2.msra.mxu0 0.0
        %7334 = vmatprep.subr.mxu0 0.0
        %7335 = vmatpush2.msra.mxu0 0.0
        %7336 = vmatprep.subr.mxu0 0.0
        %7337 = vmatpush2.msra.mxu0 0.0
        %7338 = vmatprep.subr.mxu0 0.0
        %7339 = vmatpush2.msra.mxu0 0.0
        %7340 = vmatprep.subr.mxu0 0.0
        %7341 = vmatpush2.msra.mxu0 0.0
        %7342 = vmatprep.mubr.f32.mxu0 0.0
        %7343 = vmatmul.mubr.f32.gmra.mxu0 %v7255
        %v7344 = vpop.f32.mrf.mxu0
        %v7345 = vadd.f32 %v866, %v7344
        %v7346 = vpop.f32.mrf.mxu0
        %7347 = vmatprep.mubr.f32.mxu0 0.0
        %7348 = vmatmul.mubr.f32.gmra.mxu0 %v7258
        %v7349 = vpop.f32.mrf.mxu0
        %v7350 = vadd.f32 %v866, %v7349
        %v7351 = vpop.f32.mrf.mxu0
        %7352 = vmatprep.mubr.f32.mxu0 0.0
        %7353 = vmatmul.mubr.f32.gmra.mxu0 %v7261
        %v7354 = vpop.f32.mrf.mxu0
        %v7355 = vadd.f32 %v866, %v7354
        %v7356 = vpop.f32.mrf.mxu0
        %7357 = vmatprep.mubr.f32.mxu0 0.0
        %7358 = vmatmul.mubr.f32.gmra.mxu0 %v7264
        %v7359 = vpop.f32.mrf.mxu0
        %v7360 = vadd.f32 %v866, %v7359
        %v7361 = vpop.f32.mrf.mxu0
        %7362 = vmatprep.mubr.f32.mxu0 0.0
        %7363 = vmatmul.mubr.f32.gmra.mxu0 %v7267
        %v7364 = vpop.f32.mrf.mxu0
        %v7365 = vadd.f32 %v866, %v7364
        %v7366 = vpop.f32.mrf.mxu0
        %7367 = vmatprep.mubr.f32.mxu0 0.0
        %7368 = vmatmul.mubr.f32.gmra.mxu0 %v7270
        %v7369 = vpop.f32.mrf.mxu0
        %v7370 = vadd.f32 %v866, %v7369
        %v7371 = vpop.f32.mrf.mxu0
        %7372 = vmatprep.mubr.f32.mxu0 0.0
        %7373 = vmatmul.mubr.f32.gmra.mxu0 %v7273
        %v7374 = vpop.f32.mrf.mxu0
        %v7375 = vadd.f32 %v866, %v7374
        %v7376 = vpop.f32.mrf.mxu0
        %7377 = vmatprep.mubr.f32.mxu0 0.0
        %7378 = vmatmul.mubr.f32.gmra.mxu0 %v7276
        %v7379 = vpop.f32.mrf.mxu0
        %v7380 = vadd.f32 %v866, %v7379
        %v7381 = vpop.f32.mrf.mxu0
        %7382 = vdwg.mxu0
        %v7383 = vmax.f32 %v7345, 0.0
        %v7384 = vmax.f32 %v7350, 0.0
        %v7385 = vmax.f32 %v7355, 0.0
        %v7386 = vmax.f32 %v7360, 0.0
        %v7387 = vmax.f32 %v7365, 0.0
        %v7388 = vmax.f32 %v7370, 0.0
        %v7389 = vmax.f32 %v7375, 0.0
        %v7390 = vmax.f32 %v7380, 0.0
        %v7392 = vsel %vm572, %v7383, 0
        %v7395 = vsel %vm572, %v7384, 0
        %v7398 = vsel %vm572, %v7385, 0
        %v7401 = vsel %vm572, %v7386, 0
        %v7404 = vsel %vm572, %v7387, 0
        %v7407 = vsel %vm572, %v7388, 0
        %v7410 = vsel %vm572, %v7389, 0
        %v7413 = vsel %vm572, %v7390, 0
        %7415 = vmatprep.subr.mxu0 0.0
        %7416 = vmatpush1.msra.mxu0 0.0
        %7417 = vmatprep.subr.mxu0 0.0
        %7418 = vmatpush1.msra.mxu0 0.0
        %7419 = vmatprep.subr.mxu0 0.0
        %7420 = vmatpush1.msra.mxu0 0.0
        %7421 = vmatprep.subr.mxu0 0.0
        %7422 = vmatpush1.msra.mxu0 0.0
        %7423 = vmatprep.subr.mxu0 0.0
        %7424 = vmatpush1.msra.mxu0 0.0
        %7425 = vmatprep.subr.mxu0 0.0
        %7426 = vmatpush1.msra.mxu0 0.0
        %7427 = vmatprep.subr.mxu0 0.0
        %7428 = vmatpush1.msra.mxu0 0.0
        %7429 = vmatprep.subr.mxu0 0.0
        %7430 = vmatpush1.msra.mxu0 0.0
        %7431 = vmatprep.subr.mxu0 0.0
        %7432 = vmatpush1.msra.mxu0 %v447
        %7433 = vmatprep.subr.mxu0 0.0
        %7434 = vmatpush1.msra.mxu0 %v446
        %7435 = vmatprep.subr.mxu0 0.0
        %7436 = vmatpush1.msra.mxu0 %v445
        %7437 = vmatprep.subr.mxu0 0.0
        %7438 = vmatpush1.msra.mxu0 %v444
        %7439 = vmatprep.subr.mxu0 0.0
        %7440 = vmatpush1.msra.mxu0 %v443
        %7441 = vmatprep.subr.mxu0 0.0
        %7442 = vmatpush1.msra.mxu0 %v442
        %7443 = vmatprep.subr.mxu0 0.0
        %7444 = vmatpush1.msra.mxu0 %v441
        %7445 = vmatprep.subr.mxu0 0.0
        %7446 = vmatpush1.msra.mxu0 %v440
        %7447 = vmatprep.subr.mxu0 0.0
        %7448 = vmatpush2.msra.mxu0 0.0
        %7449 = vmatprep.subr.mxu0 0.0
        %7450 = vmatpush2.msra.mxu0 0.0
        %7451 = vmatprep.subr.mxu0 0.0
        %7452 = vmatpush2.msra.mxu0 0.0
        %7453 = vmatprep.subr.mxu0 0.0
        %7454 = vmatpush2.msra.mxu0 0.0
        %7455 = vmatprep.subr.mxu0 0.0
        %7456 = vmatpush2.msra.mxu0 0.0
        %7457 = vmatprep.subr.mxu0 0.0
        %7458 = vmatpush2.msra.mxu0 0.0
        %7459 = vmatprep.subr.mxu0 0.0
        %7460 = vmatpush2.msra.mxu0 0.0
        %7461 = vmatprep.subr.mxu0 0.0
        %7462 = vmatpush2.msra.mxu0 0.0
        %7463 = vmatprep.subr.mxu0 0.0
        %7464 = vmatpush2.msra.mxu0 0.0
        %7465 = vmatprep.subr.mxu0 0.0
        %7466 = vmatpush2.msra.mxu0 0.0
        %7467 = vmatprep.subr.mxu0 0.0
        %7468 = vmatpush2.msra.mxu0 0.0
        %7469 = vmatprep.subr.mxu0 0.0
        %7470 = vmatpush2.msra.mxu0 0.0
        %7471 = vmatprep.subr.mxu0 0.0
        %7472 = vmatpush2.msra.mxu0 0.0
        %7473 = vmatprep.subr.mxu0 0.0
        %7474 = vmatpush2.msra.mxu0 0.0
        %7475 = vmatprep.subr.mxu0 0.0
        %7476 = vmatpush2.msra.mxu0 0.0
        %7477 = vmatprep.subr.mxu0 0.0
        %7478 = vmatpush2.msra.mxu0 0.0
        %7479 = vmatprep.mubr.f32.mxu0 0.0
        %7480 = vmatmul.mubr.f32.gmra.mxu0 %v7392
        %v7481 = vpop.f32.mrf.mxu0
        %v7482 = vadd.f32 %v1007, %v7481
        %v7483 = vpop.f32.mrf.mxu0
        %7484 = vmatprep.mubr.f32.mxu0 0.0
        %7485 = vmatmul.mubr.f32.gmra.mxu0 %v7395
        %v7486 = vpop.f32.mrf.mxu0
        %v7487 = vadd.f32 %v1007, %v7486
        %v7488 = vpop.f32.mrf.mxu0
        %7489 = vmatprep.mubr.f32.mxu0 0.0
        %7490 = vmatmul.mubr.f32.gmra.mxu0 %v7398
        %v7491 = vpop.f32.mrf.mxu0
        %v7492 = vadd.f32 %v1007, %v7491
        %v7493 = vpop.f32.mrf.mxu0
        %7494 = vmatprep.mubr.f32.mxu0 0.0
        %7495 = vmatmul.mubr.f32.gmra.mxu0 %v7401
        %v7496 = vpop.f32.mrf.mxu0
        %v7497 = vadd.f32 %v1007, %v7496
        %v7498 = vpop.f32.mrf.mxu0
        %7499 = vmatprep.mubr.f32.mxu0 0.0
        %7500 = vmatmul.mubr.f32.gmra.mxu0 %v7404
        %v7501 = vpop.f32.mrf.mxu0
        %v7502 = vadd.f32 %v1007, %v7501
        %v7503 = vpop.f32.mrf.mxu0
        %7504 = vmatprep.mubr.f32.mxu0 0.0
        %7505 = vmatmul.mubr.f32.gmra.mxu0 %v7407
        %v7506 = vpop.f32.mrf.mxu0
        %v7507 = vadd.f32 %v1007, %v7506
        %v7508 = vpop.f32.mrf.mxu0
        %7509 = vmatprep.mubr.f32.mxu0 0.0
        %7510 = vmatmul.mubr.f32.gmra.mxu0 %v7410
        %v7511 = vpop.f32.mrf.mxu0
        %v7512 = vadd.f32 %v1007, %v7511
        %v7513 = vpop.f32.mrf.mxu0
        %7514 = vmatprep.mubr.f32.mxu0 0.0
        %7515 = vmatmul.mubr.f32.gmra.mxu0 %v7413
        %v7516 = vpop.f32.mrf.mxu0
        %v7517 = vadd.f32 %v1007, %v7516
        %v7518 = vpop.f32.mrf.mxu0
        %7519 = vdwg.mxu0
        %v7520 = vsel %vm572, %v7482, 0.0
        %7521 = vadd.xlane.f32.xlu0 %v7520
        %v7522 = vpop.xlane.xlu0 %7521
        %v7523 = vsel %vm572, %v7487, 0.0
        %7524 = vadd.xlane.f32.xlu0 %v7523
        %v7525 = vpop.xlane.xlu0 %7524
        %v7526 = vsel %vm572, %v7492, 0.0
        %7527 = vadd.xlane.f32.xlu0 %v7526
        %v7528 = vpop.xlane.xlu0 %7527
        %v7529 = vsel %vm572, %v7497, 0.0
        %7530 = vadd.xlane.f32.xlu0 %v7529
        %v7531 = vpop.xlane.xlu0 %7530
        %v7532 = vsel %vm572, %v7502, 0.0
        %7533 = vadd.xlane.f32.xlu0 %v7532
        %v7534 = vpop.xlane.xlu0 %7533
        %v7535 = vsel %vm572, %v7507, 0.0
        %7536 = vadd.xlane.f32.xlu0 %v7535
        %v7537 = vpop.xlane.xlu0 %7536
        %v7538 = vsel %vm572, %v7512, 0.0
        %7539 = vadd.xlane.f32.xlu0 %v7538
        %v7540 = vpop.xlane.xlu0 %7539
        %v7541 = vsel %vm572, %v7517, 0.0
        %7542 = vadd.xlane.f32.xlu0 %v7541
        %v7543 = vpop.xlane.xlu0 %7542
        %v7544 = vmul.f32 %v7522, %v742
        %v7545 = vmul.f32 %v7525, %v742
        %v7546 = vmul.f32 %v7528, %v742
        %v7547 = vmul.f32 %v7531, %v742
        %v7548 = vmul.f32 %v7534, %v742
        %v7549 = vmul.f32 %v7537, %v742
        %v7550 = vmul.f32 %v7540, %v742
        %v7551 = vmul.f32 %v7543, %v742
        %v7552 = vmul.f32 %v7482, %v7482
        %v7553 = vmul.f32 %v7487, %v7487
        %v7554 = vmul.f32 %v7492, %v7492
        %v7555 = vmul.f32 %v7497, %v7497
        %v7556 = vmul.f32 %v7502, %v7502
        %v7557 = vmul.f32 %v7507, %v7507
        %v7558 = vmul.f32 %v7512, %v7512
        %v7559 = vmul.f32 %v7517, %v7517
        %v7560 = vsel %vm572, %v7552, 0.0
        %7561 = vadd.xlane.f32.xlu0 %v7560
        %v7562 = vpop.xlane.xlu0 %7561
        %v7563 = vsel %vm572, %v7553, 0.0
        %7564 = vadd.xlane.f32.xlu0 %v7563
        %v7565 = vpop.xlane.xlu0 %7564
        %v7566 = vsel %vm572, %v7554, 0.0
        %7567 = vadd.xlane.f32.xlu0 %v7566
        %v7568 = vpop.xlane.xlu0 %7567
        %v7569 = vsel %vm572, %v7555, 0.0
        %7570 = vadd.xlane.f32.xlu0 %v7569
        %v7571 = vpop.xlane.xlu0 %7570
        %v7572 = vsel %vm572, %v7556, 0.0
        %7573 = vadd.xlane.f32.xlu0 %v7572
        %v7574 = vpop.xlane.xlu0 %7573
        %v7575 = vsel %vm572, %v7557, 0.0
        %7576 = vadd.xlane.f32.xlu0 %v7575
        %v7577 = vpop.xlane.xlu0 %7576
        %v7578 = vsel %vm572, %v7558, 0.0
        %7579 = vadd.xlane.f32.xlu0 %v7578
        %v7580 = vpop.xlane.xlu0 %7579
        %v7581 = vsel %vm572, %v7559, 0.0
        %7582 = vadd.xlane.f32.xlu0 %v7581
        %v7583 = vpop.xlane.xlu0 %7582
        %v7584 = vmul.f32 %v7562, %v742
        %v7585 = vmul.f32 %v7565, %v742
        %v7586 = vmul.f32 %v7568, %v742
        %v7587 = vmul.f32 %v7571, %v742
        %v7588 = vmul.f32 %v7574, %v742
        %v7589 = vmul.f32 %v7577, %v742
        %v7590 = vmul.f32 %v7580, %v742
        %v7591 = vmul.f32 %v7583, %v742
        %v7592 = vmul.f32 %v7544, %v7544
        %v7593 = vmul.f32 %v7545, %v7545
        %v7594 = vmul.f32 %v7546, %v7546
        %v7595 = vmul.f32 %v7547, %v7547
        %v7596 = vmul.f32 %v7548, %v7548
        %v7597 = vmul.f32 %v7549, %v7549
        %v7598 = vmul.f32 %v7550, %v7550
        %v7599 = vmul.f32 %v7551, %v7551
        %v7600 = vsub.f32 %v7584, %v7592
        %v7601 = vsub.f32 %v7585, %v7593
        %v7602 = vsub.f32 %v7586, %v7594
        %v7603 = vsub.f32 %v7587, %v7595
        %v7604 = vsub.f32 %v7588, %v7596
        %v7605 = vsub.f32 %v7589, %v7597
        %v7606 = vsub.f32 %v7590, %v7598
        %v7607 = vsub.f32 %v7591, %v7599
        %v7608 = vsub.f32 %v7482, %v7544
        %v7609 = vsub.f32 %v7487, %v7545
        %v7610 = vsub.f32 %v7492, %v7546
        %v7611 = vsub.f32 %v7497, %v7547
        %v7612 = vsub.f32 %v7502, %v7548
        %v7613 = vsub.f32 %v7507, %v7549
        %v7614 = vsub.f32 %v7512, %v7550
        %v7615 = vsub.f32 %v7517, %v7551
        %v7616 = vadd.f32 %v7600, 1e-05
        %v7617 = vadd.f32 %v7601, 1e-05
        %v7618 = vadd.f32 %v7602, 1e-05
        %v7619 = vadd.f32 %v7603, 1e-05
        %v7620 = vadd.f32 %v7604, 1e-05
        %v7621 = vadd.f32 %v7605, 1e-05
        %v7622 = vadd.f32 %v7606, 1e-05
        %v7623 = vadd.f32 %v7607, 1e-05
        %v7624 = vrsqrt.pop %v7616
        %v7625 = vrsqrt.pop %v7617
        %v7626 = vrsqrt.pop %v7618
        %v7627 = vrsqrt.pop %v7619
        %v7628 = vrsqrt.pop %v7620
        %v7629 = vrsqrt.pop %v7621
        %v7630 = vrsqrt.pop %v7622
        %v7631 = vrsqrt.pop %v7623
        %v7632 = vmul.f32 %v7608, %v7624
        %v7633 = vmul.f32 %v7609, %v7625
        %v7634 = vmul.f32 %v7610, %v7626
        %v7635 = vmul.f32 %v7611, %v7627
        %v7636 = vmul.f32 %v7612, %v7628
        %v7637 = vmul.f32 %v7613, %v7629
        %v7638 = vmul.f32 %v7614, %v7630
        %v7639 = vmul.f32 %v7615, %v7631
        %v7640 = vmul.f32 %v7632, %v1260
        %v7641 = vmul.f32 %v7633, %v1260
        %v7642 = vmul.f32 %v7634, %v1260
        %v7643 = vmul.f32 %v7635, %v1260
        %v7644 = vmul.f32 %v7636, %v1260
        %v7645 = vmul.f32 %v7637, %v1260
        %v7646 = vmul.f32 %v7638, %v1260
        %v7647 = vmul.f32 %v7639, %v1260
        %v7648 = vadd.f32 %v7640, %v1272
        %v7649 = vadd.f32 %v7641, %v1272
        %v7650 = vadd.f32 %v7642, %v1272
        %v7651 = vadd.f32 %v7643, %v1272
        %v7652 = vadd.f32 %v7644, %v1272
        %v7653 = vadd.f32 %v7645, %v1272
        %v7654 = vadd.f32 %v7646, %v1272
        %v7655 = vadd.f32 %v7647, %v1272
        %v7657 = vsel %vm572, %v7648, 0
        %v7660 = vsel %vm572, %v7649, 0
        %v7663 = vsel %vm572, %v7650, 0
        %v7666 = vsel %vm572, %v7651, 0
        %v7669 = vsel %vm572, %v7652, 0
        %v7672 = vsel %vm572, %v7653, 0
        %v7675 = vsel %vm572, %v7654, 0
        %v7678 = vsel %vm572, %v7655, 0
        %7680 = vmatprep.subr.mxu0 0.0
        %7681 = vmatpush1.msra.mxu0 0.0
        %7682 = vmatprep.subr.mxu0 0.0
        %7683 = vmatpush1.msra.mxu0 0.0
        %7684 = vmatprep.subr.mxu0 0.0
        %7685 = vmatpush1.msra.mxu0 0.0
        %7686 = vmatprep.subr.mxu0 0.0
        %7687 = vmatpush1.msra.mxu0 0.0
        %7688 = vmatprep.subr.mxu0 0.0
        %7689 = vmatpush1.msra.mxu0 0.0
        %7690 = vmatprep.subr.mxu0 0.0
        %7691 = vmatpush1.msra.mxu0 0.0
        %7692 = vmatprep.subr.mxu0 0.0
        %7693 = vmatpush1.msra.mxu0 0.0
        %7694 = vmatprep.subr.mxu0 0.0
        %7695 = vmatpush1.msra.mxu0 0.0
        %7696 = vmatprep.subr.mxu0 0.0
        %7697 = vmatpush1.msra.mxu0 %v491
        %7698 = vmatprep.subr.mxu0 0.0
        %7699 = vmatpush1.msra.mxu0 %v490
        %7700 = vmatprep.subr.mxu0 0.0
        %7701 = vmatpush1.msra.mxu0 %v489
        %7702 = vmatprep.subr.mxu0 0.0
        %7703 = vmatpush1.msra.mxu0 %v488
        %7704 = vmatprep.subr.mxu0 0.0
        %7705 = vmatpush1.msra.mxu0 %v487
        %7706 = vmatprep.subr.mxu0 0.0
        %7707 = vmatpush1.msra.mxu0 %v486
        %7708 = vmatprep.subr.mxu0 0.0
        %7709 = vmatpush1.msra.mxu0 %v485
        %7710 = vmatprep.subr.mxu0 0.0
        %7711 = vmatpush1.msra.mxu0 %v484
        %7712 = vmatprep.subr.mxu0 0.0
        %7713 = vmatpush2.msra.mxu0 0.0
        %7714 = vmatprep.subr.mxu0 0.0
        %7715 = vmatpush2.msra.mxu0 0.0
        %7716 = vmatprep.subr.mxu0 0.0
        %7717 = vmatpush2.msra.mxu0 0.0
        %7718 = vmatprep.subr.mxu0 0.0
        %7719 = vmatpush2.msra.mxu0 0.0
        %7720 = vmatprep.subr.mxu0 0.0
        %7721 = vmatpush2.msra.mxu0 0.0
        %7722 = vmatprep.subr.mxu0 0.0
        %7723 = vmatpush2.msra.mxu0 0.0
        %7724 = vmatprep.subr.mxu0 0.0
        %7725 = vmatpush2.msra.mxu0 0.0
        %7726 = vmatprep.subr.mxu0 0.0
        %7727 = vmatpush2.msra.mxu0 0.0
        %7728 = vmatprep.subr.mxu0 0.0
        %7729 = vmatpush2.msra.mxu0 0.0
        %7730 = vmatprep.subr.mxu0 0.0
        %7731 = vmatpush2.msra.mxu0 0.0
        %7732 = vmatprep.subr.mxu0 0.0
        %7733 = vmatpush2.msra.mxu0 0.0
        %7734 = vmatprep.subr.mxu0 0.0
        %7735 = vmatpush2.msra.mxu0 0.0
        %7736 = vmatprep.subr.mxu0 0.0
        %7737 = vmatpush2.msra.mxu0 0.0
        %7738 = vmatprep.subr.mxu0 0.0
        %7739 = vmatpush2.msra.mxu0 0.0
        %7740 = vmatprep.subr.mxu0 0.0
        %7741 = vmatpush2.msra.mxu0 0.0
        %7742 = vmatprep.subr.mxu0 0.0
        %7743 = vmatpush2.msra.mxu0 0.0
        %7744 = vmatprep.mubr.f32.mxu0 0.0
        %7745 = vmatmul.mubr.f32.gmra.mxu0 %v7657
        %v7746 = vpop.f32.mrf.mxu0
        %v7747 = vadd.f32 %v1285, %v7746
        %v7748 = vpop.f32.mrf.mxu0
        %7749 = vmatprep.mubr.f32.mxu0 0.0
        %7750 = vmatmul.mubr.f32.gmra.mxu0 %v7660
        %v7751 = vpop.f32.mrf.mxu0
        %v7752 = vadd.f32 %v1285, %v7751
        %v7753 = vpop.f32.mrf.mxu0
        %7754 = vmatprep.mubr.f32.mxu0 0.0
        %7755 = vmatmul.mubr.f32.gmra.mxu0 %v7663
        %v7756 = vpop.f32.mrf.mxu0
        %v7757 = vadd.f32 %v1285, %v7756
        %v7758 = vpop.f32.mrf.mxu0
        %7759 = vmatprep.mubr.f32.mxu0 0.0
        %7760 = vmatmul.mubr.f32.gmra.mxu0 %v7666
        %v7761 = vpop.f32.mrf.mxu0
        %v7762 = vadd.f32 %v1285, %v7761
        %v7763 = vpop.f32.mrf.mxu0
        %7764 = vmatprep.mubr.f32.mxu0 0.0
        %7765 = vmatmul.mubr.f32.gmra.mxu0 %v7669
        %v7766 = vpop.f32.mrf.mxu0
        %v7767 = vadd.f32 %v1285, %v7766
        %v7768 = vpop.f32.mrf.mxu0
        %7769 = vmatprep.mubr.f32.mxu0 0.0
        %7770 = vmatmul.mubr.f32.gmra.mxu0 %v7672
        %v7771 = vpop.f32.mrf.mxu0
        %v7772 = vadd.f32 %v1285, %v7771
        %v7773 = vpop.f32.mrf.mxu0
        %7774 = vmatprep.mubr.f32.mxu0 0.0
        %7775 = vmatmul.mubr.f32.gmra.mxu0 %v7675
        %v7776 = vpop.f32.mrf.mxu0
        %v7777 = vadd.f32 %v1285, %v7776
        %v7778 = vpop.f32.mrf.mxu0
        %7779 = vmatprep.mubr.f32.mxu0 0.0
        %7780 = vmatmul.mubr.f32.gmra.mxu0 %v7678
        %v7781 = vpop.f32.mrf.mxu0
        %v7782 = vadd.f32 %v1285, %v7781
        %v7783 = vpop.f32.mrf.mxu0
        %7784 = vdwg.mxu0
        %v7785 = vsel %vm572, %v6929, 0.0
        %7786 = vadd.xlane.f32.xlu0 %v7785
        %v7787 = vpop.xlane.xlu0 %7786
        %v7788 = vsel %vm572, %v6931, 0.0
        %7789 = vadd.xlane.f32.xlu0 %v7788
        %v7790 = vpop.xlane.xlu0 %7789
        %v7791 = vsel %vm1422, %v6933, 0.0
        %7792 = vadd.xlane.f32.xlu0 %v7791
        %v7793 = vpop.xlane.xlu0 %7792
        %v7794 = vmul.f32 %v7787, %v742
        %v7795 = vmul.f32 %v7790, %v742
        %v7796 = vmul.f32 %v7793, %v742
        %v7797 = vmul.f32 %v6922, %v6922
        %v7798 = vmul.f32 %v6923, %v6923
        %v7799 = vmul.f32 %v6924, %v6924
        %7803 = vrot.lane.b32.xlu0 %v7797, 64
        %v7804 = vpop.permute.xlu0 %7803
        %7805 = vrot.lane.b32.xlu0 %v7798, 64
        %v7806 = vpop.permute.xlu0 %7805
        %7807 = vrot.lane.b32.xlu0 %v7799, 64
        %v7808 = vpop.permute.xlu0 %7807
        %v7812 = vsel %vm572, %v7804, 0.0
        %7813 = vadd.xlane.f32.xlu0 %v7812
        %v7814 = vpop.xlane.xlu0 %7813
        %v7815 = vsel %vm572, %v7806, 0.0
        %7816 = vadd.xlane.f32.xlu0 %v7815
        %v7817 = vpop.xlane.xlu0 %7816
        %v7818 = vsel %vm1422, %v7808, 0.0
        %7819 = vadd.xlane.f32.xlu0 %v7818
        %v7820 = vpop.xlane.xlu0 %7819
        %v7821 = vmul.f32 %v7814, %v742
        %v7822 = vmul.f32 %v7817, %v742
        %v7823 = vmul.f32 %v7820, %v742
        %v7824 = vmul.f32 %v7794, %v7794
        %v7825 = vmul.f32 %v7795, %v7795
        %v7826 = vmul.f32 %v7796, %v7796
        %v7827 = vsub.f32 %v7821, %v7824
        %v7828 = vsub.f32 %v7822, %v7825
        %v7829 = vsub.f32 %v7823, %v7826
        %v7830 = vsub.f32 %v6922, %v7794
        %v7831 = vsub.f32 %v6923, %v7795
        %v7832 = vsub.f32 %v6924, %v7796
        %v7833 = vadd.f32 %v7827, 1e-05
        %v7834 = vadd.f32 %v7828, 1e-05
        %v7835 = vadd.f32 %v7829, 1e-05
        %v7836 = vrsqrt.pop %v7833
        %v7837 = vrsqrt.pop %v7834
        %v7838 = vrsqrt.pop %v7835
        %v7839 = vmul.f32 %v7830, %v7836
        %v7840 = vmul.f32 %v7831, %v7837
        %v7841 = vmul.f32 %v7832, %v7838
        %v7842 = vmul.f32 %v7839, %v2476
        %v7843 = vmul.f32 %v7840, %v2476
        %v7844 = vmul.f32 %v7841, %v2476
        %v7845 = vadd.f32 %v7842, %v2483
        %v7846 = vadd.f32 %v7843, %v2483
        %v7847 = vadd.f32 %v7844, %v2483
        %7851 = vrot.lane.b32.xlu0 %v7845, 64
        %v7852 = vpop.permute.xlu0 %7851
        %7853 = vrot.lane.b32.xlu0 %v7846, 64
        %v7854 = vpop.permute.xlu0 %7853
        %7855 = vrot.lane.b32.xlu0 %v7847, 64
        %v7856 = vpop.permute.xlu0 %7855
        %v7857 = vsel %vm572, %v7852, 0
        %v7859 = vsel %vm572, %v7854, 0
        %v7861 = vsel %vm572, %v7856, 0
        %7863 = vmatprep.subr.mxu0 0.0
        %7864 = vmatpush1.msra.mxu0 0.0
        %7865 = vmatprep.subr.mxu0 0.0
        %7866 = vmatpush1.msra.mxu0 0.0
        %7867 = vmatprep.subr.mxu0 0.0
        %7868 = vmatpush1.msra.mxu0 0.0
        %7869 = vmatprep.subr.mxu0 0.0
        %7870 = vmatpush1.msra.mxu0 0.0
        %7871 = vmatprep.subr.mxu0 0.0
        %7872 = vmatpush1.msra.mxu0 0.0
        %7873 = vmatprep.subr.mxu0 0.0
        %7874 = vmatpush1.msra.mxu0 0.0
        %7875 = vmatprep.subr.mxu0 0.0
        %7876 = vmatpush1.msra.mxu0 0.0
        %7877 = vmatprep.subr.mxu0 0.0
        %7878 = vmatpush1.msra.mxu0 0.0
        %7879 = vmatprep.subr.mxu0 0.0
        %7880 = vmatpush1.msra.mxu0 %v456
        %7881 = vmatprep.subr.mxu0 0.0
        %7882 = vmatpush1.msra.mxu0 %v455
        %7883 = vmatprep.subr.mxu0 0.0
        %7884 = vmatpush1.msra.mxu0 %v454
        %7885 = vmatprep.subr.mxu0 0.0
        %7886 = vmatpush1.msra.mxu0 %v453
        %7887 = vmatprep.subr.mxu0 0.0
        %7888 = vmatpush1.msra.mxu0 %v452
        %7889 = vmatprep.subr.mxu0 0.0
        %7890 = vmatpush1.msra.mxu0 %v451
        %7891 = vmatprep.subr.mxu0 0.0
        %7892 = vmatpush1.msra.mxu0 %v450
        %7893 = vmatprep.subr.mxu0 0.0
        %7894 = vmatpush1.msra.mxu0 %v449
        %7895 = vmatprep.subr.mxu0 0.0
        %7896 = vmatpush2.msra.mxu0 0.0
        %7897 = vmatprep.subr.mxu0 0.0
        %7898 = vmatpush2.msra.mxu0 0.0
        %7899 = vmatprep.subr.mxu0 0.0
        %7900 = vmatpush2.msra.mxu0 0.0
        %7901 = vmatprep.subr.mxu0 0.0
        %7902 = vmatpush2.msra.mxu0 0.0
        %7903 = vmatprep.subr.mxu0 0.0
        %7904 = vmatpush2.msra.mxu0 0.0
        %7905 = vmatprep.subr.mxu0 0.0
        %7906 = vmatpush2.msra.mxu0 0.0
        %7907 = vmatprep.subr.mxu0 0.0
        %7908 = vmatpush2.msra.mxu0 0.0
        %7909 = vmatprep.subr.mxu0 0.0
        %7910 = vmatpush2.msra.mxu0 0.0
        %7911 = vmatprep.subr.mxu0 0.0
        %7912 = vmatpush2.msra.mxu0 0.0
        %7913 = vmatprep.subr.mxu0 0.0
        %7914 = vmatpush2.msra.mxu0 0.0
        %7915 = vmatprep.subr.mxu0 0.0
        %7916 = vmatpush2.msra.mxu0 0.0
        %7917 = vmatprep.subr.mxu0 0.0
        %7918 = vmatpush2.msra.mxu0 0.0
        %7919 = vmatprep.subr.mxu0 0.0
        %7920 = vmatpush2.msra.mxu0 0.0
        %7921 = vmatprep.subr.mxu0 0.0
        %7922 = vmatpush2.msra.mxu0 0.0
        %7923 = vmatprep.subr.mxu0 0.0
        %7924 = vmatpush2.msra.mxu0 0.0
        %7925 = vmatprep.subr.mxu0 0.0
        %7926 = vmatpush2.msra.mxu0 0.0
        %7927 = vmatprep.mubr.f32.mxu0 0.0
        %7928 = vmatmul.mubr.f32.gmra.mxu0 %v7857
        %v7929 = vpop.f32.mrf.mxu0
        %v7930 = vadd.f32 %v1479, %v7929
        %v7931 = vpop.f32.mrf.mxu0
        %7932 = vmatprep.mubr.f32.mxu0 0.0
        %7933 = vmatmul.mubr.f32.gmra.mxu0 %v7859
        %v7934 = vpop.f32.mrf.mxu0
        %v7935 = vadd.f32 %v1479, %v7934
        %v7936 = vpop.f32.mrf.mxu0
        %7937 = vmatprep.mubr.f32.mxu0 0.0
        %7938 = vmatmul.mubr.f32.gmra.mxu0 %v7861
        %v7939 = vpop.f32.mrf.mxu0
        %v7940 = vadd.f32 %v1479, %v7939
        %v7941 = vpop.f32.mrf.mxu0
        %7942 = vdwg.mxu0
        %v7944 = vsel %vm572, %v7930, 0
        %v7947 = vsel %vm572, %v7935, 0
        %v7950 = vsel %vm572, %v7940, 0
        %v7953 = vsel %vm572, %v7747, 0
        %v7956 = vsel %vm572, %v7752, 0
        %v7959 = vsel %vm572, %v7757, 0
        %v7962 = vsel %vm572, %v7762, 0
        %v7965 = vsel %vm572, %v7767, 0
        %v7968 = vsel %vm572, %v7772, 0
        %v7971 = vsel %vm572, %v7777, 0
        %v7974 = vsel %vm572, %v7782, 0
        %7976 = vmatprep.subr.mxu0 0.0
        %7977 = vmatpush1.xpose.msra.mxu0 0.0
        %7978 = vmatprep.subr.mxu0 0.0
        %7979 = vmatpush1.xpose.msra.mxu0 0.0
        %7980 = vmatprep.subr.mxu0 0.0
        %7981 = vmatpush1.xpose.msra.mxu0 0.0
        %7982 = vmatprep.subr.mxu0 0.0
        %7983 = vmatpush1.xpose.msra.mxu0 0.0
        %7984 = vmatprep.subr.mxu0 0.0
        %7985 = vmatpush1.xpose.msra.mxu0 0.0
        %7986 = vmatprep.subr.mxu0 0.0
        %7987 = vmatpush1.xpose.msra.mxu0 0.0
        %7988 = vmatprep.subr.mxu0 0.0
        %7989 = vmatpush1.xpose.msra.mxu0 0.0
        %7990 = vmatprep.subr.mxu0 0.0
        %7991 = vmatpush1.xpose.msra.mxu0 0.0
        %7992 = vmatprep.subr.mxu0 0.0
        %7993 = vmatpush1.xpose.msra.mxu0 %v7974
        %7994 = vmatprep.subr.mxu0 0.0
        %7995 = vmatpush1.xpose.msra.mxu0 %v7971
        %7996 = vmatprep.subr.mxu0 0.0
        %7997 = vmatpush1.xpose.msra.mxu0 %v7968
        %7998 = vmatprep.subr.mxu0 0.0
        %7999 = vmatpush1.xpose.msra.mxu0 %v7965
        %8000 = vmatprep.subr.mxu0 0.0
        %8001 = vmatpush1.xpose.msra.mxu0 %v7962
        %8002 = vmatprep.subr.mxu0 0.0
        %8003 = vmatpush1.xpose.msra.mxu0 %v7959
        %8004 = vmatprep.subr.mxu0 0.0
        %8005 = vmatpush1.xpose.msra.mxu0 %v7956
        %8006 = vmatprep.subr.mxu0 0.0
        %8007 = vmatpush1.xpose.msra.mxu0 %v7953
        %8008 = vmatprep.subr.mxu0 0.0
        %8009 = vmatpush2.xpose.msra.mxu0 0.0
        %8010 = vmatprep.subr.mxu0 0.0
        %8011 = vmatpush2.xpose.msra.mxu0 0.0
        %8012 = vmatprep.subr.mxu0 0.0
        %8013 = vmatpush2.xpose.msra.mxu0 0.0
        %8014 = vmatprep.subr.mxu0 0.0
        %8015 = vmatpush2.xpose.msra.mxu0 0.0
        %8016 = vmatprep.subr.mxu0 0.0
        %8017 = vmatpush2.xpose.msra.mxu0 0.0
        %8018 = vmatprep.subr.mxu0 0.0
        %8019 = vmatpush2.xpose.msra.mxu0 0.0
        %8020 = vmatprep.subr.mxu0 0.0
        %8021 = vmatpush2.xpose.msra.mxu0 0.0
        %8022 = vmatprep.subr.mxu0 0.0
        %8023 = vmatpush2.xpose.msra.mxu0 0.0
        %8024 = vmatprep.subr.mxu0 0.0
        %8025 = vmatpush2.xpose.msra.mxu0 0.0
        %8026 = vmatprep.subr.mxu0 0.0
        %8027 = vmatpush2.xpose.msra.mxu0 0.0
        %8028 = vmatprep.subr.mxu0 0.0
        %8029 = vmatpush2.xpose.msra.mxu0 0.0
        %8030 = vmatprep.subr.mxu0 0.0
        %8031 = vmatpush2.xpose.msra.mxu0 0.0
        %8032 = vmatprep.subr.mxu0 0.0
        %8033 = vmatpush2.xpose.msra.mxu0 0.0
        %8034 = vmatprep.subr.mxu0 0.0
        %8035 = vmatpush2.xpose.msra.mxu0 0.0
        %8036 = vmatprep.subr.mxu0 0.0
        %8037 = vmatpush2.xpose.msra.mxu0 0.0
        %8038 = vmatprep.subr.mxu0 0.0
        %8039 = vmatpush2.xpose.msra.mxu0 0.0
        %8040 = vmatprep.mubr.f32.mxu0 0.0
        %8041 = vmatmul.mubr.f32.gmra.mxu0 %v7944
        %v8042 = vpop.f32.mrf.mxu0
        %v8043 = vadd.f32 0.0, %v8042
        %v8044 = vpop.f32.mrf.mxu0
        %8045 = vmatprep.mubr.f32.mxu0 0.0
        %8046 = vmatmul.mubr.f32.gmra.mxu0 %v7947
        %v8047 = vpop.f32.mrf.mxu0
        %v8048 = vadd.f32 0.0, %v8047
        %v8049 = vpop.f32.mrf.mxu0
        %8050 = vmatprep.mubr.f32.mxu0 0.0
        %8051 = vmatmul.mubr.f32.gmra.mxu0 %v7950
        %v8052 = vpop.f32.mrf.mxu0
        %v8053 = vadd.f32 0.0, %v8052
        %v8054 = vpop.f32.mrf.mxu0
        %8055 = vdwg.mxu0
        %v8056 = vmul.f32 %v8043, 0.125
        %v8057 = vmul.f32 %v8048, 0.125
        %v8058 = vmul.f32 %v8053, 0.125
        %v8059 = vsel %vm572, %v8056, -inf
        %v8060 = vsel %vm572, %v8057, -inf
        %v8061 = vsel %vm1422, %v8058, -inf
        %v8062 = vmax.f32 %v8059, %v8060
        %v8063 = vmax.f32 %v8062, %v8061
        %v8064 = vrot.slane %v8063, 4
        %v8065 = vmax.f32 %v8063, %v8064
        %v8066 = vrot.slane %v8065, 2
        %v8067 = vmax.f32 %v8065, %v8066
        %v8068 = vrot.slane %v8067, 1
        %v8069 = vmax.f32 %v8067, %v8068
        %v8070 = vsub.f32 %v8056, %v8069
        %v8071 = vsub.f32 %v8057, %v8069
        %v8072 = vsub.f32 %v8058, %v8069
        %v8073 = vmul.f32 %v8070, 1.442695
        %v8074 = vpow.pop %v8073
        %v8075 = vmul.f32 %v8071, 1.442695
        %v8076 = vpow.pop %v8075
        %v8077 = vmul.f32 %v8072, 1.442695
        %v8078 = vpow.pop %v8077
        %v8079 = vsel %vm572, %v8074, 0.0
        %v8080 = vsel %vm572, %v8076, 0.0
        %v8081 = vadd.f32 %v8079, %v8080
        %v8082 = vsel %vm1422, %v8078, 0.0
        %v8083 = vadd.f32 %v8081, %v8082
        %v8084 = vrot.slane %v8083, 4
        %v8085 = vadd.f32 %v8083, %v8084
        %v8086 = vrot.slane %v8085, 2
        %v8087 = vadd.f32 %v8085, %v8086
        %v8088 = vrot.slane %v8087, 1
        %v8089 = vadd.f32 %v8087, %v8088
        %v8090 = vrcp.pop %v8089
        %v8091 = vmul.f32 %v8074, %v8090
        %v8092 = vmul.f32 %v8076, %v8090
        %v8093 = vmul.f32 %v8078, %v8090
        %v8094 = vadd.f32 %v8091, 1e-08
        %v8095 = vadd.f32 %v8092, 1e-08
        %v8096 = vadd.f32 %v8093, 1e-08
        %v8097 = vsel %vm572, %v8094, 0.0
        %8098 = vadd.xlane.f32.xlu0 %v8097
        %v8099 = vpop.xlane.xlu0 %8098
        %v8100 = vsel %vm572, %v8095, 0.0
        %8101 = vadd.xlane.f32.xlu0 %v8100
        %v8102 = vpop.xlane.xlu0 %8101
        %v8103 = vsel %vm1422, %v8096, 0.0
        %8104 = vadd.xlane.f32.xlu0 %v8103
        %v8105 = vpop.xlane.xlu0 %8104
        %v8106 = vrcp.pop %v8099
        %v8107 = vrcp.pop %v8102
        %v8108 = vrcp.pop %v8105
        %v8109 = vmul.f32 %v8094, %v8106
        %v8110 = vmul.f32 %v8095, %v8107
        %v8111 = vmul.f32 %v8096, %v8108
        %8112 = vrot.lane.b32.xlu0 %v7747, 64
        %v8113 = vpop.permute.xlu0 %8112
        %8114 = vrot.lane.b32.xlu0 %v7752, 64
        %v8115 = vpop.permute.xlu0 %8114
        %8116 = vrot.lane.b32.xlu0 %v7757, 64
        %v8117 = vpop.permute.xlu0 %8116
        %8118 = vrot.lane.b32.xlu0 %v7762, 64
        %v8119 = vpop.permute.xlu0 %8118
        %8120 = vrot.lane.b32.xlu0 %v7767, 64
        %v8121 = vpop.permute.xlu0 %8120
        %8122 = vrot.lane.b32.xlu0 %v7772, 64
        %v8123 = vpop.permute.xlu0 %8122
        %8124 = vrot.lane.b32.xlu0 %v7777, 64
        %v8125 = vpop.permute.xlu0 %8124
        %8126 = vrot.lane.b32.xlu0 %v7782, 64
        %v8127 = vpop.permute.xlu0 %8126
        %v8137 = vsel %vm572, %v8109, 0
        %v8140 = vsel %vm572, %v8110, 0
        %v8143 = vsel %vm572, %v8111, 0
        %8145 = vmatprep.subr.mxu0 0.0
        %8146 = vmatpush1.msra.mxu0 0.0
        %8147 = vmatprep.subr.mxu0 0.0
        %8148 = vmatpush1.msra.mxu0 0.0
        %8149 = vmatprep.subr.mxu0 0.0
        %8150 = vmatpush1.msra.mxu0 0.0
        %8151 = vmatprep.subr.mxu0 0.0
        %8152 = vmatpush1.msra.mxu0 0.0
        %8153 = vmatprep.subr.mxu0 0.0
        %8154 = vmatpush1.msra.mxu0 0.0
        %8155 = vmatprep.subr.mxu0 0.0
        %8156 = vmatpush1.msra.mxu0 0.0
        %8157 = vmatprep.subr.mxu0 0.0
        %8158 = vmatpush1.msra.mxu0 0.0
        %8159 = vmatprep.subr.mxu0 0.0
        %8160 = vmatpush1.msra.mxu0 0.0
        %8161 = vmatprep.subr.mxu0 0.0
        %8162 = vmatpush1.msra.mxu0 %v8127
        %8163 = vmatprep.subr.mxu0 0.0
        %8164 = vmatpush1.msra.mxu0 %v8125
        %8165 = vmatprep.subr.mxu0 0.0
        %8166 = vmatpush1.msra.mxu0 %v8123
        %8167 = vmatprep.subr.mxu0 0.0
        %8168 = vmatpush1.msra.mxu0 %v8121
        %8169 = vmatprep.subr.mxu0 0.0
        %8170 = vmatpush1.msra.mxu0 %v8119
        %8171 = vmatprep.subr.mxu0 0.0
        %8172 = vmatpush1.msra.mxu0 %v8117
        %8173 = vmatprep.subr.mxu0 0.0
        %8174 = vmatpush1.msra.mxu0 %v8115
        %8175 = vmatprep.subr.mxu0 0.0
        %8176 = vmatpush1.msra.mxu0 %v8113
        %8177 = vmatprep.subr.mxu0 0.0
        %8178 = vmatpush2.msra.mxu0 0.0
        %8179 = vmatprep.subr.mxu0 0.0
        %8180 = vmatpush2.msra.mxu0 0.0
        %8181 = vmatprep.subr.mxu0 0.0
        %8182 = vmatpush2.msra.mxu0 0.0
        %8183 = vmatprep.subr.mxu0 0.0
        %8184 = vmatpush2.msra.mxu0 0.0
        %8185 = vmatprep.subr.mxu0 0.0
        %8186 = vmatpush2.msra.mxu0 0.0
        %8187 = vmatprep.subr.mxu0 0.0
        %8188 = vmatpush2.msra.mxu0 0.0
        %8189 = vmatprep.subr.mxu0 0.0
        %8190 = vmatpush2.msra.mxu0 0.0
        %8191 = vmatprep.subr.mxu0 0.0
        %8192 = vmatpush2.msra.mxu0 0.0
        %8193 = vmatprep.subr.mxu0 0.0
        %8194 = vmatpush2.msra.mxu0 0.0
        %8195 = vmatprep.subr.mxu0 0.0
        %8196 = vmatpush2.msra.mxu0 0.0
        %8197 = vmatprep.subr.mxu0 0.0
        %8198 = vmatpush2.msra.mxu0 0.0
        %8199 = vmatprep.subr.mxu0 0.0
        %8200 = vmatpush2.msra.mxu0 0.0
        %8201 = vmatprep.subr.mxu0 0.0
        %8202 = vmatpush2.msra.mxu0 0.0
        %8203 = vmatprep.subr.mxu0 0.0
        %8204 = vmatpush2.msra.mxu0 0.0
        %8205 = vmatprep.subr.mxu0 0.0
        %8206 = vmatpush2.msra.mxu0 0.0
        %8207 = vmatprep.subr.mxu0 0.0
        %8208 = vmatpush2.msra.mxu0 0.0
        %8209 = vmatprep.mubr.f32.mxu0 0.0
        %8210 = vmatmul.mubr.f32.gmra.mxu0 %v8137
        %v8211 = vpop.f32.mrf.mxu0
        %v8212 = vadd.f32 0.0, %v8211
        %v8213 = vpop.f32.mrf.mxu0
        %8214 = vmatprep.mubr.f32.mxu0 0.0
        %8215 = vmatmul.mubr.f32.gmra.mxu0 %v8140
        %v8216 = vpop.f32.mrf.mxu0
        %v8217 = vadd.f32 0.0, %v8216
        %v8218 = vpop.f32.mrf.mxu0
        %8219 = vmatprep.mubr.f32.mxu0 0.0
        %8220 = vmatmul.mubr.f32.gmra.mxu0 %v8143
        %v8221 = vpop.f32.mrf.mxu0
        %v8222 = vadd.f32 0.0, %v8221
        %v8223 = vpop.f32.mrf.mxu0
        %8224 = vdwg.mxu0
        %v8225 = vsel %vm572, %v8212, %v6922
        %v8226 = vsel %vm572, %v8217, %v6923
        %v8227 = vsel %vm572, %v8222, %v6924
        %8228 = vmatprep.subr.mxu0 %v523
        %8229 = vmatpush1.msra.mxu0 %v522
        %8230 = vmatprep.subr.mxu0 %v521
        %8231 = vmatpush1.msra.mxu0 %v520
        %8232 = vmatprep.subr.mxu0 %v519
        %8233 = vmatpush1.msra.mxu0 %v518
        %8234 = vmatprep.subr.mxu0 %v517
        %8235 = vmatpush1.msra.mxu0 %v516
        %8236 = vmatprep.subr.mxu0 %v515
        %8237 = vmatpush1.msra.mxu0 %v514
        %8238 = vmatprep.subr.mxu0 %v513
        %8239 = vmatpush1.msra.mxu0 %v512
        %8240 = vmatprep.subr.mxu0 %v511
        %8241 = vmatpush1.msra.mxu0 %v510
        %8242 = vmatprep.subr.mxu0 %v509
        %8243 = vmatpush1.msra.mxu0 %v508
        %8244 = vmatprep.subr.mxu0 %v507
        %8245 = vmatpush1.msra.mxu0 %v506
        %8246 = vmatprep.subr.mxu0 %v505
        %8247 = vmatpush1.msra.mxu0 %v504
        %8248 = vmatprep.subr.mxu0 %v503
        %8249 = vmatpush1.msra.mxu0 %v502
        %8250 = vmatprep.subr.mxu0 %v501
        %8251 = vmatpush1.msra.mxu0 %v500
        %8252 = vmatprep.subr.mxu0 %v499
        %8253 = vmatpush1.msra.mxu0 %v498
        %8254 = vmatprep.subr.mxu0 %v497
        %8255 = vmatpush1.msra.mxu0 %v496
        %8256 = vmatprep.subr.mxu0 %v495
        %8257 = vmatpush1.msra.mxu0 %v494
        %8258 = vmatprep.subr.mxu0 %v493
        %8259 = vmatpush1.msra.mxu0 %v492
        %8260 = vmatprep.subr.mxu0 0.0
        %8261 = vmatpush2.msra.mxu0 0.0
        %8262 = vmatprep.subr.mxu0 0.0
        %8263 = vmatpush2.msra.mxu0 0.0
        %8264 = vmatprep.subr.mxu0 0.0
        %8265 = vmatpush2.msra.mxu0 0.0
        %8266 = vmatprep.subr.mxu0 0.0
        %8267 = vmatpush2.msra.mxu0 0.0
        %8268 = vmatprep.subr.mxu0 0.0
        %8269 = vmatpush2.msra.mxu0 0.0
        %8270 = vmatprep.subr.mxu0 0.0
        %8271 = vmatpush2.msra.mxu0 0.0
        %8272 = vmatprep.subr.mxu0 0.0
        %8273 = vmatpush2.msra.mxu0 0.0
        %8274 = vmatprep.subr.mxu0 0.0
        %8275 = vmatpush2.msra.mxu0 0.0
        %8276 = vmatprep.subr.mxu0 0.0
        %8277 = vmatpush2.msra.mxu0 0.0
        %8278 = vmatprep.subr.mxu0 0.0
        %8279 = vmatpush2.msra.mxu0 0.0
        %8280 = vmatprep.subr.mxu0 0.0
        %8281 = vmatpush2.msra.mxu0 0.0
        %8282 = vmatprep.subr.mxu0 0.0
        %8283 = vmatpush2.msra.mxu0 0.0
        %8284 = vmatprep.subr.mxu0 0.0
        %8285 = vmatpush2.msra.mxu0 0.0
        %8286 = vmatprep.subr.mxu0 0.0
        %8287 = vmatpush2.msra.mxu0 0.0
        %8288 = vmatprep.subr.mxu0 0.0
        %8289 = vmatpush2.msra.mxu0 0.0
        %8290 = vmatprep.subr.mxu0 0.0
        %8291 = vmatpush2.msra.mxu0 0.0
        %8292 = vmatprep.mubr.f32.mxu0 0.0
        %8293 = vmatmul.mubr.f32.gmra.mxu0 %v8225
        %v8294 = vpop.f32.mrf.mxu0
        %v8295 = vadd.f32 %v1870, %v8294
        %v8296 = vpop.f32.mrf.mxu0
        %v8297 = vadd.f32 %v1874, %v8296
        %8298 = vmatprep.mubr.f32.mxu0 0.0
        %8299 = vmatmul.mubr.f32.gmra.mxu0 %v8226
        %v8300 = vpop.f32.mrf.mxu0
        %v8301 = vadd.f32 %v1870, %v8300
        %v8302 = vpop.f32.mrf.mxu0
        %v8303 = vadd.f32 %v1874, %v8302
        %8304 = vmatprep.mubr.f32.mxu0 0.0
        %8305 = vmatmul.mubr.f32.gmra.mxu0 %v8227
        %v8306 = vpop.f32.mrf.mxu0
        %v8307 = vadd.f32 %v1870, %v8306
        %v8308 = vpop.f32.mrf.mxu0
        %v8309 = vadd.f32 %v1874, %v8308
        %8310 = vdwg.mxu0
        %v8311 = vsel %vm572, %v6929, 0
        %v8313 = vsel %vm572, %v6931, 0
        %v8315 = vsel %vm572, %v6933, 0
        %8317 = vmatprep.subr.mxu0 0.0
        %8318 = vmatpush1.msra.mxu0 0.0
        %8319 = vmatprep.subr.mxu0 0.0
        %8320 = vmatpush1.msra.mxu0 0.0
        %8321 = vmatprep.subr.mxu0 0.0
        %8322 = vmatpush1.msra.mxu0 0.0
        %8323 = vmatprep.subr.mxu0 0.0
        %8324 = vmatpush1.msra.mxu0 0.0
        %8325 = vmatprep.subr.mxu0 0.0
        %8326 = vmatpush1.msra.mxu0 0.0
        %8327 = vmatprep.subr.mxu0 0.0
        %8328 = vmatpush1.msra.mxu0 0.0
        %8329 = vmatprep.subr.mxu0 0.0
        %8330 = vmatpush1.msra.mxu0 0.0
        %8331 = vmatprep.subr.mxu0 0.0
        %8332 = vmatpush1.msra.mxu0 0.0
        %8333 = vmatprep.subr.mxu0 0.0
        %8334 = vmatpush1.msra.mxu0 %v483
        %8335 = vmatprep.subr.mxu0 0.0
        %8336 = vmatpush1.msra.mxu0 %v482
        %8337 = vmatprep.subr.mxu0 0.0
        %8338 = vmatpush1.msra.mxu0 %v481
        %8339 = vmatprep.subr.mxu0 0.0
        %8340 = vmatpush1.msra.mxu0 %v480
        %8341 = vmatprep.subr.mxu0 0.0
        %8342 = vmatpush1.msra.mxu0 %v479
        %8343 = vmatprep.subr.mxu0 0.0
        %8344 = vmatpush1.msra.mxu0 %v478
        %8345 = vmatprep.subr.mxu0 0.0
        %8346 = vmatpush1.msra.mxu0 %v477
        %8347 = vmatprep.subr.mxu0 0.0
        %8348 = vmatpush1.msra.mxu0 %v476
        %8349 = vmatprep.subr.mxu0 0.0
        %8350 = vmatpush2.msra.mxu0 0.0
        %8351 = vmatprep.subr.mxu0 0.0
        %8352 = vmatpush2.msra.mxu0 0.0
        %8353 = vmatprep.subr.mxu0 0.0
        %8354 = vmatpush2.msra.mxu0 0.0
        %8355 = vmatprep.subr.mxu0 0.0
        %8356 = vmatpush2.msra.mxu0 0.0
        %8357 = vmatprep.subr.mxu0 0.0
        %8358 = vmatpush2.msra.mxu0 0.0
        %8359 = vmatprep.subr.mxu0 0.0
        %8360 = vmatpush2.msra.mxu0 0.0
        %8361 = vmatprep.subr.mxu0 0.0
        %8362 = vmatpush2.msra.mxu0 0.0
        %8363 = vmatprep.subr.mxu0 0.0
        %8364 = vmatpush2.msra.mxu0 0.0
        %8365 = vmatprep.subr.mxu0 0.0
        %8366 = vmatpush2.msra.mxu0 0.0
        %8367 = vmatprep.subr.mxu0 0.0
        %8368 = vmatpush2.msra.mxu0 0.0
        %8369 = vmatprep.subr.mxu0 0.0
        %8370 = vmatpush2.msra.mxu0 0.0
        %8371 = vmatprep.subr.mxu0 0.0
        %8372 = vmatpush2.msra.mxu0 0.0
        %8373 = vmatprep.subr.mxu0 0.0
        %8374 = vmatpush2.msra.mxu0 0.0
        %8375 = vmatprep.subr.mxu0 0.0
        %8376 = vmatpush2.msra.mxu0 0.0
        %8377 = vmatprep.subr.mxu0 0.0
        %8378 = vmatpush2.msra.mxu0 0.0
        %8379 = vmatprep.subr.mxu0 0.0
        %8380 = vmatpush2.msra.mxu0 0.0
        %8381 = vmatprep.mubr.f32.mxu0 0.0
        %8382 = vmatmul.mubr.f32.gmra.mxu0 %v8311
        %v8383 = vpop.f32.mrf.mxu0
        %v8384 = vadd.f32 %v1963, %v8383
        %v8385 = vpop.f32.mrf.mxu0
        %8386 = vmatprep.mubr.f32.mxu0 0.0
        %8387 = vmatmul.mubr.f32.gmra.mxu0 %v8313
        %v8388 = vpop.f32.mrf.mxu0
        %v8389 = vadd.f32 %v1963, %v8388
        %v8390 = vpop.f32.mrf.mxu0
        %8391 = vmatprep.mubr.f32.mxu0 0.0
        %8392 = vmatmul.mubr.f32.gmra.mxu0 %v8315
        %v8393 = vpop.f32.mrf.mxu0
        %v8394 = vadd.f32 %v1963, %v8393
        %v8395 = vpop.f32.mrf.mxu0
        %8396 = vdwg.mxu0
        %v8397 = vxor.u32 %v8295, 2147483648
        %v8398 = vxor.u32 %v8301, 2147483648
        %v8399 = vxor.u32 %v8307, 2147483648
        %v8400 = vmul.f32 %v8397, 1.442695
        %v8401 = vpow.pop %v8400
        %v8402 = vmul.f32 %v8398, 1.442695
        %v8403 = vpow.pop %v8402
        %v8404 = vmul.f32 %v8399, 1.442695
        %v8405 = vpow.pop %v8404
        %v8406 = vadd.f32 %v8401, 1.0
        %v8407 = vadd.f32 %v8403, 1.0
        %v8408 = vadd.f32 %v8405, 1.0
        %v8409 = vrcp.pop %v8406
        %v8410 = vmul.f32 1.0, %v8409
        %v8411 = vrcp.pop %v8407
        %v8412 = vmul.f32 1.0, %v8411
        %v8413 = vrcp.pop %v8408
        %v8414 = vmul.f32 1.0, %v8413
        %v8415 = vsub.f32 %v8410, 1.0
        %v8416 = vsub.f32 %v8412, 1.0
        %v8417 = vsub.f32 %v8414, 1.0
        %v8418 = vmul.f32 %v8415, %v8384
        %v8419 = vmul.f32 %v8416, %v8389
        %v8420 = vmul.f32 %v8417, %v8394
        %v8421 = vadd.f32 %v8297, %v8418
        %v8422 = vadd.f32 %v8303, %v8419
        %v8423 = vadd.f32 %v8309, %v8420
        %v8424 = vtanh.pop %v8421
        %v8425 = vtanh.pop %v8422
        %v8426 = vtanh.pop %v8423
        %v8427 = vsub.f32 1.0, %v8410
        %v8428 = vsub.f32 1.0, %v8412
        %v8429 = vsub.f32 1.0, %v8414
        %8433 = vrot.lane.b32.xlu0 %v8424, 64
        %v8434 = vpop.permute.xlu0 %8433
        %8435 = vrot.lane.b32.xlu0 %v8425, 64
        %v8436 = vpop.permute.xlu0 %8435
        %8437 = vrot.lane.b32.xlu0 %v8426, 64
        %v8438 = vpop.permute.xlu0 %8437
        %v8442 = vmul.f32 %v8427, %v8434
        %v8443 = vmul.f32 %v8428, %v8436
        %v8444 = vmul.f32 %v8429, %v8438
        %v8445 = vmul.f32 %v8410, %v6922
        %v8446 = vmul.f32 %v8412, %v6923
        %v8447 = vmul.f32 %v8414, %v6924
        %v8448 = vadd.f32 %v8442, %v8445
        %v8449 = vadd.f32 %v8443, %v8446
        %v8450 = vadd.f32 %v8444, %v8447
        %8454 = vrot.lane.b32.xlu0 %v8448, 64
        %v8455 = vpop.permute.xlu0 %8454
        %8456 = vrot.lane.b32.xlu0 %v8449, 64
        %v8457 = vpop.permute.xlu0 %8456
        %8458 = vrot.lane.b32.xlu0 %v8450, 64
        %v8459 = vpop.permute.xlu0 %8458
        %v8463 = vsel %vm572, %v8455, 0.0
        %8464 = vadd.xlane.f32.xlu0 %v8463
        %v8465 = vpop.xlane.xlu0 %8464
        %v8466 = vsel %vm572, %v8457, 0.0
        %8467 = vadd.xlane.f32.xlu0 %v8466
        %v8468 = vpop.xlane.xlu0 %8467
        %v8469 = vsel %vm1422, %v8459, 0.0
        %8470 = vadd.xlane.f32.xlu0 %v8469
        %v8471 = vpop.xlane.xlu0 %8470
        %v8472 = vmul.f32 %v8465, %v742
        %v8473 = vmul.f32 %v8468, %v742
        %v8474 = vmul.f32 %v8471, %v742
        %v8475 = vmul.f32 %v8448, %v8448
        %v8476 = vmul.f32 %v8449, %v8449
        %v8477 = vmul.f32 %v8450, %v8450
        %8481 = vrot.lane.b32.xlu0 %v8475, 64
        %v8482 = vpop.permute.xlu0 %8481
        %8483 = vrot.lane.b32.xlu0 %v8476, 64
        %v8484 = vpop.permute.xlu0 %8483
        %8485 = vrot.lane.b32.xlu0 %v8477, 64
        %v8486 = vpop.permute.xlu0 %8485
        %v8490 = vsel %vm572, %v8482, 0.0
        %8491 = vadd.xlane.f32.xlu0 %v8490
        %v8492 = vpop.xlane.xlu0 %8491
        %v8493 = vsel %vm572, %v8484, 0.0
        %8494 = vadd.xlane.f32.xlu0 %v8493
        %v8495 = vpop.xlane.xlu0 %8494
        %v8496 = vsel %vm1422, %v8486, 0.0
        %8497 = vadd.xlane.f32.xlu0 %v8496
        %v8498 = vpop.xlane.xlu0 %8497
        %v8499 = vmul.f32 %v8492, %v742
        %v8500 = vmul.f32 %v8495, %v742
        %v8501 = vmul.f32 %v8498, %v742
        %v8502 = vmul.f32 %v8472, %v8472
        %v8503 = vmul.f32 %v8473, %v8473
        %v8504 = vmul.f32 %v8474, %v8474
        %v8505 = vsub.f32 %v8499, %v8502
        %v8506 = vsub.f32 %v8500, %v8503
        %v8507 = vsub.f32 %v8501, %v8504
        %v8508 = vsub.f32 %v8448, %v8472
        %v8509 = vsub.f32 %v8449, %v8473
        %v8510 = vsub.f32 %v8450, %v8474
        %v8511 = vadd.f32 %v8505, 1e-05
        %v8512 = vadd.f32 %v8506, 1e-05
        %v8513 = vadd.f32 %v8507, 1e-05
        %v8514 = vrsqrt.pop %v8511
        %v8515 = vrsqrt.pop %v8512
        %v8516 = vrsqrt.pop %v8513
        %v8517 = vmul.f32 %v8508, %v8514
        %v8518 = vmul.f32 %v8509, %v8515
        %v8519 = vmul.f32 %v8510, %v8516
        %v8520 = vmul.f32 %v8517, %v2179
        %v8521 = vmul.f32 %v8518, %v2179
        %v8522 = vmul.f32 %v8519, %v2179
        %v8523 = vadd.f32 %v8520, %v2190
        %v8524 = vadd.f32 %v8521, %v2190
        %v8525 = vadd.f32 %v8522, %v2190
        %8529 = vrot.lane.b32.xlu0 %v8523, 64
        %v8530 = vpop.permute.xlu0 %8529
        %8531 = vrot.lane.b32.xlu0 %v8524, 64
        %v8532 = vpop.permute.xlu0 %8531
        %8533 = vrot.lane.b32.xlu0 %v8525, 64
        %v8534 = vpop.permute.xlu0 %8533
        %v8535 = vsel %vm572, %v8530, 0
        %v8537 = vsel %vm572, %v8532, 0
        %v8539 = vsel %vm572, %v8534, 0
        %8541 = vmatprep.subr.mxu0 0.0
        %8542 = vmatpush1.msra.mxu0 0.0
        %8543 = vmatprep.subr.mxu0 0.0
        %8544 = vmatpush1.msra.mxu0 0.0
        %8545 = vmatprep.subr.mxu0 0.0
        %8546 = vmatpush1.msra.mxu0 0.0
        %8547 = vmatprep.subr.mxu0 0.0
        %8548 = vmatpush1.msra.mxu0 0.0
        %8549 = vmatprep.subr.mxu0 0.0
        %8550 = vmatpush1.msra.mxu0 0.0
        %8551 = vmatprep.subr.mxu0 0.0
        %8552 = vmatpush1.msra.mxu0 0.0
        %8553 = vmatprep.subr.mxu0 0.0
        %8554 = vmatpush1.msra.mxu0 0.0
        %8555 = vmatprep.subr.mxu0 0.0
        %8556 = vmatpush1.msra.mxu0 0.0
        %8557 = vmatprep.subr.mxu0 0.0
        %8558 = vmatpush1.msra.mxu0 %v465
        %8559 = vmatprep.subr.mxu0 0.0
        %8560 = vmatpush1.msra.mxu0 %v464
        %8561 = vmatprep.subr.mxu0 0.0
        %8562 = vmatpush1.msra.mxu0 %v463
        %8563 = vmatprep.subr.mxu0 0.0
        %8564 = vmatpush1.msra.mxu0 %v462
        %8565 = vmatprep.subr.mxu0 0.0
        %8566 = vmatpush1.msra.mxu0 %v461
        %8567 = vmatprep.subr.mxu0 0.0
        %8568 = vmatpush1.msra.mxu0 %v460
        %8569 = vmatprep.subr.mxu0 0.0
        %8570 = vmatpush1.msra.mxu0 %v459
        %8571 = vmatprep.subr.mxu0 0.0
        %8572 = vmatpush1.msra.mxu0 %v458
        %8573 = vmatprep.subr.mxu0 0.0
        %8574 = vmatpush2.msra.mxu0 0.0
        %8575 = vmatprep.subr.mxu0 0.0
        %8576 = vmatpush2.msra.mxu0 0.0
        %8577 = vmatprep.subr.mxu0 0.0
        %8578 = vmatpush2.msra.mxu0 0.0
        %8579 = vmatprep.subr.mxu0 0.0
        %8580 = vmatpush2.msra.mxu0 0.0
        %8581 = vmatprep.subr.mxu0 0.0
        %8582 = vmatpush2.msra.mxu0 0.0
        %8583 = vmatprep.subr.mxu0 0.0
        %8584 = vmatpush2.msra.mxu0 0.0
        %8585 = vmatprep.subr.mxu0 0.0
        %8586 = vmatpush2.msra.mxu0 0.0
        %8587 = vmatprep.subr.mxu0 0.0
        %8588 = vmatpush2.msra.mxu0 0.0
        %8589 = vmatprep.subr.mxu0 0.0
        %8590 = vmatpush2.msra.mxu0 0.0
        %8591 = vmatprep.subr.mxu0 0.0
        %8592 = vmatpush2.msra.mxu0 0.0
        %8593 = vmatprep.subr.mxu0 0.0
        %8594 = vmatpush2.msra.mxu0 0.0
        %8595 = vmatprep.subr.mxu0 0.0
        %8596 = vmatpush2.msra.mxu0 0.0
        %8597 = vmatprep.subr.mxu0 0.0
        %8598 = vmatpush2.msra.mxu0 0.0
        %8599 = vmatprep.subr.mxu0 0.0
        %8600 = vmatpush2.msra.mxu0 0.0
        %8601 = vmatprep.subr.mxu0 0.0
        %8602 = vmatpush2.msra.mxu0 0.0
        %8603 = vmatprep.subr.mxu0 0.0
        %8604 = vmatpush2.msra.mxu0 0.0
        %8605 = vmatprep.mubr.f32.mxu0 0.0
        %8606 = vmatmul.mubr.f32.gmra.mxu0 %v8535
        %v8607 = vpop.f32.mrf.mxu0
        %v8608 = vadd.f32 %v2198, %v8607
        %v8609 = vpop.f32.mrf.mxu0
        %8610 = vmatprep.mubr.f32.mxu0 0.0
        %8611 = vmatmul.mubr.f32.gmra.mxu0 %v8537
        %v8612 = vpop.f32.mrf.mxu0
        %v8613 = vadd.f32 %v2198, %v8612
        %v8614 = vpop.f32.mrf.mxu0
        %8615 = vmatprep.mubr.f32.mxu0 0.0
        %8616 = vmatmul.mubr.f32.gmra.mxu0 %v8539
        %v8617 = vpop.f32.mrf.mxu0
        %v8618 = vadd.f32 %v2198, %v8617
        %v8619 = vpop.f32.mrf.mxu0
        %8620 = vdwg.mxu0
        %v8621 = vmax.f32 %v8608, 0.0
        %v8622 = vmax.f32 %v8613, 0.0
        %v8623 = vmax.f32 %v8618, 0.0
        %v8625 = vsel %vm572, %v8621, 0
        %v8628 = vsel %vm572, %v8622, 0
        %v8631 = vsel %vm572, %v8623, 0
        %8633 = vmatprep.subr.mxu0 0.0
        %8634 = vmatpush1.msra.mxu0 0.0
        %8635 = vmatprep.subr.mxu0 0.0
        %8636 = vmatpush1.msra.mxu0 0.0
        %8637 = vmatprep.subr.mxu0 0.0
        %8638 = vmatpush1.msra.mxu0 0.0
        %8639 = vmatprep.subr.mxu0 0.0
        %8640 = vmatpush1.msra.mxu0 0.0
        %8641 = vmatprep.subr.mxu0 0.0
        %8642 = vmatpush1.msra.mxu0 0.0
        %8643 = vmatprep.subr.mxu0 0.0
        %8644 = vmatpush1.msra.mxu0 0.0
        %8645 = vmatprep.subr.mxu0 0.0
        %8646 = vmatpush1.msra.mxu0 0.0
        %8647 = vmatprep.subr.mxu0 0.0
        %8648 = vmatpush1.msra.mxu0 0.0
        %8649 = vmatprep.subr.mxu0 0.0
        %8650 = vmatpush1.msra.mxu0 %v474
        %8651 = vmatprep.subr.mxu0 0.0
        %8652 = vmatpush1.msra.mxu0 %v473
        %8653 = vmatprep.subr.mxu0 0.0
        %8654 = vmatpush1.msra.mxu0 %v472
        %8655 = vmatprep.subr.mxu0 0.0
        %8656 = vmatpush1.msra.mxu0 %v471
        %8657 = vmatprep.subr.mxu0 0.0
        %8658 = vmatpush1.msra.mxu0 %v470
        %8659 = vmatprep.subr.mxu0 0.0
        %8660 = vmatpush1.msra.mxu0 %v469
        %8661 = vmatprep.subr.mxu0 0.0
        %8662 = vmatpush1.msra.mxu0 %v468
        %8663 = vmatprep.subr.mxu0 0.0
        %8664 = vmatpush1.msra.mxu0 %v467
        %8665 = vmatprep.subr.mxu0 0.0
        %8666 = vmatpush2.msra.mxu0 0.0
        %8667 = vmatprep.subr.mxu0 0.0
        %8668 = vmatpush2.msra.mxu0 0.0
        %8669 = vmatprep.subr.mxu0 0.0
        %8670 = vmatpush2.msra.mxu0 0.0
        %8671 = vmatprep.subr.mxu0 0.0
        %8672 = vmatpush2.msra.mxu0 0.0
        %8673 = vmatprep.subr.mxu0 0.0
        %8674 = vmatpush2.msra.mxu0 0.0
        %8675 = vmatprep.subr.mxu0 0.0
        %8676 = vmatpush2.msra.mxu0 0.0
        %8677 = vmatprep.subr.mxu0 0.0
        %8678 = vmatpush2.msra.mxu0 0.0
        %8679 = vmatprep.subr.mxu0 0.0
        %8680 = vmatpush2.msra.mxu0 0.0
        %8681 = vmatprep.subr.mxu0 0.0
        %8682 = vmatpush2.msra.mxu0 0.0
        %8683 = vmatprep.subr.mxu0 0.0
        %8684 = vmatpush2.msra.mxu0 0.0
        %8685 = vmatprep.subr.mxu0 0.0
        %8686 = vmatpush2.msra.mxu0 0.0
        %8687 = vmatprep.subr.mxu0 0.0
        %8688 = vmatpush2.msra.mxu0 0.0
        %8689 = vmatprep.subr.mxu0 0.0
        %8690 = vmatpush2.msra.mxu0 0.0
        %8691 = vmatprep.subr.mxu0 0.0
        %8692 = vmatpush2.msra.mxu0 0.0
        %8693 = vmatprep.subr.mxu0 0.0
        %8694 = vmatpush2.msra.mxu0 0.0
        %8695 = vmatprep.subr.mxu0 0.0
        %8696 = vmatpush2.msra.mxu0 0.0
        %8697 = vmatprep.mubr.f32.mxu0 0.0
        %8698 = vmatmul.mubr.f32.gmra.mxu0 %v8625
        %v8699 = vpop.f32.mrf.mxu0
        %v8700 = vadd.f32 %v2300, %v8699
        %v8701 = vpop.f32.mrf.mxu0
        %8702 = vmatprep.mubr.f32.mxu0 0.0
        %8703 = vmatmul.mubr.f32.gmra.mxu0 %v8628
        %v8704 = vpop.f32.mrf.mxu0
        %v8705 = vadd.f32 %v2300, %v8704
        %v8706 = vpop.f32.mrf.mxu0
        %8707 = vmatprep.mubr.f32.mxu0 0.0
        %8708 = vmatmul.mubr.f32.gmra.mxu0 %v8631
        %v8709 = vpop.f32.mrf.mxu0
        %v8710 = vadd.f32 %v2300, %v8709
        %v8711 = vpop.f32.mrf.mxu0
        %8712 = vdwg.mxu0
        %8716 = vrot.lane.b32.xlu0 %v8700, 64
        %v8717 = vpop.permute.xlu0 %8716
        %8718 = vrot.lane.b32.xlu0 %v8705, 64
        %v8719 = vpop.permute.xlu0 %8718
        %8720 = vrot.lane.b32.xlu0 %v8710, 64
        %v8721 = vpop.permute.xlu0 %8720
        %v8725 = vadd.f32 %v8448, %v8717
        %v8726 = vadd.f32 %v8449, %v8719
        %v8727 = vadd.f32 %v8450, %v8721
        %8731 = vrot.lane.b32.xlu0 %v8725, 64
        %v8732 = vpop.permute.xlu0 %8731
        %8733 = vrot.lane.b32.xlu0 %v8726, 64
        %v8734 = vpop.permute.xlu0 %8733
        %8735 = vrot.lane.b32.xlu0 %v8727, 64
        %v8736 = vpop.permute.xlu0 %8735
        %8743 = vrot.lane.b32.xlu0 %v8094, 64
        %v8744 = vpop.permute.xlu0 %8743
        %8745 = vrot.lane.b32.xlu0 %v8095, 64
        %v8746 = vpop.permute.xlu0 %8745
        %8747 = vrot.lane.b32.xlu0 %v8096, 64
        %v8748 = vpop.permute.xlu0 %8747
        %v8752 = vsel %vm572, %v8732, %v8744
        %v8753 = vsel %vm572, %v8734, %v8746
        %v8754 = vsel %vm572, %v8736, %v8748
        %s8755 = scalar_lea.vmem %s421, 72
        %8756 = vst [vmem:[%s8755] sm:$0xff] %v8752
        %8757 = vst [vmem:[%s8755 + $0x8] sm:$0xff] %v8753
        %8758 = vst [vmem:[%s8755 + $0x10] sm:$0x1f] %v8754
        %p8759 = scmp.lt.s32.totalorder %s26, 1
        %s8760 = scalar_select %p8759, %s26, 1
        %s8761 = smul.addr %s8760, 12
        %s8762 = smul.addr %s8761, 8
        %s8763 = scalar_lea.vmem %s9, %s8762
        // Predicated region
        $region81: #{slot_mo_forward.1} parent=55 // pred_check
          %p8764 = pneg %p238
        $region82: #{slot_mo_forward.1} parent=55 // pred_check_branch
          %8766 = sbr.rel (%p8764) target = $region84
        $region83: #{slot_mo_forward.1} parent=55 // pred_region
          _
        $region84: #{slot_mo_forward.1} parent=55 // pred_fallthru
          _
      $region56: #{slot_mo_forward.1} parent=5 // pred_fallthru
        _
      %p8767 = scmp.le.s32.totalorder 2, %s21
      // Predicated region
      $region85: #{slot_mo_forward.1} parent=5 // pred_check
        %p8768 = pneg %p8767
      $region86: #{slot_mo_forward.1} parent=5 // pred_check_branch
        %8770 = sbr.rel (%p8768) target = $region88
      $region87: #{slot_mo_forward.1} parent=5 // pred_region
        %s8771 = ssub.s32 %s21, 2
        // Predicated region
        $region89: #{slot_mo_forward.1} parent=87 // pred_check
          %p8772 = pneg %p244
        $region90: #{slot_mo_forward.1} parent=87 // pred_check_branch
          %8774 = sbr.rel (%p8772) target = $region92
        $region91: #{slot_mo_forward.1} parent=87 // pred_region
          %p8775 = scmp.lt.s32.totalorder %s27, 1
          %s8776 = scalar_select %p8775, %s27, 1
          %s8777 = smul.addr %s8776, 12
          %s8778 = smul.addr %s8777, 8
          %s8779 = scalar_lea.vmem %s9, %s8778
        $region92: #{slot_mo_forward.1} parent=87 // pred_fallthru
          _
      $region88: #{slot_mo_forward.1} parent=5 // pred_fallthru
        _
    $region6: #{slot_mo_forward.1} parent=1 // loop_footer
      %s25 = sadd.s32 1, %s21
    $region7: #{slot_mo_forward.1} parent=1 // loop_footer_branch
      %20 = sbr.rel target = $region3
    $region8: #{slot_mo_forward.1} parent=1 // loop_exit
      _
    %8780 = vsyncpa [#allocation3], 1
    %s8781 = scalar_lea.sflag [#allocation3], 1
    %8782 = vsyncpa %s8781, 1
    %8783 = vsyncpa [#allocation5], 1
    %8784 = vsyncpa [#allocation8], 1
    %8785 = vsyncpa [#allocation11], 1

</llo_original>
